<compile_context>
chip_gen: v7x
topology: tpu7x:2x2x1
jax: 0.10.0
libtpu: 0.0.40
codegen_flags: <defaults>
</compile_context>

<pallas_src>
import functools
import math

import jax
import jax.numpy as jnp
from jax.experimental import pallas as pl
from jax.experimental.pallas import tpu as pltpu


def _round_up(x, m):
    return (x + m - 1) // m * m


# --------------------------- fused forward kernel ----------------------------

def _gru_model_kernel(*refs, seq_len, batch_pad, hidden_pad, num_layers):
    S, B, HP = seq_len, batch_pad, hidden_pad
    L = num_layers

    x_ref = refs[0]                                             # (S*B, DP) bf16
    layer_refs = [tuple(refs[1 + 4 * l: 1 + 4 * (l + 1)]) for l in range(L)]
    lin_w_ref = refs[1 + 4 * L]                                 # (HP, OP) bf16
    lin_b_ref = refs[2 + 4 * L]                                 # (1, OP)  f32
    o_ref = refs[3 + 4 * L]                                     # (S*B, OP) f32
    gi0_ref = refs[4 + 4 * L]   # (S*B, 3*HP) f32  hoisted layer-0 input proj
    seq_ref = refs[5 + 4 * L]   # (S*B, HP)   f32  last layer's output sequence

    # ---- hoisted input projection for layer 0: one MXU matmul, all steps ----
    w_ih0_ref, _, b_gi0_ref, _ = layer_refs[0]
    gi0_ref[...] = (
        jnp.dot(x_ref[...], w_ih0_ref[...], preferred_element_type=jnp.float32)
        + b_gi0_ref[...])

    def gru_cell(gi, h, l):
        """One GRU cell update.  gi: (B, 3*HP) f32, h: (B, HP) f32 -> f32."""
        _, w_hh_ref, _, b_hn_ref = layer_refs[l]
        gh = jnp.dot(h.astype(jnp.bfloat16), w_hh_ref[...],
                     preferred_element_type=jnp.float32)
        # PyTorch gate order [r, z, n]; each gate is a lane-aligned 128 block.
        r = jax.nn.sigmoid(gi[:, 0:HP] + gh[:, 0:HP])
        z = jax.nn.sigmoid(gi[:, HP:2 * HP] + gh[:, HP:2 * HP])
        n = jnp.tanh(gi[:, 2 * HP:3 * HP]
                     + r * (gh[:, 2 * HP:3 * HP] + b_hn_ref[...]))
        return (1.0 - z) * n + z * h

    # ---- wavefront recurrence: at step w compute (layer l, t = w - l) -------
    # Layer l's input at time t is layer (l-1)'s output at time t, which was
    # produced at wavefront step w-1, i.e. the *old* carried h[l-1].
    h = [jnp.zeros((B, HP), jnp.float32) for _ in range(L)]     # h_0 = 0
    for w in range(S + L - 1):
        new_h = list(h)
        for l in range(L):
            t = w - l
            if not (0 <= t < S):
                continue
            if l == 0:
                gi = gi0_ref[pl.ds(t * B, B), :]                # static slice
            else:
                w_ih_ref, _, b_gi_ref, _ = layer_refs[l]
                gi = (jnp.dot(h[l - 1].astype(jnp.bfloat16), w_ih_ref[...],
                              preferred_element_type=jnp.float32)
                      + b_gi_ref[...])
            new_h[l] = gru_cell(gi, h[l], l)
            if l == L - 1:
                seq_ref[pl.ds(t * B, B), :] = new_h[l]
        h = new_h

    # ---- fused final Linear over the whole output sequence ------------------
    out2d = (jnp.dot(seq_ref[...].astype(jnp.bfloat16), lin_w_ref[...],
                     preferred_element_type=jnp.float32)
             + lin_b_ref[...])
    o_ref[...] = out2d.astype(o_ref.dtype)


# ------------------------------ param handling --------------------------------

def init_params(key, input_size, hidden_size, output_size, layers_size):
    """Logical (unpadded) f32 params, PyTorch-style init, gate order [r,z,n]."""
    k = 1.0 / math.sqrt(hidden_size)
    params = {"gru": []}
    for layer in range(layers_size):
        d_in = input_size if layer == 0 else hidden_size
        key, k1, k2, k3, k4 = jax.random.split(key, 5)
        params["gru"].append({
            # stored transposed: (d_in, 3H) / (H, 3H)
            "w_ih": jax.random.uniform(k1, (d_in, 3 * hidden_size),
                                       jnp.float32, -k, k),
            "w_hh": jax.random.uniform(k2, (hidden_size, 3 * hidden_size),
                                       jnp.float32, -k, k),
            "b_ih": jax.random.uniform(k3, (1, 3 * hidden_size),
                                       jnp.float32, -k, k),
            "b_hh": jax.random.uniform(k4, (1, 3 * hidden_size),
                                       jnp.float32, -k, k),
        })
    key, k5, k6 = jax.random.split(key, 3)
    params["lin_w"] = jax.random.uniform(k5, (hidden_size, output_size),
                                         jnp.float32, -k, k)
    params["lin_b"] = jax.random.uniform(k6, (1, output_size),
                                         jnp.float32, -k, k)
    return params


def prepare_kernel_params(params, input_size, hidden_size, output_size):
    """Pad/relayout params for the kernel.

    Lane-aligned gates (each gate padded to a 128-lane block), combined r/z
    biases, weight matrices cast to bf16 (MXU operands), biases kept f32.
    """
    H = hidden_size
    HP = _round_up(H, 128)
    DP = _round_up(input_size, 128)
    OP = _round_up(output_size, 128)

    layers = []
    for i, layer in enumerate(params["gru"]):
        d_in = input_size if i == 0 else H
        d_in_p = DP if i == 0 else HP
        w_ih, w_hh = layer["w_ih"], layer["w_hh"]
        b_ih, b_hh = layer["b_ih"], layer["b_hh"]

        w_ih_p = jnp.zeros((d_in_p, 3 * HP), jnp.float32)
        w_hh_p = jnp.zeros((HP, 3 * HP), jnp.float32)
        for g in range(3):
            w_ih_p = w_ih_p.at[:d_in, g * HP:g * HP + H].set(
                w_ih[:, g * H:(g + 1) * H])
            w_hh_p = w_hh_p.at[:H, g * HP:g * HP + H].set(
                w_hh[:, g * H:(g + 1) * H])

        # r/z biases pre-combined (b_ih + b_hh); n keeps only b_ih here, its
        # hidden bias b_hh_n must stay inside the r*(...) term (PyTorch GRU).
        b_gi_p = jnp.zeros((1, 3 * HP), jnp.float32)
        b_gi_p = b_gi_p.at[:, 0 * HP:0 * HP + H].set(b_ih[:, 0:H] + b_hh[:, 0:H])
        b_gi_p = b_gi_p.at[:, 1 * HP:1 * HP + H].set(
            b_ih[:, H:2 * H] + b_hh[:, H:2 * H])
        b_gi_p = b_gi_p.at[:, 2 * HP:2 * HP + H].set(b_ih[:, 2 * H:3 * H])
        b_hn_p = jnp.zeros((1, HP), jnp.float32).at[:, :H].set(
            b_hh[:, 2 * H:3 * H])

        layers.append((w_ih_p.astype(jnp.bfloat16),
                       w_hh_p.astype(jnp.bfloat16),
                       b_gi_p, b_hn_p))

    lin_w_p = (jnp.zeros((HP, OP), jnp.float32)
               .at[:H, :output_size].set(params["lin_w"])
               .astype(jnp.bfloat16))
    lin_b_p = jnp.zeros((1, OP), jnp.float32).at[:, :output_size].set(
        params["lin_b"])

    return {"layers": layers, "lin": (lin_w_p, lin_b_p), "dims": (DP, HP, OP)}


# ------------------------------- model wrapper --------------------------------

def gru_model_forward(x, kparams, output_size):
    """x: (S, B, input_size) f32 -> (S, B, output_size) f32."""
    S, B, D = x.shape
    DP, HP, OP = kparams["dims"]
    BP = _round_up(B, 8)
    num_layers = len(kparams["layers"])

    # Pad batch to 8 sublanes / features to 128 lanes, flatten time into rows,
    # cast to bf16 once on the host side (MXU operand feed).
    xp = jnp.zeros((S, BP, DP), jnp.float32).at[:, :B, :D].set(x)
    x2d = xp.reshape(S * BP, DP).astype(jnp.bfloat16)

    flat_weights = []
    for layer in kparams["layers"]:
        flat_weights.extend(layer)
    lin_w, lin_b = kparams["lin"]
    inputs = [x2d] + flat_weights + [lin_w, lin_b]

    def fullspec(shape):
        return pl.BlockSpec(shape, lambda i: (0,) * len(shape))

    kernel = functools.partial(_gru_model_kernel, seq_len=S, batch_pad=BP,
                               hidden_pad=HP, num_layers=num_layers)

    out = pl.pallas_call(
        kernel,
        out_shape=jax.ShapeDtypeStruct((S * BP, OP), jnp.float32),
        grid_spec=pltpu.PrefetchScalarGridSpec(
            num_scalar_prefetch=0,
            grid=(1,),
            in_specs=[fullspec(a.shape) for a in inputs],
            out_specs=fullspec((S * BP, OP)),
            scratch_shapes=[
                pltpu.VMEM((S * BP, 3 * HP), jnp.float32),  # hoisted layer-0 gi
                pltpu.VMEM((S * BP, HP), jnp.float32),      # last-layer out seq
            ],
        ),
        compiler_params=pltpu.CompilerParams(
            dimension_semantics=("arbitrary",),
            vmem_limit_bytes=32 * 1024 * 1024),
    )(*inputs)

    return out.reshape(S, BP, OP)[:, :B, :output_size]


# ----------------------------- pure-JAX reference ------------------------------

def gru_model_ref(x, params):
    h = x
    for layer in params["gru"]:
        w_ih, w_hh = layer["w_ih"], layer["w_hh"]
        b_ih, b_hh = layer["b_ih"], layer["b_hh"]
        H = w_hh.shape[0]
        B = x.shape[1]

        def step(h_prev, x_t):
            gi = x_t @ w_ih + b_ih
            gh = h_prev @ w_hh + b_hh
            r = jax.nn.sigmoid(gi[:, :H] + gh[:, :H])
            z = jax.nn.sigmoid(gi[:, H:2 * H] + gh[:, H:2 * H])
            n = jnp.tanh(gi[:, 2 * H:] + r * gh[:, 2 * H:])
            h_new = (1.0 - z) * n + z * h_prev
            return h_new, h_new

        _, h = jax.lax.scan(step, jnp.zeros((B, H), jnp.float32), h)
    return h @ params["lin_w"] + params["lin_b"]


# ------------------------------------ main -------------------------------------

if __name__ == "__main__":
    # Small shapes consistent with the module: seq=8, batch=2, input=10,
    # hidden=20, 3 GRU layers, output=1; x is time-major (batch_first=False).
    # TODO(synk): input_size in the original script is derived from a pandas CSV;
    # fixed to 10 here since no data files may be read.
    seq_len, batch, input_size = 8, 2, 10
    hidden_size, output_size, layers_size = 20, 1, 3

    key = jax.random.PRNGKey(0)
    key, xkey = jax.random.split(key)
    x = jax.random.normal(xkey, (seq_len, batch, input_size), jnp.float32)

    params = init_params(key, input_size, hidden_size, output_size, layers_size)
    kparams = prepare_kernel_params(params, input_size, hidden_size, output_size)

    y = gru_model_forward(x, kparams, output_size)
    y = jax.block_until_ready(y)

    y_ref = gru_model_ref(x, params)
    assert y.shape == (seq_len, batch, output_size)
    # Tolerance relaxed vs the pure-f32 version: MXU operands are bf16.
    assert jnp.allclose(y, y_ref, atol=5e-2, rtol=5e-2), "mismatch vs reference"

    print("KERNEL_OK")
</pallas_src>

<mosaic_0001>
module attributes {stable_mosaic.version = 11 : i64} {
  func.func @_gru_model_kernel(%arg0: i32, %arg1: memref<64x128xbf16, #tpu.memory_space<vmem>>, %arg2: memref<128x384xbf16, #tpu.memory_space<vmem>>, %arg3: memref<128x384xbf16, #tpu.memory_space<vmem>>, %arg4: memref<1x384xf32, #tpu.memory_space<vmem>>, %arg5: memref<1x128xf32, #tpu.memory_space<vmem>>, %arg6: memref<128x384xbf16, #tpu.memory_space<vmem>>, %arg7: memref<128x384xbf16, #tpu.memory_space<vmem>>, %arg8: memref<1x384xf32, #tpu.memory_space<vmem>>, %arg9: memref<1x128xf32, #tpu.memory_space<vmem>>, %arg10: memref<128x384xbf16, #tpu.memory_space<vmem>>, %arg11: memref<128x384xbf16, #tpu.memory_space<vmem>>, %arg12: memref<1x384xf32, #tpu.memory_space<vmem>>, %arg13: memref<1x128xf32, #tpu.memory_space<vmem>>, %arg14: memref<128x128xbf16, #tpu.memory_space<vmem>>, %arg15: memref<1x128xf32, #tpu.memory_space<vmem>>, %arg16: memref<64x128xf32, #tpu.memory_space<vmem>>, %arg17: memref<64x384xf32, #tpu.memory_space<vmem>>, %arg18: memref<64x128xf32, #tpu.memory_space<vmem>>) attributes {dimension_semantics = [#tpu.dimension_semantics<arbitrary>], iteration_bounds = array<i64: 1>, scalar_prefetch = 0 : i64, scratch_operands = 2 : i64, tpu.core_type = #tpu.core_type<tc>, window_params = [{pipeline_mode = #tpu.pipeline_mode<synchronous>, transform_indices = @transform_0, window_bounds = array<i64: 64, 128>}, {pipeline_mode = #tpu.pipeline_mode<synchronous>, transform_indices = @transform_1, window_bounds = array<i64: 128, 384>}, {pipeline_mode = #tpu.pipeline_mode<synchronous>, transform_indices = @transform_2, window_bounds = array<i64: 128, 384>}, {pipeline_mode = #tpu.pipeline_mode<synchronous>, transform_indices = @transform_3, window_bounds = array<i64: 1, 384>}, {pipeline_mode = #tpu.pipeline_mode<synchronous>, transform_indices = @transform_4, window_bounds = array<i64: 1, 128>}, {pipeline_mode = #tpu.pipeline_mode<synchronous>, transform_indices = @transform_5, window_bounds = array<i64: 128, 384>}, {pipeline_mode = #tpu.pipeline_mode<synchronous>, transform_indices = @transform_6, window_bounds = array<i64: 128, 384>}, {pipeline_mode = #tpu.pipeline_mode<synchronous>, transform_indices = @transform_7, window_bounds = array<i64: 1, 384>}, {pipeline_mode = #tpu.pipeline_mode<synchronous>, transform_indices = @transform_8, window_bounds = array<i64: 1, 128>}, {pipeline_mode = #tpu.pipeline_mode<synchronous>, transform_indices = @transform_9, window_bounds = array<i64: 128, 384>}, {pipeline_mode = #tpu.pipeline_mode<synchronous>, transform_indices = @transform_10, window_bounds = array<i64: 128, 384>}, {pipeline_mode = #tpu.pipeline_mode<synchronous>, transform_indices = @transform_11, window_bounds = array<i64: 1, 384>}, {pipeline_mode = #tpu.pipeline_mode<synchronous>, transform_indices = @transform_12, window_bounds = array<i64: 1, 128>}, {pipeline_mode = #tpu.pipeline_mode<synchronous>, transform_indices = @transform_13, window_bounds = array<i64: 128, 128>}, {pipeline_mode = #tpu.pipeline_mode<synchronous>, transform_indices = @transform_14, window_bounds = array<i64: 1, 128>}, {pipeline_mode = #tpu.pipeline_mode<synchronous>, transform_indices = @transform_15, window_bounds = array<i64: 64, 128>}]} {
    %c0 = arith.constant 0 : index
    %c0_0 = arith.constant 0 : index
    %0 = vector.load %arg1[%c0, %c0_0] : memref<64x128xbf16, #tpu.memory_space<vmem>>, vector<64x128xbf16>
    %c0_1 = arith.constant 0 : index
    %c0_2 = arith.constant 0 : index
    %1 = vector.load %arg2[%c0_1, %c0_2] : memref<128x384xbf16, #tpu.memory_space<vmem>>, vector<128x384xbf16>
    %cst = arith.constant dense<0.000000e+00> : vector<64x384xf32>
    %2 = tpu.matmul %0, %1, %cst {dimension_numbers = #tpu.dot_dimension_numbers<[1], [0], [0], [1], [0, 0, 1, 1], [], []>} : vector<64x128xbf16>, vector<128x384xbf16>, vector<64x384xf32> -> vector<64x384xf32>
    %c0_3 = arith.constant 0 : index
    %c0_4 = arith.constant 0 : index
    %3 = vector.load %arg4[%c0_3, %c0_4] : memref<1x384xf32, #tpu.memory_space<vmem>>, vector<1x384xf32>
    %4 = vector.broadcast %3 : vector<1x384xf32> to vector<64x384xf32>
    %5 = arith.addf %2, %4 : vector<64x384xf32>
    %c0_5 = arith.constant 0 : index
    %c0_6 = arith.constant 0 : index
    %6 = vector.load %arg17[%c0_5, %c0_6] : memref<64x384xf32, #tpu.memory_space<vmem>>, vector<64x384xf32>
    tpu.vector_store %arg17[%c0_5, %c0_6], %5 {strides = array<i32>} : memref<64x384xf32, #tpu.memory_space<vmem>>, vector<64x384xf32>,
    %cst_7 = arith.constant 0.000000e+00 : f32
    %7 = vector.broadcast %cst_7 : f32 to vector<8x128xf32>
    %cst_8 = arith.constant 0.000000e+00 : f32
    %8 = vector.broadcast %cst_8 : f32 to vector<8x128xf32>
    %cst_9 = arith.constant 0.000000e+00 : f32
    %9 = vector.broadcast %cst_9 : f32 to vector<8x128xf32>
    %c0_10 = arith.constant 0 : index
    %c0_11 = arith.constant 0 : index
    %10 = vector.load %arg17[%c0_10, %c0_11] : memref<64x384xf32, #tpu.memory_space<vmem>>, vector<8x384xf32>
    %11 = arith.truncf %7 : vector<8x128xf32> to vector<8x128xbf16>
    %c0_12 = arith.constant 0 : index
    %c0_13 = arith.constant 0 : index
    %12 = vector.load %arg3[%c0_12, %c0_13] : memref<128x384xbf16, #tpu.memory_space<vmem>>, vector<128x384xbf16>
    %cst_14 = arith.constant dense<0.000000e+00> : vector<8x384xf32>
    %13 = tpu.matmul %11, %12, %cst_14 {dimension_numbers = #tpu.dot_dimension_numbers<[1], [0], [0], [1], [0, 0, 1, 1], [], []>} : vector<8x128xbf16>, vector<128x384xbf16>, vector<8x384xf32> -> vector<8x384xf32>
    %14 = vector.extract_strided_slice %10 {offsets = [0, 0], sizes = [8, 128], strides = [1, 1]} : vector<8x384xf32> to vector<8x128xf32>
    %15 = vector.extract_strided_slice %13 {offsets = [0, 0], sizes = [8, 128], strides = [1, 1]} : vector<8x384xf32> to vector<8x128xf32>
    %16 = arith.addf %14, %15 : vector<8x128xf32>
    %17 = arith.negf %16 : vector<8x128xf32>
    %18 = math.exp %17 : vector<8x128xf32>
    %cst_15 = arith.constant 1.000000e+00 : f32
    %19 = vector.broadcast %cst_15 : f32 to vector<8x128xf32>
    %20 = arith.addf %19, %18 : vector<8x128xf32>
    %21 = arith.divf %19, %20 : vector<8x128xf32>
    %22 = vector.extract_strided_slice %10 {offsets = [0, 128], sizes = [8, 128], strides = [1, 1]} : vector<8x384xf32> to vector<8x128xf32>
    %23 = vector.extract_strided_slice %13 {offsets = [0, 128], sizes = [8, 128], strides = [1, 1]} : vector<8x384xf32> to vector<8x128xf32>
    %24 = arith.addf %22, %23 : vector<8x128xf32>
    %25 = arith.negf %24 : vector<8x128xf32>
    %26 = math.exp %25 : vector<8x128xf32>
    %cst_16 = arith.constant 1.000000e+00 : f32
    %27 = vector.broadcast %cst_16 : f32 to vector<8x128xf32>
    %28 = arith.addf %27, %26 : vector<8x128xf32>
    %29 = arith.divf %27, %28 : vector<8x128xf32>
    %30 = vector.extract_strided_slice %10 {offsets = [0, 256], sizes = [8, 128], strides = [1, 1]} : vector<8x384xf32> to vector<8x128xf32>
    %31 = vector.extract_strided_slice %13 {offsets = [0, 256], sizes = [8, 128], strides = [1, 1]} : vector<8x384xf32> to vector<8x128xf32>
    %c0_17 = arith.constant 0 : index
    %c0_18 = arith.constant 0 : index
    %32 = vector.load %arg5[%c0_17, %c0_18] : memref<1x128xf32, #tpu.memory_space<vmem>>, vector<1x128xf32>
    %33 = vector.broadcast %32 : vector<1x128xf32> to vector<8x128xf32>
    %34 = arith.addf %31, %33 : vector<8x128xf32>
    %35 = arith.mulf %21, %34 : vector<8x128xf32>
    %36 = arith.addf %30, %35 : vector<8x128xf32>
    %37 = math.tanh %36 : vector<8x128xf32>
    %cst_19 = arith.constant 1.000000e+00 : f32
    %38 = vector.broadcast %cst_19 : f32 to vector<8x128xf32>
    %39 = arith.subf %38, %29 : vector<8x128xf32>
    %40 = arith.mulf %39, %37 : vector<8x128xf32>
    %41 = arith.mulf %29, %7 : vector<8x128xf32>
    %42 = arith.addf %40, %41 : vector<8x128xf32>
    %c8 = arith.constant 8 : index
    %c0_20 = arith.constant 0 : index
    %43 = vector.load %arg17[%c8, %c0_20] : memref<64x384xf32, #tpu.memory_space<vmem>>, vector<8x384xf32>
    %44 = arith.truncf %42 : vector<8x128xf32> to vector<8x128xbf16>
    %c0_21 = arith.constant 0 : index
    %c0_22 = arith.constant 0 : index
    %45 = vector.load %arg3[%c0_21, %c0_22] : memref<128x384xbf16, #tpu.memory_space<vmem>>, vector<128x384xbf16>
    %cst_23 = arith.constant dense<0.000000e+00> : vector<8x384xf32>
    %46 = tpu.matmul %44, %45, %cst_23 {dimension_numbers = #tpu.dot_dimension_numbers<[1], [0], [0], [1], [0, 0, 1, 1], [], []>} : vector<8x128xbf16>, vector<128x384xbf16>, vector<8x384xf32> -> vector<8x384xf32>
    %47 = vector.extract_strided_slice %43 {offsets = [0, 0], sizes = [8, 128], strides = [1, 1]} : vector<8x384xf32> to vector<8x128xf32>
    %48 = vector.extract_strided_slice %46 {offsets = [0, 0], sizes = [8, 128], strides = [1, 1]} : vector<8x384xf32> to vector<8x128xf32>
    %49 = arith.addf %47, %48 : vector<8x128xf32>
    %50 = arith.negf %49 : vector<8x128xf32>
    %51 = math.exp %50 : vector<8x128xf32>
    %cst_24 = arith.constant 1.000000e+00 : f32
    %52 = vector.broadcast %cst_24 : f32 to vector<8x128xf32>
    %53 = arith.addf %52, %51 : vector<8x128xf32>
    %54 = arith.divf %52, %53 : vector<8x128xf32>
    %55 = vector.extract_strided_slice %43 {offsets = [0, 128], sizes = [8, 128], strides = [1, 1]} : vector<8x384xf32> to vector<8x128xf32>
    %56 = vector.extract_strided_slice %46 {offsets = [0, 128], sizes = [8, 128], strides = [1, 1]} : vector<8x384xf32> to vector<8x128xf32>
    %57 = arith.addf %55, %56 : vector<8x128xf32>
    %58 = arith.negf %57 : vector<8x128xf32>
    %59 = math.exp %58 : vector<8x128xf32>
    %cst_25 = arith.constant 1.000000e+00 : f32
    %60 = vector.broadcast %cst_25 : f32 to vector<8x128xf32>
    %61 = arith.addf %60, %59 : vector<8x128xf32>
    %62 = arith.divf %60, %61 : vector<8x128xf32>
    %63 = vector.extract_strided_slice %43 {offsets = [0, 256], sizes = [8, 128], strides = [1, 1]} : vector<8x384xf32> to vector<8x128xf32>
    %64 = vector.extract_strided_slice %46 {offsets = [0, 256], sizes = [8, 128], strides = [1, 1]} : vector<8x384xf32> to vector<8x128xf32>
    %c0_26 = arith.constant 0 : index
    %c0_27 = arith.constant 0 : index
    %65 = vector.load %arg5[%c0_26, %c0_27] : memref<1x128xf32, #tpu.memory_space<vmem>>, vector<1x128xf32>
    %66 = vector.broadcast %65 : vector<1x128xf32> to vector<8x128xf32>
    %67 = arith.addf %64, %66 : vector<8x128xf32>
    %68 = arith.mulf %54, %67 : vector<8x128xf32>
    %69 = arith.addf %63, %68 : vector<8x128xf32>
    %70 = math.tanh %69 : vector<8x128xf32>
    %cst_28 = arith.constant 1.000000e+00 : f32
    %71 = vector.broadcast %cst_28 : f32 to vector<8x128xf32>
    %72 = arith.subf %71, %62 : vector<8x128xf32>
    %73 = arith.mulf %72, %70 : vector<8x128xf32>
    %74 = arith.mulf %62, %42 : vector<8x128xf32>
    %75 = arith.addf %73, %74 : vector<8x128xf32>
    %76 = arith.truncf %42 : vector<8x128xf32> to vector<8x128xbf16>
    %c0_29 = arith.constant 0 : index
    %c0_30 = arith.constant 0 : index
    %77 = vector.load %arg6[%c0_29, %c0_30] : memref<128x384xbf16, #tpu.memory_space<vmem>>, vector<128x384xbf16>
    %cst_31 = arith.constant dense<0.000000e+00> : vector<8x384xf32>
    %78 = tpu.matmul %76, %77, %cst_31 {dimension_numbers = #tpu.dot_dimension_numbers<[1], [0], [0], [1], [0, 0, 1, 1], [], []>} : vector<8x128xbf16>, vector<128x384xbf16>, vector<8x384xf32> -> vector<8x384xf32>
    %c0_32 = arith.constant 0 : index
    %c0_33 = arith.constant 0 : index
    %79 = vector.load %arg8[%c0_32, %c0_33] : memref<1x384xf32, #tpu.memory_space<vmem>>, vector<1x384xf32>
    %80 = vector.broadcast %79 : vector<1x384xf32> to vector<8x384xf32>
    %81 = arith.addf %78, %80 : vector<8x384xf32>
    %82 = arith.truncf %8 : vector<8x128xf32> to vector<8x128xbf16>
    %c0_34 = arith.constant 0 : index
    %c0_35 = arith.constant 0 : index
    %83 = vector.load %arg7[%c0_34, %c0_35] : memref<128x384xbf16, #tpu.memory_space<vmem>>, vector<128x384xbf16>
    %cst_36 = arith.constant dense<0.000000e+00> : vector<8x384xf32>
    %84 = tpu.matmul %82, %83, %cst_36 {dimension_numbers = #tpu.dot_dimension_numbers<[1], [0], [0], [1], [0, 0, 1, 1], [], []>} : vector<8x128xbf16>, vector<128x384xbf16>, vector<8x384xf32> -> vector<8x384xf32>
    %85 = vector.extract_strided_slice %81 {offsets = [0, 0], sizes = [8, 128], strides = [1, 1]} : vector<8x384xf32> to vector<8x128xf32>
    %86 = vector.extract_strided_slice %84 {offsets = [0, 0], sizes = [8, 128], strides = [1, 1]} : vector<8x384xf32> to vector<8x128xf32>
    %87 = arith.addf %85, %86 : vector<8x128xf32>
    %88 = arith.negf %87 : vector<8x128xf32>
    %89 = math.exp %88 : vector<8x128xf32>
    %cst_37 = arith.constant 1.000000e+00 : f32
    %90 = vector.broadcast %cst_37 : f32 to vector<8x128xf32>
    %91 = arith.addf %90, %89 : vector<8x128xf32>
    %92 = arith.divf %90, %91 : vector<8x128xf32>
    %93 = vector.extract_strided_slice %81 {offsets = [0, 128], sizes = [8, 128], strides = [1, 1]} : vector<8x384xf32> to vector<8x128xf32>
    %94 = vector.extract_strided_slice %84 {offsets = [0, 128], sizes = [8, 128], strides = [1, 1]} : vector<8x384xf32> to vector<8x128xf32>
    %95 = arith.addf %93, %94 : vector<8x128xf32>
    %96 = arith.negf %95 : vector<8x128xf32>
    %97 = math.exp %96 : vector<8x128xf32>
    %cst_38 = arith.constant 1.000000e+00 : f32
    %98 = vector.broadcast %cst_38 : f32 to vector<8x128xf32>
    %99 = arith.addf %98, %97 : vector<8x128xf32>
    %100 = arith.divf %98, %99 : vector<8x128xf32>
    %101 = vector.extract_strided_slice %81 {offsets = [0, 256], sizes = [8, 128], strides = [1, 1]} : vector<8x384xf32> to vector<8x128xf32>
    %102 = vector.extract_strided_slice %84 {offsets = [0, 256], sizes = [8, 128], strides = [1, 1]} : vector<8x384xf32> to vector<8x128xf32>
    %c0_39 = arith.constant 0 : index
    %c0_40 = arith.constant 0 : index
    %103 = vector.load %arg9[%c0_39, %c0_40] : memref<1x128xf32, #tpu.memory_space<vmem>>, vector<1x128xf32>
    %104 = vector.broadcast %103 : vector<1x128xf32> to vector<8x128xf32>
    %105 = arith.addf %102, %104 : vector<8x128xf32>
    %106 = arith.mulf %92, %105 : vector<8x128xf32>
    %107 = arith.addf %101, %106 : vector<8x128xf32>
    %108 = math.tanh %107 : vector<8x128xf32>
    %cst_41 = arith.constant 1.000000e+00 : f32
    %109 = vector.broadcast %cst_41 : f32 to vector<8x128xf32>
    %110 = arith.subf %109, %100 : vector<8x128xf32>
    %111 = arith.mulf %110, %108 : vector<8x128xf32>
    %112 = arith.mulf %100, %8 : vector<8x128xf32>
    %113 = arith.addf %111, %112 : vector<8x128xf32>
    %c16 = arith.constant 16 : index
    %c0_42 = arith.constant 0 : index
    %114 = vector.load %arg17[%c16, %c0_42] : memref<64x384xf32, #tpu.memory_space<vmem>>, vector<8x384xf32>
    %115 = arith.truncf %75 : vector<8x128xf32> to vector<8x128xbf16>
    %c0_43 = arith.constant 0 : index
    %c0_44 = arith.constant 0 : index
    %116 = vector.load %arg3[%c0_43, %c0_44] : memref<128x384xbf16, #tpu.memory_space<vmem>>, vector<128x384xbf16>
    %cst_45 = arith.constant dense<0.000000e+00> : vector<8x384xf32>
    %117 = tpu.matmul %115, %116, %cst_45 {dimension_numbers = #tpu.dot_dimension_numbers<[1], [0], [0], [1], [0, 0, 1, 1], [], []>} : vector<8x128xbf16>, vector<128x384xbf16>, vector<8x384xf32> -> vector<8x384xf32>
    %118 = vector.extract_strided_slice %114 {offsets = [0, 0], sizes = [8, 128], strides = [1, 1]} : vector<8x384xf32> to vector<8x128xf32>
    %119 = vector.extract_strided_slice %117 {offsets = [0, 0], sizes = [8, 128], strides = [1, 1]} : vector<8x384xf32> to vector<8x128xf32>
    %120 = arith.addf %118, %119 : vector<8x128xf32>
    %121 = arith.negf %120 : vector<8x128xf32>
    %122 = math.exp %121 : vector<8x128xf32>
    %cst_46 = arith.constant 1.000000e+00 : f32
    %123 = vector.broadcast %cst_46 : f32 to vector<8x128xf32>
    %124 = arith.addf %123, %122 : vector<8x128xf32>
    %125 = arith.divf %123, %124 : vector<8x128xf32>
    %126 = vector.extract_strided_slice %114 {offsets = [0, 128], sizes = [8, 128], strides = [1, 1]} : vector<8x384xf32> to vector<8x128xf32>
    %127 = vector.extract_strided_slice %117 {offsets = [0, 128], sizes = [8, 128], strides = [1, 1]} : vector<8x384xf32> to vector<8x128xf32>
    %128 = arith.addf %126, %127 : vector<8x128xf32>
    %129 = arith.negf %128 : vector<8x128xf32>
    %130 = math.exp %129 : vector<8x128xf32>
    %cst_47 = arith.constant 1.000000e+00 : f32
    %131 = vector.broadcast %cst_47 : f32 to vector<8x128xf32>
    %132 = arith.addf %131, %130 : vector<8x128xf32>
    %133 = arith.divf %131, %132 : vector<8x128xf32>
    %134 = vector.extract_strided_slice %114 {offsets = [0, 256], sizes = [8, 128], strides = [1, 1]} : vector<8x384xf32> to vector<8x128xf32>
    %135 = vector.extract_strided_slice %117 {offsets = [0, 256], sizes = [8, 128], strides = [1, 1]} : vector<8x384xf32> to vector<8x128xf32>
    %c0_48 = arith.constant 0 : index
    %c0_49 = arith.constant 0 : index
    %136 = vector.load %arg5[%c0_48, %c0_49] : memref<1x128xf32, #tpu.memory_space<vmem>>, vector<1x128xf32>
    %137 = vector.broadcast %136 : vector<1x128xf32> to vector<8x128xf32>
    %138 = arith.addf %135, %137 : vector<8x128xf32>
    %139 = arith.mulf %125, %138 : vector<8x128xf32>
    %140 = arith.addf %134, %139 : vector<8x128xf32>
    %141 = math.tanh %140 : vector<8x128xf32>
    %cst_50 = arith.constant 1.000000e+00 : f32
    %142 = vector.broadcast %cst_50 : f32 to vector<8x128xf32>
    %143 = arith.subf %142, %133 : vector<8x128xf32>
    %144 = arith.mulf %143, %141 : vector<8x128xf32>
    %145 = arith.mulf %133, %75 : vector<8x128xf32>
    %146 = arith.addf %144, %145 : vector<8x128xf32>
    %147 = arith.truncf %75 : vector<8x128xf32> to vector<8x128xbf16>
    %c0_51 = arith.constant 0 : index
    %c0_52 = arith.constant 0 : index
    %148 = vector.load %arg6[%c0_51, %c0_52] : memref<128x384xbf16, #tpu.memory_space<vmem>>, vector<128x384xbf16>
    %cst_53 = arith.constant dense<0.000000e+00> : vector<8x384xf32>
    %149 = tpu.matmul %147, %148, %cst_53 {dimension_numbers = #tpu.dot_dimension_numbers<[1], [0], [0], [1], [0, 0, 1, 1], [], []>} : vector<8x128xbf16>, vector<128x384xbf16>, vector<8x384xf32> -> vector<8x384xf32>
    %c0_54 = arith.constant 0 : index
    %c0_55 = arith.constant 0 : index
    %150 = vector.load %arg8[%c0_54, %c0_55] : memref<1x384xf32, #tpu.memory_space<vmem>>, vector<1x384xf32>
    %151 = vector.broadcast %150 : vector<1x384xf32> to vector<8x384xf32>
    %152 = arith.addf %149, %151 : vector<8x384xf32>
    %153 = arith.truncf %113 : vector<8x128xf32> to vector<8x128xbf16>
    %c0_56 = arith.constant 0 : index
    %c0_57 = arith.constant 0 : index
    %154 = vector.load %arg7[%c0_56, %c0_57] : memref<128x384xbf16, #tpu.memory_space<vmem>>, vector<128x384xbf16>
    %cst_58 = arith.constant dense<0.000000e+00> : vector<8x384xf32>
    %155 = tpu.matmul %153, %154, %cst_58 {dimension_numbers = #tpu.dot_dimension_numbers<[1], [0], [0], [1], [0, 0, 1, 1], [], []>} : vector<8x128xbf16>, vector<128x384xbf16>, vector<8x384xf32> -> vector<8x384xf32>
    %156 = vector.extract_strided_slice %152 {offsets = [0, 0], sizes = [8, 128], strides = [1, 1]} : vector<8x384xf32> to vector<8x128xf32>
    %157 = vector.extract_strided_slice %155 {offsets = [0, 0], sizes = [8, 128], strides = [1, 1]} : vector<8x384xf32> to vector<8x128xf32>
    %158 = arith.addf %156, %157 : vector<8x128xf32>
    %159 = arith.negf %158 : vector<8x128xf32>
    %160 = math.exp %159 : vector<8x128xf32>
    %cst_59 = arith.constant 1.000000e+00 : f32
    %161 = vector.broadcast %cst_59 : f32 to vector<8x128xf32>
    %162 = arith.addf %161, %160 : vector<8x128xf32>
    %163 = arith.divf %161, %162 : vector<8x128xf32>
    %164 = vector.extract_strided_slice %152 {offsets = [0, 128], sizes = [8, 128], strides = [1, 1]} : vector<8x384xf32> to vector<8x128xf32>
    %165 = vector.extract_strided_slice %155 {offsets = [0, 128], sizes = [8, 128], strides = [1, 1]} : vector<8x384xf32> to vector<8x128xf32>
    %166 = arith.addf %164, %165 : vector<8x128xf32>
    %167 = arith.negf %166 : vector<8x128xf32>
    %168 = math.exp %167 : vector<8x128xf32>
    %cst_60 = arith.constant 1.000000e+00 : f32
    %169 = vector.broadcast %cst_60 : f32 to vector<8x128xf32>
    %170 = arith.addf %169, %168 : vector<8x128xf32>
    %171 = arith.divf %169, %170 : vector<8x128xf32>
    %172 = vector.extract_strided_slice %152 {offsets = [0, 256], sizes = [8, 128], strides = [1, 1]} : vector<8x384xf32> to vector<8x128xf32>
    %173 = vector.extract_strided_slice %155 {offsets = [0, 256], sizes = [8, 128], strides = [1, 1]} : vector<8x384xf32> to vector<8x128xf32>
    %c0_61 = arith.constant 0 : index
    %c0_62 = arith.constant 0 : index
    %174 = vector.load %arg9[%c0_61, %c0_62] : memref<1x128xf32, #tpu.memory_space<vmem>>, vector<1x128xf32>
    %175 = vector.broadcast %174 : vector<1x128xf32> to vector<8x128xf32>
    %176 = arith.addf %173, %175 : vector<8x128xf32>
    %177 = arith.mulf %163, %176 : vector<8x128xf32>
    %178 = arith.addf %172, %177 : vector<8x128xf32>
    %179 = math.tanh %178 : vector<8x128xf32>
    %cst_63 = arith.constant 1.000000e+00 : f32
    %180 = vector.broadcast %cst_63 : f32 to vector<8x128xf32>
    %181 = arith.subf %180, %171 : vector<8x128xf32>
    %182 = arith.mulf %181, %179 : vector<8x128xf32>
    %183 = arith.mulf %171, %113 : vector<8x128xf32>
    %184 = arith.addf %182, %183 : vector<8x128xf32>
    %185 = arith.truncf %113 : vector<8x128xf32> to vector<8x128xbf16>
    %c0_64 = arith.constant 0 : index
    %c0_65 = arith.constant 0 : index
    %186 = vector.load %arg10[%c0_64, %c0_65] : memref<128x384xbf16, #tpu.memory_space<vmem>>, vector<128x384xbf16>
    %cst_66 = arith.constant dense<0.000000e+00> : vector<8x384xf32>
    %187 = tpu.matmul %185, %186, %cst_66 {dimension_numbers = #tpu.dot_dimension_numbers<[1], [0], [0], [1], [0, 0, 1, 1], [], []>} : vector<8x128xbf16>, vector<128x384xbf16>, vector<8x384xf32> -> vector<8x384xf32>
    %c0_67 = arith.constant 0 : index
    %c0_68 = arith.constant 0 : index
    %188 = vector.load %arg12[%c0_67, %c0_68] : memref<1x384xf32, #tpu.memory_space<vmem>>, vector<1x384xf32>
    %189 = vector.broadcast %188 : vector<1x384xf32> to vector<8x384xf32>
    %190 = arith.addf %187, %189 : vector<8x384xf32>
    %191 = arith.truncf %9 : vector<8x128xf32> to vector<8x128xbf16>
    %c0_69 = arith.constant 0 : index
    %c0_70 = arith.constant 0 : index
    %192 = vector.load %arg11[%c0_69, %c0_70] : memref<128x384xbf16, #tpu.memory_space<vmem>>, vector<128x384xbf16>
    %cst_71 = arith.constant dense<0.000000e+00> : vector<8x384xf32>
    %193 = tpu.matmul %191, %192, %cst_71 {dimension_numbers = #tpu.dot_dimension_numbers<[1], [0], [0], [1], [0, 0, 1, 1], [], []>} : vector<8x128xbf16>, vector<128x384xbf16>, vector<8x384xf32> -> vector<8x384xf32>
    %194 = vector.extract_strided_slice %190 {offsets = [0, 0], sizes = [8, 128], strides = [1, 1]} : vector<8x384xf32> to vector<8x128xf32>
    %195 = vector.extract_strided_slice %193 {offsets = [0, 0], sizes = [8, 128], strides = [1, 1]} : vector<8x384xf32> to vector<8x128xf32>
    %196 = arith.addf %194, %195 : vector<8x128xf32>
    %197 = arith.negf %196 : vector<8x128xf32>
    %198 = math.exp %197 : vector<8x128xf32>
    %cst_72 = arith.constant 1.000000e+00 : f32
    %199 = vector.broadcast %cst_72 : f32 to vector<8x128xf32>
    %200 = arith.addf %199, %198 : vector<8x128xf32>
    %201 = arith.divf %199, %200 : vector<8x128xf32>
    %202 = vector.extract_strided_slice %190 {offsets = [0, 128], sizes = [8, 128], strides = [1, 1]} : vector<8x384xf32> to vector<8x128xf32>
    %203 = vector.extract_strided_slice %193 {offsets = [0, 128], sizes = [8, 128], strides = [1, 1]} : vector<8x384xf32> to vector<8x128xf32>
    %204 = arith.addf %202, %203 : vector<8x128xf32>
    %205 = arith.negf %204 : vector<8x128xf32>
    %206 = math.exp %205 : vector<8x128xf32>
    %cst_73 = arith.constant 1.000000e+00 : f32
    %207 = vector.broadcast %cst_73 : f32 to vector<8x128xf32>
    %208 = arith.addf %207, %206 : vector<8x128xf32>
    %209 = arith.divf %207, %208 : vector<8x128xf32>
    %210 = vector.extract_strided_slice %190 {offsets = [0, 256], sizes = [8, 128], strides = [1, 1]} : vector<8x384xf32> to vector<8x128xf32>
    %211 = vector.extract_strided_slice %193 {offsets = [0, 256], sizes = [8, 128], strides = [1, 1]} : vector<8x384xf32> to vector<8x128xf32>
    %c0_74 = arith.constant 0 : index
    %c0_75 = arith.constant 0 : index
    %212 = vector.load %arg13[%c0_74, %c0_75] : memref<1x128xf32, #tpu.memory_space<vmem>>, vector<1x128xf32>
    %213 = vector.broadcast %212 : vector<1x128xf32> to vector<8x128xf32>
    %214 = arith.addf %211, %213 : vector<8x128xf32>
    %215 = arith.mulf %201, %214 : vector<8x128xf32>
    %216 = arith.addf %210, %215 : vector<8x128xf32>
    %217 = math.tanh %216 : vector<8x128xf32>
    %cst_76 = arith.constant 1.000000e+00 : f32
    %218 = vector.broadcast %cst_76 : f32 to vector<8x128xf32>
    %219 = arith.subf %218, %209 : vector<8x128xf32>
    %220 = arith.mulf %219, %217 : vector<8x128xf32>
    %221 = arith.mulf %209, %9 : vector<8x128xf32>
    %222 = arith.addf %220, %221 : vector<8x128xf32>
    %c0_77 = arith.constant 0 : index
    %c0_78 = arith.constant 0 : index
    %223 = vector.load %arg18[%c0_77, %c0_78] : memref<64x128xf32, #tpu.memory_space<vmem>>, vector<8x128xf32>
    tpu.vector_store %arg18[%c0_77, %c0_78], %222 {strides = array<i32>} : memref<64x128xf32, #tpu.memory_space<vmem>>, vector<8x128xf32>,
    %c24 = arith.constant 24 : index
    %c0_79 = arith.constant 0 : index
    %224 = vector.load %arg17[%c24, %c0_79] : memref<64x384xf32, #tpu.memory_space<vmem>>, vector<8x384xf32>
    %225 = arith.truncf %146 : vector<8x128xf32> to vector<8x128xbf16>
    %c0_80 = arith.constant 0 : index
    %c0_81 = arith.constant 0 : index
    %226 = vector.load %arg3[%c0_80, %c0_81] : memref<128x384xbf16, #tpu.memory_space<vmem>>, vector<128x384xbf16>
    %cst_82 = arith.constant dense<0.000000e+00> : vector<8x384xf32>
    %227 = tpu.matmul %225, %226, %cst_82 {dimension_numbers = #tpu.dot_dimension_numbers<[1], [0], [0], [1], [0, 0, 1, 1], [], []>} : vector<8x128xbf16>, vector<128x384xbf16>, vector<8x384xf32> -> vector<8x384xf32>
    %228 = vector.extract_strided_slice %224 {offsets = [0, 0], sizes = [8, 128], strides = [1, 1]} : vector<8x384xf32> to vector<8x128xf32>
    %229 = vector.extract_strided_slice %227 {offsets = [0, 0], sizes = [8, 128], strides = [1, 1]} : vector<8x384xf32> to vector<8x128xf32>
    %230 = arith.addf %228, %229 : vector<8x128xf32>
    %231 = arith.negf %230 : vector<8x128xf32>
    %232 = math.exp %231 : vector<8x128xf32>
    %cst_83 = arith.constant 1.000000e+00 : f32
    %233 = vector.broadcast %cst_83 : f32 to vector<8x128xf32>
    %234 = arith.addf %233, %232 : vector<8x128xf32>
    %235 = arith.divf %233, %234 : vector<8x128xf32>
    %236 = vector.extract_strided_slice %224 {offsets = [0, 128], sizes = [8, 128], strides = [1, 1]} : vector<8x384xf32> to vector<8x128xf32>
    %237 = vector.extract_strided_slice %227 {offsets = [0, 128], sizes = [8, 128], strides = [1, 1]} : vector<8x384xf32> to vector<8x128xf32>
    %238 = arith.addf %236, %237 : vector<8x128xf32>
    %239 = arith.negf %238 : vector<8x128xf32>
    %240 = math.exp %239 : vector<8x128xf32>
    %cst_84 = arith.constant 1.000000e+00 : f32
    %241 = vector.broadcast %cst_84 : f32 to vector<8x128xf32>
    %242 = arith.addf %241, %240 : vector<8x128xf32>
    %243 = arith.divf %241, %242 : vector<8x128xf32>
    %244 = vector.extract_strided_slice %224 {offsets = [0, 256], sizes = [8, 128], strides = [1, 1]} : vector<8x384xf32> to vector<8x128xf32>
    %245 = vector.extract_strided_slice %227 {offsets = [0, 256], sizes = [8, 128], strides = [1, 1]} : vector<8x384xf32> to vector<8x128xf32>
    %c0_85 = arith.constant 0 : index
    %c0_86 = arith.constant 0 : index
    %246 = vector.load %arg5[%c0_85, %c0_86] : memref<1x128xf32, #tpu.memory_space<vmem>>, vector<1x128xf32>
    %247 = vector.broadcast %246 : vector<1x128xf32> to vector<8x128xf32>
    %248 = arith.addf %245, %247 : vector<8x128xf32>
    %249 = arith.mulf %235, %248 : vector<8x128xf32>
    %250 = arith.addf %244, %249 : vector<8x128xf32>
    %251 = math.tanh %250 : vector<8x128xf32>
    %cst_87 = arith.constant 1.000000e+00 : f32
    %252 = vector.broadcast %cst_87 : f32 to vector<8x128xf32>
    %253 = arith.subf %252, %243 : vector<8x128xf32>
    %254 = arith.mulf %253, %251 : vector<8x128xf32>
    %255 = arith.mulf %243, %146 : vector<8x128xf32>
    %256 = arith.addf %254, %255 : vector<8x128xf32>
    %257 = arith.truncf %146 : vector<8x128xf32> to vector<8x128xbf16>
    %c0_88 = arith.constant 0 : index
    %c0_89 = arith.constant 0 : index
    %258 = vector.load %arg6[%c0_88, %c0_89] : memref<128x384xbf16, #tpu.memory_space<vmem>>, vector<128x384xbf16>
    %cst_90 = arith.constant dense<0.000000e+00> : vector<8x384xf32>
    %259 = tpu.matmul %257, %258, %cst_90 {dimension_numbers = #tpu.dot_dimension_numbers<[1], [0], [0], [1], [0, 0, 1, 1], [], []>} : vector<8x128xbf16>, vector<128x384xbf16>, vector<8x384xf32> -> vector<8x384xf32>
    %c0_91 = arith.constant 0 : index
    %c0_92 = arith.constant 0 : index
    %260 = vector.load %arg8[%c0_91, %c0_92] : memref<1x384xf32, #tpu.memory_space<vmem>>, vector<1x384xf32>
    %261 = vector.broadcast %260 : vector<1x384xf32> to vector<8x384xf32>
    %262 = arith.addf %259, %261 : vector<8x384xf32>
    %263 = arith.truncf %184 : vector<8x128xf32> to vector<8x128xbf16>
    %c0_93 = arith.constant 0 : index
    %c0_94 = arith.constant 0 : index
    %264 = vector.load %arg7[%c0_93, %c0_94] : memref<128x384xbf16, #tpu.memory_space<vmem>>, vector<128x384xbf16>
    %cst_95 = arith.constant dense<0.000000e+00> : vector<8x384xf32>
    %265 = tpu.matmul %263, %264, %cst_95 {dimension_numbers = #tpu.dot_dimension_numbers<[1], [0], [0], [1], [0, 0, 1, 1], [], []>} : vector<8x128xbf16>, vector<128x384xbf16>, vector<8x384xf32> -> vector<8x384xf32>
    %266 = vector.extract_strided_slice %262 {offsets = [0, 0], sizes = [8, 128], strides = [1, 1]} : vector<8x384xf32> to vector<8x128xf32>
    %267 = vector.extract_strided_slice %265 {offsets = [0, 0], sizes = [8, 128], strides = [1, 1]} : vector<8x384xf32> to vector<8x128xf32>
    %268 = arith.addf %266, %267 : vector<8x128xf32>
    %269 = arith.negf %268 : vector<8x128xf32>
    %270 = math.exp %269 : vector<8x128xf32>
    %cst_96 = arith.constant 1.000000e+00 : f32
    %271 = vector.broadcast %cst_96 : f32 to vector<8x128xf32>
    %272 = arith.addf %271, %270 : vector<8x128xf32>
    %273 = arith.divf %271, %272 : vector<8x128xf32>
    %274 = vector.extract_strided_slice %262 {offsets = [0, 128], sizes = [8, 128], strides = [1, 1]} : vector<8x384xf32> to vector<8x128xf32>
    %275 = vector.extract_strided_slice %265 {offsets = [0, 128], sizes = [8, 128], strides = [1, 1]} : vector<8x384xf32> to vector<8x128xf32>
    %276 = arith.addf %274, %275 : vector<8x128xf32>
    %277 = arith.negf %276 : vector<8x128xf32>
    %278 = math.exp %277 : vector<8x128xf32>
    %cst_97 = arith.constant 1.000000e+00 : f32
    %279 = vector.broadcast %cst_97 : f32 to vector<8x128xf32>
    %280 = arith.addf %279, %278 : vector<8x128xf32>
    %281 = arith.divf %279, %280 : vector<8x128xf32>
    %282 = vector.extract_strided_slice %262 {offsets = [0, 256], sizes = [8, 128], strides = [1, 1]} : vector<8x384xf32> to vector<8x128xf32>
    %283 = vector.extract_strided_slice %265 {offsets = [0, 256], sizes = [8, 128], strides = [1, 1]} : vector<8x384xf32> to vector<8x128xf32>
    %c0_98 = arith.constant 0 : index
    %c0_99 = arith.constant 0 : index
    %284 = vector.load %arg9[%c0_98, %c0_99] : memref<1x128xf32, #tpu.memory_space<vmem>>, vector<1x128xf32>
    %285 = vector.broadcast %284 : vector<1x128xf32> to vector<8x128xf32>
    %286 = arith.addf %283, %285 : vector<8x128xf32>
    %287 = arith.mulf %273, %286 : vector<8x128xf32>
    %288 = arith.addf %282, %287 : vector<8x128xf32>
    %289 = math.tanh %288 : vector<8x128xf32>
    %cst_100 = arith.constant 1.000000e+00 : f32
    %290 = vector.broadcast %cst_100 : f32 to vector<8x128xf32>
    %291 = arith.subf %290, %281 : vector<8x128xf32>
    %292 = arith.mulf %291, %289 : vector<8x128xf32>
    %293 = arith.mulf %281, %184 : vector<8x128xf32>
    %294 = arith.addf %292, %293 : vector<8x128xf32>
    %295 = arith.truncf %184 : vector<8x128xf32> to vector<8x128xbf16>
    %c0_101 = arith.constant 0 : index
    %c0_102 = arith.constant 0 : index
    %296 = vector.load %arg10[%c0_101, %c0_102] : memref<128x384xbf16, #tpu.memory_space<vmem>>, vector<128x384xbf16>
    %cst_103 = arith.constant dense<0.000000e+00> : vector<8x384xf32>
    %297 = tpu.matmul %295, %296, %cst_103 {dimension_numbers = #tpu.dot_dimension_numbers<[1], [0], [0], [1], [0, 0, 1, 1], [], []>} : vector<8x128xbf16>, vector<128x384xbf16>, vector<8x384xf32> -> vector<8x384xf32>
    %c0_104 = arith.constant 0 : index
    %c0_105 = arith.constant 0 : index
    %298 = vector.load %arg12[%c0_104, %c0_105] : memref<1x384xf32, #tpu.memory_space<vmem>>, vector<1x384xf32>
    %299 = vector.broadcast %298 : vector<1x384xf32> to vector<8x384xf32>
    %300 = arith.addf %297, %299 : vector<8x384xf32>
    %301 = arith.truncf %222 : vector<8x128xf32> to vector<8x128xbf16>
    %c0_106 = arith.constant 0 : index
    %c0_107 = arith.constant 0 : index
    %302 = vector.load %arg11[%c0_106, %c0_107] : memref<128x384xbf16, #tpu.memory_space<vmem>>, vector<128x384xbf16>
    %cst_108 = arith.constant dense<0.000000e+00> : vector<8x384xf32>
    %303 = tpu.matmul %301, %302, %cst_108 {dimension_numbers = #tpu.dot_dimension_numbers<[1], [0], [0], [1], [0, 0, 1, 1], [], []>} : vector<8x128xbf16>, vector<128x384xbf16>, vector<8x384xf32> -> vector<8x384xf32>
    %304 = vector.extract_strided_slice %300 {offsets = [0, 0], sizes = [8, 128], strides = [1, 1]} : vector<8x384xf32> to vector<8x128xf32>
    %305 = vector.extract_strided_slice %303 {offsets = [0, 0], sizes = [8, 128], strides = [1, 1]} : vector<8x384xf32> to vector<8x128xf32>
    %306 = arith.addf %304, %305 : vector<8x128xf32>
    %307 = arith.negf %306 : vector<8x128xf32>
    %308 = math.exp %307 : vector<8x128xf32>
    %cst_109 = arith.constant 1.000000e+00 : f32
    %309 = vector.broadcast %cst_109 : f32 to vector<8x128xf32>
    %310 = arith.addf %309, %308 : vector<8x128xf32>
    %311 = arith.divf %309, %310 : vector<8x128xf32>
    %312 = vector.extract_strided_slice %300 {offsets = [0, 128], sizes = [8, 128], strides = [1, 1]} : vector<8x384xf32> to vector<8x128xf32>
    %313 = vector.extract_strided_slice %303 {offsets = [0, 128], sizes = [8, 128], strides = [1, 1]} : vector<8x384xf32> to vector<8x128xf32>
    %314 = arith.addf %312, %313 : vector<8x128xf32>
    %315 = arith.negf %314 : vector<8x128xf32>
    %316 = math.exp %315 : vector<8x128xf32>
    %cst_110 = arith.constant 1.000000e+00 : f32
    %317 = vector.broadcast %cst_110 : f32 to vector<8x128xf32>
    %318 = arith.addf %317, %316 : vector<8x128xf32>
    %319 = arith.divf %317, %318 : vector<8x128xf32>
    %320 = vector.extract_strided_slice %300 {offsets = [0, 256], sizes = [8, 128], strides = [1, 1]} : vector<8x384xf32> to vector<8x128xf32>
    %321 = vector.extract_strided_slice %303 {offsets = [0, 256], sizes = [8, 128], strides = [1, 1]} : vector<8x384xf32> to vector<8x128xf32>
    %c0_111 = arith.constant 0 : index
    %c0_112 = arith.constant 0 : index
    %322 = vector.load %arg13[%c0_111, %c0_112] : memref<1x128xf32, #tpu.memory_space<vmem>>, vector<1x128xf32>
    %323 = vector.broadcast %322 : vector<1x128xf32> to vector<8x128xf32>
    %324 = arith.addf %321, %323 : vector<8x128xf32>
    %325 = arith.mulf %311, %324 : vector<8x128xf32>
    %326 = arith.addf %320, %325 : vector<8x128xf32>
    %327 = math.tanh %326 : vector<8x128xf32>
    %cst_113 = arith.constant 1.000000e+00 : f32
    %328 = vector.broadcast %cst_113 : f32 to vector<8x128xf32>
    %329 = arith.subf %328, %319 : vector<8x128xf32>
    %330 = arith.mulf %329, %327 : vector<8x128xf32>
    %331 = arith.mulf %319, %222 : vector<8x128xf32>
    %332 = arith.addf %330, %331 : vector<8x128xf32>
    %c8_114 = arith.constant 8 : index
    %c0_115 = arith.constant 0 : index
    %333 = vector.load %arg18[%c8_114, %c0_115] : memref<64x128xf32, #tpu.memory_space<vmem>>, vector<8x128xf32>
    tpu.vector_store %arg18[%c8_114, %c0_115], %332 {strides = array<i32>} : memref<64x128xf32, #tpu.memory_space<vmem>>, vector<8x128xf32>,
    %c32 = arith.constant 32 : index
    %c0_116 = arith.constant 0 : index
    %334 = vector.load %arg17[%c32, %c0_116] : memref<64x384xf32, #tpu.memory_space<vmem>>, vector<8x384xf32>
    %335 = arith.truncf %256 : vector<8x128xf32> to vector<8x128xbf16>
    %c0_117 = arith.constant 0 : index
    %c0_118 = arith.constant 0 : index
    %336 = vector.load %arg3[%c0_117, %c0_118] : memref<128x384xbf16, #tpu.memory_space<vmem>>, vector<128x384xbf16>
    %cst_119 = arith.constant dense<0.000000e+00> : vector<8x384xf32>
    %337 = tpu.matmul %335, %336, %cst_119 {dimension_numbers = #tpu.dot_dimension_numbers<[1], [0], [0], [1], [0, 0, 1, 1], [], []>} : vector<8x128xbf16>, vector<128x384xbf16>, vector<8x384xf32> -> vector<8x384xf32>
    %338 = vector.extract_strided_slice %334 {offsets = [0, 0], sizes = [8, 128], strides = [1, 1]} : vector<8x384xf32> to vector<8x128xf32>
    %339 = vector.extract_strided_slice %337 {offsets = [0, 0], sizes = [8, 128], strides = [1, 1]} : vector<8x384xf32> to vector<8x128xf32>
    %340 = arith.addf %338, %339 : vector<8x128xf32>
    %341 = arith.negf %340 : vector<8x128xf32>
    %342 = math.exp %341 : vector<8x128xf32>
    %cst_120 = arith.constant 1.000000e+00 : f32
    %343 = vector.broadcast %cst_120 : f32 to vector<8x128xf32>
    %344 = arith.addf %343, %342 : vector<8x128xf32>
    %345 = arith.divf %343, %344 : vector<8x128xf32>
    %346 = vector.extract_strided_slice %334 {offsets = [0, 128], sizes = [8, 128], strides = [1, 1]} : vector<8x384xf32> to vector<8x128xf32>
    %347 = vector.extract_strided_slice %337 {offsets = [0, 128], sizes = [8, 128], strides = [1, 1]} : vector<8x384xf32> to vector<8x128xf32>
    %348 = arith.addf %346, %347 : vector<8x128xf32>
    %349 = arith.negf %348 : vector<8x128xf32>
    %350 = math.exp %349 : vector<8x128xf32>
    %cst_121 = arith.constant 1.000000e+00 : f32
    %351 = vector.broadcast %cst_121 : f32 to vector<8x128xf32>
    %352 = arith.addf %351, %350 : vector<8x128xf32>
    %353 = arith.divf %351, %352 : vector<8x128xf32>
    %354 = vector.extract_strided_slice %334 {offsets = [0, 256], sizes = [8, 128], strides = [1, 1]} : vector<8x384xf32> to vector<8x128xf32>
    %355 = vector.extract_strided_slice %337 {offsets = [0, 256], sizes = [8, 128], strides = [1, 1]} : vector<8x384xf32> to vector<8x128xf32>
    %c0_122 = arith.constant 0 : index
    %c0_123 = arith.constant 0 : index
    %356 = vector.load %arg5[%c0_122, %c0_123] : memref<1x128xf32, #tpu.memory_space<vmem>>, vector<1x128xf32>
    %357 = vector.broadcast %356 : vector<1x128xf32> to vector<8x128xf32>
    %358 = arith.addf %355, %357 : vector<8x128xf32>
    %359 = arith.mulf %345, %358 : vector<8x128xf32>
    %360 = arith.addf %354, %359 : vector<8x128xf32>
    %361 = math.tanh %360 : vector<8x128xf32>
    %cst_124 = arith.constant 1.000000e+00 : f32
    %362 = vector.broadcast %cst_124 : f32 to vector<8x128xf32>
    %363 = arith.subf %362, %353 : vector<8x128xf32>
    %364 = arith.mulf %363, %361 : vector<8x128xf32>
    %365 = arith.mulf %353, %256 : vector<8x128xf32>
    %366 = arith.addf %364, %365 : vector<8x128xf32>
    %367 = arith.truncf %256 : vector<8x128xf32> to vector<8x128xbf16>
    %c0_125 = arith.constant 0 : index
    %c0_126 = arith.constant 0 : index
    %368 = vector.load %arg6[%c0_125, %c0_126] : memref<128x384xbf16, #tpu.memory_space<vmem>>, vector<128x384xbf16>
    %cst_127 = arith.constant dense<0.000000e+00> : vector<8x384xf32>
    %369 = tpu.matmul %367, %368, %cst_127 {dimension_numbers = #tpu.dot_dimension_numbers<[1], [0], [0], [1], [0, 0, 1, 1], [], []>} : vector<8x128xbf16>, vector<128x384xbf16>, vector<8x384xf32> -> vector<8x384xf32>
    %c0_128 = arith.constant 0 : index
    %c0_129 = arith.constant 0 : index
    %370 = vector.load %arg8[%c0_128, %c0_129] : memref<1x384xf32, #tpu.memory_space<vmem>>, vector<1x384xf32>
    %371 = vector.broadcast %370 : vector<1x384xf32> to vector<8x384xf32>
    %372 = arith.addf %369, %371 : vector<8x384xf32>
    %373 = arith.truncf %294 : vector<8x128xf32> to vector<8x128xbf16>
    %c0_130 = arith.constant 0 : index
    %c0_131 = arith.constant 0 : index
    %374 = vector.load %arg7[%c0_130, %c0_131] : memref<128x384xbf16, #tpu.memory_space<vmem>>, vector<128x384xbf16>
    %cst_132 = arith.constant dense<0.000000e+00> : vector<8x384xf32>
    %375 = tpu.matmul %373, %374, %cst_132 {dimension_numbers = #tpu.dot_dimension_numbers<[1], [0], [0], [1], [0, 0, 1, 1], [], []>} : vector<8x128xbf16>, vector<128x384xbf16>, vector<8x384xf32> -> vector<8x384xf32>
    %376 = vector.extract_strided_slice %372 {offsets = [0, 0], sizes = [8, 128], strides = [1, 1]} : vector<8x384xf32> to vector<8x128xf32>
    %377 = vector.extract_strided_slice %375 {offsets = [0, 0], sizes = [8, 128], strides = [1, 1]} : vector<8x384xf32> to vector<8x128xf32>
    %378 = arith.addf %376, %377 : vector<8x128xf32>
    %379 = arith.negf %378 : vector<8x128xf32>
    %380 = math.exp %379 : vector<8x128xf32>
    %cst_133 = arith.constant 1.000000e+00 : f32
    %381 = vector.broadcast %cst_133 : f32 to vector<8x128xf32>
    %382 = arith.addf %381, %380 : vector<8x128xf32>
    %383 = arith.divf %381, %382 : vector<8x128xf32>
    %384 = vector.extract_strided_slice %372 {offsets = [0, 128], sizes = [8, 128], strides = [1, 1]} : vector<8x384xf32> to vector<8x128xf32>
    %385 = vector.extract_strided_slice %375 {offsets = [0, 128], sizes = [8, 128], strides = [1, 1]} : vector<8x384xf32> to vector<8x128xf32>
    %386 = arith.addf %384, %385 : vector<8x128xf32>
    %387 = arith.negf %386 : vector<8x128xf32>
    %388 = math.exp %387 : vector<8x128xf32>
    %cst_134 = arith.constant 1.000000e+00 : f32
    %389 = vector.broadcast %cst_134 : f32 to vector<8x128xf32>
    %390 = arith.addf %389, %388 : vector<8x128xf32>
    %391 = arith.divf %389, %390 : vector<8x128xf32>
    %392 = vector.extract_strided_slice %372 {offsets = [0, 256], sizes = [8, 128], strides = [1, 1]} : vector<8x384xf32> to vector<8x128xf32>
    %393 = vector.extract_strided_slice %375 {offsets = [0, 256], sizes = [8, 128], strides = [1, 1]} : vector<8x384xf32> to vector<8x128xf32>
    %c0_135 = arith.constant 0 : index
    %c0_136 = arith.constant 0 : index
    %394 = vector.load %arg9[%c0_135, %c0_136] : memref<1x128xf32, #tpu.memory_space<vmem>>, vector<1x128xf32>
    %395 = vector.broadcast %394 : vector<1x128xf32> to vector<8x128xf32>
    %396 = arith.addf %393, %395 : vector<8x128xf32>
    %397 = arith.mulf %383, %396 : vector<8x128xf32>
    %398 = arith.addf %392, %397 : vector<8x128xf32>
    %399 = math.tanh %398 : vector<8x128xf32>
    %cst_137 = arith.constant 1.000000e+00 : f32
    %400 = vector.broadcast %cst_137 : f32 to vector<8x128xf32>
    %401 = arith.subf %400, %391 : vector<8x128xf32>
    %402 = arith.mulf %401, %399 : vector<8x128xf32>
    %403 = arith.mulf %391, %294 : vector<8x128xf32>
    %404 = arith.addf %402, %403 : vector<8x128xf32>
    %405 = arith.truncf %294 : vector<8x128xf32> to vector<8x128xbf16>
    %c0_138 = arith.constant 0 : index
    %c0_139 = arith.constant 0 : index
    %406 = vector.load %arg10[%c0_138, %c0_139] : memref<128x384xbf16, #tpu.memory_space<vmem>>, vector<128x384xbf16>
    %cst_140 = arith.constant dense<0.000000e+00> : vector<8x384xf32>
    %407 = tpu.matmul %405, %406, %cst_140 {dimension_numbers = #tpu.dot_dimension_numbers<[1], [0], [0], [1], [0, 0, 1, 1], [], []>} : vector<8x128xbf16>, vector<128x384xbf16>, vector<8x384xf32> -> vector<8x384xf32>
    %c0_141 = arith.constant 0 : index
    %c0_142 = arith.constant 0 : index
    %408 = vector.load %arg12[%c0_141, %c0_142] : memref<1x384xf32, #tpu.memory_space<vmem>>, vector<1x384xf32>
    %409 = vector.broadcast %408 : vector<1x384xf32> to vector<8x384xf32>
    %410 = arith.addf %407, %409 : vector<8x384xf32>
    %411 = arith.truncf %332 : vector<8x128xf32> to vector<8x128xbf16>
    %c0_143 = arith.constant 0 : index
    %c0_144 = arith.constant 0 : index
    %412 = vector.load %arg11[%c0_143, %c0_144] : memref<128x384xbf16, #tpu.memory_space<vmem>>, vector<128x384xbf16>
    %cst_145 = arith.constant dense<0.000000e+00> : vector<8x384xf32>
    %413 = tpu.matmul %411, %412, %cst_145 {dimension_numbers = #tpu.dot_dimension_numbers<[1], [0], [0], [1], [0, 0, 1, 1], [], []>} : vector<8x128xbf16>, vector<128x384xbf16>, vector<8x384xf32> -> vector<8x384xf32>
    %414 = vector.extract_strided_slice %410 {offsets = [0, 0], sizes = [8, 128], strides = [1, 1]} : vector<8x384xf32> to vector<8x128xf32>
    %415 = vector.extract_strided_slice %413 {offsets = [0, 0], sizes = [8, 128], strides = [1, 1]} : vector<8x384xf32> to vector<8x128xf32>
    %416 = arith.addf %414, %415 : vector<8x128xf32>
    %417 = arith.negf %416 : vector<8x128xf32>
    %418 = math.exp %417 : vector<8x128xf32>
    %cst_146 = arith.constant 1.000000e+00 : f32
    %419 = vector.broadcast %cst_146 : f32 to vector<8x128xf32>
    %420 = arith.addf %419, %418 : vector<8x128xf32>
    %421 = arith.divf %419, %420 : vector<8x128xf32>
    %422 = vector.extract_strided_slice %410 {offsets = [0, 128], sizes = [8, 128], strides = [1, 1]} : vector<8x384xf32> to vector<8x128xf32>
    %423 = vector.extract_strided_slice %413 {offsets = [0, 128], sizes = [8, 128], strides = [1, 1]} : vector<8x384xf32> to vector<8x128xf32>
    %424 = arith.addf %422, %423 : vector<8x128xf32>
    %425 = arith.negf %424 : vector<8x128xf32>
    %426 = math.exp %425 : vector<8x128xf32>
    %cst_147 = arith.constant 1.000000e+00 : f32
    %427 = vector.broadcast %cst_147 : f32 to vector<8x128xf32>
    %428 = arith.addf %427, %426 : vector<8x128xf32>
    %429 = arith.divf %427, %428 : vector<8x128xf32>
    %430 = vector.extract_strided_slice %410 {offsets = [0, 256], sizes = [8, 128], strides = [1, 1]} : vector<8x384xf32> to vector<8x128xf32>
    %431 = vector.extract_strided_slice %413 {offsets = [0, 256], sizes = [8, 128], strides = [1, 1]} : vector<8x384xf32> to vector<8x128xf32>
    %c0_148 = arith.constant 0 : index
    %c0_149 = arith.constant 0 : index
    %432 = vector.load %arg13[%c0_148, %c0_149] : memref<1x128xf32, #tpu.memory_space<vmem>>, vector<1x128xf32>
    %433 = vector.broadcast %432 : vector<1x128xf32> to vector<8x128xf32>
    %434 = arith.addf %431, %433 : vector<8x128xf32>
    %435 = arith.mulf %421, %434 : vector<8x128xf32>
    %436 = arith.addf %430, %435 : vector<8x128xf32>
    %437 = math.tanh %436 : vector<8x128xf32>
    %cst_150 = arith.constant 1.000000e+00 : f32
    %438 = vector.broadcast %cst_150 : f32 to vector<8x128xf32>
    %439 = arith.subf %438, %429 : vector<8x128xf32>
    %440 = arith.mulf %439, %437 : vector<8x128xf32>
    %441 = arith.mulf %429, %332 : vector<8x128xf32>
    %442 = arith.addf %440, %441 : vector<8x128xf32>
    %c16_151 = arith.constant 16 : index
    %c0_152 = arith.constant 0 : index
    %443 = vector.load %arg18[%c16_151, %c0_152] : memref<64x128xf32, #tpu.memory_space<vmem>>, vector<8x128xf32>
    tpu.vector_store %arg18[%c16_151, %c0_152], %442 {strides = array<i32>} : memref<64x128xf32, #tpu.memory_space<vmem>>, vector<8x128xf32>,
    %c40 = arith.constant 40 : index
    %c0_153 = arith.constant 0 : index
    %444 = vector.load %arg17[%c40, %c0_153] : memref<64x384xf32, #tpu.memory_space<vmem>>, vector<8x384xf32>
    %445 = arith.truncf %366 : vector<8x128xf32> to vector<8x128xbf16>
    %c0_154 = arith.constant 0 : index
    %c0_155 = arith.constant 0 : index
    %446 = vector.load %arg3[%c0_154, %c0_155] : memref<128x384xbf16, #tpu.memory_space<vmem>>, vector<128x384xbf16>
    %cst_156 = arith.constant dense<0.000000e+00> : vector<8x384xf32>
    %447 = tpu.matmul %445, %446, %cst_156 {dimension_numbers = #tpu.dot_dimension_numbers<[1], [0], [0], [1], [0, 0, 1, 1], [], []>} : vector<8x128xbf16>, vector<128x384xbf16>, vector<8x384xf32> -> vector<8x384xf32>
    %448 = vector.extract_strided_slice %444 {offsets = [0, 0], sizes = [8, 128], strides = [1, 1]} : vector<8x384xf32> to vector<8x128xf32>
    %449 = vector.extract_strided_slice %447 {offsets = [0, 0], sizes = [8, 128], strides = [1, 1]} : vector<8x384xf32> to vector<8x128xf32>
    %450 = arith.addf %448, %449 : vector<8x128xf32>
    %451 = arith.negf %450 : vector<8x128xf32>
    %452 = math.exp %451 : vector<8x128xf32>
    %cst_157 = arith.constant 1.000000e+00 : f32
    %453 = vector.broadcast %cst_157 : f32 to vector<8x128xf32>
    %454 = arith.addf %453, %452 : vector<8x128xf32>
    %455 = arith.divf %453, %454 : vector<8x128xf32>
    %456 = vector.extract_strided_slice %444 {offsets = [0, 128], sizes = [8, 128], strides = [1, 1]} : vector<8x384xf32> to vector<8x128xf32>
    %457 = vector.extract_strided_slice %447 {offsets = [0, 128], sizes = [8, 128], strides = [1, 1]} : vector<8x384xf32> to vector<8x128xf32>
    %458 = arith.addf %456, %457 : vector<8x128xf32>
    %459 = arith.negf %458 : vector<8x128xf32>
    %460 = math.exp %459 : vector<8x128xf32>
    %cst_158 = arith.constant 1.000000e+00 : f32
    %461 = vector.broadcast %cst_158 : f32 to vector<8x128xf32>
    %462 = arith.addf %461, %460 : vector<8x128xf32>
    %463 = arith.divf %461, %462 : vector<8x128xf32>
    %464 = vector.extract_strided_slice %444 {offsets = [0, 256], sizes = [8, 128], strides = [1, 1]} : vector<8x384xf32> to vector<8x128xf32>
    %465 = vector.extract_strided_slice %447 {offsets = [0, 256], sizes = [8, 128], strides = [1, 1]} : vector<8x384xf32> to vector<8x128xf32>
    %c0_159 = arith.constant 0 : index
    %c0_160 = arith.constant 0 : index
    %466 = vector.load %arg5[%c0_159, %c0_160] : memref<1x128xf32, #tpu.memory_space<vmem>>, vector<1x128xf32>
    %467 = vector.broadcast %466 : vector<1x128xf32> to vector<8x128xf32>
    %468 = arith.addf %465, %467 : vector<8x128xf32>
    %469 = arith.mulf %455, %468 : vector<8x128xf32>
    %470 = arith.addf %464, %469 : vector<8x128xf32>
    %471 = math.tanh %470 : vector<8x128xf32>
    %cst_161 = arith.constant 1.000000e+00 : f32
    %472 = vector.broadcast %cst_161 : f32 to vector<8x128xf32>
    %473 = arith.subf %472, %463 : vector<8x128xf32>
    %474 = arith.mulf %473, %471 : vector<8x128xf32>
    %475 = arith.mulf %463, %366 : vector<8x128xf32>
    %476 = arith.addf %474, %475 : vector<8x128xf32>
    %477 = arith.truncf %366 : vector<8x128xf32> to vector<8x128xbf16>
    %c0_162 = arith.constant 0 : index
    %c0_163 = arith.constant 0 : index
    %478 = vector.load %arg6[%c0_162, %c0_163] : memref<128x384xbf16, #tpu.memory_space<vmem>>, vector<128x384xbf16>
    %cst_164 = arith.constant dense<0.000000e+00> : vector<8x384xf32>
    %479 = tpu.matmul %477, %478, %cst_164 {dimension_numbers = #tpu.dot_dimension_numbers<[1], [0], [0], [1], [0, 0, 1, 1], [], []>} : vector<8x128xbf16>, vector<128x384xbf16>, vector<8x384xf32> -> vector<8x384xf32>
    %c0_165 = arith.constant 0 : index
    %c0_166 = arith.constant 0 : index
    %480 = vector.load %arg8[%c0_165, %c0_166] : memref<1x384xf32, #tpu.memory_space<vmem>>, vector<1x384xf32>
    %481 = vector.broadcast %480 : vector<1x384xf32> to vector<8x384xf32>
    %482 = arith.addf %479, %481 : vector<8x384xf32>
    %483 = arith.truncf %404 : vector<8x128xf32> to vector<8x128xbf16>
    %c0_167 = arith.constant 0 : index
    %c0_168 = arith.constant 0 : index
    %484 = vector.load %arg7[%c0_167, %c0_168] : memref<128x384xbf16, #tpu.memory_space<vmem>>, vector<128x384xbf16>
    %cst_169 = arith.constant dense<0.000000e+00> : vector<8x384xf32>
    %485 = tpu.matmul %483, %484, %cst_169 {dimension_numbers = #tpu.dot_dimension_numbers<[1], [0], [0], [1], [0, 0, 1, 1], [], []>} : vector<8x128xbf16>, vector<128x384xbf16>, vector<8x384xf32> -> vector<8x384xf32>
    %486 = vector.extract_strided_slice %482 {offsets = [0, 0], sizes = [8, 128], strides = [1, 1]} : vector<8x384xf32> to vector<8x128xf32>
    %487 = vector.extract_strided_slice %485 {offsets = [0, 0], sizes = [8, 128], strides = [1, 1]} : vector<8x384xf32> to vector<8x128xf32>
    %488 = arith.addf %486, %487 : vector<8x128xf32>
    %489 = arith.negf %488 : vector<8x128xf32>
    %490 = math.exp %489 : vector<8x128xf32>
    %cst_170 = arith.constant 1.000000e+00 : f32
    %491 = vector.broadcast %cst_170 : f32 to vector<8x128xf32>
    %492 = arith.addf %491, %490 : vector<8x128xf32>
    %493 = arith.divf %491, %492 : vector<8x128xf32>
    %494 = vector.extract_strided_slice %482 {offsets = [0, 128], sizes = [8, 128], strides = [1, 1]} : vector<8x384xf32> to vector<8x128xf32>
    %495 = vector.extract_strided_slice %485 {offsets = [0, 128], sizes = [8, 128], strides = [1, 1]} : vector<8x384xf32> to vector<8x128xf32>
    %496 = arith.addf %494, %495 : vector<8x128xf32>
    %497 = arith.negf %496 : vector<8x128xf32>
    %498 = math.exp %497 : vector<8x128xf32>
    %cst_171 = arith.constant 1.000000e+00 : f32
    %499 = vector.broadcast %cst_171 : f32 to vector<8x128xf32>
    %500 = arith.addf %499, %498 : vector<8x128xf32>
    %501 = arith.divf %499, %500 : vector<8x128xf32>
    %502 = vector.extract_strided_slice %482 {offsets = [0, 256], sizes = [8, 128], strides = [1, 1]} : vector<8x384xf32> to vector<8x128xf32>
    %503 = vector.extract_strided_slice %485 {offsets = [0, 256], sizes = [8, 128], strides = [1, 1]} : vector<8x384xf32> to vector<8x128xf32>
    %c0_172 = arith.constant 0 : index
    %c0_173 = arith.constant 0 : index
    %504 = vector.load %arg9[%c0_172, %c0_173] : memref<1x128xf32, #tpu.memory_space<vmem>>, vector<1x128xf32>
    %505 = vector.broadcast %504 : vector<1x128xf32> to vector<8x128xf32>
    %506 = arith.addf %503, %505 : vector<8x128xf32>
    %507 = arith.mulf %493, %506 : vector<8x128xf32>
    %508 = arith.addf %502, %507 : vector<8x128xf32>
    %509 = math.tanh %508 : vector<8x128xf32>
    %cst_174 = arith.constant 1.000000e+00 : f32
    %510 = vector.broadcast %cst_174 : f32 to vector<8x128xf32>
    %511 = arith.subf %510, %501 : vector<8x128xf32>
    %512 = arith.mulf %511, %509 : vector<8x128xf32>
    %513 = arith.mulf %501, %404 : vector<8x128xf32>
    %514 = arith.addf %512, %513 : vector<8x128xf32>
    %515 = arith.truncf %404 : vector<8x128xf32> to vector<8x128xbf16>
    %c0_175 = arith.constant 0 : index
    %c0_176 = arith.constant 0 : index
    %516 = vector.load %arg10[%c0_175, %c0_176] : memref<128x384xbf16, #tpu.memory_space<vmem>>, vector<128x384xbf16>
    %cst_177 = arith.constant dense<0.000000e+00> : vector<8x384xf32>
    %517 = tpu.matmul %515, %516, %cst_177 {dimension_numbers = #tpu.dot_dimension_numbers<[1], [0], [0], [1], [0, 0, 1, 1], [], []>} : vector<8x128xbf16>, vector<128x384xbf16>, vector<8x384xf32> -> vector<8x384xf32>
    %c0_178 = arith.constant 0 : index
    %c0_179 = arith.constant 0 : index
    %518 = vector.load %arg12[%c0_178, %c0_179] : memref<1x384xf32, #tpu.memory_space<vmem>>, vector<1x384xf32>
    %519 = vector.broadcast %518 : vector<1x384xf32> to vector<8x384xf32>
    %520 = arith.addf %517, %519 : vector<8x384xf32>
    %521 = arith.truncf %442 : vector<8x128xf32> to vector<8x128xbf16>
    %c0_180 = arith.constant 0 : index
    %c0_181 = arith.constant 0 : index
    %522 = vector.load %arg11[%c0_180, %c0_181] : memref<128x384xbf16, #tpu.memory_space<vmem>>, vector<128x384xbf16>
    %cst_182 = arith.constant dense<0.000000e+00> : vector<8x384xf32>
    %523 = tpu.matmul %521, %522, %cst_182 {dimension_numbers = #tpu.dot_dimension_numbers<[1], [0], [0], [1], [0, 0, 1, 1], [], []>} : vector<8x128xbf16>, vector<128x384xbf16>, vector<8x384xf32> -> vector<8x384xf32>
    %524 = vector.extract_strided_slice %520 {offsets = [0, 0], sizes = [8, 128], strides = [1, 1]} : vector<8x384xf32> to vector<8x128xf32>
    %525 = vector.extract_strided_slice %523 {offsets = [0, 0], sizes = [8, 128], strides = [1, 1]} : vector<8x384xf32> to vector<8x128xf32>
    %526 = arith.addf %524, %525 : vector<8x128xf32>
    %527 = arith.negf %526 : vector<8x128xf32>
    %528 = math.exp %527 : vector<8x128xf32>
    %cst_183 = arith.constant 1.000000e+00 : f32
    %529 = vector.broadcast %cst_183 : f32 to vector<8x128xf32>
    %530 = arith.addf %529, %528 : vector<8x128xf32>
    %531 = arith.divf %529, %530 : vector<8x128xf32>
    %532 = vector.extract_strided_slice %520 {offsets = [0, 128], sizes = [8, 128], strides = [1, 1]} : vector<8x384xf32> to vector<8x128xf32>
    %533 = vector.extract_strided_slice %523 {offsets = [0, 128], sizes = [8, 128], strides = [1, 1]} : vector<8x384xf32> to vector<8x128xf32>
    %534 = arith.addf %532, %533 : vector<8x128xf32>
    %535 = arith.negf %534 : vector<8x128xf32>
    %536 = math.exp %535 : vector<8x128xf32>
    %cst_184 = arith.constant 1.000000e+00 : f32
    %537 = vector.broadcast %cst_184 : f32 to vector<8x128xf32>
    %538 = arith.addf %537, %536 : vector<8x128xf32>
    %539 = arith.divf %537, %538 : vector<8x128xf32>
    %540 = vector.extract_strided_slice %520 {offsets = [0, 256], sizes = [8, 128], strides = [1, 1]} : vector<8x384xf32> to vector<8x128xf32>
    %541 = vector.extract_strided_slice %523 {offsets = [0, 256], sizes = [8, 128], strides = [1, 1]} : vector<8x384xf32> to vector<8x128xf32>
    %c0_185 = arith.constant 0 : index
    %c0_186 = arith.constant 0 : index
    %542 = vector.load %arg13[%c0_185, %c0_186] : memref<1x128xf32, #tpu.memory_space<vmem>>, vector<1x128xf32>
    %543 = vector.broadcast %542 : vector<1x128xf32> to vector<8x128xf32>
    %544 = arith.addf %541, %543 : vector<8x128xf32>
    %545 = arith.mulf %531, %544 : vector<8x128xf32>
    %546 = arith.addf %540, %545 : vector<8x128xf32>
    %547 = math.tanh %546 : vector<8x128xf32>
    %cst_187 = arith.constant 1.000000e+00 : f32
    %548 = vector.broadcast %cst_187 : f32 to vector<8x128xf32>
    %549 = arith.subf %548, %539 : vector<8x128xf32>
    %550 = arith.mulf %549, %547 : vector<8x128xf32>
    %551 = arith.mulf %539, %442 : vector<8x128xf32>
    %552 = arith.addf %550, %551 : vector<8x128xf32>
    %c24_188 = arith.constant 24 : index
    %c0_189 = arith.constant 0 : index
    %553 = vector.load %arg18[%c24_188, %c0_189] : memref<64x128xf32, #tpu.memory_space<vmem>>, vector<8x128xf32>
    tpu.vector_store %arg18[%c24_188, %c0_189], %552 {strides = array<i32>} : memref<64x128xf32, #tpu.memory_space<vmem>>, vector<8x128xf32>,
    %c48 = arith.constant 48 : index
    %c0_190 = arith.constant 0 : index
    %554 = vector.load %arg17[%c48, %c0_190] : memref<64x384xf32, #tpu.memory_space<vmem>>, vector<8x384xf32>
    %555 = arith.truncf %476 : vector<8x128xf32> to vector<8x128xbf16>
    %c0_191 = arith.constant 0 : index
    %c0_192 = arith.constant 0 : index
    %556 = vector.load %arg3[%c0_191, %c0_192] : memref<128x384xbf16, #tpu.memory_space<vmem>>, vector<128x384xbf16>
    %cst_193 = arith.constant dense<0.000000e+00> : vector<8x384xf32>
    %557 = tpu.matmul %555, %556, %cst_193 {dimension_numbers = #tpu.dot_dimension_numbers<[1], [0], [0], [1], [0, 0, 1, 1], [], []>} : vector<8x128xbf16>, vector<128x384xbf16>, vector<8x384xf32> -> vector<8x384xf32>
    %558 = vector.extract_strided_slice %554 {offsets = [0, 0], sizes = [8, 128], strides = [1, 1]} : vector<8x384xf32> to vector<8x128xf32>
    %559 = vector.extract_strided_slice %557 {offsets = [0, 0], sizes = [8, 128], strides = [1, 1]} : vector<8x384xf32> to vector<8x128xf32>
    %560 = arith.addf %558, %559 : vector<8x128xf32>
    %561 = arith.negf %560 : vector<8x128xf32>
    %562 = math.exp %561 : vector<8x128xf32>
    %cst_194 = arith.constant 1.000000e+00 : f32
    %563 = vector.broadcast %cst_194 : f32 to vector<8x128xf32>
    %564 = arith.addf %563, %562 : vector<8x128xf32>
    %565 = arith.divf %563, %564 : vector<8x128xf32>
    %566 = vector.extract_strided_slice %554 {offsets = [0, 128], sizes = [8, 128], strides = [1, 1]} : vector<8x384xf32> to vector<8x128xf32>
    %567 = vector.extract_strided_slice %557 {offsets = [0, 128], sizes = [8, 128], strides = [1, 1]} : vector<8x384xf32> to vector<8x128xf32>
    %568 = arith.addf %566, %567 : vector<8x128xf32>
    %569 = arith.negf %568 : vector<8x128xf32>
    %570 = math.exp %569 : vector<8x128xf32>
    %cst_195 = arith.constant 1.000000e+00 : f32
    %571 = vector.broadcast %cst_195 : f32 to vector<8x128xf32>
    %572 = arith.addf %571, %570 : vector<8x128xf32>
    %573 = arith.divf %571, %572 : vector<8x128xf32>
    %574 = vector.extract_strided_slice %554 {offsets = [0, 256], sizes = [8, 128], strides = [1, 1]} : vector<8x384xf32> to vector<8x128xf32>
    %575 = vector.extract_strided_slice %557 {offsets = [0, 256], sizes = [8, 128], strides = [1, 1]} : vector<8x384xf32> to vector<8x128xf32>
    %c0_196 = arith.constant 0 : index
    %c0_197 = arith.constant 0 : index
    %576 = vector.load %arg5[%c0_196, %c0_197] : memref<1x128xf32, #tpu.memory_space<vmem>>, vector<1x128xf32>
    %577 = vector.broadcast %576 : vector<1x128xf32> to vector<8x128xf32>
    %578 = arith.addf %575, %577 : vector<8x128xf32>
    %579 = arith.mulf %565, %578 : vector<8x128xf32>
    %580 = arith.addf %574, %579 : vector<8x128xf32>
    %581 = math.tanh %580 : vector<8x128xf32>
    %cst_198 = arith.constant 1.000000e+00 : f32
    %582 = vector.broadcast %cst_198 : f32 to vector<8x128xf32>
    %583 = arith.subf %582, %573 : vector<8x128xf32>
    %584 = arith.mulf %583, %581 : vector<8x128xf32>
    %585 = arith.mulf %573, %476 : vector<8x128xf32>
    %586 = arith.addf %584, %585 : vector<8x128xf32>
    %587 = arith.truncf %476 : vector<8x128xf32> to vector<8x128xbf16>
    %c0_199 = arith.constant 0 : index
    %c0_200 = arith.constant 0 : index
    %588 = vector.load %arg6[%c0_199, %c0_200] : memref<128x384xbf16, #tpu.memory_space<vmem>>, vector<128x384xbf16>
    %cst_201 = arith.constant dense<0.000000e+00> : vector<8x384xf32>
    %589 = tpu.matmul %587, %588, %cst_201 {dimension_numbers = #tpu.dot_dimension_numbers<[1], [0], [0], [1], [0, 0, 1, 1], [], []>} : vector<8x128xbf16>, vector<128x384xbf16>, vector<8x384xf32> -> vector<8x384xf32>
    %c0_202 = arith.constant 0 : index
    %c0_203 = arith.constant 0 : index
    %590 = vector.load %arg8[%c0_202, %c0_203] : memref<1x384xf32, #tpu.memory_space<vmem>>, vector<1x384xf32>
    %591 = vector.broadcast %590 : vector<1x384xf32> to vector<8x384xf32>
    %592 = arith.addf %589, %591 : vector<8x384xf32>
    %593 = arith.truncf %514 : vector<8x128xf32> to vector<8x128xbf16>
    %c0_204 = arith.constant 0 : index
    %c0_205 = arith.constant 0 : index
    %594 = vector.load %arg7[%c0_204, %c0_205] : memref<128x384xbf16, #tpu.memory_space<vmem>>, vector<128x384xbf16>
    %cst_206 = arith.constant dense<0.000000e+00> : vector<8x384xf32>
    %595 = tpu.matmul %593, %594, %cst_206 {dimension_numbers = #tpu.dot_dimension_numbers<[1], [0], [0], [1], [0, 0, 1, 1], [], []>} : vector<8x128xbf16>, vector<128x384xbf16>, vector<8x384xf32> -> vector<8x384xf32>
    %596 = vector.extract_strided_slice %592 {offsets = [0, 0], sizes = [8, 128], strides = [1, 1]} : vector<8x384xf32> to vector<8x128xf32>
    %597 = vector.extract_strided_slice %595 {offsets = [0, 0], sizes = [8, 128], strides = [1, 1]} : vector<8x384xf32> to vector<8x128xf32>
    %598 = arith.addf %596, %597 : vector<8x128xf32>
    %599 = arith.negf %598 : vector<8x128xf32>
    %600 = math.exp %599 : vector<8x128xf32>
    %cst_207 = arith.constant 1.000000e+00 : f32
    %601 = vector.broadcast %cst_207 : f32 to vector<8x128xf32>
    %602 = arith.addf %601, %600 : vector<8x128xf32>
    %603 = arith.divf %601, %602 : vector<8x128xf32>
    %604 = vector.extract_strided_slice %592 {offsets = [0, 128], sizes = [8, 128], strides = [1, 1]} : vector<8x384xf32> to vector<8x128xf32>
    %605 = vector.extract_strided_slice %595 {offsets = [0, 128], sizes = [8, 128], strides = [1, 1]} : vector<8x384xf32> to vector<8x128xf32>
    %606 = arith.addf %604, %605 : vector<8x128xf32>
    %607 = arith.negf %606 : vector<8x128xf32>
    %608 = math.exp %607 : vector<8x128xf32>
    %cst_208 = arith.constant 1.000000e+00 : f32
    %609 = vector.broadcast %cst_208 : f32 to vector<8x128xf32>
    %610 = arith.addf %609, %608 : vector<8x128xf32>
    %611 = arith.divf %609, %610 : vector<8x128xf32>
    %612 = vector.extract_strided_slice %592 {offsets = [0, 256], sizes = [8, 128], strides = [1, 1]} : vector<8x384xf32> to vector<8x128xf32>
    %613 = vector.extract_strided_slice %595 {offsets = [0, 256], sizes = [8, 128], strides = [1, 1]} : vector<8x384xf32> to vector<8x128xf32>
    %c0_209 = arith.constant 0 : index
    %c0_210 = arith.constant 0 : index
    %614 = vector.load %arg9[%c0_209, %c0_210] : memref<1x128xf32, #tpu.memory_space<vmem>>, vector<1x128xf32>
    %615 = vector.broadcast %614 : vector<1x128xf32> to vector<8x128xf32>
    %616 = arith.addf %613, %615 : vector<8x128xf32>
    %617 = arith.mulf %603, %616 : vector<8x128xf32>
    %618 = arith.addf %612, %617 : vector<8x128xf32>
    %619 = math.tanh %618 : vector<8x128xf32>
    %cst_211 = arith.constant 1.000000e+00 : f32
    %620 = vector.broadcast %cst_211 : f32 to vector<8x128xf32>
    %621 = arith.subf %620, %611 : vector<8x128xf32>
    %622 = arith.mulf %621, %619 : vector<8x128xf32>
    %623 = arith.mulf %611, %514 : vector<8x128xf32>
    %624 = arith.addf %622, %623 : vector<8x128xf32>
    %625 = arith.truncf %514 : vector<8x128xf32> to vector<8x128xbf16>
    %c0_212 = arith.constant 0 : index
    %c0_213 = arith.constant 0 : index
    %626 = vector.load %arg10[%c0_212, %c0_213] : memref<128x384xbf16, #tpu.memory_space<vmem>>, vector<128x384xbf16>
    %cst_214 = arith.constant dense<0.000000e+00> : vector<8x384xf32>
    %627 = tpu.matmul %625, %626, %cst_214 {dimension_numbers = #tpu.dot_dimension_numbers<[1], [0], [0], [1], [0, 0, 1, 1], [], []>} : vector<8x128xbf16>, vector<128x384xbf16>, vector<8x384xf32> -> vector<8x384xf32>
    %c0_215 = arith.constant 0 : index
    %c0_216 = arith.constant 0 : index
    %628 = vector.load %arg12[%c0_215, %c0_216] : memref<1x384xf32, #tpu.memory_space<vmem>>, vector<1x384xf32>
    %629 = vector.broadcast %628 : vector<1x384xf32> to vector<8x384xf32>
    %630 = arith.addf %627, %629 : vector<8x384xf32>
    %631 = arith.truncf %552 : vector<8x128xf32> to vector<8x128xbf16>
    %c0_217 = arith.constant 0 : index
    %c0_218 = arith.constant 0 : index
    %632 = vector.load %arg11[%c0_217, %c0_218] : memref<128x384xbf16, #tpu.memory_space<vmem>>, vector<128x384xbf16>
    %cst_219 = arith.constant dense<0.000000e+00> : vector<8x384xf32>
    %633 = tpu.matmul %631, %632, %cst_219 {dimension_numbers = #tpu.dot_dimension_numbers<[1], [0], [0], [1], [0, 0, 1, 1], [], []>} : vector<8x128xbf16>, vector<128x384xbf16>, vector<8x384xf32> -> vector<8x384xf32>
    %634 = vector.extract_strided_slice %630 {offsets = [0, 0], sizes = [8, 128], strides = [1, 1]} : vector<8x384xf32> to vector<8x128xf32>
    %635 = vector.extract_strided_slice %633 {offsets = [0, 0], sizes = [8, 128], strides = [1, 1]} : vector<8x384xf32> to vector<8x128xf32>
    %636 = arith.addf %634, %635 : vector<8x128xf32>
    %637 = arith.negf %636 : vector<8x128xf32>
    %638 = math.exp %637 : vector<8x128xf32>
    %cst_220 = arith.constant 1.000000e+00 : f32
    %639 = vector.broadcast %cst_220 : f32 to vector<8x128xf32>
    %640 = arith.addf %639, %638 : vector<8x128xf32>
    %641 = arith.divf %639, %640 : vector<8x128xf32>
    %642 = vector.extract_strided_slice %630 {offsets = [0, 128], sizes = [8, 128], strides = [1, 1]} : vector<8x384xf32> to vector<8x128xf32>
    %643 = vector.extract_strided_slice %633 {offsets = [0, 128], sizes = [8, 128], strides = [1, 1]} : vector<8x384xf32> to vector<8x128xf32>
    %644 = arith.addf %642, %643 : vector<8x128xf32>
    %645 = arith.negf %644 : vector<8x128xf32>
    %646 = math.exp %645 : vector<8x128xf32>
    %cst_221 = arith.constant 1.000000e+00 : f32
    %647 = vector.broadcast %cst_221 : f32 to vector<8x128xf32>
    %648 = arith.addf %647, %646 : vector<8x128xf32>
    %649 = arith.divf %647, %648 : vector<8x128xf32>
    %650 = vector.extract_strided_slice %630 {offsets = [0, 256], sizes = [8, 128], strides = [1, 1]} : vector<8x384xf32> to vector<8x128xf32>
    %651 = vector.extract_strided_slice %633 {offsets = [0, 256], sizes = [8, 128], strides = [1, 1]} : vector<8x384xf32> to vector<8x128xf32>
    %c0_222 = arith.constant 0 : index
    %c0_223 = arith.constant 0 : index
    %652 = vector.load %arg13[%c0_222, %c0_223] : memref<1x128xf32, #tpu.memory_space<vmem>>, vector<1x128xf32>
    %653 = vector.broadcast %652 : vector<1x128xf32> to vector<8x128xf32>
    %654 = arith.addf %651, %653 : vector<8x128xf32>
    %655 = arith.mulf %641, %654 : vector<8x128xf32>
    %656 = arith.addf %650, %655 : vector<8x128xf32>
    %657 = math.tanh %656 : vector<8x128xf32>
    %cst_224 = arith.constant 1.000000e+00 : f32
    %658 = vector.broadcast %cst_224 : f32 to vector<8x128xf32>
    %659 = arith.subf %658, %649 : vector<8x128xf32>
    %660 = arith.mulf %659, %657 : vector<8x128xf32>
    %661 = arith.mulf %649, %552 : vector<8x128xf32>
    %662 = arith.addf %660, %661 : vector<8x128xf32>
    %c32_225 = arith.constant 32 : index
    %c0_226 = arith.constant 0 : index
    %663 = vector.load %arg18[%c32_225, %c0_226] : memref<64x128xf32, #tpu.memory_space<vmem>>, vector<8x128xf32>
    tpu.vector_store %arg18[%c32_225, %c0_226], %662 {strides = array<i32>} : memref<64x128xf32, #tpu.memory_space<vmem>>, vector<8x128xf32>,
    %c56 = arith.constant 56 : index
    %c0_227 = arith.constant 0 : index
    %664 = vector.load %arg17[%c56, %c0_227] : memref<64x384xf32, #tpu.memory_space<vmem>>, vector<8x384xf32>
    %665 = arith.truncf %586 : vector<8x128xf32> to vector<8x128xbf16>
    %c0_228 = arith.constant 0 : index
    %c0_229 = arith.constant 0 : index
    %666 = vector.load %arg3[%c0_228, %c0_229] : memref<128x384xbf16, #tpu.memory_space<vmem>>, vector<128x384xbf16>
    %cst_230 = arith.constant dense<0.000000e+00> : vector<8x384xf32>
    %667 = tpu.matmul %665, %666, %cst_230 {dimension_numbers = #tpu.dot_dimension_numbers<[1], [0], [0], [1], [0, 0, 1, 1], [], []>} : vector<8x128xbf16>, vector<128x384xbf16>, vector<8x384xf32> -> vector<8x384xf32>
    %668 = vector.extract_strided_slice %664 {offsets = [0, 0], sizes = [8, 128], strides = [1, 1]} : vector<8x384xf32> to vector<8x128xf32>
    %669 = vector.extract_strided_slice %667 {offsets = [0, 0], sizes = [8, 128], strides = [1, 1]} : vector<8x384xf32> to vector<8x128xf32>
    %670 = arith.addf %668, %669 : vector<8x128xf32>
    %671 = arith.negf %670 : vector<8x128xf32>
    %672 = math.exp %671 : vector<8x128xf32>
    %cst_231 = arith.constant 1.000000e+00 : f32
    %673 = vector.broadcast %cst_231 : f32 to vector<8x128xf32>
    %674 = arith.addf %673, %672 : vector<8x128xf32>
    %675 = arith.divf %673, %674 : vector<8x128xf32>
    %676 = vector.extract_strided_slice %664 {offsets = [0, 128], sizes = [8, 128], strides = [1, 1]} : vector<8x384xf32> to vector<8x128xf32>
    %677 = vector.extract_strided_slice %667 {offsets = [0, 128], sizes = [8, 128], strides = [1, 1]} : vector<8x384xf32> to vector<8x128xf32>
    %678 = arith.addf %676, %677 : vector<8x128xf32>
    %679 = arith.negf %678 : vector<8x128xf32>
    %680 = math.exp %679 : vector<8x128xf32>
    %cst_232 = arith.constant 1.000000e+00 : f32
    %681 = vector.broadcast %cst_232 : f32 to vector<8x128xf32>
    %682 = arith.addf %681, %680 : vector<8x128xf32>
    %683 = arith.divf %681, %682 : vector<8x128xf32>
    %684 = vector.extract_strided_slice %664 {offsets = [0, 256], sizes = [8, 128], strides = [1, 1]} : vector<8x384xf32> to vector<8x128xf32>
    %685 = vector.extract_strided_slice %667 {offsets = [0, 256], sizes = [8, 128], strides = [1, 1]} : vector<8x384xf32> to vector<8x128xf32>
    %c0_233 = arith.constant 0 : index
    %c0_234 = arith.constant 0 : index
    %686 = vector.load %arg5[%c0_233, %c0_234] : memref<1x128xf32, #tpu.memory_space<vmem>>, vector<1x128xf32>
    %687 = vector.broadcast %686 : vector<1x128xf32> to vector<8x128xf32>
    %688 = arith.addf %685, %687 : vector<8x128xf32>
    %689 = arith.mulf %675, %688 : vector<8x128xf32>
    %690 = arith.addf %684, %689 : vector<8x128xf32>
    %691 = math.tanh %690 : vector<8x128xf32>
    %cst_235 = arith.constant 1.000000e+00 : f32
    %692 = vector.broadcast %cst_235 : f32 to vector<8x128xf32>
    %693 = arith.subf %692, %683 : vector<8x128xf32>
    %694 = arith.mulf %693, %691 : vector<8x128xf32>
    %695 = arith.mulf %683, %586 : vector<8x128xf32>
    %696 = arith.addf %694, %695 : vector<8x128xf32>
    %697 = arith.truncf %586 : vector<8x128xf32> to vector<8x128xbf16>
    %c0_236 = arith.constant 0 : index
    %c0_237 = arith.constant 0 : index
    %698 = vector.load %arg6[%c0_236, %c0_237] : memref<128x384xbf16, #tpu.memory_space<vmem>>, vector<128x384xbf16>
    %cst_238 = arith.constant dense<0.000000e+00> : vector<8x384xf32>
    %699 = tpu.matmul %697, %698, %cst_238 {dimension_numbers = #tpu.dot_dimension_numbers<[1], [0], [0], [1], [0, 0, 1, 1], [], []>} : vector<8x128xbf16>, vector<128x384xbf16>, vector<8x384xf32> -> vector<8x384xf32>
    %c0_239 = arith.constant 0 : index
    %c0_240 = arith.constant 0 : index
    %700 = vector.load %arg8[%c0_239, %c0_240] : memref<1x384xf32, #tpu.memory_space<vmem>>, vector<1x384xf32>
    %701 = vector.broadcast %700 : vector<1x384xf32> to vector<8x384xf32>
    %702 = arith.addf %699, %701 : vector<8x384xf32>
    %703 = arith.truncf %624 : vector<8x128xf32> to vector<8x128xbf16>
    %c0_241 = arith.constant 0 : index
    %c0_242 = arith.constant 0 : index
    %704 = vector.load %arg7[%c0_241, %c0_242] : memref<128x384xbf16, #tpu.memory_space<vmem>>, vector<128x384xbf16>
    %cst_243 = arith.constant dense<0.000000e+00> : vector<8x384xf32>
    %705 = tpu.matmul %703, %704, %cst_243 {dimension_numbers = #tpu.dot_dimension_numbers<[1], [0], [0], [1], [0, 0, 1, 1], [], []>} : vector<8x128xbf16>, vector<128x384xbf16>, vector<8x384xf32> -> vector<8x384xf32>
    %706 = vector.extract_strided_slice %702 {offsets = [0, 0], sizes = [8, 128], strides = [1, 1]} : vector<8x384xf32> to vector<8x128xf32>
    %707 = vector.extract_strided_slice %705 {offsets = [0, 0], sizes = [8, 128], strides = [1, 1]} : vector<8x384xf32> to vector<8x128xf32>
    %708 = arith.addf %706, %707 : vector<8x128xf32>
    %709 = arith.negf %708 : vector<8x128xf32>
    %710 = math.exp %709 : vector<8x128xf32>
    %cst_244 = arith.constant 1.000000e+00 : f32
    %711 = vector.broadcast %cst_244 : f32 to vector<8x128xf32>
    %712 = arith.addf %711, %710 : vector<8x128xf32>
    %713 = arith.divf %711, %712 : vector<8x128xf32>
    %714 = vector.extract_strided_slice %702 {offsets = [0, 128], sizes = [8, 128], strides = [1, 1]} : vector<8x384xf32> to vector<8x128xf32>
    %715 = vector.extract_strided_slice %705 {offsets = [0, 128], sizes = [8, 128], strides = [1, 1]} : vector<8x384xf32> to vector<8x128xf32>
    %716 = arith.addf %714, %715 : vector<8x128xf32>
    %717 = arith.negf %716 : vector<8x128xf32>
    %718 = math.exp %717 : vector<8x128xf32>
    %cst_245 = arith.constant 1.000000e+00 : f32
    %719 = vector.broadcast %cst_245 : f32 to vector<8x128xf32>
    %720 = arith.addf %719, %718 : vector<8x128xf32>
    %721 = arith.divf %719, %720 : vector<8x128xf32>
    %722 = vector.extract_strided_slice %702 {offsets = [0, 256], sizes = [8, 128], strides = [1, 1]} : vector<8x384xf32> to vector<8x128xf32>
    %723 = vector.extract_strided_slice %705 {offsets = [0, 256], sizes = [8, 128], strides = [1, 1]} : vector<8x384xf32> to vector<8x128xf32>
    %c0_246 = arith.constant 0 : index
    %c0_247 = arith.constant 0 : index
    %724 = vector.load %arg9[%c0_246, %c0_247] : memref<1x128xf32, #tpu.memory_space<vmem>>, vector<1x128xf32>
    %725 = vector.broadcast %724 : vector<1x128xf32> to vector<8x128xf32>
    %726 = arith.addf %723, %725 : vector<8x128xf32>
    %727 = arith.mulf %713, %726 : vector<8x128xf32>
    %728 = arith.addf %722, %727 : vector<8x128xf32>
    %729 = math.tanh %728 : vector<8x128xf32>
    %cst_248 = arith.constant 1.000000e+00 : f32
    %730 = vector.broadcast %cst_248 : f32 to vector<8x128xf32>
    %731 = arith.subf %730, %721 : vector<8x128xf32>
    %732 = arith.mulf %731, %729 : vector<8x128xf32>
    %733 = arith.mulf %721, %624 : vector<8x128xf32>
    %734 = arith.addf %732, %733 : vector<8x128xf32>
    %735 = arith.truncf %624 : vector<8x128xf32> to vector<8x128xbf16>
    %c0_249 = arith.constant 0 : index
    %c0_250 = arith.constant 0 : index
    %736 = vector.load %arg10[%c0_249, %c0_250] : memref<128x384xbf16, #tpu.memory_space<vmem>>, vector<128x384xbf16>
    %cst_251 = arith.constant dense<0.000000e+00> : vector<8x384xf32>
    %737 = tpu.matmul %735, %736, %cst_251 {dimension_numbers = #tpu.dot_dimension_numbers<[1], [0], [0], [1], [0, 0, 1, 1], [], []>} : vector<8x128xbf16>, vector<128x384xbf16>, vector<8x384xf32> -> vector<8x384xf32>
    %c0_252 = arith.constant 0 : index
    %c0_253 = arith.constant 0 : index
    %738 = vector.load %arg12[%c0_252, %c0_253] : memref<1x384xf32, #tpu.memory_space<vmem>>, vector<1x384xf32>
    %739 = vector.broadcast %738 : vector<1x384xf32> to vector<8x384xf32>
    %740 = arith.addf %737, %739 : vector<8x384xf32>
    %741 = arith.truncf %662 : vector<8x128xf32> to vector<8x128xbf16>
    %c0_254 = arith.constant 0 : index
    %c0_255 = arith.constant 0 : index
    %742 = vector.load %arg11[%c0_254, %c0_255] : memref<128x384xbf16, #tpu.memory_space<vmem>>, vector<128x384xbf16>
    %cst_256 = arith.constant dense<0.000000e+00> : vector<8x384xf32>
    %743 = tpu.matmul %741, %742, %cst_256 {dimension_numbers = #tpu.dot_dimension_numbers<[1], [0], [0], [1], [0, 0, 1, 1], [], []>} : vector<8x128xbf16>, vector<128x384xbf16>, vector<8x384xf32> -> vector<8x384xf32>
    %744 = vector.extract_strided_slice %740 {offsets = [0, 0], sizes = [8, 128], strides = [1, 1]} : vector<8x384xf32> to vector<8x128xf32>
    %745 = vector.extract_strided_slice %743 {offsets = [0, 0], sizes = [8, 128], strides = [1, 1]} : vector<8x384xf32> to vector<8x128xf32>
    %746 = arith.addf %744, %745 : vector<8x128xf32>
    %747 = arith.negf %746 : vector<8x128xf32>
    %748 = math.exp %747 : vector<8x128xf32>
    %cst_257 = arith.constant 1.000000e+00 : f32
    %749 = vector.broadcast %cst_257 : f32 to vector<8x128xf32>
    %750 = arith.addf %749, %748 : vector<8x128xf32>
    %751 = arith.divf %749, %750 : vector<8x128xf32>
    %752 = vector.extract_strided_slice %740 {offsets = [0, 128], sizes = [8, 128], strides = [1, 1]} : vector<8x384xf32> to vector<8x128xf32>
    %753 = vector.extract_strided_slice %743 {offsets = [0, 128], sizes = [8, 128], strides = [1, 1]} : vector<8x384xf32> to vector<8x128xf32>
    %754 = arith.addf %752, %753 : vector<8x128xf32>
    %755 = arith.negf %754 : vector<8x128xf32>
    %756 = math.exp %755 : vector<8x128xf32>
    %cst_258 = arith.constant 1.000000e+00 : f32
    %757 = vector.broadcast %cst_258 : f32 to vector<8x128xf32>
    %758 = arith.addf %757, %756 : vector<8x128xf32>
    %759 = arith.divf %757, %758 : vector<8x128xf32>
    %760 = vector.extract_strided_slice %740 {offsets = [0, 256], sizes = [8, 128], strides = [1, 1]} : vector<8x384xf32> to vector<8x128xf32>
    %761 = vector.extract_strided_slice %743 {offsets = [0, 256], sizes = [8, 128], strides = [1, 1]} : vector<8x384xf32> to vector<8x128xf32>
    %c0_259 = arith.constant 0 : index
    %c0_260 = arith.constant 0 : index
    %762 = vector.load %arg13[%c0_259, %c0_260] : memref<1x128xf32, #tpu.memory_space<vmem>>, vector<1x128xf32>
    %763 = vector.broadcast %762 : vector<1x128xf32> to vector<8x128xf32>
    %764 = arith.addf %761, %763 : vector<8x128xf32>
    %765 = arith.mulf %751, %764 : vector<8x128xf32>
    %766 = arith.addf %760, %765 : vector<8x128xf32>
    %767 = math.tanh %766 : vector<8x128xf32>
    %cst_261 = arith.constant 1.000000e+00 : f32
    %768 = vector.broadcast %cst_261 : f32 to vector<8x128xf32>
    %769 = arith.subf %768, %759 : vector<8x128xf32>
    %770 = arith.mulf %769, %767 : vector<8x128xf32>
    %771 = arith.mulf %759, %662 : vector<8x128xf32>
    %772 = arith.addf %770, %771 : vector<8x128xf32>
    %c40_262 = arith.constant 40 : index
    %c0_263 = arith.constant 0 : index
    %773 = vector.load %arg18[%c40_262, %c0_263] : memref<64x128xf32, #tpu.memory_space<vmem>>, vector<8x128xf32>
    tpu.vector_store %arg18[%c40_262, %c0_263], %772 {strides = array<i32>} : memref<64x128xf32, #tpu.memory_space<vmem>>, vector<8x128xf32>,
    %774 = arith.truncf %696 : vector<8x128xf32> to vector<8x128xbf16>
    %c0_264 = arith.constant 0 : index
    %c0_265 = arith.constant 0 : index
    %775 = vector.load %arg6[%c0_264, %c0_265] : memref<128x384xbf16, #tpu.memory_space<vmem>>, vector<128x384xbf16>
    %cst_266 = arith.constant dense<0.000000e+00> : vector<8x384xf32>
    %776 = tpu.matmul %774, %775, %cst_266 {dimension_numbers = #tpu.dot_dimension_numbers<[1], [0], [0], [1], [0, 0, 1, 1], [], []>} : vector<8x128xbf16>, vector<128x384xbf16>, vector<8x384xf32> -> vector<8x384xf32>
    %c0_267 = arith.constant 0 : index
    %c0_268 = arith.constant 0 : index
    %777 = vector.load %arg8[%c0_267, %c0_268] : memref<1x384xf32, #tpu.memory_space<vmem>>, vector<1x384xf32>
    %778 = vector.broadcast %777 : vector<1x384xf32> to vector<8x384xf32>
    %779 = arith.addf %776, %778 : vector<8x384xf32>
    %780 = arith.truncf %734 : vector<8x128xf32> to vector<8x128xbf16>
    %c0_269 = arith.constant 0 : index
    %c0_270 = arith.constant 0 : index
    %781 = vector.load %arg7[%c0_269, %c0_270] : memref<128x384xbf16, #tpu.memory_space<vmem>>, vector<128x384xbf16>
    %cst_271 = arith.constant dense<0.000000e+00> : vector<8x384xf32>
    %782 = tpu.matmul %780, %781, %cst_271 {dimension_numbers = #tpu.dot_dimension_numbers<[1], [0], [0], [1], [0, 0, 1, 1], [], []>} : vector<8x128xbf16>, vector<128x384xbf16>, vector<8x384xf32> -> vector<8x384xf32>
    %783 = vector.extract_strided_slice %779 {offsets = [0, 0], sizes = [8, 128], strides = [1, 1]} : vector<8x384xf32> to vector<8x128xf32>
    %784 = vector.extract_strided_slice %782 {offsets = [0, 0], sizes = [8, 128], strides = [1, 1]} : vector<8x384xf32> to vector<8x128xf32>
    %785 = arith.addf %783, %784 : vector<8x128xf32>
    %786 = arith.negf %785 : vector<8x128xf32>
    %787 = math.exp %786 : vector<8x128xf32>
    %cst_272 = arith.constant 1.000000e+00 : f32
    %788 = vector.broadcast %cst_272 : f32 to vector<8x128xf32>
    %789 = arith.addf %788, %787 : vector<8x128xf32>
    %790 = arith.divf %788, %789 : vector<8x128xf32>
    %791 = vector.extract_strided_slice %779 {offsets = [0, 128], sizes = [8, 128], strides = [1, 1]} : vector<8x384xf32> to vector<8x128xf32>
    %792 = vector.extract_strided_slice %782 {offsets = [0, 128], sizes = [8, 128], strides = [1, 1]} : vector<8x384xf32> to vector<8x128xf32>
    %793 = arith.addf %791, %792 : vector<8x128xf32>
    %794 = arith.negf %793 : vector<8x128xf32>
    %795 = math.exp %794 : vector<8x128xf32>
    %cst_273 = arith.constant 1.000000e+00 : f32
    %796 = vector.broadcast %cst_273 : f32 to vector<8x128xf32>
    %797 = arith.addf %796, %795 : vector<8x128xf32>
    %798 = arith.divf %796, %797 : vector<8x128xf32>
    %799 = vector.extract_strided_slice %779 {offsets = [0, 256], sizes = [8, 128], strides = [1, 1]} : vector<8x384xf32> to vector<8x128xf32>
    %800 = vector.extract_strided_slice %782 {offsets = [0, 256], sizes = [8, 128], strides = [1, 1]} : vector<8x384xf32> to vector<8x128xf32>
    %c0_274 = arith.constant 0 : index
    %c0_275 = arith.constant 0 : index
    %801 = vector.load %arg9[%c0_274, %c0_275] : memref<1x128xf32, #tpu.memory_space<vmem>>, vector<1x128xf32>
    %802 = vector.broadcast %801 : vector<1x128xf32> to vector<8x128xf32>
    %803 = arith.addf %800, %802 : vector<8x128xf32>
    %804 = arith.mulf %790, %803 : vector<8x128xf32>
    %805 = arith.addf %799, %804 : vector<8x128xf32>
    %806 = math.tanh %805 : vector<8x128xf32>
    %cst_276 = arith.constant 1.000000e+00 : f32
    %807 = vector.broadcast %cst_276 : f32 to vector<8x128xf32>
    %808 = arith.subf %807, %798 : vector<8x128xf32>
    %809 = arith.mulf %808, %806 : vector<8x128xf32>
    %810 = arith.mulf %798, %734 : vector<8x128xf32>
    %811 = arith.addf %809, %810 : vector<8x128xf32>
    %812 = arith.truncf %734 : vector<8x128xf32> to vector<8x128xbf16>
    %c0_277 = arith.constant 0 : index
    %c0_278 = arith.constant 0 : index
    %813 = vector.load %arg10[%c0_277, %c0_278] : memref<128x384xbf16, #tpu.memory_space<vmem>>, vector<128x384xbf16>
    %cst_279 = arith.constant dense<0.000000e+00> : vector<8x384xf32>
    %814 = tpu.matmul %812, %813, %cst_279 {dimension_numbers = #tpu.dot_dimension_numbers<[1], [0], [0], [1], [0, 0, 1, 1], [], []>} : vector<8x128xbf16>, vector<128x384xbf16>, vector<8x384xf32> -> vector<8x384xf32>
    %c0_280 = arith.constant 0 : index
    %c0_281 = arith.constant 0 : index
    %815 = vector.load %arg12[%c0_280, %c0_281] : memref<1x384xf32, #tpu.memory_space<vmem>>, vector<1x384xf32>
    %816 = vector.broadcast %815 : vector<1x384xf32> to vector<8x384xf32>
    %817 = arith.addf %814, %816 : vector<8x384xf32>
    %818 = arith.truncf %772 : vector<8x128xf32> to vector<8x128xbf16>
    %c0_282 = arith.constant 0 : index
    %c0_283 = arith.constant 0 : index
    %819 = vector.load %arg11[%c0_282, %c0_283] : memref<128x384xbf16, #tpu.memory_space<vmem>>, vector<128x384xbf16>
    %cst_284 = arith.constant dense<0.000000e+00> : vector<8x384xf32>
    %820 = tpu.matmul %818, %819, %cst_284 {dimension_numbers = #tpu.dot_dimension_numbers<[1], [0], [0], [1], [0, 0, 1, 1], [], []>} : vector<8x128xbf16>, vector<128x384xbf16>, vector<8x384xf32> -> vector<8x384xf32>
    %821 = vector.extract_strided_slice %817 {offsets = [0, 0], sizes = [8, 128], strides = [1, 1]} : vector<8x384xf32> to vector<8x128xf32>
    %822 = vector.extract_strided_slice %820 {offsets = [0, 0], sizes = [8, 128], strides = [1, 1]} : vector<8x384xf32> to vector<8x128xf32>
    %823 = arith.addf %821, %822 : vector<8x128xf32>
    %824 = arith.negf %823 : vector<8x128xf32>
    %825 = math.exp %824 : vector<8x128xf32>
    %cst_285 = arith.constant 1.000000e+00 : f32
    %826 = vector.broadcast %cst_285 : f32 to vector<8x128xf32>
    %827 = arith.addf %826, %825 : vector<8x128xf32>
    %828 = arith.divf %826, %827 : vector<8x128xf32>
    %829 = vector.extract_strided_slice %817 {offsets = [0, 128], sizes = [8, 128], strides = [1, 1]} : vector<8x384xf32> to vector<8x128xf32>
    %830 = vector.extract_strided_slice %820 {offsets = [0, 128], sizes = [8, 128], strides = [1, 1]} : vector<8x384xf32> to vector<8x128xf32>
    %831 = arith.addf %829, %830 : vector<8x128xf32>
    %832 = arith.negf %831 : vector<8x128xf32>
    %833 = math.exp %832 : vector<8x128xf32>
    %cst_286 = arith.constant 1.000000e+00 : f32
    %834 = vector.broadcast %cst_286 : f32 to vector<8x128xf32>
    %835 = arith.addf %834, %833 : vector<8x128xf32>
    %836 = arith.divf %834, %835 : vector<8x128xf32>
    %837 = vector.extract_strided_slice %817 {offsets = [0, 256], sizes = [8, 128], strides = [1, 1]} : vector<8x384xf32> to vector<8x128xf32>
    %838 = vector.extract_strided_slice %820 {offsets = [0, 256], sizes = [8, 128], strides = [1, 1]} : vector<8x384xf32> to vector<8x128xf32>
    %c0_287 = arith.constant 0 : index
    %c0_288 = arith.constant 0 : index
    %839 = vector.load %arg13[%c0_287, %c0_288] : memref<1x128xf32, #tpu.memory_space<vmem>>, vector<1x128xf32>
    %840 = vector.broadcast %839 : vector<1x128xf32> to vector<8x128xf32>
    %841 = arith.addf %838, %840 : vector<8x128xf32>
    %842 = arith.mulf %828, %841 : vector<8x128xf32>
    %843 = arith.addf %837, %842 : vector<8x128xf32>
    %844 = math.tanh %843 : vector<8x128xf32>
    %cst_289 = arith.constant 1.000000e+00 : f32
    %845 = vector.broadcast %cst_289 : f32 to vector<8x128xf32>
    %846 = arith.subf %845, %836 : vector<8x128xf32>
    %847 = arith.mulf %846, %844 : vector<8x128xf32>
    %848 = arith.mulf %836, %772 : vector<8x128xf32>
    %849 = arith.addf %847, %848 : vector<8x128xf32>
    %c48_290 = arith.constant 48 : index
    %c0_291 = arith.constant 0 : index
    %850 = vector.load %arg18[%c48_290, %c0_291] : memref<64x128xf32, #tpu.memory_space<vmem>>, vector<8x128xf32>
    tpu.vector_store %arg18[%c48_290, %c0_291], %849 {strides = array<i32>} : memref<64x128xf32, #tpu.memory_space<vmem>>, vector<8x128xf32>,
    %851 = arith.truncf %811 : vector<8x128xf32> to vector<8x128xbf16>
    %c0_292 = arith.constant 0 : index
    %c0_293 = arith.constant 0 : index
    %852 = vector.load %arg10[%c0_292, %c0_293] : memref<128x384xbf16, #tpu.memory_space<vmem>>, vector<128x384xbf16>
    %cst_294 = arith.constant dense<0.000000e+00> : vector<8x384xf32>
    %853 = tpu.matmul %851, %852, %cst_294 {dimension_numbers = #tpu.dot_dimension_numbers<[1], [0], [0], [1], [0, 0, 1, 1], [], []>} : vector<8x128xbf16>, vector<128x384xbf16>, vector<8x384xf32> -> vector<8x384xf32>
    %c0_295 = arith.constant 0 : index
    %c0_296 = arith.constant 0 : index
    %854 = vector.load %arg12[%c0_295, %c0_296] : memref<1x384xf32, #tpu.memory_space<vmem>>, vector<1x384xf32>
    %855 = vector.broadcast %854 : vector<1x384xf32> to vector<8x384xf32>
    %856 = arith.addf %853, %855 : vector<8x384xf32>
    %857 = arith.truncf %849 : vector<8x128xf32> to vector<8x128xbf16>
    %c0_297 = arith.constant 0 : index
    %c0_298 = arith.constant 0 : index
    %858 = vector.load %arg11[%c0_297, %c0_298] : memref<128x384xbf16, #tpu.memory_space<vmem>>, vector<128x384xbf16>
    %cst_299 = arith.constant dense<0.000000e+00> : vector<8x384xf32>
    %859 = tpu.matmul %857, %858, %cst_299 {dimension_numbers = #tpu.dot_dimension_numbers<[1], [0], [0], [1], [0, 0, 1, 1], [], []>} : vector<8x128xbf16>, vector<128x384xbf16>, vector<8x384xf32> -> vector<8x384xf32>
    %860 = vector.extract_strided_slice %856 {offsets = [0, 0], sizes = [8, 128], strides = [1, 1]} : vector<8x384xf32> to vector<8x128xf32>
    %861 = vector.extract_strided_slice %859 {offsets = [0, 0], sizes = [8, 128], strides = [1, 1]} : vector<8x384xf32> to vector<8x128xf32>
    %862 = arith.addf %860, %861 : vector<8x128xf32>
    %863 = arith.negf %862 : vector<8x128xf32>
    %864 = math.exp %863 : vector<8x128xf32>
    %cst_300 = arith.constant 1.000000e+00 : f32
    %865 = vector.broadcast %cst_300 : f32 to vector<8x128xf32>
    %866 = arith.addf %865, %864 : vector<8x128xf32>
    %867 = arith.divf %865, %866 : vector<8x128xf32>
    %868 = vector.extract_strided_slice %856 {offsets = [0, 128], sizes = [8, 128], strides = [1, 1]} : vector<8x384xf32> to vector<8x128xf32>
    %869 = vector.extract_strided_slice %859 {offsets = [0, 128], sizes = [8, 128], strides = [1, 1]} : vector<8x384xf32> to vector<8x128xf32>
    %870 = arith.addf %868, %869 : vector<8x128xf32>
    %871 = arith.negf %870 : vector<8x128xf32>
    %872 = math.exp %871 : vector<8x128xf32>
    %cst_301 = arith.constant 1.000000e+00 : f32
    %873 = vector.broadcast %cst_301 : f32 to vector<8x128xf32>
    %874 = arith.addf %873, %872 : vector<8x128xf32>
    %875 = arith.divf %873, %874 : vector<8x128xf32>
    %876 = vector.extract_strided_slice %856 {offsets = [0, 256], sizes = [8, 128], strides = [1, 1]} : vector<8x384xf32> to vector<8x128xf32>
    %877 = vector.extract_strided_slice %859 {offsets = [0, 256], sizes = [8, 128], strides = [1, 1]} : vector<8x384xf32> to vector<8x128xf32>
    %c0_302 = arith.constant 0 : index
    %c0_303 = arith.constant 0 : index
    %878 = vector.load %arg13[%c0_302, %c0_303] : memref<1x128xf32, #tpu.memory_space<vmem>>, vector<1x128xf32>
    %879 = vector.broadcast %878 : vector<1x128xf32> to vector<8x128xf32>
    %880 = arith.addf %877, %879 : vector<8x128xf32>
    %881 = arith.mulf %867, %880 : vector<8x128xf32>
    %882 = arith.addf %876, %881 : vector<8x128xf32>
    %883 = math.tanh %882 : vector<8x128xf32>
    %cst_304 = arith.constant 1.000000e+00 : f32
    %884 = vector.broadcast %cst_304 : f32 to vector<8x128xf32>
    %885 = arith.subf %884, %875 : vector<8x128xf32>
    %886 = arith.mulf %885, %883 : vector<8x128xf32>
    %887 = arith.mulf %875, %849 : vector<8x128xf32>
    %888 = arith.addf %886, %887 : vector<8x128xf32>
    %c56_305 = arith.constant 56 : index
    %c0_306 = arith.constant 0 : index
    %889 = vector.load %arg18[%c56_305, %c0_306] : memref<64x128xf32, #tpu.memory_space<vmem>>, vector<8x128xf32>
    tpu.vector_store %arg18[%c56_305, %c0_306], %888 {strides = array<i32>} : memref<64x128xf32, #tpu.memory_space<vmem>>, vector<8x128xf32>,
    %c0_307 = arith.constant 0 : index
    %c0_308 = arith.constant 0 : index
    %890 = vector.load %arg18[%c0_307, %c0_308] : memref<64x128xf32, #tpu.memory_space<vmem>>, vector<64x128xf32>
    %891 = arith.truncf %890 : vector<64x128xf32> to vector<64x128xbf16>
    %c0_309 = arith.constant 0 : index
    %c0_310 = arith.constant 0 : index
    %892 = vector.load %arg14[%c0_309, %c0_310] : memref<128x128xbf16, #tpu.memory_space<vmem>>, vector<128x128xbf16>
    %cst_311 = arith.constant dense<0.000000e+00> : vector<64x128xf32>
    %893 = tpu.matmul %891, %892, %cst_311 {dimension_numbers = #tpu.dot_dimension_numbers<[1], [0], [0], [1], [0, 0, 1, 1], [], []>} : vector<64x128xbf16>, vector<128x128xbf16>, vector<64x128xf32> -> vector<64x128xf32>
    %c0_312 = arith.constant 0 : index
    %c0_313 = arith.constant 0 : index
    %894 = vector.load %arg15[%c0_312, %c0_313] : memref<1x128xf32, #tpu.memory_space<vmem>>, vector<1x128xf32>
    %895 = vector.broadcast %894 : vector<1x128xf32> to vector<64x128xf32>
    %896 = arith.addf %893, %895 : vector<64x128xf32>
    %c0_314 = arith.constant 0 : index
    %c0_315 = arith.constant 0 : index
    %897 = vector.load %arg16[%c0_314, %c0_315] : memref<64x128xf32, #tpu.memory_space<vmem>>, vector<64x128xf32>
    tpu.vector_store %arg16[%c0_314, %c0_315], %896 {strides = array<i32>} : memref<64x128xf32, #tpu.memory_space<vmem>>, vector<64x128xf32>,
    return
  }
  func.func @transform_0(%arg0: i32) -> (i32, i32) {
    %c0_i32 = arith.constant 0 : i32
    %c0_i32_0 = arith.constant 0 : i32
    %c0_i32_1 = arith.constant 0 : i32
    return %c0_i32, %c0_i32_0 : i32, i32
  }
  func.func @transform_1(%arg0: i32) -> (i32, i32) {
    %c0_i32 = arith.constant 0 : i32
    %c0_i32_0 = arith.constant 0 : i32
    %c0_i32_1 = arith.constant 0 : i32
    return %c0_i32, %c0_i32_0 : i32, i32
  }
  func.func @transform_2(%arg0: i32) -> (i32, i32) {
    %c0_i32 = arith.constant 0 : i32
    %c0_i32_0 = arith.constant 0 : i32
    %c0_i32_1 = arith.constant 0 : i32
    return %c0_i32, %c0_i32_0 : i32, i32
  }
  func.func @transform_3(%arg0: i32) -> (i32, i32) {
    %c0_i32 = arith.constant 0 : i32
    %c0_i32_0 = arith.constant 0 : i32
    %c0_i32_1 = arith.constant 0 : i32
    return %c0_i32, %c0_i32_0 : i32, i32
  }
  func.func @transform_4(%arg0: i32) -> (i32, i32) {
    %c0_i32 = arith.constant 0 : i32
    %c0_i32_0 = arith.constant 0 : i32
    %c0_i32_1 = arith.constant 0 : i32
    return %c0_i32, %c0_i32_0 : i32, i32
  }
  func.func @transform_5(%arg0: i32) -> (i32, i32) {
    %c0_i32 = arith.constant 0 : i32
    %c0_i32_0 = arith.constant 0 : i32
    %c0_i32_1 = arith.constant 0 : i32
    return %c0_i32, %c0_i32_0 : i32, i32
  }
  func.func @transform_6(%arg0: i32) -> (i32, i32) {
    %c0_i32 = arith.constant 0 : i32
    %c0_i32_0 = arith.constant 0 : i32
    %c0_i32_1 = arith.constant 0 : i32
    return %c0_i32, %c0_i32_0 : i32, i32
  }
  func.func @transform_7(%arg0: i32) -> (i32, i32) {
    %c0_i32 = arith.constant 0 : i32
    %c0_i32_0 = arith.constant 0 : i32
    %c0_i32_1 = arith.constant 0 : i32
    return %c0_i32, %c0_i32_0 : i32, i32
  }
  func.func @transform_8(%arg0: i32) -> (i32, i32) {
    %c0_i32 = arith.constant 0 : i32
    %c0_i32_0 = arith.constant 0 : i32
    %c0_i32_1 = arith.constant 0 : i32
    return %c0_i32, %c0_i32_0 : i32, i32
  }
  func.func @transform_9(%arg0: i32) -> (i32, i32) {
    %c0_i32 = arith.constant 0 : i32
    %c0_i32_0 = arith.constant 0 : i32
    %c0_i32_1 = arith.constant 0 : i32
    return %c0_i32, %c0_i32_0 : i32, i32
  }
  func.func @transform_10(%arg0: i32) -> (i32, i32) {
    %c0_i32 = arith.constant 0 : i32
    %c0_i32_0 = arith.constant 0 : i32
    %c0_i32_1 = arith.constant 0 : i32
    return %c0_i32, %c0_i32_0 : i32, i32
  }
  func.func @transform_11(%arg0: i32) -> (i32, i32) {
    %c0_i32 = arith.constant 0 : i32
    %c0_i32_0 = arith.constant 0 : i32
    %c0_i32_1 = arith.constant 0 : i32
    return %c0_i32, %c0_i32_0 : i32, i32
  }
  func.func @transform_12(%arg0: i32) -> (i32, i32) {
    %c0_i32 = arith.constant 0 : i32
    %c0_i32_0 = arith.constant 0 : i32
    %c0_i32_1 = arith.constant 0 : i32
    return %c0_i32, %c0_i32_0 : i32, i32
  }
  func.func @transform_13(%arg0: i32) -> (i32, i32) {
    %c0_i32 = arith.constant 0 : i32
    %c0_i32_0 = arith.constant 0 : i32
    %c0_i32_1 = arith.constant 0 : i32
    return %c0_i32, %c0_i32_0 : i32, i32
  }
  func.func @transform_14(%arg0: i32) -> (i32, i32) {
    %c0_i32 = arith.constant 0 : i32
    %c0_i32_0 = arith.constant 0 : i32
    %c0_i32_1 = arith.constant 0 : i32
    return %c0_i32, %c0_i32_0 : i32, i32
  }
  func.func @transform_15(%arg0: i32) -> (i32, i32) {
    %c0_i32 = arith.constant 0 : i32
    %c0_i32_0 = arith.constant 0 : i32
    %c0_i32_1 = arith.constant 0 : i32
    return %c0_i32, %c0_i32_0 : i32, i32
  }
}

</mosaic_0001>

<llo_original>
// kernel: tpu_custom_call.1
$region0: #{tpu_custom_call.1}
  #allocation0 [shape = 'u32[]', space=smem, size = 0x4, offset = 0x4, fixed_abs, tag = 'smem constant byte address 0x4 - core index']
  #allocation1 [shape = 'u32[144,128]{1,0:T(1,128)}', space=vmem, size = 0x12000, scoped, tag = 'internal scratch']
  #allocation2 [shape = 'f32[64,384]{1,0:T(8,128)}', space=vmem, size = 0x18000, scoped, tag = 'scratch operand']
  #allocation3 [shape = 'f32[64,128]{1,0:T(8,128)}', space=vmem, size = 0x8000, scoped, tag = 'scratch operand']
  %s0 = inlined_call_operand.hbm [shape: bf16[64,128], index: 0, kind: input, shape index: {}]
  %s1 = inlined_call_operand.hbm [shape: bf16[128,384], index: 1, kind: input, shape index: {}]
  %s2 = inlined_call_operand.hbm [shape: bf16[128,384], index: 2, kind: input, shape index: {}]
  %s3 = inlined_call_operand.vmem [shape: f32[1,384], index: 3, kind: input, shape index: {}]
  %s4 = inlined_call_operand.vmem [shape: f32[1,128], index: 4, kind: input, shape index: {}]
  %s5 = inlined_call_operand.hbm [shape: bf16[128,384], index: 5, kind: input, shape index: {}]
  %s6 = inlined_call_operand.hbm [shape: bf16[128,384], index: 6, kind: input, shape index: {}]
  %s7 = inlined_call_operand.vmem [shape: f32[1,384], index: 7, kind: input, shape index: {}]
  %s8 = inlined_call_operand.vmem [shape: f32[1,128], index: 8, kind: input, shape index: {}]
  %s9 = inlined_call_operand.hbm [shape: bf16[128,384], index: 9, kind: input, shape index: {}]
  %s10 = inlined_call_operand.hbm [shape: bf16[128,384], index: 10, kind: input, shape index: {}]
  %s11 = inlined_call_operand.vmem [shape: f32[1,384], index: 11, kind: input, shape index: {}]
  %s12 = inlined_call_operand.vmem [shape: f32[1,128], index: 12, kind: input, shape index: {}]
  %s13 = inlined_call_operand.hbm [shape: bf16[128,128], index: 13, kind: input, shape index: {}]
  %s14 = inlined_call_operand.vmem [shape: f32[1,128], index: 14, kind: input, shape index: {}]
  %s15 = inlined_call_operand.hbm [shape: f32[64,128], index: 15, kind: output, shape index: {}]
  %s16 = sld [smem:[#allocation0]]
  $region102: #{tpu_custom_call.1} parent=0
    _
  %s18 = ssub.s32 1, %s16
  %s19 = scalar_select 0, %s18, %s16
  $region1: #{tpu_custom_call.1} parent=0
    #allocation4 [shape = 'u8[16384]{0}', space=vmem, size = 0x4000, scoped, tag = 'input window, operand 0, single buffered']
    #allocation5 [shape = 's32[1]{0}', space=sflag, size = 0x4, scoped, tag = 'scoped memory for tpu_custom_call.1']
    #allocation6 [shape = 's32[1]{0}', space=sflag, size = 0x4, scoped, tag = 'scoped memory for tpu_custom_call.1']
    #allocation7 [shape = 'u8[98304]{0}', space=vmem, size = 0x18000, scoped, tag = 'input window, operand 1, single buffered']
    #allocation8 [shape = 's32[1]{0}', space=sflag, size = 0x4, scoped, tag = 'scoped memory for tpu_custom_call.1']
    #allocation9 [shape = 'u8[98304]{0}', space=vmem, size = 0x18000, scoped, tag = 'input window, operand 2, single buffered']
    #allocation10 [shape = 'u8[98304]{0}', space=vmem, size = 0x18000, scoped, tag = 'input window, operand 5, single buffered']
    #allocation11 [shape = 's32[1]{0}', space=sflag, size = 0x4, scoped, tag = 'scoped memory for tpu_custom_call.1']
    #allocation12 [shape = 'u8[98304]{0}', space=vmem, size = 0x18000, scoped, tag = 'input window, operand 6, single buffered']
    #allocation13 [shape = 'u8[98304]{0}', space=vmem, size = 0x18000, scoped, tag = 'input window, operand 9, single buffered']
    #allocation14 [shape = 's32[1]{0}', space=sflag, size = 0x4, scoped, tag = 'scoped memory for tpu_custom_call.1']
    #allocation15 [shape = 'u8[98304]{0}', space=vmem, size = 0x18000, scoped, tag = 'input window, operand 10, single buffered']
    #allocation16 [shape = 'u8[32768]{0}', space=vmem, size = 0x8000, scoped, tag = 'input window, operand 13, single buffered']
    #allocation17 [shape = 's32[1]{0}', space=sflag, size = 0x4, scoped, tag = 'scoped memory for tpu_custom_call.1']
    #allocation18 [shape = 'u8[32768]{0}', space=vmem, size = 0x8000, scoped, tag = 'output window, operand 0, single buffered']
    %20 = vsyncpa [#allocation5], 0
    %21 = vsyncpa [#allocation8], 0
    %22 = vsyncpa [#allocation11], 0
    %23 = vsyncpa [#allocation14], 0
    %24 = vsyncpa [#allocation17], 0
    %25 = vsyncpa [#allocation6], 0
    // Predicated region
    $region2: #{tpu_custom_call.1} parent=1 // pred_check
      _
    $region3: #{tpu_custom_call.1} parent=1 // pred_check_branch
      %27 = sbr.rel (0) target = $region5
    $region4: #{tpu_custom_call.1} parent=1 // pred_region
      %s29 = ssub.s32 512, 512
      %30 = vsyncadd [#allocation5], %s29
      %s31 = sshll.u32 [#allocation4], 4
      %s32 = int_to_ptr.vmem [resolvable:$true] %s31
      %37 = dma.hbm_to_vmem [thread:$0]  %s0, 512, %s32, [#allocation5], 64, 64, 4
    $region5: #{tpu_custom_call.1} parent=1 // pred_fallthru
      _
    // Predicated region
    $region6: #{tpu_custom_call.1} parent=1 // pred_check
      _
    $region7: #{tpu_custom_call.1} parent=1 // pred_check_branch
      %39 = sbr.rel (0) target = $region9
    $region8: #{tpu_custom_call.1} parent=1 // pred_region
      %s41 = ssub.s32 3072, 3072
      %42 = vsyncadd [#allocation8], %s41
      %s43 = sshll.u32 [#allocation7], 4
      %s44 = int_to_ptr.vmem [resolvable:$true] %s43
      %49 = dma.hbm_to_vmem [thread:$0]  %s1, 3072, %s44, [#allocation8], 192, 192, 12
    $region9: #{tpu_custom_call.1} parent=1 // pred_fallthru
      _
    // Predicated region
    $region10: #{tpu_custom_call.1} parent=1 // pred_check
      _
    $region11: #{tpu_custom_call.1} parent=1 // pred_check_branch
      %51 = sbr.rel (0) target = $region13
    $region12: #{tpu_custom_call.1} parent=1 // pred_region
      %s53 = ssub.s32 3072, 3072
      %54 = vsyncadd [#allocation8], %s53
      %s55 = sshll.u32 [#allocation9], 4
      %s56 = int_to_ptr.vmem [resolvable:$true] %s55
      %61 = dma.hbm_to_vmem [thread:$0]  %s2, 3072, %s56, [#allocation8], 192, 192, 12
    $region13: #{tpu_custom_call.1} parent=1 // pred_fallthru
      _
    // Predicated region
    $region14: #{tpu_custom_call.1} parent=1 // pred_check
      _
    $region15: #{tpu_custom_call.1} parent=1 // pred_check_branch
      %63 = sbr.rel (0) target = $region17
    $region16: #{tpu_custom_call.1} parent=1 // pred_region
      _
    $region17: #{tpu_custom_call.1} parent=1 // pred_fallthru
      _
    // Predicated region
    $region18: #{tpu_custom_call.1} parent=1 // pred_check
      _
    $region19: #{tpu_custom_call.1} parent=1 // pred_check_branch
      %65 = sbr.rel (0) target = $region21
    $region20: #{tpu_custom_call.1} parent=1 // pred_region
      _
    $region21: #{tpu_custom_call.1} parent=1 // pred_fallthru
      _
    // Predicated region
    $region22: #{tpu_custom_call.1} parent=1 // pred_check
      _
    $region23: #{tpu_custom_call.1} parent=1 // pred_check_branch
      %67 = sbr.rel (0) target = $region25
    $region24: #{tpu_custom_call.1} parent=1 // pred_region
      %s69 = ssub.s32 3072, 3072
      %70 = vsyncadd [#allocation11], %s69
      %s71 = sshll.u32 [#allocation10], 4
      %s72 = int_to_ptr.vmem [resolvable:$true] %s71
      %77 = dma.hbm_to_vmem [thread:$0]  %s5, 3072, %s72, [#allocation11], 192, 192, 12
    $region25: #{tpu_custom_call.1} parent=1 // pred_fallthru
      _
    // Predicated region
    $region26: #{tpu_custom_call.1} parent=1 // pred_check
      _
    $region27: #{tpu_custom_call.1} parent=1 // pred_check_branch
      %79 = sbr.rel (0) target = $region29
    $region28: #{tpu_custom_call.1} parent=1 // pred_region
      %s81 = ssub.s32 3072, 3072
      %82 = vsyncadd [#allocation11], %s81
      %s83 = sshll.u32 [#allocation12], 4
      %s84 = int_to_ptr.vmem [resolvable:$true] %s83
      %89 = dma.hbm_to_vmem [thread:$0]  %s6, 3072, %s84, [#allocation11], 192, 192, 12
    $region29: #{tpu_custom_call.1} parent=1 // pred_fallthru
      _
    // Predicated region
    $region30: #{tpu_custom_call.1} parent=1 // pred_check
      _
    $region31: #{tpu_custom_call.1} parent=1 // pred_check_branch
      %91 = sbr.rel (0) target = $region33
    $region32: #{tpu_custom_call.1} parent=1 // pred_region
      _
    $region33: #{tpu_custom_call.1} parent=1 // pred_fallthru
      _
    // Predicated region
    $region34: #{tpu_custom_call.1} parent=1 // pred_check
      _
    $region35: #{tpu_custom_call.1} parent=1 // pred_check_branch
      %93 = sbr.rel (0) target = $region37
    $region36: #{tpu_custom_call.1} parent=1 // pred_region
      _
    $region37: #{tpu_custom_call.1} parent=1 // pred_fallthru
      _
    // Predicated region
    $region38: #{tpu_custom_call.1} parent=1 // pred_check
      _
    $region39: #{tpu_custom_call.1} parent=1 // pred_check_branch
      %95 = sbr.rel (0) target = $region41
    $region40: #{tpu_custom_call.1} parent=1 // pred_region
      %s97 = ssub.s32 3072, 3072
      %98 = vsyncadd [#allocation14], %s97
      %s99 = sshll.u32 [#allocation13], 4
      %s100 = int_to_ptr.vmem [resolvable:$true] %s99
      %105 = dma.hbm_to_vmem [thread:$0]  %s9, 3072, %s100, [#allocation14], 192, 192, 12
    $region41: #{tpu_custom_call.1} parent=1 // pred_fallthru
      _
    // Predicated region
    $region42: #{tpu_custom_call.1} parent=1 // pred_check
      _
    $region43: #{tpu_custom_call.1} parent=1 // pred_check_branch
      %107 = sbr.rel (0) target = $region45
    $region44: #{tpu_custom_call.1} parent=1 // pred_region
      %s109 = ssub.s32 3072, 3072
      %110 = vsyncadd [#allocation14], %s109
      %s111 = sshll.u32 [#allocation15], 4
      %s112 = int_to_ptr.vmem [resolvable:$true] %s111
      %117 = dma.hbm_to_vmem [thread:$0]  %s10, 3072, %s112, [#allocation14], 192, 192, 12
    $region45: #{tpu_custom_call.1} parent=1 // pred_fallthru
      _
    // Predicated region
    $region46: #{tpu_custom_call.1} parent=1 // pred_check
      _
    $region47: #{tpu_custom_call.1} parent=1 // pred_check_branch
      %119 = sbr.rel (0) target = $region49
    $region48: #{tpu_custom_call.1} parent=1 // pred_region
      _
    $region49: #{tpu_custom_call.1} parent=1 // pred_fallthru
      _
    // Predicated region
    $region50: #{tpu_custom_call.1} parent=1 // pred_check
      _
    $region51: #{tpu_custom_call.1} parent=1 // pred_check_branch
      %121 = sbr.rel (0) target = $region53
    $region52: #{tpu_custom_call.1} parent=1 // pred_region
      _
    $region53: #{tpu_custom_call.1} parent=1 // pred_fallthru
      _
    // Predicated region
    $region54: #{tpu_custom_call.1} parent=1 // pred_check
      _
    $region55: #{tpu_custom_call.1} parent=1 // pred_check_branch
      %123 = sbr.rel (0) target = $region57
    $region56: #{tpu_custom_call.1} parent=1 // pred_region
      %s125 = ssub.s32 1024, 1024
      %126 = vsyncadd [#allocation17], %s125
      %s127 = sshll.u32 [#allocation16], 4
      %s128 = int_to_ptr.vmem [resolvable:$true] %s127
      %133 = dma.hbm_to_vmem [thread:$0]  %s13, 1024, %s128, [#allocation17], 64, 64, 4
    $region57: #{tpu_custom_call.1} parent=1 // pred_fallthru
      _
    // Predicated region
    $region58: #{tpu_custom_call.1} parent=1 // pred_check
      _
    $region59: #{tpu_custom_call.1} parent=1 // pred_check_branch
      %135 = sbr.rel (0) target = $region61
    $region60: #{tpu_custom_call.1} parent=1 // pred_region
      _
    $region61: #{tpu_custom_call.1} parent=1 // pred_fallthru
      _
    // Predicated region
    $region62: #{tpu_custom_call.1} parent=1 // pred_check
      _
    $region63: #{tpu_custom_call.1} parent=1 // pred_check_branch
      %137 = sbr.rel (0) target = $region65
    $region64: #{tpu_custom_call.1} parent=1 // pred_region
      %138 = dma.done [#allocation5], 512
    $region65: #{tpu_custom_call.1} parent=1 // pred_fallthru
      _
    // Predicated region
    $region66: #{tpu_custom_call.1} parent=1 // pred_check
      _
    $region67: #{tpu_custom_call.1} parent=1 // pred_check_branch
      %140 = sbr.rel (0) target = $region69
    $region68: #{tpu_custom_call.1} parent=1 // pred_region
      %141 = dma.done [#allocation8], 3072
    $region69: #{tpu_custom_call.1} parent=1 // pred_fallthru
      _
    // Predicated region
    $region70: #{tpu_custom_call.1} parent=1 // pred_check
      _
    $region71: #{tpu_custom_call.1} parent=1 // pred_check_branch
      %143 = sbr.rel (0) target = $region73
    $region72: #{tpu_custom_call.1} parent=1 // pred_region
      %144 = dma.done [#allocation8], 3072
    $region73: #{tpu_custom_call.1} parent=1 // pred_fallthru
      _
    // Predicated region
    $region74: #{tpu_custom_call.1} parent=1 // pred_check
      _
    $region75: #{tpu_custom_call.1} parent=1 // pred_check_branch
      %146 = sbr.rel (0) target = $region77
    $region76: #{tpu_custom_call.1} parent=1 // pred_region
      %147 = dma.done [#allocation11], 3072
    $region77: #{tpu_custom_call.1} parent=1 // pred_fallthru
      _
    // Predicated region
    $region78: #{tpu_custom_call.1} parent=1 // pred_check
      _
    $region79: #{tpu_custom_call.1} parent=1 // pred_check_branch
      %149 = sbr.rel (0) target = $region81
    $region80: #{tpu_custom_call.1} parent=1 // pred_region
      %150 = dma.done [#allocation11], 3072
    $region81: #{tpu_custom_call.1} parent=1 // pred_fallthru
      _
    // Predicated region
    $region82: #{tpu_custom_call.1} parent=1 // pred_check
      _
    $region83: #{tpu_custom_call.1} parent=1 // pred_check_branch
      %152 = sbr.rel (0) target = $region85
    $region84: #{tpu_custom_call.1} parent=1 // pred_region
      %153 = dma.done [#allocation14], 3072
    $region85: #{tpu_custom_call.1} parent=1 // pred_fallthru
      _
    // Predicated region
    $region86: #{tpu_custom_call.1} parent=1 // pred_check
      _
    $region87: #{tpu_custom_call.1} parent=1 // pred_check_branch
      %155 = sbr.rel (0) target = $region89
    $region88: #{tpu_custom_call.1} parent=1 // pred_region
      %156 = dma.done [#allocation14], 3072
    $region89: #{tpu_custom_call.1} parent=1 // pred_fallthru
      _
    // Predicated region
    $region90: #{tpu_custom_call.1} parent=1 // pred_check
      _
    $region91: #{tpu_custom_call.1} parent=1 // pred_check_branch
      %158 = sbr.rel (0) target = $region93
    $region92: #{tpu_custom_call.1} parent=1 // pred_region
      %159 = dma.done [#allocation17], 1024
    $region93: #{tpu_custom_call.1} parent=1 // pred_fallthru
      _
    %v161 = vld [vmem:[#allocation4] sm:$0xf]
    %v162 = vld [vmem:[#allocation4 + $0x4] sm:$0xf]
    %v163 = vld [vmem:[#allocation4 + $0x8] sm:$0xf]
    %v164 = vld [vmem:[#allocation4 + $0xc] sm:$0xf]
    %v165 = vld [vmem:[#allocation4 + $0x10] sm:$0xf]
    %v166 = vld [vmem:[#allocation4 + $0x14] sm:$0xf]
    %v167 = vld [vmem:[#allocation4 + $0x18] sm:$0xf]
    %v168 = vld [vmem:[#allocation4 + $0x1c] sm:$0xf]
    %v169 = vld [vmem:[#allocation7] sm:$0xff]
    %v170 = vld [vmem:[#allocation7 + $0x8] sm:$0xf]
    %v171 = vld [vmem:[#allocation7 + $0xc] sm:$0xff]
    %v172 = vld [vmem:[#allocation7 + $0x14] sm:$0xf]
    %v173 = vld [vmem:[#allocation7 + $0x18] sm:$0xff]
    %v174 = vld [vmem:[#allocation7 + $0x20] sm:$0xf]
    %v175 = vld [vmem:[#allocation7 + $0x24] sm:$0xff]
    %v176 = vld [vmem:[#allocation7 + $0x2c] sm:$0xf]
    %v177 = vld [vmem:[#allocation7 + $0x30] sm:$0xff]
    %v178 = vld [vmem:[#allocation7 + $0x38] sm:$0xf]
    %v179 = vld [vmem:[#allocation7 + $0x3c] sm:$0xff]
    %v180 = vld [vmem:[#allocation7 + $0x44] sm:$0xf]
    %v181 = vld [vmem:[#allocation7 + $0x48] sm:$0xff]
    %v182 = vld [vmem:[#allocation7 + $0x50] sm:$0xf]
    %v183 = vld [vmem:[#allocation7 + $0x54] sm:$0xff]
    %v184 = vld [vmem:[#allocation7 + $0x5c] sm:$0xf]
    %v185 = vld [vmem:[#allocation7 + $0x60] sm:$0xff]
    %v186 = vld [vmem:[#allocation7 + $0x68] sm:$0xf]
    %v187 = vld [vmem:[#allocation7 + $0x6c] sm:$0xff]
    %v188 = vld [vmem:[#allocation7 + $0x74] sm:$0xf]
    %v189 = vld [vmem:[#allocation7 + $0x78] sm:$0xff]
    %v190 = vld [vmem:[#allocation7 + $0x80] sm:$0xf]
    %v191 = vld [vmem:[#allocation7 + $0x84] sm:$0xff]
    %v192 = vld [vmem:[#allocation7 + $0x8c] sm:$0xf]
    %v193 = vld [vmem:[#allocation7 + $0x90] sm:$0xff]
    %v194 = vld [vmem:[#allocation7 + $0x98] sm:$0xf]
    %v195 = vld [vmem:[#allocation7 + $0x9c] sm:$0xff]
    %v196 = vld [vmem:[#allocation7 + $0xa4] sm:$0xf]
    %v197 = vld [vmem:[#allocation7 + $0xa8] sm:$0xff]
    %v198 = vld [vmem:[#allocation7 + $0xb0] sm:$0xf]
    %v199 = vld [vmem:[#allocation7 + $0xb4] sm:$0xff]
    %v200 = vld [vmem:[#allocation7 + $0xbc] sm:$0xf]
    %v201 = vld [vmem:[%s3] sm:$0x7]
    %v203 = vlaneseq
    %v204 = vshrl.u32 %v203, 7
    %v205 = vsub.s32 0, %v204
    %v206 = vrot.slane %v201, %v205
    %v207 = vlaneseq
    %v208 = vshrl.u32 %v207, 7
    %v209 = vsub.s32 1, %v208
    %v210 = vrot.slane %v201, %v209
    %v211 = vlaneseq
    %v212 = vshrl.u32 %v211, 7
    %v213 = vsub.s32 2, %v212
    %v214 = vrot.slane %v201, %v213
    %v226 = vunpack.c.l.b16 %v161
    %v227 = vunpack.c.l.b16 %v162
    %v228 = vunpack.c.l.b16 %v163
    %v229 = vunpack.c.l.b16 %v164
    %v230 = vunpack.c.l.b16 %v165
    %v231 = vunpack.c.l.b16 %v166
    %v232 = vunpack.c.l.b16 %v167
    %v233 = vunpack.c.l.b16 %v168
    %v234 = vpack.c.b16 %v227, %v226
    %v235 = vpack.c.b16 %v229, %v228
    %v236 = vpack.c.b16 %v231, %v230
    %v237 = vpack.c.b16 %v233, %v232
    %v274 = vunpack.c.l.b16 %v169
    %v275 = vunpack.c.h.b16 %v169
    %v276 = vunpack.c.l.b16 %v170
    %v277 = vunpack.c.l.b16 %v171
    %v278 = vunpack.c.h.b16 %v171
    %v279 = vunpack.c.l.b16 %v172
    %v280 = vunpack.c.l.b16 %v173
    %v281 = vunpack.c.h.b16 %v173
    %v282 = vunpack.c.l.b16 %v174
    %v283 = vunpack.c.l.b16 %v175
    %v284 = vunpack.c.h.b16 %v175
    %v285 = vunpack.c.l.b16 %v176
    %v286 = vunpack.c.l.b16 %v177
    %v287 = vunpack.c.h.b16 %v177
    %v288 = vunpack.c.l.b16 %v178
    %v289 = vunpack.c.l.b16 %v179
    %v290 = vunpack.c.h.b16 %v179
    %v291 = vunpack.c.l.b16 %v180
    %v292 = vunpack.c.l.b16 %v181
    %v293 = vunpack.c.h.b16 %v181
    %v294 = vunpack.c.l.b16 %v182
    %v295 = vunpack.c.l.b16 %v183
    %v296 = vunpack.c.h.b16 %v183
    %v297 = vunpack.c.l.b16 %v184
    %v298 = vunpack.c.l.b16 %v185
    %v299 = vunpack.c.h.b16 %v185
    %v300 = vunpack.c.l.b16 %v186
    %v301 = vunpack.c.l.b16 %v187
    %v302 = vunpack.c.h.b16 %v187
    %v303 = vunpack.c.l.b16 %v188
    %v304 = vunpack.c.l.b16 %v189
    %v305 = vunpack.c.h.b16 %v189
    %v306 = vunpack.c.l.b16 %v190
    %v307 = vunpack.c.l.b16 %v191
    %v308 = vunpack.c.h.b16 %v191
    %v309 = vunpack.c.l.b16 %v192
    %v310 = vunpack.c.l.b16 %v193
    %v311 = vunpack.c.h.b16 %v193
    %v312 = vunpack.c.l.b16 %v194
    %v313 = vunpack.c.l.b16 %v195
    %v314 = vunpack.c.h.b16 %v195
    %v315 = vunpack.c.l.b16 %v196
    %v316 = vunpack.c.l.b16 %v197
    %v317 = vunpack.c.h.b16 %v197
    %v318 = vunpack.c.l.b16 %v198
    %v319 = vunpack.c.l.b16 %v199
    %v320 = vunpack.c.h.b16 %v199
    %v321 = vunpack.c.l.b16 %v200
    %v322 = vpack.c.b16 %v277, %v274
    %v323 = vpack.c.b16 %v278, %v275
    %v324 = vpack.c.b16 %v279, %v276
    %v325 = vpack.c.b16 %v283, %v280
    %v326 = vpack.c.b16 %v284, %v281
    %v327 = vpack.c.b16 %v285, %v282
    %v328 = vpack.c.b16 %v289, %v286
    %v329 = vpack.c.b16 %v290, %v287
    %v330 = vpack.c.b16 %v291, %v288
    %v331 = vpack.c.b16 %v295, %v292
    %v332 = vpack.c.b16 %v296, %v293
    %v333 = vpack.c.b16 %v297, %v294
    %v334 = vpack.c.b16 %v301, %v298
    %v335 = vpack.c.b16 %v302, %v299
    %v336 = vpack.c.b16 %v303, %v300
    %v337 = vpack.c.b16 %v307, %v304
    %v338 = vpack.c.b16 %v308, %v305
    %v339 = vpack.c.b16 %v309, %v306
    %v340 = vpack.c.b16 %v313, %v310
    %v341 = vpack.c.b16 %v314, %v311
    %v342 = vpack.c.b16 %v315, %v312
    %v343 = vpack.c.b16 %v319, %v316
    %v344 = vpack.c.b16 %v320, %v317
    %v345 = vpack.c.b16 %v321, %v318
    %370 = vmatprep.subr.bf16.mxu0 %v323
    %371 = vmatpush1.bf16.msra.mxu0 %v322
    %372 = vmatprep.subr.bf16.mxu0 %v326
    %373 = vmatpush1.bf16.msra.mxu0 %v325
    %374 = vmatprep.subr.bf16.mxu0 %v329
    %375 = vmatpush1.bf16.msra.mxu0 %v328
    %376 = vmatprep.subr.bf16.mxu0 %v332
    %377 = vmatpush1.bf16.msra.mxu0 %v331
    %378 = vmatprep.subr.bf16.mxu0 %v335
    %379 = vmatpush1.bf16.msra.mxu0 %v334
    %380 = vmatprep.subr.bf16.mxu0 %v338
    %381 = vmatpush1.bf16.msra.mxu0 %v337
    %382 = vmatprep.subr.bf16.mxu0 %v341
    %383 = vmatpush1.bf16.msra.mxu0 %v340
    %384 = vmatprep.subr.bf16.mxu0 %v344
    %385 = vmatpush1.bf16.msra.mxu0 %v343
    %386 = vmatprep.subr.bf16.mxu0 0
    %387 = vmatpush1.bf16.msra.mxu0 0
    %388 = vmatprep.subr.bf16.mxu0 0
    %389 = vmatpush1.bf16.msra.mxu0 0
    %390 = vmatprep.subr.bf16.mxu0 0
    %391 = vmatpush1.bf16.msra.mxu0 0
    %392 = vmatprep.subr.bf16.mxu0 0
    %393 = vmatpush1.bf16.msra.mxu0 0
    %394 = vmatprep.subr.bf16.mxu0 0
    %395 = vmatpush1.bf16.msra.mxu0 0
    %396 = vmatprep.subr.bf16.mxu0 0
    %397 = vmatpush1.bf16.msra.mxu0 0
    %398 = vmatprep.subr.bf16.mxu0 0
    %399 = vmatpush1.bf16.msra.mxu0 0
    %400 = vmatprep.subr.bf16.mxu0 0
    %401 = vmatpush1.bf16.msra.mxu0 0
    %402 = vmatprep.mubr.bf16.mxu0 0
    %403 = vmatmul.mubr.bf16.gmra.mrb[0].mxu0 %v234
    %v404 = vpop.f32.mrb[0].mxu0
    %v405 = vadd.f32 %v206, %v404
    %v406 = vpop.f32.mrb[0].mxu0
    %v407 = vadd.f32 %v210, %v406
    %v408 = vpop.f32.mrb[0].mxu0
    %v409 = vadd.f32 %v206, %v408
    %v410 = vpop.f32.mrb[0].mxu0
    %v411 = vadd.f32 %v210, %v410
    %412 = vmatprep.mubr.bf16.mxu0 0
    %413 = vmatmul.mubr.bf16.gmra.mrb[0].mxu0 %v235
    %v414 = vpop.f32.mrb[0].mxu0
    %v415 = vadd.f32 %v206, %v414
    %v416 = vpop.f32.mrb[0].mxu0
    %v417 = vadd.f32 %v210, %v416
    %v418 = vpop.f32.mrb[0].mxu0
    %v419 = vadd.f32 %v206, %v418
    %v420 = vpop.f32.mrb[0].mxu0
    %v421 = vadd.f32 %v210, %v420
    %422 = vmatprep.mubr.bf16.mxu0 0
    %423 = vmatmul.mubr.bf16.gmra.mrb[0].mxu0 %v236
    %v424 = vpop.f32.mrb[0].mxu0
    %v425 = vadd.f32 %v206, %v424
    %v426 = vpop.f32.mrb[0].mxu0
    %v427 = vadd.f32 %v210, %v426
    %v428 = vpop.f32.mrb[0].mxu0
    %v429 = vadd.f32 %v206, %v428
    %v430 = vpop.f32.mrb[0].mxu0
    %v431 = vadd.f32 %v210, %v430
    %432 = vmatprep.mubr.bf16.mxu0 0
    %433 = vmatmul.mubr.bf16.gmra.mrb[0].mxu0 %v237
    %v434 = vpop.f32.mrb[0].mxu0
    %v435 = vadd.f32 %v206, %v434
    %v436 = vpop.f32.mrb[0].mxu0
    %v437 = vadd.f32 %v210, %v436
    %v438 = vpop.f32.mrb[0].mxu0
    %v439 = vadd.f32 %v206, %v438
    %v440 = vpop.f32.mrb[0].mxu0
    %v441 = vadd.f32 %v210, %v440
    %442 = vdwg.mxu0
    %443 = vmatprep.subr.bf16.mxu0 0
    %444 = vmatpush1.bf16.msra.mxu0 %v324
    %445 = vmatprep.subr.bf16.mxu0 0
    %446 = vmatpush1.bf16.msra.mxu0 %v327
    %447 = vmatprep.subr.bf16.mxu0 0
    %448 = vmatpush1.bf16.msra.mxu0 %v330
    %449 = vmatprep.subr.bf16.mxu0 0
    %450 = vmatpush1.bf16.msra.mxu0 %v333
    %451 = vmatprep.subr.bf16.mxu0 0
    %452 = vmatpush1.bf16.msra.mxu0 %v336
    %453 = vmatprep.subr.bf16.mxu0 0
    %454 = vmatpush1.bf16.msra.mxu0 %v339
    %455 = vmatprep.subr.bf16.mxu0 0
    %456 = vmatpush1.bf16.msra.mxu0 %v342
    %457 = vmatprep.subr.bf16.mxu0 0
    %458 = vmatpush1.bf16.msra.mxu0 %v345
    %459 = vmatprep.subr.bf16.mxu0 0
    %460 = vmatpush1.bf16.msra.mxu0 0
    %461 = vmatprep.subr.bf16.mxu0 0
    %462 = vmatpush1.bf16.msra.mxu0 0
    %463 = vmatprep.subr.bf16.mxu0 0
    %464 = vmatpush1.bf16.msra.mxu0 0
    %465 = vmatprep.subr.bf16.mxu0 0
    %466 = vmatpush1.bf16.msra.mxu0 0
    %467 = vmatprep.subr.bf16.mxu0 0
    %468 = vmatpush1.bf16.msra.mxu0 0
    %469 = vmatprep.subr.bf16.mxu0 0
    %470 = vmatpush1.bf16.msra.mxu0 0
    %471 = vmatprep.subr.bf16.mxu0 0
    %472 = vmatpush1.bf16.msra.mxu0 0
    %473 = vmatprep.subr.bf16.mxu0 0
    %474 = vmatpush1.bf16.msra.mxu0 0
    %475 = vmatprep.mubr.bf16.mxu0 0
    %476 = vmatmul.mubr.bf16.gmra.mrb[0].mxu0 %v234
    %v477 = vpop.f32.mrb[0].mxu0
    %v478 = vadd.f32 %v214, %v477
    %v479 = vpop.f32.mrb[0].mxu0
    %v480 = vpop.f32.mrb[0].mxu0
    %v481 = vadd.f32 %v214, %v480
    %v482 = vpop.f32.mrb[0].mxu0
    %483 = vmatprep.mubr.bf16.mxu0 0
    %484 = vmatmul.mubr.bf16.gmra.mrb[0].mxu0 %v235
    %v485 = vpop.f32.mrb[0].mxu0
    %v486 = vadd.f32 %v214, %v485
    %v487 = vpop.f32.mrb[0].mxu0
    %v488 = vpop.f32.mrb[0].mxu0
    %v489 = vadd.f32 %v214, %v488
    %v490 = vpop.f32.mrb[0].mxu0
    %491 = vmatprep.mubr.bf16.mxu0 0
    %492 = vmatmul.mubr.bf16.gmra.mrb[0].mxu0 %v236
    %v493 = vpop.f32.mrb[0].mxu0
    %v494 = vadd.f32 %v214, %v493
    %v495 = vpop.f32.mrb[0].mxu0
    %v496 = vpop.f32.mrb[0].mxu0
    %v497 = vadd.f32 %v214, %v496
    %v498 = vpop.f32.mrb[0].mxu0
    %499 = vmatprep.mubr.bf16.mxu0 0
    %500 = vmatmul.mubr.bf16.gmra.mrb[0].mxu0 %v237
    %v501 = vpop.f32.mrb[0].mxu0
    %v502 = vadd.f32 %v214, %v501
    %v503 = vpop.f32.mrb[0].mxu0
    %v504 = vpop.f32.mrb[0].mxu0
    %v505 = vadd.f32 %v214, %v504
    %v506 = vpop.f32.mrb[0].mxu0
    %507 = vdwg.mxu0
    %508 = vst [vmem:[#allocation2] sm:$0xff] %v405
    %509 = vst [vmem:[#allocation2 + $0x8] sm:$0xff] %v407
    %510 = vst [vmem:[#allocation2 + $0x10] sm:$0xff] %v478
    %511 = vst [vmem:[#allocation2 + $0x18] sm:$0xff] %v409
    %512 = vst [vmem:[#allocation2 + $0x20] sm:$0xff] %v411
    %513 = vst [vmem:[#allocation2 + $0x28] sm:$0xff] %v481
    %514 = vst [vmem:[#allocation2 + $0x30] sm:$0xff] %v415
    %515 = vst [vmem:[#allocation2 + $0x38] sm:$0xff] %v417
    %516 = vst [vmem:[#allocation2 + $0x40] sm:$0xff] %v486
    %517 = vst [vmem:[#allocation2 + $0x48] sm:$0xff] %v419
    %518 = vst [vmem:[#allocation2 + $0x50] sm:$0xff] %v421
    %519 = vst [vmem:[#allocation2 + $0x58] sm:$0xff] %v489
    %520 = vst [vmem:[#allocation2 + $0x60] sm:$0xff] %v425
    %521 = vst [vmem:[#allocation2 + $0x68] sm:$0xff] %v427
    %522 = vst [vmem:[#allocation2 + $0x70] sm:$0xff] %v494
    %523 = vst [vmem:[#allocation2 + $0x78] sm:$0xff] %v429
    %524 = vst [vmem:[#allocation2 + $0x80] sm:$0xff] %v431
    %525 = vst [vmem:[#allocation2 + $0x88] sm:$0xff] %v497
    %526 = vst [vmem:[#allocation2 + $0x90] sm:$0xff] %v435
    %527 = vst [vmem:[#allocation2 + $0x98] sm:$0xff] %v437
    %528 = vst [vmem:[#allocation2 + $0xa0] sm:$0xff] %v502
    %529 = vst [vmem:[#allocation2 + $0xa8] sm:$0xff] %v439
    %530 = vst [vmem:[#allocation2 + $0xb0] sm:$0xff] %v441
    %531 = vst [vmem:[#allocation2 + $0xb8] sm:$0xff] %v505
    %v532 = vld [vmem:[#allocation2] sm:$0xff]
    %v533 = vld [vmem:[#allocation2 + $0x8] sm:$0xff]
    %v534 = vld [vmem:[#allocation2 + $0x10] sm:$0xff]
    %v535 = vld [vmem:[#allocation9] sm:$0xff]
    %v536 = vld [vmem:[#allocation9 + $0x8] sm:$0xf]
    %v537 = vld [vmem:[#allocation9 + $0xc] sm:$0xff]
    %v538 = vld [vmem:[#allocation9 + $0x14] sm:$0xf]
    %v539 = vld [vmem:[#allocation9 + $0x18] sm:$0xff]
    %v540 = vld [vmem:[#allocation9 + $0x20] sm:$0xf]
    %v541 = vld [vmem:[#allocation9 + $0x24] sm:$0xff]
    %v542 = vld [vmem:[#allocation9 + $0x2c] sm:$0xf]
    %v543 = vld [vmem:[#allocation9 + $0x30] sm:$0xff]
    %v544 = vld [vmem:[#allocation9 + $0x38] sm:$0xf]
    %v545 = vld [vmem:[#allocation9 + $0x3c] sm:$0xff]
    %v546 = vld [vmem:[#allocation9 + $0x44] sm:$0xf]
    %v547 = vld [vmem:[#allocation9 + $0x48] sm:$0xff]
    %v548 = vld [vmem:[#allocation9 + $0x50] sm:$0xf]
    %v549 = vld [vmem:[#allocation9 + $0x54] sm:$0xff]
    %v550 = vld [vmem:[#allocation9 + $0x5c] sm:$0xf]
    %v551 = vld [vmem:[#allocation9 + $0x60] sm:$0xff]
    %v552 = vld [vmem:[#allocation9 + $0x68] sm:$0xf]
    %v553 = vld [vmem:[#allocation9 + $0x6c] sm:$0xff]
    %v554 = vld [vmem:[#allocation9 + $0x74] sm:$0xf]
    %v555 = vld [vmem:[#allocation9 + $0x78] sm:$0xff]
    %v556 = vld [vmem:[#allocation9 + $0x80] sm:$0xf]
    %v557 = vld [vmem:[#allocation9 + $0x84] sm:$0xff]
    %v558 = vld [vmem:[#allocation9 + $0x8c] sm:$0xf]
    %v559 = vld [vmem:[#allocation9 + $0x90] sm:$0xff]
    %v560 = vld [vmem:[#allocation9 + $0x98] sm:$0xf]
    %v561 = vld [vmem:[#allocation9 + $0x9c] sm:$0xff]
    %v562 = vld [vmem:[#allocation9 + $0xa4] sm:$0xf]
    %v563 = vld [vmem:[#allocation9 + $0xa8] sm:$0xff]
    %v564 = vld [vmem:[#allocation9 + $0xb0] sm:$0xf]
    %v565 = vld [vmem:[#allocation9 + $0xb4] sm:$0xff]
    %v566 = vld [vmem:[#allocation9 + $0xbc] sm:$0xf]
    %v599 = vunpack.c.l.b16 %v535
    %v600 = vunpack.c.h.b16 %v535
    %v601 = vunpack.c.l.b16 %v536
    %v602 = vunpack.c.l.b16 %v537
    %v603 = vunpack.c.h.b16 %v537
    %v604 = vunpack.c.l.b16 %v538
    %v605 = vunpack.c.l.b16 %v539
    %v606 = vunpack.c.h.b16 %v539
    %v607 = vunpack.c.l.b16 %v540
    %v608 = vunpack.c.l.b16 %v541
    %v609 = vunpack.c.h.b16 %v541
    %v610 = vunpack.c.l.b16 %v542
    %v611 = vunpack.c.l.b16 %v543
    %v612 = vunpack.c.h.b16 %v543
    %v613 = vunpack.c.l.b16 %v544
    %v614 = vunpack.c.l.b16 %v545
    %v615 = vunpack.c.h.b16 %v545
    %v616 = vunpack.c.l.b16 %v546
    %v617 = vunpack.c.l.b16 %v547
    %v618 = vunpack.c.h.b16 %v547
    %v619 = vunpack.c.l.b16 %v548
    %v620 = vunpack.c.l.b16 %v549
    %v621 = vunpack.c.h.b16 %v549
    %v622 = vunpack.c.l.b16 %v550
    %v623 = vunpack.c.l.b16 %v551
    %v624 = vunpack.c.h.b16 %v551
    %v625 = vunpack.c.l.b16 %v552
    %v626 = vunpack.c.l.b16 %v553
    %v627 = vunpack.c.h.b16 %v553
    %v628 = vunpack.c.l.b16 %v554
    %v629 = vunpack.c.l.b16 %v555
    %v630 = vunpack.c.h.b16 %v555
    %v631 = vunpack.c.l.b16 %v556
    %v632 = vunpack.c.l.b16 %v557
    %v633 = vunpack.c.h.b16 %v557
    %v634 = vunpack.c.l.b16 %v558
    %v635 = vunpack.c.l.b16 %v559
    %v636 = vunpack.c.h.b16 %v559
    %v637 = vunpack.c.l.b16 %v560
    %v638 = vunpack.c.l.b16 %v561
    %v639 = vunpack.c.h.b16 %v561
    %v640 = vunpack.c.l.b16 %v562
    %v641 = vunpack.c.l.b16 %v563
    %v642 = vunpack.c.h.b16 %v563
    %v643 = vunpack.c.l.b16 %v564
    %v644 = vunpack.c.l.b16 %v565
    %v645 = vunpack.c.h.b16 %v565
    %v646 = vunpack.c.l.b16 %v566
    %v647 = vpack.c.b16 %v602, %v599
    %v648 = vpack.c.b16 %v603, %v600
    %v649 = vpack.c.b16 %v604, %v601
    %v650 = vpack.c.b16 %v608, %v605
    %v651 = vpack.c.b16 %v609, %v606
    %v652 = vpack.c.b16 %v610, %v607
    %v653 = vpack.c.b16 %v614, %v611
    %v654 = vpack.c.b16 %v615, %v612
    %v655 = vpack.c.b16 %v616, %v613
    %v656 = vpack.c.b16 %v620, %v617
    %v657 = vpack.c.b16 %v621, %v618
    %v658 = vpack.c.b16 %v622, %v619
    %v659 = vpack.c.b16 %v626, %v623
    %v660 = vpack.c.b16 %v627, %v624
    %v661 = vpack.c.b16 %v628, %v625
    %v662 = vpack.c.b16 %v632, %v629
    %v663 = vpack.c.b16 %v633, %v630
    %v664 = vpack.c.b16 %v634, %v631
    %v665 = vpack.c.b16 %v638, %v635
    %v666 = vpack.c.b16 %v639, %v636
    %v667 = vpack.c.b16 %v640, %v637
    %v668 = vpack.c.b16 %v644, %v641
    %v669 = vpack.c.b16 %v645, %v642
    %v670 = vpack.c.b16 %v646, %v643
    %695 = vmatprep.subr.bf16.mxu0 %v648
    %696 = vmatpush1.bf16.msra.mxu0 %v647
    %697 = vmatprep.subr.bf16.mxu0 %v651
    %698 = vmatpush1.bf16.msra.mxu0 %v650
    %699 = vmatprep.subr.bf16.mxu0 %v654
    %700 = vmatpush1.bf16.msra.mxu0 %v653
    %701 = vmatprep.subr.bf16.mxu0 %v657
    %702 = vmatpush1.bf16.msra.mxu0 %v656
    %703 = vmatprep.subr.bf16.mxu0 %v660
    %704 = vmatpush1.bf16.msra.mxu0 %v659
    %705 = vmatprep.subr.bf16.mxu0 %v663
    %706 = vmatpush1.bf16.msra.mxu0 %v662
    %707 = vmatprep.subr.bf16.mxu0 %v666
    %708 = vmatpush1.bf16.msra.mxu0 %v665
    %709 = vmatprep.subr.bf16.mxu0 %v669
    %710 = vmatpush1.bf16.msra.mxu0 %v668
    %711 = vmatprep.subr.bf16.mxu0 0
    %712 = vmatpush1.bf16.msra.mxu0 0
    %713 = vmatprep.subr.bf16.mxu0 0
    %714 = vmatpush1.bf16.msra.mxu0 0
    %715 = vmatprep.subr.bf16.mxu0 0
    %716 = vmatpush1.bf16.msra.mxu0 0
    %717 = vmatprep.subr.bf16.mxu0 0
    %718 = vmatpush1.bf16.msra.mxu0 0
    %719 = vmatprep.subr.bf16.mxu0 0
    %720 = vmatpush1.bf16.msra.mxu0 0
    %721 = vmatprep.subr.bf16.mxu0 0
    %722 = vmatpush1.bf16.msra.mxu0 0
    %723 = vmatprep.subr.bf16.mxu0 0
    %724 = vmatpush1.bf16.msra.mxu0 0
    %725 = vmatprep.subr.bf16.mxu0 0
    %726 = vmatpush1.bf16.msra.mxu0 0
    %727 = vmatprep.mubr.bf16.mxu0 0
    %728 = vmatmul.mubr.bf16.gmra.mrb[0].mxu0 0
    %v729 = vpop.f32.mrb[0].mxu0
    %v730 = vadd.f32 0.0, %v729
    %v731 = vpop.f32.mrb[0].mxu0
    %v732 = vadd.f32 0.0, %v731
    %v733 = vpop.f32.mrb[0].mxu0
    %v734 = vpop.f32.mrb[0].mxu0
    %735 = vdwg.mxu0
    %736 = vmatprep.subr.bf16.mxu0 0
    %737 = vmatpush1.bf16.msra.mxu0 %v649
    %738 = vmatprep.subr.bf16.mxu0 0
    %739 = vmatpush1.bf16.msra.mxu0 %v652
    %740 = vmatprep.subr.bf16.mxu0 0
    %741 = vmatpush1.bf16.msra.mxu0 %v655
    %742 = vmatprep.subr.bf16.mxu0 0
    %743 = vmatpush1.bf16.msra.mxu0 %v658
    %744 = vmatprep.subr.bf16.mxu0 0
    %745 = vmatpush1.bf16.msra.mxu0 %v661
    %746 = vmatprep.subr.bf16.mxu0 0
    %747 = vmatpush1.bf16.msra.mxu0 %v664
    %748 = vmatprep.subr.bf16.mxu0 0
    %749 = vmatpush1.bf16.msra.mxu0 %v667
    %750 = vmatprep.subr.bf16.mxu0 0
    %751 = vmatpush1.bf16.msra.mxu0 %v670
    %752 = vmatprep.subr.bf16.mxu0 0
    %753 = vmatpush1.bf16.msra.mxu0 0
    %754 = vmatprep.subr.bf16.mxu0 0
    %755 = vmatpush1.bf16.msra.mxu0 0
    %756 = vmatprep.subr.bf16.mxu0 0
    %757 = vmatpush1.bf16.msra.mxu0 0
    %758 = vmatprep.subr.bf16.mxu0 0
    %759 = vmatpush1.bf16.msra.mxu0 0
    %760 = vmatprep.subr.bf16.mxu0 0
    %761 = vmatpush1.bf16.msra.mxu0 0
    %762 = vmatprep.subr.bf16.mxu0 0
    %763 = vmatpush1.bf16.msra.mxu0 0
    %764 = vmatprep.subr.bf16.mxu0 0
    %765 = vmatpush1.bf16.msra.mxu0 0
    %766 = vmatprep.subr.bf16.mxu0 0
    %767 = vmatpush1.bf16.msra.mxu0 0
    %768 = vmatprep.mubr.bf16.mxu0 0
    %769 = vmatmul.mubr.bf16.gmra.mrb[0].mxu0 0
    %v770 = vpop.f32.mrb[0].mxu0
    %v771 = vadd.f32 0.0, %v770
    %v772 = vpop.f32.mrb[0].mxu0
    %v773 = vpop.f32.mrb[0].mxu0
    %v774 = vpop.f32.mrb[0].mxu0
    %775 = vdwg.mxu0
    %v776 = vadd.f32 %v532, %v730
    %v777 = vxor.u32 %v776, 2147483648
    %v778 = vmul.f32 %v777, 1.442695
    %v779 = vpow.pop %v778
    %v780 = vadd.f32 %v779, 1.0
    %v781 = vrcp.pop %v780
    %v782 = vmul.f32 1.0, %v781
    %v783 = vadd.f32 %v533, %v732
    %v784 = vxor.u32 %v783, 2147483648
    %v785 = vmul.f32 %v784, 1.442695
    %v786 = vpow.pop %v785
    %v787 = vadd.f32 %v786, 1.0
    %v788 = vrcp.pop %v787
    %v789 = vmul.f32 1.0, %v788
    %v790 = vld [vmem:[%s4] sm:$0x1]
    %v792 = vlaneseq
    %v793 = vshrl.u32 %v792, 7
    %v794 = vsub.s32 0, %v793
    %v795 = vrot.slane %v790, %v794
    %v797 = vadd.f32 %v771, %v795
    %v798 = vmul.f32 %v782, %v797
    %v799 = vadd.f32 %v534, %v798
    %v800 = vtanh.pop %v799
    %v801 = vsub.f32 1.0, %v789
    %v802 = vmul.f32 %v801, %v800
    %v803 = vmul.f32 %v789, 0.0
    %v804 = vadd.f32 %v802, %v803
    %v805 = vld [vmem:[#allocation2 + $0x18] sm:$0xff]
    %v806 = vld [vmem:[#allocation2 + $0x20] sm:$0xff]
    %v807 = vld [vmem:[#allocation2 + $0x28] sm:$0xff]
    %v808 = vpack.c.bf16 %v804, %v804
    %809 = vmatprep.subr.bf16.mxu0 %v648
    %810 = vmatpush1.bf16.msra.mxu0 %v647
    %811 = vmatprep.subr.bf16.mxu0 %v651
    %812 = vmatpush1.bf16.msra.mxu0 %v650
    %813 = vmatprep.subr.bf16.mxu0 %v654
    %814 = vmatpush1.bf16.msra.mxu0 %v653
    %815 = vmatprep.subr.bf16.mxu0 %v657
    %816 = vmatpush1.bf16.msra.mxu0 %v656
    %817 = vmatprep.subr.bf16.mxu0 %v660
    %818 = vmatpush1.bf16.msra.mxu0 %v659
    %819 = vmatprep.subr.bf16.mxu0 %v663
    %820 = vmatpush1.bf16.msra.mxu0 %v662
    %821 = vmatprep.subr.bf16.mxu0 %v666
    %822 = vmatpush1.bf16.msra.mxu0 %v665
    %823 = vmatprep.subr.bf16.mxu0 %v669
    %824 = vmatpush1.bf16.msra.mxu0 %v668
    %825 = vmatprep.subr.bf16.mxu0 0
    %826 = vmatpush1.bf16.msra.mxu0 0
    %827 = vmatprep.subr.bf16.mxu0 0
    %828 = vmatpush1.bf16.msra.mxu0 0
    %829 = vmatprep.subr.bf16.mxu0 0
    %830 = vmatpush1.bf16.msra.mxu0 0
    %831 = vmatprep.subr.bf16.mxu0 0
    %832 = vmatpush1.bf16.msra.mxu0 0
    %833 = vmatprep.subr.bf16.mxu0 0
    %834 = vmatpush1.bf16.msra.mxu0 0
    %835 = vmatprep.subr.bf16.mxu0 0
    %836 = vmatpush1.bf16.msra.mxu0 0
    %837 = vmatprep.subr.bf16.mxu0 0
    %838 = vmatpush1.bf16.msra.mxu0 0
    %839 = vmatprep.subr.bf16.mxu0 0
    %840 = vmatpush1.bf16.msra.mxu0 0
    %841 = vmatprep.mubr.bf16.mxu0 0
    %842 = vmatmul.mubr.bf16.gmra.mrb[0].mxu0 %v808
    %v843 = vpop.f32.mrb[0].mxu0
    %v844 = vadd.f32 0.0, %v843
    %v845 = vpop.f32.mrb[0].mxu0
    %v846 = vadd.f32 0.0, %v845
    %v847 = vpop.f32.mrb[0].mxu0
    %v848 = vpop.f32.mrb[0].mxu0
    %849 = vdwg.mxu0
    %850 = vmatprep.subr.bf16.mxu0 0
    %851 = vmatpush1.bf16.msra.mxu0 %v649
    %852 = vmatprep.subr.bf16.mxu0 0
    %853 = vmatpush1.bf16.msra.mxu0 %v652
    %854 = vmatprep.subr.bf16.mxu0 0
    %855 = vmatpush1.bf16.msra.mxu0 %v655
    %856 = vmatprep.subr.bf16.mxu0 0
    %857 = vmatpush1.bf16.msra.mxu0 %v658
    %858 = vmatprep.subr.bf16.mxu0 0
    %859 = vmatpush1.bf16.msra.mxu0 %v661
    %860 = vmatprep.subr.bf16.mxu0 0
    %861 = vmatpush1.bf16.msra.mxu0 %v664
    %862 = vmatprep.subr.bf16.mxu0 0
    %863 = vmatpush1.bf16.msra.mxu0 %v667
    %864 = vmatprep.subr.bf16.mxu0 0
    %865 = vmatpush1.bf16.msra.mxu0 %v670
    %866 = vmatprep.subr.bf16.mxu0 0
    %867 = vmatpush1.bf16.msra.mxu0 0
    %868 = vmatprep.subr.bf16.mxu0 0
    %869 = vmatpush1.bf16.msra.mxu0 0
    %870 = vmatprep.subr.bf16.mxu0 0
    %871 = vmatpush1.bf16.msra.mxu0 0
    %872 = vmatprep.subr.bf16.mxu0 0
    %873 = vmatpush1.bf16.msra.mxu0 0
    %874 = vmatprep.subr.bf16.mxu0 0
    %875 = vmatpush1.bf16.msra.mxu0 0
    %876 = vmatprep.subr.bf16.mxu0 0
    %877 = vmatpush1.bf16.msra.mxu0 0
    %878 = vmatprep.subr.bf16.mxu0 0
    %879 = vmatpush1.bf16.msra.mxu0 0
    %880 = vmatprep.subr.bf16.mxu0 0
    %881 = vmatpush1.bf16.msra.mxu0 0
    %882 = vmatprep.mubr.bf16.mxu0 0
    %883 = vmatmul.mubr.bf16.gmra.mrb[0].mxu0 %v808
    %v884 = vpop.f32.mrb[0].mxu0
    %v885 = vadd.f32 0.0, %v884
    %v886 = vpop.f32.mrb[0].mxu0
    %v887 = vpop.f32.mrb[0].mxu0
    %v888 = vpop.f32.mrb[0].mxu0
    %889 = vdwg.mxu0
    %v890 = vadd.f32 %v805, %v844
    %v891 = vxor.u32 %v890, 2147483648
    %v892 = vmul.f32 %v891, 1.442695
    %v893 = vpow.pop %v892
    %v894 = vadd.f32 %v893, 1.0
    %v895 = vrcp.pop %v894
    %v896 = vmul.f32 1.0, %v895
    %v897 = vadd.f32 %v806, %v846
    %v898 = vxor.u32 %v897, 2147483648
    %v899 = vmul.f32 %v898, 1.442695
    %v900 = vpow.pop %v899
    %v901 = vadd.f32 %v900, 1.0
    %v902 = vrcp.pop %v901
    %v903 = vmul.f32 1.0, %v902
    %v904 = vadd.f32 %v885, %v795
    %v905 = vmul.f32 %v896, %v904
    %v906 = vadd.f32 %v807, %v905
    %v907 = vtanh.pop %v906
    %v908 = vsub.f32 1.0, %v903
    %v909 = vmul.f32 %v908, %v907
    %v910 = vmul.f32 %v903, %v804
    %v911 = vadd.f32 %v909, %v910
    %v912 = vld [vmem:[#allocation10] sm:$0xff]
    %v913 = vld [vmem:[#allocation10 + $0x8] sm:$0xf]
    %v914 = vld [vmem:[#allocation10 + $0xc] sm:$0xff]
    %v915 = vld [vmem:[#allocation10 + $0x14] sm:$0xf]
    %v916 = vld [vmem:[#allocation10 + $0x18] sm:$0xff]
    %v917 = vld [vmem:[#allocation10 + $0x20] sm:$0xf]
    %v918 = vld [vmem:[#allocation10 + $0x24] sm:$0xff]
    %v919 = vld [vmem:[#allocation10 + $0x2c] sm:$0xf]
    %v920 = vld [vmem:[#allocation10 + $0x30] sm:$0xff]
    %v921 = vld [vmem:[#allocation10 + $0x38] sm:$0xf]
    %v922 = vld [vmem:[#allocation10 + $0x3c] sm:$0xff]
    %v923 = vld [vmem:[#allocation10 + $0x44] sm:$0xf]
    %v924 = vld [vmem:[#allocation10 + $0x48] sm:$0xff]
    %v925 = vld [vmem:[#allocation10 + $0x50] sm:$0xf]
    %v926 = vld [vmem:[#allocation10 + $0x54] sm:$0xff]
    %v927 = vld [vmem:[#allocation10 + $0x5c] sm:$0xf]
    %v928 = vld [vmem:[#allocation10 + $0x60] sm:$0xff]
    %v929 = vld [vmem:[#allocation10 + $0x68] sm:$0xf]
    %v930 = vld [vmem:[#allocation10 + $0x6c] sm:$0xff]
    %v931 = vld [vmem:[#allocation10 + $0x74] sm:$0xf]
    %v932 = vld [vmem:[#allocation10 + $0x78] sm:$0xff]
    %v933 = vld [vmem:[#allocation10 + $0x80] sm:$0xf]
    %v934 = vld [vmem:[#allocation10 + $0x84] sm:$0xff]
    %v935 = vld [vmem:[#allocation10 + $0x8c] sm:$0xf]
    %v936 = vld [vmem:[#allocation10 + $0x90] sm:$0xff]
    %v937 = vld [vmem:[#allocation10 + $0x98] sm:$0xf]
    %v938 = vld [vmem:[#allocation10 + $0x9c] sm:$0xff]
    %v939 = vld [vmem:[#allocation10 + $0xa4] sm:$0xf]
    %v940 = vld [vmem:[#allocation10 + $0xa8] sm:$0xff]
    %v941 = vld [vmem:[#allocation10 + $0xb0] sm:$0xf]
    %v942 = vld [vmem:[#allocation10 + $0xb4] sm:$0xff]
    %v943 = vld [vmem:[#allocation10 + $0xbc] sm:$0xf]
    %v944 = vld [vmem:[%s7] sm:$0x7]
    %v946 = vlaneseq
    %v947 = vshrl.u32 %v946, 7
    %v948 = vsub.s32 0, %v947
    %v949 = vrot.slane %v944, %v948
    %v950 = vlaneseq
    %v951 = vshrl.u32 %v950, 7
    %v952 = vsub.s32 1, %v951
    %v953 = vrot.slane %v944, %v952
    %v954 = vlaneseq
    %v955 = vshrl.u32 %v954, 7
    %v956 = vsub.s32 2, %v955
    %v957 = vrot.slane %v944, %v956
    %v993 = vunpack.c.l.b16 %v912
    %v994 = vunpack.c.h.b16 %v912
    %v995 = vunpack.c.l.b16 %v913
    %v996 = vunpack.c.l.b16 %v914
    %v997 = vunpack.c.h.b16 %v914
    %v998 = vunpack.c.l.b16 %v915
    %v999 = vunpack.c.l.b16 %v916
    %v1000 = vunpack.c.h.b16 %v916
    %v1001 = vunpack.c.l.b16 %v917
    %v1002 = vunpack.c.l.b16 %v918
    %v1003 = vunpack.c.h.b16 %v918
    %v1004 = vunpack.c.l.b16 %v919
    %v1005 = vunpack.c.l.b16 %v920
    %v1006 = vunpack.c.h.b16 %v920
    %v1007 = vunpack.c.l.b16 %v921
    %v1008 = vunpack.c.l.b16 %v922
    %v1009 = vunpack.c.h.b16 %v922
    %v1010 = vunpack.c.l.b16 %v923
    %v1011 = vunpack.c.l.b16 %v924
    %v1012 = vunpack.c.h.b16 %v924
    %v1013 = vunpack.c.l.b16 %v925
    %v1014 = vunpack.c.l.b16 %v926
    %v1015 = vunpack.c.h.b16 %v926
    %v1016 = vunpack.c.l.b16 %v927
    %v1017 = vunpack.c.l.b16 %v928
    %v1018 = vunpack.c.h.b16 %v928
    %v1019 = vunpack.c.l.b16 %v929
    %v1020 = vunpack.c.l.b16 %v930
    %v1021 = vunpack.c.h.b16 %v930
    %v1022 = vunpack.c.l.b16 %v931
    %v1023 = vunpack.c.l.b16 %v932
    %v1024 = vunpack.c.h.b16 %v932
    %v1025 = vunpack.c.l.b16 %v933
    %v1026 = vunpack.c.l.b16 %v934
    %v1027 = vunpack.c.h.b16 %v934
    %v1028 = vunpack.c.l.b16 %v935
    %v1029 = vunpack.c.l.b16 %v936
    %v1030 = vunpack.c.h.b16 %v936
    %v1031 = vunpack.c.l.b16 %v937
    %v1032 = vunpack.c.l.b16 %v938
    %v1033 = vunpack.c.h.b16 %v938
    %v1034 = vunpack.c.l.b16 %v939
    %v1035 = vunpack.c.l.b16 %v940
    %v1036 = vunpack.c.h.b16 %v940
    %v1037 = vunpack.c.l.b16 %v941
    %v1038 = vunpack.c.l.b16 %v942
    %v1039 = vunpack.c.h.b16 %v942
    %v1040 = vunpack.c.l.b16 %v943
    %v1041 = vpack.c.b16 %v996, %v993
    %v1042 = vpack.c.b16 %v997, %v994
    %v1043 = vpack.c.b16 %v998, %v995
    %v1044 = vpack.c.b16 %v1002, %v999
    %v1045 = vpack.c.b16 %v1003, %v1000
    %v1046 = vpack.c.b16 %v1004, %v1001
    %v1047 = vpack.c.b16 %v1008, %v1005
    %v1048 = vpack.c.b16 %v1009, %v1006
    %v1049 = vpack.c.b16 %v1010, %v1007
    %v1050 = vpack.c.b16 %v1014, %v1011
    %v1051 = vpack.c.b16 %v1015, %v1012
    %v1052 = vpack.c.b16 %v1016, %v1013
    %v1053 = vpack.c.b16 %v1020, %v1017
    %v1054 = vpack.c.b16 %v1021, %v1018
    %v1055 = vpack.c.b16 %v1022, %v1019
    %v1056 = vpack.c.b16 %v1026, %v1023
    %v1057 = vpack.c.b16 %v1027, %v1024
    %v1058 = vpack.c.b16 %v1028, %v1025
    %v1059 = vpack.c.b16 %v1032, %v1029
    %v1060 = vpack.c.b16 %v1033, %v1030
    %v1061 = vpack.c.b16 %v1034, %v1031
    %v1062 = vpack.c.b16 %v1038, %v1035
    %v1063 = vpack.c.b16 %v1039, %v1036
    %v1064 = vpack.c.b16 %v1040, %v1037
    %1089 = vmatprep.subr.bf16.mxu0 %v1042
    %1090 = vmatpush1.bf16.msra.mxu0 %v1041
    %1091 = vmatprep.subr.bf16.mxu0 %v1045
    %1092 = vmatpush1.bf16.msra.mxu0 %v1044
    %1093 = vmatprep.subr.bf16.mxu0 %v1048
    %1094 = vmatpush1.bf16.msra.mxu0 %v1047
    %1095 = vmatprep.subr.bf16.mxu0 %v1051
    %1096 = vmatpush1.bf16.msra.mxu0 %v1050
    %1097 = vmatprep.subr.bf16.mxu0 %v1054
    %1098 = vmatpush1.bf16.msra.mxu0 %v1053
    %1099 = vmatprep.subr.bf16.mxu0 %v1057
    %1100 = vmatpush1.bf16.msra.mxu0 %v1056
    %1101 = vmatprep.subr.bf16.mxu0 %v1060
    %1102 = vmatpush1.bf16.msra.mxu0 %v1059
    %1103 = vmatprep.subr.bf16.mxu0 %v1063
    %1104 = vmatpush1.bf16.msra.mxu0 %v1062
    %1105 = vmatprep.subr.bf16.mxu0 0
    %1106 = vmatpush1.bf16.msra.mxu0 0
    %1107 = vmatprep.subr.bf16.mxu0 0
    %1108 = vmatpush1.bf16.msra.mxu0 0
    %1109 = vmatprep.subr.bf16.mxu0 0
    %1110 = vmatpush1.bf16.msra.mxu0 0
    %1111 = vmatprep.subr.bf16.mxu0 0
    %1112 = vmatpush1.bf16.msra.mxu0 0
    %1113 = vmatprep.subr.bf16.mxu0 0
    %1114 = vmatpush1.bf16.msra.mxu0 0
    %1115 = vmatprep.subr.bf16.mxu0 0
    %1116 = vmatpush1.bf16.msra.mxu0 0
    %1117 = vmatprep.subr.bf16.mxu0 0
    %1118 = vmatpush1.bf16.msra.mxu0 0
    %1119 = vmatprep.subr.bf16.mxu0 0
    %1120 = vmatpush1.bf16.msra.mxu0 0
    %1121 = vmatprep.mubr.bf16.mxu0 0
    %1122 = vmatmul.mubr.bf16.gmra.mrb[0].mxu0 %v808
    %v1123 = vpop.f32.mrb[0].mxu0
    %v1124 = vadd.f32 %v949, %v1123
    %v1125 = vpop.f32.mrb[0].mxu0
    %v1126 = vadd.f32 %v953, %v1125
    %v1127 = vpop.f32.mrb[0].mxu0
    %v1128 = vpop.f32.mrb[0].mxu0
    %1129 = vdwg.mxu0
    %1130 = vmatprep.subr.bf16.mxu0 0
    %1131 = vmatpush1.bf16.msra.mxu0 %v1043
    %1132 = vmatprep.subr.bf16.mxu0 0
    %1133 = vmatpush1.bf16.msra.mxu0 %v1046
    %1134 = vmatprep.subr.bf16.mxu0 0
    %1135 = vmatpush1.bf16.msra.mxu0 %v1049
    %1136 = vmatprep.subr.bf16.mxu0 0
    %1137 = vmatpush1.bf16.msra.mxu0 %v1052
    %1138 = vmatprep.subr.bf16.mxu0 0
    %1139 = vmatpush1.bf16.msra.mxu0 %v1055
    %1140 = vmatprep.subr.bf16.mxu0 0
    %1141 = vmatpush1.bf16.msra.mxu0 %v1058
    %1142 = vmatprep.subr.bf16.mxu0 0
    %1143 = vmatpush1.bf16.msra.mxu0 %v1061
    %1144 = vmatprep.subr.bf16.mxu0 0
    %1145 = vmatpush1.bf16.msra.mxu0 %v1064
    %1146 = vmatprep.subr.bf16.mxu0 0
    %1147 = vmatpush1.bf16.msra.mxu0 0
    %1148 = vmatprep.subr.bf16.mxu0 0
    %1149 = vmatpush1.bf16.msra.mxu0 0
    %1150 = vmatprep.subr.bf16.mxu0 0
    %1151 = vmatpush1.bf16.msra.mxu0 0
    %1152 = vmatprep.subr.bf16.mxu0 0
    %1153 = vmatpush1.bf16.msra.mxu0 0
    %1154 = vmatprep.subr.bf16.mxu0 0
    %1155 = vmatpush1.bf16.msra.mxu0 0
    %1156 = vmatprep.subr.bf16.mxu0 0
    %1157 = vmatpush1.bf16.msra.mxu0 0
    %1158 = vmatprep.subr.bf16.mxu0 0
    %1159 = vmatpush1.bf16.msra.mxu0 0
    %1160 = vmatprep.subr.bf16.mxu0 0
    %1161 = vmatpush1.bf16.msra.mxu0 0
    %1162 = vmatprep.mubr.bf16.mxu0 0
    %1163 = vmatmul.mubr.bf16.gmra.mrb[0].mxu0 %v808
    %v1164 = vpop.f32.mrb[0].mxu0
    %v1165 = vadd.f32 %v957, %v1164
    %v1166 = vpop.f32.mrb[0].mxu0
    %v1167 = vpop.f32.mrb[0].mxu0
    %v1168 = vpop.f32.mrb[0].mxu0
    %1169 = vdwg.mxu0
    %v1170 = vld [vmem:[#allocation12] sm:$0xff]
    %v1171 = vld [vmem:[#allocation12 + $0x8] sm:$0xf]
    %v1172 = vld [vmem:[#allocation12 + $0xc] sm:$0xff]
    %v1173 = vld [vmem:[#allocation12 + $0x14] sm:$0xf]
    %v1174 = vld [vmem:[#allocation12 + $0x18] sm:$0xff]
    %v1175 = vld [vmem:[#allocation12 + $0x20] sm:$0xf]
    %v1176 = vld [vmem:[#allocation12 + $0x24] sm:$0xff]
    %v1177 = vld [vmem:[#allocation12 + $0x2c] sm:$0xf]
    %v1178 = vld [vmem:[#allocation12 + $0x30] sm:$0xff]
    %v1179 = vld [vmem:[#allocation12 + $0x38] sm:$0xf]
    %v1180 = vld [vmem:[#allocation12 + $0x3c] sm:$0xff]
    %v1181 = vld [vmem:[#allocation12 + $0x44] sm:$0xf]
    %v1182 = vld [vmem:[#allocation12 + $0x48] sm:$0xff]
    %v1183 = vld [vmem:[#allocation12 + $0x50] sm:$0xf]
    %v1184 = vld [vmem:[#allocation12 + $0x54] sm:$0xff]
    %v1185 = vld [vmem:[#allocation12 + $0x5c] sm:$0xf]
    %v1186 = vld [vmem:[#allocation12 + $0x60] sm:$0xff]
    %v1187 = vld [vmem:[#allocation12 + $0x68] sm:$0xf]
    %v1188 = vld [vmem:[#allocation12 + $0x6c] sm:$0xff]
    %v1189 = vld [vmem:[#allocation12 + $0x74] sm:$0xf]
    %v1190 = vld [vmem:[#allocation12 + $0x78] sm:$0xff]
    %v1191 = vld [vmem:[#allocation12 + $0x80] sm:$0xf]
    %v1192 = vld [vmem:[#allocation12 + $0x84] sm:$0xff]
    %v1193 = vld [vmem:[#allocation12 + $0x8c] sm:$0xf]
    %v1194 = vld [vmem:[#allocation12 + $0x90] sm:$0xff]
    %v1195 = vld [vmem:[#allocation12 + $0x98] sm:$0xf]
    %v1196 = vld [vmem:[#allocation12 + $0x9c] sm:$0xff]
    %v1197 = vld [vmem:[#allocation12 + $0xa4] sm:$0xf]
    %v1198 = vld [vmem:[#allocation12 + $0xa8] sm:$0xff]
    %v1199 = vld [vmem:[#allocation12 + $0xb0] sm:$0xf]
    %v1200 = vld [vmem:[#allocation12 + $0xb4] sm:$0xff]
    %v1201 = vld [vmem:[#allocation12 + $0xbc] sm:$0xf]
    %v1234 = vunpack.c.l.b16 %v1170
    %v1235 = vunpack.c.h.b16 %v1170
    %v1236 = vunpack.c.l.b16 %v1171
    %v1237 = vunpack.c.l.b16 %v1172
    %v1238 = vunpack.c.h.b16 %v1172
    %v1239 = vunpack.c.l.b16 %v1173
    %v1240 = vunpack.c.l.b16 %v1174
    %v1241 = vunpack.c.h.b16 %v1174
    %v1242 = vunpack.c.l.b16 %v1175
    %v1243 = vunpack.c.l.b16 %v1176
    %v1244 = vunpack.c.h.b16 %v1176
    %v1245 = vunpack.c.l.b16 %v1177
    %v1246 = vunpack.c.l.b16 %v1178
    %v1247 = vunpack.c.h.b16 %v1178
    %v1248 = vunpack.c.l.b16 %v1179
    %v1249 = vunpack.c.l.b16 %v1180
    %v1250 = vunpack.c.h.b16 %v1180
    %v1251 = vunpack.c.l.b16 %v1181
    %v1252 = vunpack.c.l.b16 %v1182
    %v1253 = vunpack.c.h.b16 %v1182
    %v1254 = vunpack.c.l.b16 %v1183
    %v1255 = vunpack.c.l.b16 %v1184
    %v1256 = vunpack.c.h.b16 %v1184
    %v1257 = vunpack.c.l.b16 %v1185
    %v1258 = vunpack.c.l.b16 %v1186
    %v1259 = vunpack.c.h.b16 %v1186
    %v1260 = vunpack.c.l.b16 %v1187
    %v1261 = vunpack.c.l.b16 %v1188
    %v1262 = vunpack.c.h.b16 %v1188
    %v1263 = vunpack.c.l.b16 %v1189
    %v1264 = vunpack.c.l.b16 %v1190
    %v1265 = vunpack.c.h.b16 %v1190
    %v1266 = vunpack.c.l.b16 %v1191
    %v1267 = vunpack.c.l.b16 %v1192
    %v1268 = vunpack.c.h.b16 %v1192
    %v1269 = vunpack.c.l.b16 %v1193
    %v1270 = vunpack.c.l.b16 %v1194
    %v1271 = vunpack.c.h.b16 %v1194
    %v1272 = vunpack.c.l.b16 %v1195
    %v1273 = vunpack.c.l.b16 %v1196
    %v1274 = vunpack.c.h.b16 %v1196
    %v1275 = vunpack.c.l.b16 %v1197
    %v1276 = vunpack.c.l.b16 %v1198
    %v1277 = vunpack.c.h.b16 %v1198
    %v1278 = vunpack.c.l.b16 %v1199
    %v1279 = vunpack.c.l.b16 %v1200
    %v1280 = vunpack.c.h.b16 %v1200
    %v1281 = vunpack.c.l.b16 %v1201
    %v1282 = vpack.c.b16 %v1237, %v1234
    %v1283 = vpack.c.b16 %v1238, %v1235
    %v1284 = vpack.c.b16 %v1239, %v1236
    %v1285 = vpack.c.b16 %v1243, %v1240
    %v1286 = vpack.c.b16 %v1244, %v1241
    %v1287 = vpack.c.b16 %v1245, %v1242
    %v1288 = vpack.c.b16 %v1249, %v1246
    %v1289 = vpack.c.b16 %v1250, %v1247
    %v1290 = vpack.c.b16 %v1251, %v1248
    %v1291 = vpack.c.b16 %v1255, %v1252
    %v1292 = vpack.c.b16 %v1256, %v1253
    %v1293 = vpack.c.b16 %v1257, %v1254
    %v1294 = vpack.c.b16 %v1261, %v1258
    %v1295 = vpack.c.b16 %v1262, %v1259
    %v1296 = vpack.c.b16 %v1263, %v1260
    %v1297 = vpack.c.b16 %v1267, %v1264
    %v1298 = vpack.c.b16 %v1268, %v1265
    %v1299 = vpack.c.b16 %v1269, %v1266
    %v1300 = vpack.c.b16 %v1273, %v1270
    %v1301 = vpack.c.b16 %v1274, %v1271
    %v1302 = vpack.c.b16 %v1275, %v1272
    %v1303 = vpack.c.b16 %v1279, %v1276
    %v1304 = vpack.c.b16 %v1280, %v1277
    %v1305 = vpack.c.b16 %v1281, %v1278
    %1330 = vmatprep.subr.bf16.mxu0 %v1283
    %1331 = vmatpush1.bf16.msra.mxu0 %v1282
    %1332 = vmatprep.subr.bf16.mxu0 %v1286
    %1333 = vmatpush1.bf16.msra.mxu0 %v1285
    %1334 = vmatprep.subr.bf16.mxu0 %v1289
    %1335 = vmatpush1.bf16.msra.mxu0 %v1288
    %1336 = vmatprep.subr.bf16.mxu0 %v1292
    %1337 = vmatpush1.bf16.msra.mxu0 %v1291
    %1338 = vmatprep.subr.bf16.mxu0 %v1295
    %1339 = vmatpush1.bf16.msra.mxu0 %v1294
    %1340 = vmatprep.subr.bf16.mxu0 %v1298
    %1341 = vmatpush1.bf16.msra.mxu0 %v1297
    %1342 = vmatprep.subr.bf16.mxu0 %v1301
    %1343 = vmatpush1.bf16.msra.mxu0 %v1300
    %1344 = vmatprep.subr.bf16.mxu0 %v1304
    %1345 = vmatpush1.bf16.msra.mxu0 %v1303
    %1346 = vmatprep.subr.bf16.mxu0 0
    %1347 = vmatpush1.bf16.msra.mxu0 0
    %1348 = vmatprep.subr.bf16.mxu0 0
    %1349 = vmatpush1.bf16.msra.mxu0 0
    %1350 = vmatprep.subr.bf16.mxu0 0
    %1351 = vmatpush1.bf16.msra.mxu0 0
    %1352 = vmatprep.subr.bf16.mxu0 0
    %1353 = vmatpush1.bf16.msra.mxu0 0
    %1354 = vmatprep.subr.bf16.mxu0 0
    %1355 = vmatpush1.bf16.msra.mxu0 0
    %1356 = vmatprep.subr.bf16.mxu0 0
    %1357 = vmatpush1.bf16.msra.mxu0 0
    %1358 = vmatprep.subr.bf16.mxu0 0
    %1359 = vmatpush1.bf16.msra.mxu0 0
    %1360 = vmatprep.subr.bf16.mxu0 0
    %1361 = vmatpush1.bf16.msra.mxu0 0
    %1362 = vmatprep.mubr.bf16.mxu0 0
    %1363 = vmatmul.mubr.bf16.gmra.mrb[0].mxu0 0
    %v1364 = vpop.f32.mrb[0].mxu0
    %v1365 = vadd.f32 0.0, %v1364
    %v1366 = vpop.f32.mrb[0].mxu0
    %v1367 = vadd.f32 0.0, %v1366
    %v1368 = vpop.f32.mrb[0].mxu0
    %v1369 = vpop.f32.mrb[0].mxu0
    %1370 = vdwg.mxu0
    %1371 = vmatprep.subr.bf16.mxu0 0
    %1372 = vmatpush1.bf16.msra.mxu0 %v1284
    %1373 = vmatprep.subr.bf16.mxu0 0
    %1374 = vmatpush1.bf16.msra.mxu0 %v1287
    %1375 = vmatprep.subr.bf16.mxu0 0
    %1376 = vmatpush1.bf16.msra.mxu0 %v1290
    %1377 = vmatprep.subr.bf16.mxu0 0
    %1378 = vmatpush1.bf16.msra.mxu0 %v1293
    %1379 = vmatprep.subr.bf16.mxu0 0
    %1380 = vmatpush1.bf16.msra.mxu0 %v1296
    %1381 = vmatprep.subr.bf16.mxu0 0
    %1382 = vmatpush1.bf16.msra.mxu0 %v1299
    %1383 = vmatprep.subr.bf16.mxu0 0
    %1384 = vmatpush1.bf16.msra.mxu0 %v1302
    %1385 = vmatprep.subr.bf16.mxu0 0
    %1386 = vmatpush1.bf16.msra.mxu0 %v1305
    %1387 = vmatprep.subr.bf16.mxu0 0
    %1388 = vmatpush1.bf16.msra.mxu0 0
    %1389 = vmatprep.subr.bf16.mxu0 0
    %1390 = vmatpush1.bf16.msra.mxu0 0
    %1391 = vmatprep.subr.bf16.mxu0 0
    %1392 = vmatpush1.bf16.msra.mxu0 0
    %1393 = vmatprep.subr.bf16.mxu0 0
    %1394 = vmatpush1.bf16.msra.mxu0 0
    %1395 = vmatprep.subr.bf16.mxu0 0
    %1396 = vmatpush1.bf16.msra.mxu0 0
    %1397 = vmatprep.subr.bf16.mxu0 0
    %1398 = vmatpush1.bf16.msra.mxu0 0
    %1399 = vmatprep.subr.bf16.mxu0 0
    %1400 = vmatpush1.bf16.msra.mxu0 0
    %1401 = vmatprep.subr.bf16.mxu0 0
    %1402 = vmatpush1.bf16.msra.mxu0 0
    %1403 = vmatprep.mubr.bf16.mxu0 0
    %1404 = vmatmul.mubr.bf16.gmra.mrb[0].mxu0 0
    %v1405 = vpop.f32.mrb[0].mxu0
    %v1406 = vadd.f32 0.0, %v1405
    %v1407 = vpop.f32.mrb[0].mxu0
    %v1408 = vpop.f32.mrb[0].mxu0
    %v1409 = vpop.f32.mrb[0].mxu0
    %1410 = vdwg.mxu0
    %v1411 = vadd.f32 %v1124, %v1365
    %v1412 = vxor.u32 %v1411, 2147483648
    %v1413 = vmul.f32 %v1412, 1.442695
    %v1414 = vpow.pop %v1413
    %v1415 = vadd.f32 %v1414, 1.0
    %v1416 = vrcp.pop %v1415
    %v1417 = vmul.f32 1.0, %v1416
    %v1418 = vadd.f32 %v1126, %v1367
    %v1419 = vxor.u32 %v1418, 2147483648
    %v1420 = vmul.f32 %v1419, 1.442695
    %v1421 = vpow.pop %v1420
    %v1422 = vadd.f32 %v1421, 1.0
    %v1423 = vrcp.pop %v1422
    %v1424 = vmul.f32 1.0, %v1423
    %v1425 = vld [vmem:[%s8] sm:$0x1]
    %v1427 = vlaneseq
    %v1428 = vshrl.u32 %v1427, 7
    %v1429 = vsub.s32 0, %v1428
    %v1430 = vrot.slane %v1425, %v1429
    %v1432 = vadd.f32 %v1406, %v1430
    %v1433 = vmul.f32 %v1417, %v1432
    %v1434 = vadd.f32 %v1165, %v1433
    %v1435 = vtanh.pop %v1434
    %v1436 = vsub.f32 1.0, %v1424
    %v1437 = vmul.f32 %v1436, %v1435
    %v1438 = vmul.f32 %v1424, 0.0
    %v1439 = vadd.f32 %v1437, %v1438
    %v1440 = vld [vmem:[#allocation2 + $0x30] sm:$0xff]
    %v1441 = vld [vmem:[#allocation2 + $0x38] sm:$0xff]
    %v1442 = vld [vmem:[#allocation2 + $0x40] sm:$0xff]
    %v1443 = vpack.c.bf16 %v911, %v911
    %1444 = vmatprep.subr.bf16.mxu0 %v648
    %1445 = vmatpush1.bf16.msra.mxu0 %v647
    %1446 = vmatprep.subr.bf16.mxu0 %v651
    %1447 = vmatpush1.bf16.msra.mxu0 %v650
    %1448 = vmatprep.subr.bf16.mxu0 %v654
    %1449 = vmatpush1.bf16.msra.mxu0 %v653
    %1450 = vmatprep.subr.bf16.mxu0 %v657
    %1451 = vmatpush1.bf16.msra.mxu0 %v656
    %1452 = vmatprep.subr.bf16.mxu0 %v660
    %1453 = vmatpush1.bf16.msra.mxu0 %v659
    %1454 = vmatprep.subr.bf16.mxu0 %v663
    %1455 = vmatpush1.bf16.msra.mxu0 %v662
    %1456 = vmatprep.subr.bf16.mxu0 %v666
    %1457 = vmatpush1.bf16.msra.mxu0 %v665
    %1458 = vmatprep.subr.bf16.mxu0 %v669
    %1459 = vmatpush1.bf16.msra.mxu0 %v668
    %1460 = vmatprep.subr.bf16.mxu0 0
    %1461 = vmatpush1.bf16.msra.mxu0 0
    %1462 = vmatprep.subr.bf16.mxu0 0
    %1463 = vmatpush1.bf16.msra.mxu0 0
    %1464 = vmatprep.subr.bf16.mxu0 0
    %1465 = vmatpush1.bf16.msra.mxu0 0
    %1466 = vmatprep.subr.bf16.mxu0 0
    %1467 = vmatpush1.bf16.msra.mxu0 0
    %1468 = vmatprep.subr.bf16.mxu0 0
    %1469 = vmatpush1.bf16.msra.mxu0 0
    %1470 = vmatprep.subr.bf16.mxu0 0
    %1471 = vmatpush1.bf16.msra.mxu0 0
    %1472 = vmatprep.subr.bf16.mxu0 0
    %1473 = vmatpush1.bf16.msra.mxu0 0
    %1474 = vmatprep.subr.bf16.mxu0 0
    %1475 = vmatpush1.bf16.msra.mxu0 0
    %1476 = vmatprep.mubr.bf16.mxu0 0
    %1477 = vmatmul.mubr.bf16.gmra.mrb[0].mxu0 %v1443
    %v1478 = vpop.f32.mrb[0].mxu0
    %v1479 = vadd.f32 0.0, %v1478
    %v1480 = vpop.f32.mrb[0].mxu0
    %v1481 = vadd.f32 0.0, %v1480
    %v1482 = vpop.f32.mrb[0].mxu0
    %v1483 = vpop.f32.mrb[0].mxu0
    %1484 = vdwg.mxu0
    %1485 = vmatprep.subr.bf16.mxu0 0
    %1486 = vmatpush1.bf16.msra.mxu0 %v649
    %1487 = vmatprep.subr.bf16.mxu0 0
    %1488 = vmatpush1.bf16.msra.mxu0 %v652
    %1489 = vmatprep.subr.bf16.mxu0 0
    %1490 = vmatpush1.bf16.msra.mxu0 %v655
    %1491 = vmatprep.subr.bf16.mxu0 0
    %1492 = vmatpush1.bf16.msra.mxu0 %v658
    %1493 = vmatprep.subr.bf16.mxu0 0
    %1494 = vmatpush1.bf16.msra.mxu0 %v661
    %1495 = vmatprep.subr.bf16.mxu0 0
    %1496 = vmatpush1.bf16.msra.mxu0 %v664
    %1497 = vmatprep.subr.bf16.mxu0 0
    %1498 = vmatpush1.bf16.msra.mxu0 %v667
    %1499 = vmatprep.subr.bf16.mxu0 0
    %1500 = vmatpush1.bf16.msra.mxu0 %v670
    %1501 = vmatprep.subr.bf16.mxu0 0
    %1502 = vmatpush1.bf16.msra.mxu0 0
    %1503 = vmatprep.subr.bf16.mxu0 0
    %1504 = vmatpush1.bf16.msra.mxu0 0
    %1505 = vmatprep.subr.bf16.mxu0 0
    %1506 = vmatpush1.bf16.msra.mxu0 0
    %1507 = vmatprep.subr.bf16.mxu0 0
    %1508 = vmatpush1.bf16.msra.mxu0 0
    %1509 = vmatprep.subr.bf16.mxu0 0
    %1510 = vmatpush1.bf16.msra.mxu0 0
    %1511 = vmatprep.subr.bf16.mxu0 0
    %1512 = vmatpush1.bf16.msra.mxu0 0
    %1513 = vmatprep.subr.bf16.mxu0 0
    %1514 = vmatpush1.bf16.msra.mxu0 0
    %1515 = vmatprep.subr.bf16.mxu0 0
    %1516 = vmatpush1.bf16.msra.mxu0 0
    %1517 = vmatprep.mubr.bf16.mxu0 0
    %1518 = vmatmul.mubr.bf16.gmra.mrb[0].mxu0 %v1443
    %v1519 = vpop.f32.mrb[0].mxu0
    %v1520 = vadd.f32 0.0, %v1519
    %v1521 = vpop.f32.mrb[0].mxu0
    %v1522 = vpop.f32.mrb[0].mxu0
    %v1523 = vpop.f32.mrb[0].mxu0
    %1524 = vdwg.mxu0
    %v1525 = vadd.f32 %v1440, %v1479
    %v1526 = vxor.u32 %v1525, 2147483648
    %v1527 = vmul.f32 %v1526, 1.442695
    %v1528 = vpow.pop %v1527
    %v1529 = vadd.f32 %v1528, 1.0
    %v1530 = vrcp.pop %v1529
    %v1531 = vmul.f32 1.0, %v1530
    %v1532 = vadd.f32 %v1441, %v1481
    %v1533 = vxor.u32 %v1532, 2147483648
    %v1534 = vmul.f32 %v1533, 1.442695
    %v1535 = vpow.pop %v1534
    %v1536 = vadd.f32 %v1535, 1.0
    %v1537 = vrcp.pop %v1536
    %v1538 = vmul.f32 1.0, %v1537
    %v1539 = vadd.f32 %v1520, %v795
    %v1540 = vmul.f32 %v1531, %v1539
    %v1541 = vadd.f32 %v1442, %v1540
    %v1542 = vtanh.pop %v1541
    %v1543 = vsub.f32 1.0, %v1538
    %v1544 = vmul.f32 %v1543, %v1542
    %v1545 = vmul.f32 %v1538, %v911
    %v1546 = vadd.f32 %v1544, %v1545
    %1547 = vmatprep.subr.bf16.mxu0 %v1042
    %1548 = vmatpush1.bf16.msra.mxu0 %v1041
    %1549 = vmatprep.subr.bf16.mxu0 %v1045
    %1550 = vmatpush1.bf16.msra.mxu0 %v1044
    %1551 = vmatprep.subr.bf16.mxu0 %v1048
    %1552 = vmatpush1.bf16.msra.mxu0 %v1047
    %1553 = vmatprep.subr.bf16.mxu0 %v1051
    %1554 = vmatpush1.bf16.msra.mxu0 %v1050
    %1555 = vmatprep.subr.bf16.mxu0 %v1054
    %1556 = vmatpush1.bf16.msra.mxu0 %v1053
    %1557 = vmatprep.subr.bf16.mxu0 %v1057
    %1558 = vmatpush1.bf16.msra.mxu0 %v1056
    %1559 = vmatprep.subr.bf16.mxu0 %v1060
    %1560 = vmatpush1.bf16.msra.mxu0 %v1059
    %1561 = vmatprep.subr.bf16.mxu0 %v1063
    %1562 = vmatpush1.bf16.msra.mxu0 %v1062
    %1563 = vmatprep.subr.bf16.mxu0 0
    %1564 = vmatpush1.bf16.msra.mxu0 0
    %1565 = vmatprep.subr.bf16.mxu0 0
    %1566 = vmatpush1.bf16.msra.mxu0 0
    %1567 = vmatprep.subr.bf16.mxu0 0
    %1568 = vmatpush1.bf16.msra.mxu0 0
    %1569 = vmatprep.subr.bf16.mxu0 0
    %1570 = vmatpush1.bf16.msra.mxu0 0
    %1571 = vmatprep.subr.bf16.mxu0 0
    %1572 = vmatpush1.bf16.msra.mxu0 0
    %1573 = vmatprep.subr.bf16.mxu0 0
    %1574 = vmatpush1.bf16.msra.mxu0 0
    %1575 = vmatprep.subr.bf16.mxu0 0
    %1576 = vmatpush1.bf16.msra.mxu0 0
    %1577 = vmatprep.subr.bf16.mxu0 0
    %1578 = vmatpush1.bf16.msra.mxu0 0
    %1579 = vmatprep.mubr.bf16.mxu0 0
    %1580 = vmatmul.mubr.bf16.gmra.mrb[0].mxu0 %v1443
    %v1581 = vpop.f32.mrb[0].mxu0
    %v1582 = vadd.f32 %v949, %v1581
    %v1583 = vpop.f32.mrb[0].mxu0
    %v1584 = vadd.f32 %v953, %v1583
    %v1585 = vpop.f32.mrb[0].mxu0
    %v1586 = vpop.f32.mrb[0].mxu0
    %1587 = vdwg.mxu0
    %1588 = vmatprep.subr.bf16.mxu0 0
    %1589 = vmatpush1.bf16.msra.mxu0 %v1043
    %1590 = vmatprep.subr.bf16.mxu0 0
    %1591 = vmatpush1.bf16.msra.mxu0 %v1046
    %1592 = vmatprep.subr.bf16.mxu0 0
    %1593 = vmatpush1.bf16.msra.mxu0 %v1049
    %1594 = vmatprep.subr.bf16.mxu0 0
    %1595 = vmatpush1.bf16.msra.mxu0 %v1052
    %1596 = vmatprep.subr.bf16.mxu0 0
    %1597 = vmatpush1.bf16.msra.mxu0 %v1055
    %1598 = vmatprep.subr.bf16.mxu0 0
    %1599 = vmatpush1.bf16.msra.mxu0 %v1058
    %1600 = vmatprep.subr.bf16.mxu0 0
    %1601 = vmatpush1.bf16.msra.mxu0 %v1061
    %1602 = vmatprep.subr.bf16.mxu0 0
    %1603 = vmatpush1.bf16.msra.mxu0 %v1064
    %1604 = vmatprep.subr.bf16.mxu0 0
    %1605 = vmatpush1.bf16.msra.mxu0 0
    %1606 = vmatprep.subr.bf16.mxu0 0
    %1607 = vmatpush1.bf16.msra.mxu0 0
    %1608 = vmatprep.subr.bf16.mxu0 0
    %1609 = vmatpush1.bf16.msra.mxu0 0
    %1610 = vmatprep.subr.bf16.mxu0 0
    %1611 = vmatpush1.bf16.msra.mxu0 0
    %1612 = vmatprep.subr.bf16.mxu0 0
    %1613 = vmatpush1.bf16.msra.mxu0 0
    %1614 = vmatprep.subr.bf16.mxu0 0
    %1615 = vmatpush1.bf16.msra.mxu0 0
    %1616 = vmatprep.subr.bf16.mxu0 0
    %1617 = vmatpush1.bf16.msra.mxu0 0
    %1618 = vmatprep.subr.bf16.mxu0 0
    %1619 = vmatpush1.bf16.msra.mxu0 0
    %1620 = vmatprep.mubr.bf16.mxu0 0
    %1621 = vmatmul.mubr.bf16.gmra.mrb[0].mxu0 %v1443
    %v1622 = vpop.f32.mrb[0].mxu0
    %v1623 = vadd.f32 %v957, %v1622
    %v1624 = vpop.f32.mrb[0].mxu0
    %v1625 = vpop.f32.mrb[0].mxu0
    %v1626 = vpop.f32.mrb[0].mxu0
    %1627 = vdwg.mxu0
    %v1628 = vpack.c.bf16 %v1439, %v1439
    %1629 = vmatprep.subr.bf16.mxu0 %v1283
    %1630 = vmatpush1.bf16.msra.mxu0 %v1282
    %1631 = vmatprep.subr.bf16.mxu0 %v1286
    %1632 = vmatpush1.bf16.msra.mxu0 %v1285
    %1633 = vmatprep.subr.bf16.mxu0 %v1289
    %1634 = vmatpush1.bf16.msra.mxu0 %v1288
    %1635 = vmatprep.subr.bf16.mxu0 %v1292
    %1636 = vmatpush1.bf16.msra.mxu0 %v1291
    %1637 = vmatprep.subr.bf16.mxu0 %v1295
    %1638 = vmatpush1.bf16.msra.mxu0 %v1294
    %1639 = vmatprep.subr.bf16.mxu0 %v1298
    %1640 = vmatpush1.bf16.msra.mxu0 %v1297
    %1641 = vmatprep.subr.bf16.mxu0 %v1301
    %1642 = vmatpush1.bf16.msra.mxu0 %v1300
    %1643 = vmatprep.subr.bf16.mxu0 %v1304
    %1644 = vmatpush1.bf16.msra.mxu0 %v1303
    %1645 = vmatprep.subr.bf16.mxu0 0
    %1646 = vmatpush1.bf16.msra.mxu0 0
    %1647 = vmatprep.subr.bf16.mxu0 0
    %1648 = vmatpush1.bf16.msra.mxu0 0
    %1649 = vmatprep.subr.bf16.mxu0 0
    %1650 = vmatpush1.bf16.msra.mxu0 0
    %1651 = vmatprep.subr.bf16.mxu0 0
    %1652 = vmatpush1.bf16.msra.mxu0 0
    %1653 = vmatprep.subr.bf16.mxu0 0
    %1654 = vmatpush1.bf16.msra.mxu0 0
    %1655 = vmatprep.subr.bf16.mxu0 0
    %1656 = vmatpush1.bf16.msra.mxu0 0
    %1657 = vmatprep.subr.bf16.mxu0 0
    %1658 = vmatpush1.bf16.msra.mxu0 0
    %1659 = vmatprep.subr.bf16.mxu0 0
    %1660 = vmatpush1.bf16.msra.mxu0 0
    %1661 = vmatprep.mubr.bf16.mxu0 0
    %1662 = vmatmul.mubr.bf16.gmra.mrb[0].mxu0 %v1628
    %v1663 = vpop.f32.mrb[0].mxu0
    %v1664 = vadd.f32 0.0, %v1663
    %v1665 = vpop.f32.mrb[0].mxu0
    %v1666 = vadd.f32 0.0, %v1665
    %v1667 = vpop.f32.mrb[0].mxu0
    %v1668 = vpop.f32.mrb[0].mxu0
    %1669 = vdwg.mxu0
    %1670 = vmatprep.subr.bf16.mxu0 0
    %1671 = vmatpush1.bf16.msra.mxu0 %v1284
    %1672 = vmatprep.subr.bf16.mxu0 0
    %1673 = vmatpush1.bf16.msra.mxu0 %v1287
    %1674 = vmatprep.subr.bf16.mxu0 0
    %1675 = vmatpush1.bf16.msra.mxu0 %v1290
    %1676 = vmatprep.subr.bf16.mxu0 0
    %1677 = vmatpush1.bf16.msra.mxu0 %v1293
    %1678 = vmatprep.subr.bf16.mxu0 0
    %1679 = vmatpush1.bf16.msra.mxu0 %v1296
    %1680 = vmatprep.subr.bf16.mxu0 0
    %1681 = vmatpush1.bf16.msra.mxu0 %v1299
    %1682 = vmatprep.subr.bf16.mxu0 0
    %1683 = vmatpush1.bf16.msra.mxu0 %v1302
    %1684 = vmatprep.subr.bf16.mxu0 0
    %1685 = vmatpush1.bf16.msra.mxu0 %v1305
    %1686 = vmatprep.subr.bf16.mxu0 0
    %1687 = vmatpush1.bf16.msra.mxu0 0
    %1688 = vmatprep.subr.bf16.mxu0 0
    %1689 = vmatpush1.bf16.msra.mxu0 0
    %1690 = vmatprep.subr.bf16.mxu0 0
    %1691 = vmatpush1.bf16.msra.mxu0 0
    %1692 = vmatprep.subr.bf16.mxu0 0
    %1693 = vmatpush1.bf16.msra.mxu0 0
    %1694 = vmatprep.subr.bf16.mxu0 0
    %1695 = vmatpush1.bf16.msra.mxu0 0
    %1696 = vmatprep.subr.bf16.mxu0 0
    %1697 = vmatpush1.bf16.msra.mxu0 0
    %1698 = vmatprep.subr.bf16.mxu0 0
    %1699 = vmatpush1.bf16.msra.mxu0 0
    %1700 = vmatprep.subr.bf16.mxu0 0
    %1701 = vmatpush1.bf16.msra.mxu0 0
    %1702 = vmatprep.mubr.bf16.mxu0 0
    %1703 = vmatmul.mubr.bf16.gmra.mrb[0].mxu0 %v1628
    %v1704 = vpop.f32.mrb[0].mxu0
    %v1705 = vadd.f32 0.0, %v1704
    %v1706 = vpop.f32.mrb[0].mxu0
    %v1707 = vpop.f32.mrb[0].mxu0
    %v1708 = vpop.f32.mrb[0].mxu0
    %1709 = vdwg.mxu0
    %v1710 = vadd.f32 %v1582, %v1664
    %v1711 = vxor.u32 %v1710, 2147483648
    %v1712 = vmul.f32 %v1711, 1.442695
    %v1713 = vpow.pop %v1712
    %v1714 = vadd.f32 %v1713, 1.0
    %v1715 = vrcp.pop %v1714
    %v1716 = vmul.f32 1.0, %v1715
    %v1717 = vadd.f32 %v1584, %v1666
    %v1718 = vxor.u32 %v1717, 2147483648
    %v1719 = vmul.f32 %v1718, 1.442695
    %v1720 = vpow.pop %v1719
    %v1721 = vadd.f32 %v1720, 1.0
    %v1722 = vrcp.pop %v1721
    %v1723 = vmul.f32 1.0, %v1722
    %v1724 = vadd.f32 %v1705, %v1430
    %v1725 = vmul.f32 %v1716, %v1724
    %v1726 = vadd.f32 %v1623, %v1725
    %v1727 = vtanh.pop %v1726
    %v1728 = vsub.f32 1.0, %v1723
    %v1729 = vmul.f32 %v1728, %v1727
    %v1730 = vmul.f32 %v1723, %v1439
    %v1731 = vadd.f32 %v1729, %v1730
    %v1732 = vld [vmem:[#allocation13] sm:$0xff]
    %v1733 = vld [vmem:[#allocation13 + $0x8] sm:$0xf]
    %v1734 = vld [vmem:[#allocation13 + $0xc] sm:$0xff]
    %v1735 = vld [vmem:[#allocation13 + $0x14] sm:$0xf]
    %v1736 = vld [vmem:[#allocation13 + $0x18] sm:$0xff]
    %v1737 = vld [vmem:[#allocation13 + $0x20] sm:$0xf]
    %v1738 = vld [vmem:[#allocation13 + $0x24] sm:$0xff]
    %v1739 = vld [vmem:[#allocation13 + $0x2c] sm:$0xf]
    %v1740 = vld [vmem:[#allocation13 + $0x30] sm:$0xff]
    %v1741 = vld [vmem:[#allocation13 + $0x38] sm:$0xf]
    %v1742 = vld [vmem:[#allocation13 + $0x3c] sm:$0xff]
    %v1743 = vld [vmem:[#allocation13 + $0x44] sm:$0xf]
    %v1744 = vld [vmem:[#allocation13 + $0x48] sm:$0xff]
    %v1745 = vld [vmem:[#allocation13 + $0x50] sm:$0xf]
    %v1746 = vld [vmem:[#allocation13 + $0x54] sm:$0xff]
    %v1747 = vld [vmem:[#allocation13 + $0x5c] sm:$0xf]
    %v1748 = vld [vmem:[#allocation13 + $0x60] sm:$0xff]
    %v1749 = vld [vmem:[#allocation13 + $0x68] sm:$0xf]
    %v1750 = vld [vmem:[#allocation13 + $0x6c] sm:$0xff]
    %v1751 = vld [vmem:[#allocation13 + $0x74] sm:$0xf]
    %v1752 = vld [vmem:[#allocation13 + $0x78] sm:$0xff]
    %v1753 = vld [vmem:[#allocation13 + $0x80] sm:$0xf]
    %v1754 = vld [vmem:[#allocation13 + $0x84] sm:$0xff]
    %v1755 = vld [vmem:[#allocation13 + $0x8c] sm:$0xf]
    %v1756 = vld [vmem:[#allocation13 + $0x90] sm:$0xff]
    %v1757 = vld [vmem:[#allocation13 + $0x98] sm:$0xf]
    %v1758 = vld [vmem:[#allocation13 + $0x9c] sm:$0xff]
    %v1759 = vld [vmem:[#allocation13 + $0xa4] sm:$0xf]
    %v1760 = vld [vmem:[#allocation13 + $0xa8] sm:$0xff]
    %v1761 = vld [vmem:[#allocation13 + $0xb0] sm:$0xf]
    %v1762 = vld [vmem:[#allocation13 + $0xb4] sm:$0xff]
    %v1763 = vld [vmem:[#allocation13 + $0xbc] sm:$0xf]
    %v1764 = vld [vmem:[%s11] sm:$0x7]
    %v1766 = vlaneseq
    %v1767 = vshrl.u32 %v1766, 7
    %v1768 = vsub.s32 0, %v1767
    %v1769 = vrot.slane %v1764, %v1768
    %v1770 = vlaneseq
    %v1771 = vshrl.u32 %v1770, 7
    %v1772 = vsub.s32 1, %v1771
    %v1773 = vrot.slane %v1764, %v1772
    %v1774 = vlaneseq
    %v1775 = vshrl.u32 %v1774, 7
    %v1776 = vsub.s32 2, %v1775
    %v1777 = vrot.slane %v1764, %v1776
    %v1813 = vunpack.c.l.b16 %v1732
    %v1814 = vunpack.c.h.b16 %v1732
    %v1815 = vunpack.c.l.b16 %v1733
    %v1816 = vunpack.c.l.b16 %v1734
    %v1817 = vunpack.c.h.b16 %v1734
    %v1818 = vunpack.c.l.b16 %v1735
    %v1819 = vunpack.c.l.b16 %v1736
    %v1820 = vunpack.c.h.b16 %v1736
    %v1821 = vunpack.c.l.b16 %v1737
    %v1822 = vunpack.c.l.b16 %v1738
    %v1823 = vunpack.c.h.b16 %v1738
    %v1824 = vunpack.c.l.b16 %v1739
    %v1825 = vunpack.c.l.b16 %v1740
    %v1826 = vunpack.c.h.b16 %v1740
    %v1827 = vunpack.c.l.b16 %v1741
    %v1828 = vunpack.c.l.b16 %v1742
    %v1829 = vunpack.c.h.b16 %v1742
    %v1830 = vunpack.c.l.b16 %v1743
    %v1831 = vunpack.c.l.b16 %v1744
    %v1832 = vunpack.c.h.b16 %v1744
    %v1833 = vunpack.c.l.b16 %v1745
    %v1834 = vunpack.c.l.b16 %v1746
    %v1835 = vunpack.c.h.b16 %v1746
    %v1836 = vunpack.c.l.b16 %v1747
    %v1837 = vunpack.c.l.b16 %v1748
    %v1838 = vunpack.c.h.b16 %v1748
    %v1839 = vunpack.c.l.b16 %v1749
    %v1840 = vunpack.c.l.b16 %v1750
    %v1841 = vunpack.c.h.b16 %v1750
    %v1842 = vunpack.c.l.b16 %v1751
    %v1843 = vunpack.c.l.b16 %v1752
    %v1844 = vunpack.c.h.b16 %v1752
    %v1845 = vunpack.c.l.b16 %v1753
    %v1846 = vunpack.c.l.b16 %v1754
    %v1847 = vunpack.c.h.b16 %v1754
    %v1848 = vunpack.c.l.b16 %v1755
    %v1849 = vunpack.c.l.b16 %v1756
    %v1850 = vunpack.c.h.b16 %v1756
    %v1851 = vunpack.c.l.b16 %v1757
    %v1852 = vunpack.c.l.b16 %v1758
    %v1853 = vunpack.c.h.b16 %v1758
    %v1854 = vunpack.c.l.b16 %v1759
    %v1855 = vunpack.c.l.b16 %v1760
    %v1856 = vunpack.c.h.b16 %v1760
    %v1857 = vunpack.c.l.b16 %v1761
    %v1858 = vunpack.c.l.b16 %v1762
    %v1859 = vunpack.c.h.b16 %v1762
    %v1860 = vunpack.c.l.b16 %v1763
    %v1861 = vpack.c.b16 %v1816, %v1813
    %v1862 = vpack.c.b16 %v1817, %v1814
    %v1863 = vpack.c.b16 %v1818, %v1815
    %v1864 = vpack.c.b16 %v1822, %v1819
    %v1865 = vpack.c.b16 %v1823, %v1820
    %v1866 = vpack.c.b16 %v1824, %v1821
    %v1867 = vpack.c.b16 %v1828, %v1825
    %v1868 = vpack.c.b16 %v1829, %v1826
    %v1869 = vpack.c.b16 %v1830, %v1827
    %v1870 = vpack.c.b16 %v1834, %v1831
    %v1871 = vpack.c.b16 %v1835, %v1832
    %v1872 = vpack.c.b16 %v1836, %v1833
    %v1873 = vpack.c.b16 %v1840, %v1837
    %v1874 = vpack.c.b16 %v1841, %v1838
    %v1875 = vpack.c.b16 %v1842, %v1839
    %v1876 = vpack.c.b16 %v1846, %v1843
    %v1877 = vpack.c.b16 %v1847, %v1844
    %v1878 = vpack.c.b16 %v1848, %v1845
    %v1879 = vpack.c.b16 %v1852, %v1849
    %v1880 = vpack.c.b16 %v1853, %v1850
    %v1881 = vpack.c.b16 %v1854, %v1851
    %v1882 = vpack.c.b16 %v1858, %v1855
    %v1883 = vpack.c.b16 %v1859, %v1856
    %v1884 = vpack.c.b16 %v1860, %v1857
    %1909 = vmatprep.subr.bf16.mxu0 %v1862
    %1910 = vmatpush1.bf16.msra.mxu0 %v1861
    %1911 = vmatprep.subr.bf16.mxu0 %v1865
    %1912 = vmatpush1.bf16.msra.mxu0 %v1864
    %1913 = vmatprep.subr.bf16.mxu0 %v1868
    %1914 = vmatpush1.bf16.msra.mxu0 %v1867
    %1915 = vmatprep.subr.bf16.mxu0 %v1871
    %1916 = vmatpush1.bf16.msra.mxu0 %v1870
    %1917 = vmatprep.subr.bf16.mxu0 %v1874
    %1918 = vmatpush1.bf16.msra.mxu0 %v1873
    %1919 = vmatprep.subr.bf16.mxu0 %v1877
    %1920 = vmatpush1.bf16.msra.mxu0 %v1876
    %1921 = vmatprep.subr.bf16.mxu0 %v1880
    %1922 = vmatpush1.bf16.msra.mxu0 %v1879
    %1923 = vmatprep.subr.bf16.mxu0 %v1883
    %1924 = vmatpush1.bf16.msra.mxu0 %v1882
    %1925 = vmatprep.subr.bf16.mxu0 0
    %1926 = vmatpush1.bf16.msra.mxu0 0
    %1927 = vmatprep.subr.bf16.mxu0 0
    %1928 = vmatpush1.bf16.msra.mxu0 0
    %1929 = vmatprep.subr.bf16.mxu0 0
    %1930 = vmatpush1.bf16.msra.mxu0 0
    %1931 = vmatprep.subr.bf16.mxu0 0
    %1932 = vmatpush1.bf16.msra.mxu0 0
    %1933 = vmatprep.subr.bf16.mxu0 0
    %1934 = vmatpush1.bf16.msra.mxu0 0
    %1935 = vmatprep.subr.bf16.mxu0 0
    %1936 = vmatpush1.bf16.msra.mxu0 0
    %1937 = vmatprep.subr.bf16.mxu0 0
    %1938 = vmatpush1.bf16.msra.mxu0 0
    %1939 = vmatprep.subr.bf16.mxu0 0
    %1940 = vmatpush1.bf16.msra.mxu0 0
    %1941 = vmatprep.mubr.bf16.mxu0 0
    %1942 = vmatmul.mubr.bf16.gmra.mrb[0].mxu0 %v1628
    %v1943 = vpop.f32.mrb[0].mxu0
    %v1944 = vadd.f32 %v1769, %v1943
    %v1945 = vpop.f32.mrb[0].mxu0
    %v1946 = vadd.f32 %v1773, %v1945
    %v1947 = vpop.f32.mrb[0].mxu0
    %v1948 = vpop.f32.mrb[0].mxu0
    %1949 = vdwg.mxu0
    %1950 = vmatprep.subr.bf16.mxu0 0
    %1951 = vmatpush1.bf16.msra.mxu0 %v1863
    %1952 = vmatprep.subr.bf16.mxu0 0
    %1953 = vmatpush1.bf16.msra.mxu0 %v1866
    %1954 = vmatprep.subr.bf16.mxu0 0
    %1955 = vmatpush1.bf16.msra.mxu0 %v1869
    %1956 = vmatprep.subr.bf16.mxu0 0
    %1957 = vmatpush1.bf16.msra.mxu0 %v1872
    %1958 = vmatprep.subr.bf16.mxu0 0
    %1959 = vmatpush1.bf16.msra.mxu0 %v1875
    %1960 = vmatprep.subr.bf16.mxu0 0
    %1961 = vmatpush1.bf16.msra.mxu0 %v1878
    %1962 = vmatprep.subr.bf16.mxu0 0
    %1963 = vmatpush1.bf16.msra.mxu0 %v1881
    %1964 = vmatprep.subr.bf16.mxu0 0
    %1965 = vmatpush1.bf16.msra.mxu0 %v1884
    %1966 = vmatprep.subr.bf16.mxu0 0
    %1967 = vmatpush1.bf16.msra.mxu0 0
    %1968 = vmatprep.subr.bf16.mxu0 0
    %1969 = vmatpush1.bf16.msra.mxu0 0
    %1970 = vmatprep.subr.bf16.mxu0 0
    %1971 = vmatpush1.bf16.msra.mxu0 0
    %1972 = vmatprep.subr.bf16.mxu0 0
    %1973 = vmatpush1.bf16.msra.mxu0 0
    %1974 = vmatprep.subr.bf16.mxu0 0
    %1975 = vmatpush1.bf16.msra.mxu0 0
    %1976 = vmatprep.subr.bf16.mxu0 0
    %1977 = vmatpush1.bf16.msra.mxu0 0
    %1978 = vmatprep.subr.bf16.mxu0 0
    %1979 = vmatpush1.bf16.msra.mxu0 0
    %1980 = vmatprep.subr.bf16.mxu0 0
    %1981 = vmatpush1.bf16.msra.mxu0 0
    %1982 = vmatprep.mubr.bf16.mxu0 0
    %1983 = vmatmul.mubr.bf16.gmra.mrb[0].mxu0 %v1628
    %v1984 = vpop.f32.mrb[0].mxu0
    %v1985 = vadd.f32 %v1777, %v1984
    %v1986 = vpop.f32.mrb[0].mxu0
    %v1987 = vpop.f32.mrb[0].mxu0
    %v1988 = vpop.f32.mrb[0].mxu0
    %1989 = vdwg.mxu0
    %v1990 = vld [vmem:[#allocation15] sm:$0xff]
    %v1991 = vld [vmem:[#allocation15 + $0x8] sm:$0xf]
    %v1992 = vld [vmem:[#allocation15 + $0xc] sm:$0xff]
    %v1993 = vld [vmem:[#allocation15 + $0x14] sm:$0xf]
    %v1994 = vld [vmem:[#allocation15 + $0x18] sm:$0xff]
    %v1995 = vld [vmem:[#allocation15 + $0x20] sm:$0xf]
    %v1996 = vld [vmem:[#allocation15 + $0x24] sm:$0xff]
    %v1997 = vld [vmem:[#allocation15 + $0x2c] sm:$0xf]
    %v1998 = vld [vmem:[#allocation15 + $0x30] sm:$0xff]
    %v1999 = vld [vmem:[#allocation15 + $0x38] sm:$0xf]
    %v2000 = vld [vmem:[#allocation15 + $0x3c] sm:$0xff]
    %v2001 = vld [vmem:[#allocation15 + $0x44] sm:$0xf]
    %v2002 = vld [vmem:[#allocation15 + $0x48] sm:$0xff]
    %v2003 = vld [vmem:[#allocation15 + $0x50] sm:$0xf]
    %v2004 = vld [vmem:[#allocation15 + $0x54] sm:$0xff]
    %v2005 = vld [vmem:[#allocation15 + $0x5c] sm:$0xf]
    %v2006 = vld [vmem:[#allocation15 + $0x60] sm:$0xff]
    %v2007 = vld [vmem:[#allocation15 + $0x68] sm:$0xf]
    %v2008 = vld [vmem:[#allocation15 + $0x6c] sm:$0xff]
    %v2009 = vld [vmem:[#allocation15 + $0x74] sm:$0xf]
    %v2010 = vld [vmem:[#allocation15 + $0x78] sm:$0xff]
    %v2011 = vld [vmem:[#allocation15 + $0x80] sm:$0xf]
    %v2012 = vld [vmem:[#allocation15 + $0x84] sm:$0xff]
    %v2013 = vld [vmem:[#allocation15 + $0x8c] sm:$0xf]
    %v2014 = vld [vmem:[#allocation15 + $0x90] sm:$0xff]
    %v2015 = vld [vmem:[#allocation15 + $0x98] sm:$0xf]
    %v2016 = vld [vmem:[#allocation15 + $0x9c] sm:$0xff]
    %v2017 = vld [vmem:[#allocation15 + $0xa4] sm:$0xf]
    %v2018 = vld [vmem:[#allocation15 + $0xa8] sm:$0xff]
    %v2019 = vld [vmem:[#allocation15 + $0xb0] sm:$0xf]
    %v2020 = vld [vmem:[#allocation15 + $0xb4] sm:$0xff]
    %v2021 = vld [vmem:[#allocation15 + $0xbc] sm:$0xf]
    %v2054 = vunpack.c.l.b16 %v1990
    %v2055 = vunpack.c.h.b16 %v1990
    %v2056 = vunpack.c.l.b16 %v1991
    %v2057 = vunpack.c.l.b16 %v1992
    %v2058 = vunpack.c.h.b16 %v1992
    %v2059 = vunpack.c.l.b16 %v1993
    %v2060 = vunpack.c.l.b16 %v1994
    %v2061 = vunpack.c.h.b16 %v1994
    %v2062 = vunpack.c.l.b16 %v1995
    %v2063 = vunpack.c.l.b16 %v1996
    %v2064 = vunpack.c.h.b16 %v1996
    %v2065 = vunpack.c.l.b16 %v1997
    %v2066 = vunpack.c.l.b16 %v1998
    %v2067 = vunpack.c.h.b16 %v1998
    %v2068 = vunpack.c.l.b16 %v1999
    %v2069 = vunpack.c.l.b16 %v2000
    %v2070 = vunpack.c.h.b16 %v2000
    %v2071 = vunpack.c.l.b16 %v2001
    %v2072 = vunpack.c.l.b16 %v2002
    %v2073 = vunpack.c.h.b16 %v2002
    %v2074 = vunpack.c.l.b16 %v2003
    %v2075 = vunpack.c.l.b16 %v2004
    %v2076 = vunpack.c.h.b16 %v2004
    %v2077 = vunpack.c.l.b16 %v2005
    %v2078 = vunpack.c.l.b16 %v2006
    %v2079 = vunpack.c.h.b16 %v2006
    %v2080 = vunpack.c.l.b16 %v2007
    %v2081 = vunpack.c.l.b16 %v2008
    %v2082 = vunpack.c.h.b16 %v2008
    %v2083 = vunpack.c.l.b16 %v2009
    %v2084 = vunpack.c.l.b16 %v2010
    %v2085 = vunpack.c.h.b16 %v2010
    %v2086 = vunpack.c.l.b16 %v2011
    %v2087 = vunpack.c.l.b16 %v2012
    %v2088 = vunpack.c.h.b16 %v2012
    %v2089 = vunpack.c.l.b16 %v2013
    %v2090 = vunpack.c.l.b16 %v2014
    %v2091 = vunpack.c.h.b16 %v2014
    %v2092 = vunpack.c.l.b16 %v2015
    %v2093 = vunpack.c.l.b16 %v2016
    %v2094 = vunpack.c.h.b16 %v2016
    %v2095 = vunpack.c.l.b16 %v2017
    %v2096 = vunpack.c.l.b16 %v2018
    %v2097 = vunpack.c.h.b16 %v2018
    %v2098 = vunpack.c.l.b16 %v2019
    %v2099 = vunpack.c.l.b16 %v2020
    %v2100 = vunpack.c.h.b16 %v2020
    %v2101 = vunpack.c.l.b16 %v2021
    %v2102 = vpack.c.b16 %v2057, %v2054
    %v2103 = vpack.c.b16 %v2058, %v2055
    %v2104 = vpack.c.b16 %v2059, %v2056
    %v2105 = vpack.c.b16 %v2063, %v2060
    %v2106 = vpack.c.b16 %v2064, %v2061
    %v2107 = vpack.c.b16 %v2065, %v2062
    %v2108 = vpack.c.b16 %v2069, %v2066
    %v2109 = vpack.c.b16 %v2070, %v2067
    %v2110 = vpack.c.b16 %v2071, %v2068
    %v2111 = vpack.c.b16 %v2075, %v2072
    %v2112 = vpack.c.b16 %v2076, %v2073
    %v2113 = vpack.c.b16 %v2077, %v2074
    %v2114 = vpack.c.b16 %v2081, %v2078
    %v2115 = vpack.c.b16 %v2082, %v2079
    %v2116 = vpack.c.b16 %v2083, %v2080
    %v2117 = vpack.c.b16 %v2087, %v2084
    %v2118 = vpack.c.b16 %v2088, %v2085
    %v2119 = vpack.c.b16 %v2089, %v2086
    %v2120 = vpack.c.b16 %v2093, %v2090
    %v2121 = vpack.c.b16 %v2094, %v2091
    %v2122 = vpack.c.b16 %v2095, %v2092
    %v2123 = vpack.c.b16 %v2099, %v2096
    %v2124 = vpack.c.b16 %v2100, %v2097
    %v2125 = vpack.c.b16 %v2101, %v2098
    %2150 = vmatprep.subr.bf16.mxu0 %v2103
    %2151 = vmatpush1.bf16.msra.mxu0 %v2102
    %2152 = vmatprep.subr.bf16.mxu0 %v2106
    %2153 = vmatpush1.bf16.msra.mxu0 %v2105
    %2154 = vmatprep.subr.bf16.mxu0 %v2109
    %2155 = vmatpush1.bf16.msra.mxu0 %v2108
    %2156 = vmatprep.subr.bf16.mxu0 %v2112
    %2157 = vmatpush1.bf16.msra.mxu0 %v2111
    %2158 = vmatprep.subr.bf16.mxu0 %v2115
    %2159 = vmatpush1.bf16.msra.mxu0 %v2114
    %2160 = vmatprep.subr.bf16.mxu0 %v2118
    %2161 = vmatpush1.bf16.msra.mxu0 %v2117
    %2162 = vmatprep.subr.bf16.mxu0 %v2121
    %2163 = vmatpush1.bf16.msra.mxu0 %v2120
    %2164 = vmatprep.subr.bf16.mxu0 %v2124
    %2165 = vmatpush1.bf16.msra.mxu0 %v2123
    %2166 = vmatprep.subr.bf16.mxu0 0
    %2167 = vmatpush1.bf16.msra.mxu0 0
    %2168 = vmatprep.subr.bf16.mxu0 0
    %2169 = vmatpush1.bf16.msra.mxu0 0
    %2170 = vmatprep.subr.bf16.mxu0 0
    %2171 = vmatpush1.bf16.msra.mxu0 0
    %2172 = vmatprep.subr.bf16.mxu0 0
    %2173 = vmatpush1.bf16.msra.mxu0 0
    %2174 = vmatprep.subr.bf16.mxu0 0
    %2175 = vmatpush1.bf16.msra.mxu0 0
    %2176 = vmatprep.subr.bf16.mxu0 0
    %2177 = vmatpush1.bf16.msra.mxu0 0
    %2178 = vmatprep.subr.bf16.mxu0 0
    %2179 = vmatpush1.bf16.msra.mxu0 0
    %2180 = vmatprep.subr.bf16.mxu0 0
    %2181 = vmatpush1.bf16.msra.mxu0 0
    %2182 = vmatprep.mubr.bf16.mxu0 0
    %2183 = vmatmul.mubr.bf16.gmra.mrb[0].mxu0 0
    %v2184 = vpop.f32.mrb[0].mxu0
    %v2185 = vadd.f32 0.0, %v2184
    %v2186 = vpop.f32.mrb[0].mxu0
    %v2187 = vadd.f32 0.0, %v2186
    %v2188 = vpop.f32.mrb[0].mxu0
    %v2189 = vpop.f32.mrb[0].mxu0
    %2190 = vdwg.mxu0
    %2191 = vmatprep.subr.bf16.mxu0 0
    %2192 = vmatpush1.bf16.msra.mxu0 %v2104
    %2193 = vmatprep.subr.bf16.mxu0 0
    %2194 = vmatpush1.bf16.msra.mxu0 %v2107
    %2195 = vmatprep.subr.bf16.mxu0 0
    %2196 = vmatpush1.bf16.msra.mxu0 %v2110
    %2197 = vmatprep.subr.bf16.mxu0 0
    %2198 = vmatpush1.bf16.msra.mxu0 %v2113
    %2199 = vmatprep.subr.bf16.mxu0 0
    %2200 = vmatpush1.bf16.msra.mxu0 %v2116
    %2201 = vmatprep.subr.bf16.mxu0 0
    %2202 = vmatpush1.bf16.msra.mxu0 %v2119
    %2203 = vmatprep.subr.bf16.mxu0 0
    %2204 = vmatpush1.bf16.msra.mxu0 %v2122
    %2205 = vmatprep.subr.bf16.mxu0 0
    %2206 = vmatpush1.bf16.msra.mxu0 %v2125
    %2207 = vmatprep.subr.bf16.mxu0 0
    %2208 = vmatpush1.bf16.msra.mxu0 0
    %2209 = vmatprep.subr.bf16.mxu0 0
    %2210 = vmatpush1.bf16.msra.mxu0 0
    %2211 = vmatprep.subr.bf16.mxu0 0
    %2212 = vmatpush1.bf16.msra.mxu0 0
    %2213 = vmatprep.subr.bf16.mxu0 0
    %2214 = vmatpush1.bf16.msra.mxu0 0
    %2215 = vmatprep.subr.bf16.mxu0 0
    %2216 = vmatpush1.bf16.msra.mxu0 0
    %2217 = vmatprep.subr.bf16.mxu0 0
    %2218 = vmatpush1.bf16.msra.mxu0 0
    %2219 = vmatprep.subr.bf16.mxu0 0
    %2220 = vmatpush1.bf16.msra.mxu0 0
    %2221 = vmatprep.subr.bf16.mxu0 0
    %2222 = vmatpush1.bf16.msra.mxu0 0
    %2223 = vmatprep.mubr.bf16.mxu0 0
    %2224 = vmatmul.mubr.bf16.gmra.mrb[0].mxu0 0
    %v2225 = vpop.f32.mrb[0].mxu0
    %v2226 = vadd.f32 0.0, %v2225
    %v2227 = vpop.f32.mrb[0].mxu0
    %v2228 = vpop.f32.mrb[0].mxu0
    %v2229 = vpop.f32.mrb[0].mxu0
    %2230 = vdwg.mxu0
    %v2231 = vadd.f32 %v1944, %v2185
    %v2232 = vxor.u32 %v2231, 2147483648
    %v2233 = vmul.f32 %v2232, 1.442695
    %v2234 = vpow.pop %v2233
    %v2235 = vadd.f32 %v2234, 1.0
    %v2236 = vrcp.pop %v2235
    %v2237 = vmul.f32 1.0, %v2236
    %v2238 = vadd.f32 %v1946, %v2187
    %v2239 = vxor.u32 %v2238, 2147483648
    %v2240 = vmul.f32 %v2239, 1.442695
    %v2241 = vpow.pop %v2240
    %v2242 = vadd.f32 %v2241, 1.0
    %v2243 = vrcp.pop %v2242
    %v2244 = vmul.f32 1.0, %v2243
    %v2245 = vld [vmem:[%s12] sm:$0x1]
    %v2247 = vlaneseq
    %v2248 = vshrl.u32 %v2247, 7
    %v2249 = vsub.s32 0, %v2248
    %v2250 = vrot.slane %v2245, %v2249
    %v2252 = vadd.f32 %v2226, %v2250
    %v2253 = vmul.f32 %v2237, %v2252
    %v2254 = vadd.f32 %v1985, %v2253
    %v2255 = vtanh.pop %v2254
    %v2256 = vsub.f32 1.0, %v2244
    %v2257 = vmul.f32 %v2256, %v2255
    %v2258 = vmul.f32 %v2244, 0.0
    %v2259 = vadd.f32 %v2257, %v2258
    %2260 = vst [vmem:[#allocation3] sm:$0xff] %v2259
    %v2261 = vld [vmem:[#allocation2 + $0x48] sm:$0xff]
    %v2262 = vld [vmem:[#allocation2 + $0x50] sm:$0xff]
    %v2263 = vld [vmem:[#allocation2 + $0x58] sm:$0xff]
    %v2264 = vpack.c.bf16 %v1546, %v1546
    %v2265 = vld [vmem:[#allocation9] sm:$0xff]
    %v2266 = vld [vmem:[#allocation9 + $0x8] sm:$0xf]
    %v2267 = vld [vmem:[#allocation9 + $0xc] sm:$0xff]
    %v2268 = vld [vmem:[#allocation9 + $0x14] sm:$0xf]
    %v2269 = vld [vmem:[#allocation9 + $0x18] sm:$0xff]
    %v2270 = vld [vmem:[#allocation9 + $0x20] sm:$0xf]
    %v2271 = vld [vmem:[#allocation9 + $0x24] sm:$0xff]
    %v2272 = vld [vmem:[#allocation9 + $0x2c] sm:$0xf]
    %v2273 = vld [vmem:[#allocation9 + $0x30] sm:$0xff]
    %v2274 = vld [vmem:[#allocation9 + $0x38] sm:$0xf]
    %v2275 = vld [vmem:[#allocation9 + $0x3c] sm:$0xff]
    %v2276 = vld [vmem:[#allocation9 + $0x44] sm:$0xf]
    %v2277 = vld [vmem:[#allocation9 + $0x48] sm:$0xff]
    %v2278 = vld [vmem:[#allocation9 + $0x50] sm:$0xf]
    %v2279 = vld [vmem:[#allocation9 + $0x54] sm:$0xff]
    %v2280 = vld [vmem:[#allocation9 + $0x5c] sm:$0xf]
    %v2281 = vld [vmem:[#allocation9 + $0x60] sm:$0xff]
    %v2282 = vld [vmem:[#allocation9 + $0x68] sm:$0xf]
    %v2283 = vld [vmem:[#allocation9 + $0x6c] sm:$0xff]
    %v2284 = vld [vmem:[#allocation9 + $0x74] sm:$0xf]
    %v2285 = vld [vmem:[#allocation9 + $0x78] sm:$0xff]
    %v2286 = vld [vmem:[#allocation9 + $0x80] sm:$0xf]
    %v2287 = vld [vmem:[#allocation9 + $0x84] sm:$0xff]
    %v2288 = vld [vmem:[#allocation9 + $0x8c] sm:$0xf]
    %v2289 = vld [vmem:[#allocation9 + $0x90] sm:$0xff]
    %v2290 = vld [vmem:[#allocation9 + $0x98] sm:$0xf]
    %v2291 = vld [vmem:[#allocation9 + $0x9c] sm:$0xff]
    %v2292 = vld [vmem:[#allocation9 + $0xa4] sm:$0xf]
    %v2293 = vld [vmem:[#allocation9 + $0xa8] sm:$0xff]
    %v2294 = vld [vmem:[#allocation9 + $0xb0] sm:$0xf]
    %v2295 = vld [vmem:[#allocation9 + $0xb4] sm:$0xff]
    %v2296 = vld [vmem:[#allocation9 + $0xbc] sm:$0xf]
    %v2329 = vunpack.c.l.b16 %v2265
    %v2330 = vunpack.c.h.b16 %v2265
    %v2331 = vunpack.c.l.b16 %v2266
    %v2332 = vunpack.c.l.b16 %v2267
    %v2333 = vunpack.c.h.b16 %v2267
    %v2334 = vunpack.c.l.b16 %v2268
    %v2335 = vunpack.c.l.b16 %v2269
    %v2336 = vunpack.c.h.b16 %v2269
    %v2337 = vunpack.c.l.b16 %v2270
    %v2338 = vunpack.c.l.b16 %v2271
    %v2339 = vunpack.c.h.b16 %v2271
    %v2340 = vunpack.c.l.b16 %v2272
    %v2341 = vunpack.c.l.b16 %v2273
    %v2342 = vunpack.c.h.b16 %v2273
    %v2343 = vunpack.c.l.b16 %v2274
    %v2344 = vunpack.c.l.b16 %v2275
    %v2345 = vunpack.c.h.b16 %v2275
    %v2346 = vunpack.c.l.b16 %v2276
    %v2347 = vunpack.c.l.b16 %v2277
    %v2348 = vunpack.c.h.b16 %v2277
    %v2349 = vunpack.c.l.b16 %v2278
    %v2350 = vunpack.c.l.b16 %v2279
    %v2351 = vunpack.c.h.b16 %v2279
    %v2352 = vunpack.c.l.b16 %v2280
    %v2353 = vunpack.c.l.b16 %v2281
    %v2354 = vunpack.c.h.b16 %v2281
    %v2355 = vunpack.c.l.b16 %v2282
    %v2356 = vunpack.c.l.b16 %v2283
    %v2357 = vunpack.c.h.b16 %v2283
    %v2358 = vunpack.c.l.b16 %v2284
    %v2359 = vunpack.c.l.b16 %v2285
    %v2360 = vunpack.c.h.b16 %v2285
    %v2361 = vunpack.c.l.b16 %v2286
    %v2362 = vunpack.c.l.b16 %v2287
    %v2363 = vunpack.c.h.b16 %v2287
    %v2364 = vunpack.c.l.b16 %v2288
    %v2365 = vunpack.c.l.b16 %v2289
    %v2366 = vunpack.c.h.b16 %v2289
    %v2367 = vunpack.c.l.b16 %v2290
    %v2368 = vunpack.c.l.b16 %v2291
    %v2369 = vunpack.c.h.b16 %v2291
    %v2370 = vunpack.c.l.b16 %v2292
    %v2371 = vunpack.c.l.b16 %v2293
    %v2372 = vunpack.c.h.b16 %v2293
    %v2373 = vunpack.c.l.b16 %v2294
    %v2374 = vunpack.c.l.b16 %v2295
    %v2375 = vunpack.c.h.b16 %v2295
    %v2376 = vunpack.c.l.b16 %v2296
    %v2377 = vpack.c.b16 %v2332, %v2329
    %v2378 = vpack.c.b16 %v2333, %v2330
    %v2379 = vpack.c.b16 %v2334, %v2331
    %v2380 = vpack.c.b16 %v2338, %v2335
    %v2381 = vpack.c.b16 %v2339, %v2336
    %v2382 = vpack.c.b16 %v2340, %v2337
    %v2383 = vpack.c.b16 %v2344, %v2341
    %v2384 = vpack.c.b16 %v2345, %v2342
    %v2385 = vpack.c.b16 %v2346, %v2343
    %v2386 = vpack.c.b16 %v2350, %v2347
    %v2387 = vpack.c.b16 %v2351, %v2348
    %v2388 = vpack.c.b16 %v2352, %v2349
    %v2389 = vpack.c.b16 %v2356, %v2353
    %v2390 = vpack.c.b16 %v2357, %v2354
    %v2391 = vpack.c.b16 %v2358, %v2355
    %v2392 = vpack.c.b16 %v2362, %v2359
    %v2393 = vpack.c.b16 %v2363, %v2360
    %v2394 = vpack.c.b16 %v2364, %v2361
    %v2395 = vpack.c.b16 %v2368, %v2365
    %v2396 = vpack.c.b16 %v2369, %v2366
    %v2397 = vpack.c.b16 %v2370, %v2367
    %v2398 = vpack.c.b16 %v2374, %v2371
    %v2399 = vpack.c.b16 %v2375, %v2372
    %v2400 = vpack.c.b16 %v2376, %v2373
    %2425 = vmatprep.subr.bf16.mxu0 %v2378
    %2426 = vmatpush1.bf16.msra.mxu0 %v2377
    %2427 = vmatprep.subr.bf16.mxu0 %v2381
    %2428 = vmatpush1.bf16.msra.mxu0 %v2380
    %2429 = vmatprep.subr.bf16.mxu0 %v2384
    %2430 = vmatpush1.bf16.msra.mxu0 %v2383
    %2431 = vmatprep.subr.bf16.mxu0 %v2387
    %2432 = vmatpush1.bf16.msra.mxu0 %v2386
    %2433 = vmatprep.subr.bf16.mxu0 %v2390
    %2434 = vmatpush1.bf16.msra.mxu0 %v2389
    %2435 = vmatprep.subr.bf16.mxu0 %v2393
    %2436 = vmatpush1.bf16.msra.mxu0 %v2392
    %2437 = vmatprep.subr.bf16.mxu0 %v2396
    %2438 = vmatpush1.bf16.msra.mxu0 %v2395
    %2439 = vmatprep.subr.bf16.mxu0 %v2399
    %2440 = vmatpush1.bf16.msra.mxu0 %v2398
    %2441 = vmatprep.subr.bf16.mxu0 0
    %2442 = vmatpush1.bf16.msra.mxu0 0
    %2443 = vmatprep.subr.bf16.mxu0 0
    %2444 = vmatpush1.bf16.msra.mxu0 0
    %2445 = vmatprep.subr.bf16.mxu0 0
    %2446 = vmatpush1.bf16.msra.mxu0 0
    %2447 = vmatprep.subr.bf16.mxu0 0
    %2448 = vmatpush1.bf16.msra.mxu0 0
    %2449 = vmatprep.subr.bf16.mxu0 0
    %2450 = vmatpush1.bf16.msra.mxu0 0
    %2451 = vmatprep.subr.bf16.mxu0 0
    %2452 = vmatpush1.bf16.msra.mxu0 0
    %2453 = vmatprep.subr.bf16.mxu0 0
    %2454 = vmatpush1.bf16.msra.mxu0 0
    %2455 = vmatprep.subr.bf16.mxu0 0
    %2456 = vmatpush1.bf16.msra.mxu0 0
    %2457 = vmatprep.mubr.bf16.mxu0 0
    %2458 = vmatmul.mubr.bf16.gmra.mrb[0].mxu0 %v2264
    %v2459 = vpop.f32.mrb[0].mxu0
    %v2460 = vadd.f32 0.0, %v2459
    %v2461 = vpop.f32.mrb[0].mxu0
    %v2462 = vadd.f32 0.0, %v2461
    %v2463 = vpop.f32.mrb[0].mxu0
    %v2464 = vpop.f32.mrb[0].mxu0
    %2465 = vdwg.mxu0
    %2466 = vmatprep.subr.bf16.mxu0 0
    %2467 = vmatpush1.bf16.msra.mxu0 %v2379
    %2468 = vmatprep.subr.bf16.mxu0 0
    %2469 = vmatpush1.bf16.msra.mxu0 %v2382
    %2470 = vmatprep.subr.bf16.mxu0 0
    %2471 = vmatpush1.bf16.msra.mxu0 %v2385
    %2472 = vmatprep.subr.bf16.mxu0 0
    %2473 = vmatpush1.bf16.msra.mxu0 %v2388
    %2474 = vmatprep.subr.bf16.mxu0 0
    %2475 = vmatpush1.bf16.msra.mxu0 %v2391
    %2476 = vmatprep.subr.bf16.mxu0 0
    %2477 = vmatpush1.bf16.msra.mxu0 %v2394
    %2478 = vmatprep.subr.bf16.mxu0 0
    %2479 = vmatpush1.bf16.msra.mxu0 %v2397
    %2480 = vmatprep.subr.bf16.mxu0 0
    %2481 = vmatpush1.bf16.msra.mxu0 %v2400
    %2482 = vmatprep.subr.bf16.mxu0 0
    %2483 = vmatpush1.bf16.msra.mxu0 0
    %2484 = vmatprep.subr.bf16.mxu0 0
    %2485 = vmatpush1.bf16.msra.mxu0 0
    %2486 = vmatprep.subr.bf16.mxu0 0
    %2487 = vmatpush1.bf16.msra.mxu0 0
    %2488 = vmatprep.subr.bf16.mxu0 0
    %2489 = vmatpush1.bf16.msra.mxu0 0
    %2490 = vmatprep.subr.bf16.mxu0 0
    %2491 = vmatpush1.bf16.msra.mxu0 0
    %2492 = vmatprep.subr.bf16.mxu0 0
    %2493 = vmatpush1.bf16.msra.mxu0 0
    %2494 = vmatprep.subr.bf16.mxu0 0
    %2495 = vmatpush1.bf16.msra.mxu0 0
    %2496 = vmatprep.subr.bf16.mxu0 0
    %2497 = vmatpush1.bf16.msra.mxu0 0
    %2498 = vmatprep.mubr.bf16.mxu0 0
    %2499 = vmatmul.mubr.bf16.gmra.mrb[0].mxu0 %v2264
    %v2500 = vpop.f32.mrb[0].mxu0
    %v2501 = vadd.f32 0.0, %v2500
    %v2502 = vpop.f32.mrb[0].mxu0
    %v2503 = vpop.f32.mrb[0].mxu0
    %v2504 = vpop.f32.mrb[0].mxu0
    %2505 = vdwg.mxu0
    %v2506 = vadd.f32 %v2261, %v2460
    %v2507 = vxor.u32 %v2506, 2147483648
    %v2508 = vmul.f32 %v2507, 1.442695
    %v2509 = vpow.pop %v2508
    %v2510 = vadd.f32 %v2509, 1.0
    %v2511 = vrcp.pop %v2510
    %v2512 = vmul.f32 1.0, %v2511
    %v2513 = vadd.f32 %v2262, %v2462
    %v2514 = vxor.u32 %v2513, 2147483648
    %v2515 = vmul.f32 %v2514, 1.442695
    %v2516 = vpow.pop %v2515
    %v2517 = vadd.f32 %v2516, 1.0
    %v2518 = vrcp.pop %v2517
    %v2519 = vmul.f32 1.0, %v2518
    %v2520 = vld [vmem:[%s4] sm:$0x1]
    %v2522 = vlaneseq
    %v2523 = vshrl.u32 %v2522, 7
    %v2524 = vsub.s32 0, %v2523
    %v2525 = vrot.slane %v2520, %v2524
    %v2527 = vadd.f32 %v2501, %v2525
    %v2528 = vmul.f32 %v2512, %v2527
    %v2529 = vadd.f32 %v2263, %v2528
    %v2530 = vtanh.pop %v2529
    %v2531 = vsub.f32 1.0, %v2519
    %v2532 = vmul.f32 %v2531, %v2530
    %v2533 = vmul.f32 %v2519, %v1546
    %v2534 = vadd.f32 %v2532, %v2533
    %v2535 = vld [vmem:[#allocation10] sm:$0xff]
    %v2536 = vld [vmem:[#allocation10 + $0x8] sm:$0xf]
    %v2537 = vld [vmem:[#allocation10 + $0xc] sm:$0xff]
    %v2538 = vld [vmem:[#allocation10 + $0x14] sm:$0xf]
    %v2539 = vld [vmem:[#allocation10 + $0x18] sm:$0xff]
    %v2540 = vld [vmem:[#allocation10 + $0x20] sm:$0xf]
    %v2541 = vld [vmem:[#allocation10 + $0x24] sm:$0xff]
    %v2542 = vld [vmem:[#allocation10 + $0x2c] sm:$0xf]
    %v2543 = vld [vmem:[#allocation10 + $0x30] sm:$0xff]
    %v2544 = vld [vmem:[#allocation10 + $0x38] sm:$0xf]
    %v2545 = vld [vmem:[#allocation10 + $0x3c] sm:$0xff]
    %v2546 = vld [vmem:[#allocation10 + $0x44] sm:$0xf]
    %v2547 = vld [vmem:[#allocation10 + $0x48] sm:$0xff]
    %v2548 = vld [vmem:[#allocation10 + $0x50] sm:$0xf]
    %v2549 = vld [vmem:[#allocation10 + $0x54] sm:$0xff]
    %v2550 = vld [vmem:[#allocation10 + $0x5c] sm:$0xf]
    %v2551 = vld [vmem:[#allocation10 + $0x60] sm:$0xff]
    %v2552 = vld [vmem:[#allocation10 + $0x68] sm:$0xf]
    %v2553 = vld [vmem:[#allocation10 + $0x6c] sm:$0xff]
    %v2554 = vld [vmem:[#allocation10 + $0x74] sm:$0xf]
    %v2555 = vld [vmem:[#allocation10 + $0x78] sm:$0xff]
    %v2556 = vld [vmem:[#allocation10 + $0x80] sm:$0xf]
    %v2557 = vld [vmem:[#allocation10 + $0x84] sm:$0xff]
    %v2558 = vld [vmem:[#allocation10 + $0x8c] sm:$0xf]
    %v2559 = vld [vmem:[#allocation10 + $0x90] sm:$0xff]
    %v2560 = vld [vmem:[#allocation10 + $0x98] sm:$0xf]
    %v2561 = vld [vmem:[#allocation10 + $0x9c] sm:$0xff]
    %v2562 = vld [vmem:[#allocation10 + $0xa4] sm:$0xf]
    %v2563 = vld [vmem:[#allocation10 + $0xa8] sm:$0xff]
    %v2564 = vld [vmem:[#allocation10 + $0xb0] sm:$0xf]
    %v2565 = vld [vmem:[#allocation10 + $0xb4] sm:$0xff]
    %v2566 = vld [vmem:[#allocation10 + $0xbc] sm:$0xf]
    %v2567 = vld [vmem:[%s7] sm:$0x7]
    %v2569 = vlaneseq
    %v2570 = vshrl.u32 %v2569, 7
    %v2571 = vsub.s32 0, %v2570
    %v2572 = vrot.slane %v2567, %v2571
    %v2573 = vlaneseq
    %v2574 = vshrl.u32 %v2573, 7
    %v2575 = vsub.s32 1, %v2574
    %v2576 = vrot.slane %v2567, %v2575
    %v2577 = vlaneseq
    %v2578 = vshrl.u32 %v2577, 7
    %v2579 = vsub.s32 2, %v2578
    %v2580 = vrot.slane %v2567, %v2579
    %v2616 = vunpack.c.l.b16 %v2535
    %v2617 = vunpack.c.h.b16 %v2535
    %v2618 = vunpack.c.l.b16 %v2536
    %v2619 = vunpack.c.l.b16 %v2537
    %v2620 = vunpack.c.h.b16 %v2537
    %v2621 = vunpack.c.l.b16 %v2538
    %v2622 = vunpack.c.l.b16 %v2539
    %v2623 = vunpack.c.h.b16 %v2539
    %v2624 = vunpack.c.l.b16 %v2540
    %v2625 = vunpack.c.l.b16 %v2541
    %v2626 = vunpack.c.h.b16 %v2541
    %v2627 = vunpack.c.l.b16 %v2542
    %v2628 = vunpack.c.l.b16 %v2543
    %v2629 = vunpack.c.h.b16 %v2543
    %v2630 = vunpack.c.l.b16 %v2544
    %v2631 = vunpack.c.l.b16 %v2545
    %v2632 = vunpack.c.h.b16 %v2545
    %v2633 = vunpack.c.l.b16 %v2546
    %v2634 = vunpack.c.l.b16 %v2547
    %v2635 = vunpack.c.h.b16 %v2547
    %v2636 = vunpack.c.l.b16 %v2548
    %v2637 = vunpack.c.l.b16 %v2549
    %v2638 = vunpack.c.h.b16 %v2549
    %v2639 = vunpack.c.l.b16 %v2550
    %v2640 = vunpack.c.l.b16 %v2551
    %v2641 = vunpack.c.h.b16 %v2551
    %v2642 = vunpack.c.l.b16 %v2552
    %v2643 = vunpack.c.l.b16 %v2553
    %v2644 = vunpack.c.h.b16 %v2553
    %v2645 = vunpack.c.l.b16 %v2554
    %v2646 = vunpack.c.l.b16 %v2555
    %v2647 = vunpack.c.h.b16 %v2555
    %v2648 = vunpack.c.l.b16 %v2556
    %v2649 = vunpack.c.l.b16 %v2557
    %v2650 = vunpack.c.h.b16 %v2557
    %v2651 = vunpack.c.l.b16 %v2558
    %v2652 = vunpack.c.l.b16 %v2559
    %v2653 = vunpack.c.h.b16 %v2559
    %v2654 = vunpack.c.l.b16 %v2560
    %v2655 = vunpack.c.l.b16 %v2561
    %v2656 = vunpack.c.h.b16 %v2561
    %v2657 = vunpack.c.l.b16 %v2562
    %v2658 = vunpack.c.l.b16 %v2563
    %v2659 = vunpack.c.h.b16 %v2563
    %v2660 = vunpack.c.l.b16 %v2564
    %v2661 = vunpack.c.l.b16 %v2565
    %v2662 = vunpack.c.h.b16 %v2565
    %v2663 = vunpack.c.l.b16 %v2566
    %v2664 = vpack.c.b16 %v2619, %v2616
    %v2665 = vpack.c.b16 %v2620, %v2617
    %v2666 = vpack.c.b16 %v2621, %v2618
    %v2667 = vpack.c.b16 %v2625, %v2622
    %v2668 = vpack.c.b16 %v2626, %v2623
    %v2669 = vpack.c.b16 %v2627, %v2624
    %v2670 = vpack.c.b16 %v2631, %v2628
    %v2671 = vpack.c.b16 %v2632, %v2629
    %v2672 = vpack.c.b16 %v2633, %v2630
    %v2673 = vpack.c.b16 %v2637, %v2634
    %v2674 = vpack.c.b16 %v2638, %v2635
    %v2675 = vpack.c.b16 %v2639, %v2636
    %v2676 = vpack.c.b16 %v2643, %v2640
    %v2677 = vpack.c.b16 %v2644, %v2641
    %v2678 = vpack.c.b16 %v2645, %v2642
    %v2679 = vpack.c.b16 %v2649, %v2646
    %v2680 = vpack.c.b16 %v2650, %v2647
    %v2681 = vpack.c.b16 %v2651, %v2648
    %v2682 = vpack.c.b16 %v2655, %v2652
    %v2683 = vpack.c.b16 %v2656, %v2653
    %v2684 = vpack.c.b16 %v2657, %v2654
    %v2685 = vpack.c.b16 %v2661, %v2658
    %v2686 = vpack.c.b16 %v2662, %v2659
    %v2687 = vpack.c.b16 %v2663, %v2660
    %2712 = vmatprep.subr.bf16.mxu0 %v2665
    %2713 = vmatpush1.bf16.msra.mxu0 %v2664
    %2714 = vmatprep.subr.bf16.mxu0 %v2668
    %2715 = vmatpush1.bf16.msra.mxu0 %v2667
    %2716 = vmatprep.subr.bf16.mxu0 %v2671
    %2717 = vmatpush1.bf16.msra.mxu0 %v2670
    %2718 = vmatprep.subr.bf16.mxu0 %v2674
    %2719 = vmatpush1.bf16.msra.mxu0 %v2673
    %2720 = vmatprep.subr.bf16.mxu0 %v2677
    %2721 = vmatpush1.bf16.msra.mxu0 %v2676
    %2722 = vmatprep.subr.bf16.mxu0 %v2680
    %2723 = vmatpush1.bf16.msra.mxu0 %v2679
    %2724 = vmatprep.subr.bf16.mxu0 %v2683
    %2725 = vmatpush1.bf16.msra.mxu0 %v2682
    %2726 = vmatprep.subr.bf16.mxu0 %v2686
    %2727 = vmatpush1.bf16.msra.mxu0 %v2685
    %2728 = vmatprep.subr.bf16.mxu0 0
    %2729 = vmatpush1.bf16.msra.mxu0 0
    %2730 = vmatprep.subr.bf16.mxu0 0
    %2731 = vmatpush1.bf16.msra.mxu0 0
    %2732 = vmatprep.subr.bf16.mxu0 0
    %2733 = vmatpush1.bf16.msra.mxu0 0
    %2734 = vmatprep.subr.bf16.mxu0 0
    %2735 = vmatpush1.bf16.msra.mxu0 0
    %2736 = vmatprep.subr.bf16.mxu0 0
    %2737 = vmatpush1.bf16.msra.mxu0 0
    %2738 = vmatprep.subr.bf16.mxu0 0
    %2739 = vmatpush1.bf16.msra.mxu0 0
    %2740 = vmatprep.subr.bf16.mxu0 0
    %2741 = vmatpush1.bf16.msra.mxu0 0
    %2742 = vmatprep.subr.bf16.mxu0 0
    %2743 = vmatpush1.bf16.msra.mxu0 0
    %2744 = vmatprep.mubr.bf16.mxu0 0
    %2745 = vmatmul.mubr.bf16.gmra.mrb[0].mxu0 %v2264
    %v2746 = vpop.f32.mrb[0].mxu0
    %v2747 = vadd.f32 %v2572, %v2746
    %v2748 = vpop.f32.mrb[0].mxu0
    %v2749 = vadd.f32 %v2576, %v2748
    %v2750 = vpop.f32.mrb[0].mxu0
    %v2751 = vpop.f32.mrb[0].mxu0
    %2752 = vdwg.mxu0
    %2753 = vmatprep.subr.bf16.mxu0 0
    %2754 = vmatpush1.bf16.msra.mxu0 %v2666
    %2755 = vmatprep.subr.bf16.mxu0 0
    %2756 = vmatpush1.bf16.msra.mxu0 %v2669
    %2757 = vmatprep.subr.bf16.mxu0 0
    %2758 = vmatpush1.bf16.msra.mxu0 %v2672
    %2759 = vmatprep.subr.bf16.mxu0 0
    %2760 = vmatpush1.bf16.msra.mxu0 %v2675
    %2761 = vmatprep.subr.bf16.mxu0 0
    %2762 = vmatpush1.bf16.msra.mxu0 %v2678
    %2763 = vmatprep.subr.bf16.mxu0 0
    %2764 = vmatpush1.bf16.msra.mxu0 %v2681
    %2765 = vmatprep.subr.bf16.mxu0 0
    %2766 = vmatpush1.bf16.msra.mxu0 %v2684
    %2767 = vmatprep.subr.bf16.mxu0 0
    %2768 = vmatpush1.bf16.msra.mxu0 %v2687
    %2769 = vmatprep.subr.bf16.mxu0 0
    %2770 = vmatpush1.bf16.msra.mxu0 0
    %2771 = vmatprep.subr.bf16.mxu0 0
    %2772 = vmatpush1.bf16.msra.mxu0 0
    %2773 = vmatprep.subr.bf16.mxu0 0
    %2774 = vmatpush1.bf16.msra.mxu0 0
    %2775 = vmatprep.subr.bf16.mxu0 0
    %2776 = vmatpush1.bf16.msra.mxu0 0
    %2777 = vmatprep.subr.bf16.mxu0 0
    %2778 = vmatpush1.bf16.msra.mxu0 0
    %2779 = vmatprep.subr.bf16.mxu0 0
    %2780 = vmatpush1.bf16.msra.mxu0 0
    %2781 = vmatprep.subr.bf16.mxu0 0
    %2782 = vmatpush1.bf16.msra.mxu0 0
    %2783 = vmatprep.subr.bf16.mxu0 0
    %2784 = vmatpush1.bf16.msra.mxu0 0
    %2785 = vmatprep.mubr.bf16.mxu0 0
    %2786 = vmatmul.mubr.bf16.gmra.mrb[0].mxu0 %v2264
    %v2787 = vpop.f32.mrb[0].mxu0
    %v2788 = vadd.f32 %v2580, %v2787
    %v2789 = vpop.f32.mrb[0].mxu0
    %v2790 = vpop.f32.mrb[0].mxu0
    %v2791 = vpop.f32.mrb[0].mxu0
    %2792 = vdwg.mxu0
    %v2793 = vpack.c.bf16 %v1731, %v1731
    %v2794 = vld [vmem:[#allocation12] sm:$0xff]
    %v2795 = vld [vmem:[#allocation12 + $0x8] sm:$0xf]
    %v2796 = vld [vmem:[#allocation12 + $0xc] sm:$0xff]
    %v2797 = vld [vmem:[#allocation12 + $0x14] sm:$0xf]
    %v2798 = vld [vmem:[#allocation12 + $0x18] sm:$0xff]
    %v2799 = vld [vmem:[#allocation12 + $0x20] sm:$0xf]
    %v2800 = vld [vmem:[#allocation12 + $0x24] sm:$0xff]
    %v2801 = vld [vmem:[#allocation12 + $0x2c] sm:$0xf]
    %v2802 = vld [vmem:[#allocation12 + $0x30] sm:$0xff]
    %v2803 = vld [vmem:[#allocation12 + $0x38] sm:$0xf]
    %v2804 = vld [vmem:[#allocation12 + $0x3c] sm:$0xff]
    %v2805 = vld [vmem:[#allocation12 + $0x44] sm:$0xf]
    %v2806 = vld [vmem:[#allocation12 + $0x48] sm:$0xff]
    %v2807 = vld [vmem:[#allocation12 + $0x50] sm:$0xf]
    %v2808 = vld [vmem:[#allocation12 + $0x54] sm:$0xff]
    %v2809 = vld [vmem:[#allocation12 + $0x5c] sm:$0xf]
    %v2810 = vld [vmem:[#allocation12 + $0x60] sm:$0xff]
    %v2811 = vld [vmem:[#allocation12 + $0x68] sm:$0xf]
    %v2812 = vld [vmem:[#allocation12 + $0x6c] sm:$0xff]
    %v2813 = vld [vmem:[#allocation12 + $0x74] sm:$0xf]
    %v2814 = vld [vmem:[#allocation12 + $0x78] sm:$0xff]
    %v2815 = vld [vmem:[#allocation12 + $0x80] sm:$0xf]
    %v2816 = vld [vmem:[#allocation12 + $0x84] sm:$0xff]
    %v2817 = vld [vmem:[#allocation12 + $0x8c] sm:$0xf]
    %v2818 = vld [vmem:[#allocation12 + $0x90] sm:$0xff]
    %v2819 = vld [vmem:[#allocation12 + $0x98] sm:$0xf]
    %v2820 = vld [vmem:[#allocation12 + $0x9c] sm:$0xff]
    %v2821 = vld [vmem:[#allocation12 + $0xa4] sm:$0xf]
    %v2822 = vld [vmem:[#allocation12 + $0xa8] sm:$0xff]
    %v2823 = vld [vmem:[#allocation12 + $0xb0] sm:$0xf]
    %v2824 = vld [vmem:[#allocation12 + $0xb4] sm:$0xff]
    %v2825 = vld [vmem:[#allocation12 + $0xbc] sm:$0xf]
    %v2858 = vunpack.c.l.b16 %v2794
    %v2859 = vunpack.c.h.b16 %v2794
    %v2860 = vunpack.c.l.b16 %v2795
    %v2861 = vunpack.c.l.b16 %v2796
    %v2862 = vunpack.c.h.b16 %v2796
    %v2863 = vunpack.c.l.b16 %v2797
    %v2864 = vunpack.c.l.b16 %v2798
    %v2865 = vunpack.c.h.b16 %v2798
    %v2866 = vunpack.c.l.b16 %v2799
    %v2867 = vunpack.c.l.b16 %v2800
    %v2868 = vunpack.c.h.b16 %v2800
    %v2869 = vunpack.c.l.b16 %v2801
    %v2870 = vunpack.c.l.b16 %v2802
    %v2871 = vunpack.c.h.b16 %v2802
    %v2872 = vunpack.c.l.b16 %v2803
    %v2873 = vunpack.c.l.b16 %v2804
    %v2874 = vunpack.c.h.b16 %v2804
    %v2875 = vunpack.c.l.b16 %v2805
    %v2876 = vunpack.c.l.b16 %v2806
    %v2877 = vunpack.c.h.b16 %v2806
    %v2878 = vunpack.c.l.b16 %v2807
    %v2879 = vunpack.c.l.b16 %v2808
    %v2880 = vunpack.c.h.b16 %v2808
    %v2881 = vunpack.c.l.b16 %v2809
    %v2882 = vunpack.c.l.b16 %v2810
    %v2883 = vunpack.c.h.b16 %v2810
    %v2884 = vunpack.c.l.b16 %v2811
    %v2885 = vunpack.c.l.b16 %v2812
    %v2886 = vunpack.c.h.b16 %v2812
    %v2887 = vunpack.c.l.b16 %v2813
    %v2888 = vunpack.c.l.b16 %v2814
    %v2889 = vunpack.c.h.b16 %v2814
    %v2890 = vunpack.c.l.b16 %v2815
    %v2891 = vunpack.c.l.b16 %v2816
    %v2892 = vunpack.c.h.b16 %v2816
    %v2893 = vunpack.c.l.b16 %v2817
    %v2894 = vunpack.c.l.b16 %v2818
    %v2895 = vunpack.c.h.b16 %v2818
    %v2896 = vunpack.c.l.b16 %v2819
    %v2897 = vunpack.c.l.b16 %v2820
    %v2898 = vunpack.c.h.b16 %v2820
    %v2899 = vunpack.c.l.b16 %v2821
    %v2900 = vunpack.c.l.b16 %v2822
    %v2901 = vunpack.c.h.b16 %v2822
    %v2902 = vunpack.c.l.b16 %v2823
    %v2903 = vunpack.c.l.b16 %v2824
    %v2904 = vunpack.c.h.b16 %v2824
    %v2905 = vunpack.c.l.b16 %v2825
    %v2906 = vpack.c.b16 %v2861, %v2858
    %v2907 = vpack.c.b16 %v2862, %v2859
    %v2908 = vpack.c.b16 %v2863, %v2860
    %v2909 = vpack.c.b16 %v2867, %v2864
    %v2910 = vpack.c.b16 %v2868, %v2865
    %v2911 = vpack.c.b16 %v2869, %v2866
    %v2912 = vpack.c.b16 %v2873, %v2870
    %v2913 = vpack.c.b16 %v2874, %v2871
    %v2914 = vpack.c.b16 %v2875, %v2872
    %v2915 = vpack.c.b16 %v2879, %v2876
    %v2916 = vpack.c.b16 %v2880, %v2877
    %v2917 = vpack.c.b16 %v2881, %v2878
    %v2918 = vpack.c.b16 %v2885, %v2882
    %v2919 = vpack.c.b16 %v2886, %v2883
    %v2920 = vpack.c.b16 %v2887, %v2884
    %v2921 = vpack.c.b16 %v2891, %v2888
    %v2922 = vpack.c.b16 %v2892, %v2889
    %v2923 = vpack.c.b16 %v2893, %v2890
    %v2924 = vpack.c.b16 %v2897, %v2894
    %v2925 = vpack.c.b16 %v2898, %v2895
    %v2926 = vpack.c.b16 %v2899, %v2896
    %v2927 = vpack.c.b16 %v2903, %v2900
    %v2928 = vpack.c.b16 %v2904, %v2901
    %v2929 = vpack.c.b16 %v2905, %v2902
    %2954 = vmatprep.subr.bf16.mxu0 %v2907
    %2955 = vmatpush1.bf16.msra.mxu0 %v2906
    %2956 = vmatprep.subr.bf16.mxu0 %v2910
    %2957 = vmatpush1.bf16.msra.mxu0 %v2909
    %2958 = vmatprep.subr.bf16.mxu0 %v2913
    %2959 = vmatpush1.bf16.msra.mxu0 %v2912
    %2960 = vmatprep.subr.bf16.mxu0 %v2916
    %2961 = vmatpush1.bf16.msra.mxu0 %v2915
    %2962 = vmatprep.subr.bf16.mxu0 %v2919
    %2963 = vmatpush1.bf16.msra.mxu0 %v2918
    %2964 = vmatprep.subr.bf16.mxu0 %v2922
    %2965 = vmatpush1.bf16.msra.mxu0 %v2921
    %2966 = vmatprep.subr.bf16.mxu0 %v2925
    %2967 = vmatpush1.bf16.msra.mxu0 %v2924
    %2968 = vmatprep.subr.bf16.mxu0 %v2928
    %2969 = vmatpush1.bf16.msra.mxu0 %v2927
    %2970 = vmatprep.subr.bf16.mxu0 0
    %2971 = vmatpush1.bf16.msra.mxu0 0
    %2972 = vmatprep.subr.bf16.mxu0 0
    %2973 = vmatpush1.bf16.msra.mxu0 0
    %2974 = vmatprep.subr.bf16.mxu0 0
    %2975 = vmatpush1.bf16.msra.mxu0 0
    %2976 = vmatprep.subr.bf16.mxu0 0
    %2977 = vmatpush1.bf16.msra.mxu0 0
    %2978 = vmatprep.subr.bf16.mxu0 0
    %2979 = vmatpush1.bf16.msra.mxu0 0
    %2980 = vmatprep.subr.bf16.mxu0 0
    %2981 = vmatpush1.bf16.msra.mxu0 0
    %2982 = vmatprep.subr.bf16.mxu0 0
    %2983 = vmatpush1.bf16.msra.mxu0 0
    %2984 = vmatprep.subr.bf16.mxu0 0
    %2985 = vmatpush1.bf16.msra.mxu0 0
    %2986 = vmatprep.mubr.bf16.mxu0 0
    %2987 = vmatmul.mubr.bf16.gmra.mrb[0].mxu0 %v2793
    %v2988 = vpop.f32.mrb[0].mxu0
    %v2989 = vadd.f32 0.0, %v2988
    %v2990 = vpop.f32.mrb[0].mxu0
    %v2991 = vadd.f32 0.0, %v2990
    %v2992 = vpop.f32.mrb[0].mxu0
    %v2993 = vpop.f32.mrb[0].mxu0
    %2994 = vdwg.mxu0
    %2995 = vmatprep.subr.bf16.mxu0 0
    %2996 = vmatpush1.bf16.msra.mxu0 %v2908
    %2997 = vmatprep.subr.bf16.mxu0 0
    %2998 = vmatpush1.bf16.msra.mxu0 %v2911
    %2999 = vmatprep.subr.bf16.mxu0 0
    %3000 = vmatpush1.bf16.msra.mxu0 %v2914
    %3001 = vmatprep.subr.bf16.mxu0 0
    %3002 = vmatpush1.bf16.msra.mxu0 %v2917
    %3003 = vmatprep.subr.bf16.mxu0 0
    %3004 = vmatpush1.bf16.msra.mxu0 %v2920
    %3005 = vmatprep.subr.bf16.mxu0 0
    %3006 = vmatpush1.bf16.msra.mxu0 %v2923
    %3007 = vmatprep.subr.bf16.mxu0 0
    %3008 = vmatpush1.bf16.msra.mxu0 %v2926
    %3009 = vmatprep.subr.bf16.mxu0 0
    %3010 = vmatpush1.bf16.msra.mxu0 %v2929
    %3011 = vmatprep.subr.bf16.mxu0 0
    %3012 = vmatpush1.bf16.msra.mxu0 0
    %3013 = vmatprep.subr.bf16.mxu0 0
    %3014 = vmatpush1.bf16.msra.mxu0 0
    %3015 = vmatprep.subr.bf16.mxu0 0
    %3016 = vmatpush1.bf16.msra.mxu0 0
    %3017 = vmatprep.subr.bf16.mxu0 0
    %3018 = vmatpush1.bf16.msra.mxu0 0
    %3019 = vmatprep.subr.bf16.mxu0 0
    %3020 = vmatpush1.bf16.msra.mxu0 0
    %3021 = vmatprep.subr.bf16.mxu0 0
    %3022 = vmatpush1.bf16.msra.mxu0 0
    %3023 = vmatprep.subr.bf16.mxu0 0
    %3024 = vmatpush1.bf16.msra.mxu0 0
    %3025 = vmatprep.subr.bf16.mxu0 0
    %3026 = vmatpush1.bf16.msra.mxu0 0
    %3027 = vmatprep.mubr.bf16.mxu0 0
    %3028 = vmatmul.mubr.bf16.gmra.mrb[0].mxu0 %v2793
    %v3029 = vpop.f32.mrb[0].mxu0
    %v3030 = vadd.f32 0.0, %v3029
    %v3031 = vpop.f32.mrb[0].mxu0
    %v3032 = vpop.f32.mrb[0].mxu0
    %v3033 = vpop.f32.mrb[0].mxu0
    %3034 = vdwg.mxu0
    %v3035 = vadd.f32 %v2747, %v2989
    %v3036 = vxor.u32 %v3035, 2147483648
    %v3037 = vmul.f32 %v3036, 1.442695
    %v3038 = vpow.pop %v3037
    %v3039 = vadd.f32 %v3038, 1.0
    %v3040 = vrcp.pop %v3039
    %v3041 = vmul.f32 1.0, %v3040
    %v3042 = vadd.f32 %v2749, %v2991
    %v3043 = vxor.u32 %v3042, 2147483648
    %v3044 = vmul.f32 %v3043, 1.442695
    %v3045 = vpow.pop %v3044
    %v3046 = vadd.f32 %v3045, 1.0
    %v3047 = vrcp.pop %v3046
    %v3048 = vmul.f32 1.0, %v3047
    %v3049 = vld [vmem:[%s8] sm:$0x1]
    %v3051 = vlaneseq
    %v3052 = vshrl.u32 %v3051, 7
    %v3053 = vsub.s32 0, %v3052
    %v3054 = vrot.slane %v3049, %v3053
    %v3056 = vadd.f32 %v3030, %v3054
    %v3057 = vmul.f32 %v3041, %v3056
    %v3058 = vadd.f32 %v2788, %v3057
    %v3059 = vtanh.pop %v3058
    %v3060 = vsub.f32 1.0, %v3048
    %v3061 = vmul.f32 %v3060, %v3059
    %v3062 = vmul.f32 %v3048, %v1731
    %v3063 = vadd.f32 %v3061, %v3062
    %v3064 = vld [vmem:[#allocation13] sm:$0xff]
    %v3065 = vld [vmem:[#allocation13 + $0x8] sm:$0xf]
    %v3066 = vld [vmem:[#allocation13 + $0xc] sm:$0xff]
    %v3067 = vld [vmem:[#allocation13 + $0x14] sm:$0xf]
    %v3068 = vld [vmem:[#allocation13 + $0x18] sm:$0xff]
    %v3069 = vld [vmem:[#allocation13 + $0x20] sm:$0xf]
    %v3070 = vld [vmem:[#allocation13 + $0x24] sm:$0xff]
    %v3071 = vld [vmem:[#allocation13 + $0x2c] sm:$0xf]
    %v3072 = vld [vmem:[#allocation13 + $0x30] sm:$0xff]
    %v3073 = vld [vmem:[#allocation13 + $0x38] sm:$0xf]
    %v3074 = vld [vmem:[#allocation13 + $0x3c] sm:$0xff]
    %v3075 = vld [vmem:[#allocation13 + $0x44] sm:$0xf]
    %v3076 = vld [vmem:[#allocation13 + $0x48] sm:$0xff]
    %v3077 = vld [vmem:[#allocation13 + $0x50] sm:$0xf]
    %v3078 = vld [vmem:[#allocation13 + $0x54] sm:$0xff]
    %v3079 = vld [vmem:[#allocation13 + $0x5c] sm:$0xf]
    %v3080 = vld [vmem:[#allocation13 + $0x60] sm:$0xff]
    %v3081 = vld [vmem:[#allocation13 + $0x68] sm:$0xf]
    %v3082 = vld [vmem:[#allocation13 + $0x6c] sm:$0xff]
    %v3083 = vld [vmem:[#allocation13 + $0x74] sm:$0xf]
    %v3084 = vld [vmem:[#allocation13 + $0x78] sm:$0xff]
    %v3085 = vld [vmem:[#allocation13 + $0x80] sm:$0xf]
    %v3086 = vld [vmem:[#allocation13 + $0x84] sm:$0xff]
    %v3087 = vld [vmem:[#allocation13 + $0x8c] sm:$0xf]
    %v3088 = vld [vmem:[#allocation13 + $0x90] sm:$0xff]
    %v3089 = vld [vmem:[#allocation13 + $0x98] sm:$0xf]
    %v3090 = vld [vmem:[#allocation13 + $0x9c] sm:$0xff]
    %v3091 = vld [vmem:[#allocation13 + $0xa4] sm:$0xf]
    %v3092 = vld [vmem:[#allocation13 + $0xa8] sm:$0xff]
    %v3093 = vld [vmem:[#allocation13 + $0xb0] sm:$0xf]
    %v3094 = vld [vmem:[#allocation13 + $0xb4] sm:$0xff]
    %v3095 = vld [vmem:[#allocation13 + $0xbc] sm:$0xf]
    %v3096 = vld [vmem:[%s11] sm:$0x7]
    %v3098 = vlaneseq
    %v3099 = vshrl.u32 %v3098, 7
    %v3100 = vsub.s32 0, %v3099
    %v3101 = vrot.slane %v3096, %v3100
    %v3102 = vlaneseq
    %v3103 = vshrl.u32 %v3102, 7
    %v3104 = vsub.s32 1, %v3103
    %v3105 = vrot.slane %v3096, %v3104
    %v3106 = vlaneseq
    %v3107 = vshrl.u32 %v3106, 7
    %v3108 = vsub.s32 2, %v3107
    %v3109 = vrot.slane %v3096, %v3108
    %v3145 = vunpack.c.l.b16 %v3064
    %v3146 = vunpack.c.h.b16 %v3064
    %v3147 = vunpack.c.l.b16 %v3065
    %v3148 = vunpack.c.l.b16 %v3066
    %v3149 = vunpack.c.h.b16 %v3066
    %v3150 = vunpack.c.l.b16 %v3067
    %v3151 = vunpack.c.l.b16 %v3068
    %v3152 = vunpack.c.h.b16 %v3068
    %v3153 = vunpack.c.l.b16 %v3069
    %v3154 = vunpack.c.l.b16 %v3070
    %v3155 = vunpack.c.h.b16 %v3070
    %v3156 = vunpack.c.l.b16 %v3071
    %v3157 = vunpack.c.l.b16 %v3072
    %v3158 = vunpack.c.h.b16 %v3072
    %v3159 = vunpack.c.l.b16 %v3073
    %v3160 = vunpack.c.l.b16 %v3074
    %v3161 = vunpack.c.h.b16 %v3074
    %v3162 = vunpack.c.l.b16 %v3075
    %v3163 = vunpack.c.l.b16 %v3076
    %v3164 = vunpack.c.h.b16 %v3076
    %v3165 = vunpack.c.l.b16 %v3077
    %v3166 = vunpack.c.l.b16 %v3078
    %v3167 = vunpack.c.h.b16 %v3078
    %v3168 = vunpack.c.l.b16 %v3079
    %v3169 = vunpack.c.l.b16 %v3080
    %v3170 = vunpack.c.h.b16 %v3080
    %v3171 = vunpack.c.l.b16 %v3081
    %v3172 = vunpack.c.l.b16 %v3082
    %v3173 = vunpack.c.h.b16 %v3082
    %v3174 = vunpack.c.l.b16 %v3083
    %v3175 = vunpack.c.l.b16 %v3084
    %v3176 = vunpack.c.h.b16 %v3084
    %v3177 = vunpack.c.l.b16 %v3085
    %v3178 = vunpack.c.l.b16 %v3086
    %v3179 = vunpack.c.h.b16 %v3086
    %v3180 = vunpack.c.l.b16 %v3087
    %v3181 = vunpack.c.l.b16 %v3088
    %v3182 = vunpack.c.h.b16 %v3088
    %v3183 = vunpack.c.l.b16 %v3089
    %v3184 = vunpack.c.l.b16 %v3090
    %v3185 = vunpack.c.h.b16 %v3090
    %v3186 = vunpack.c.l.b16 %v3091
    %v3187 = vunpack.c.l.b16 %v3092
    %v3188 = vunpack.c.h.b16 %v3092
    %v3189 = vunpack.c.l.b16 %v3093
    %v3190 = vunpack.c.l.b16 %v3094
    %v3191 = vunpack.c.h.b16 %v3094
    %v3192 = vunpack.c.l.b16 %v3095
    %v3193 = vpack.c.b16 %v3148, %v3145
    %v3194 = vpack.c.b16 %v3149, %v3146
    %v3195 = vpack.c.b16 %v3150, %v3147
    %v3196 = vpack.c.b16 %v3154, %v3151
    %v3197 = vpack.c.b16 %v3155, %v3152
    %v3198 = vpack.c.b16 %v3156, %v3153
    %v3199 = vpack.c.b16 %v3160, %v3157
    %v3200 = vpack.c.b16 %v3161, %v3158
    %v3201 = vpack.c.b16 %v3162, %v3159
    %v3202 = vpack.c.b16 %v3166, %v3163
    %v3203 = vpack.c.b16 %v3167, %v3164
    %v3204 = vpack.c.b16 %v3168, %v3165
    %v3205 = vpack.c.b16 %v3172, %v3169
    %v3206 = vpack.c.b16 %v3173, %v3170
    %v3207 = vpack.c.b16 %v3174, %v3171
    %v3208 = vpack.c.b16 %v3178, %v3175
    %v3209 = vpack.c.b16 %v3179, %v3176
    %v3210 = vpack.c.b16 %v3180, %v3177
    %v3211 = vpack.c.b16 %v3184, %v3181
    %v3212 = vpack.c.b16 %v3185, %v3182
    %v3213 = vpack.c.b16 %v3186, %v3183
    %v3214 = vpack.c.b16 %v3190, %v3187
    %v3215 = vpack.c.b16 %v3191, %v3188
    %v3216 = vpack.c.b16 %v3192, %v3189
    %3241 = vmatprep.subr.bf16.mxu0 %v3194
    %3242 = vmatpush1.bf16.msra.mxu0 %v3193
    %3243 = vmatprep.subr.bf16.mxu0 %v3197
    %3244 = vmatpush1.bf16.msra.mxu0 %v3196
    %3245 = vmatprep.subr.bf16.mxu0 %v3200
    %3246 = vmatpush1.bf16.msra.mxu0 %v3199
    %3247 = vmatprep.subr.bf16.mxu0 %v3203
    %3248 = vmatpush1.bf16.msra.mxu0 %v3202
    %3249 = vmatprep.subr.bf16.mxu0 %v3206
    %3250 = vmatpush1.bf16.msra.mxu0 %v3205
    %3251 = vmatprep.subr.bf16.mxu0 %v3209
    %3252 = vmatpush1.bf16.msra.mxu0 %v3208
    %3253 = vmatprep.subr.bf16.mxu0 %v3212
    %3254 = vmatpush1.bf16.msra.mxu0 %v3211
    %3255 = vmatprep.subr.bf16.mxu0 %v3215
    %3256 = vmatpush1.bf16.msra.mxu0 %v3214
    %3257 = vmatprep.subr.bf16.mxu0 0
    %3258 = vmatpush1.bf16.msra.mxu0 0
    %3259 = vmatprep.subr.bf16.mxu0 0
    %3260 = vmatpush1.bf16.msra.mxu0 0
    %3261 = vmatprep.subr.bf16.mxu0 0
    %3262 = vmatpush1.bf16.msra.mxu0 0
    %3263 = vmatprep.subr.bf16.mxu0 0
    %3264 = vmatpush1.bf16.msra.mxu0 0
    %3265 = vmatprep.subr.bf16.mxu0 0
    %3266 = vmatpush1.bf16.msra.mxu0 0
    %3267 = vmatprep.subr.bf16.mxu0 0
    %3268 = vmatpush1.bf16.msra.mxu0 0
    %3269 = vmatprep.subr.bf16.mxu0 0
    %3270 = vmatpush1.bf16.msra.mxu0 0
    %3271 = vmatprep.subr.bf16.mxu0 0
    %3272 = vmatpush1.bf16.msra.mxu0 0
    %3273 = vmatprep.mubr.bf16.mxu0 0
    %3274 = vmatmul.mubr.bf16.gmra.mrb[0].mxu0 %v2793
    %v3275 = vpop.f32.mrb[0].mxu0
    %v3276 = vadd.f32 %v3101, %v3275
    %v3277 = vpop.f32.mrb[0].mxu0
    %v3278 = vadd.f32 %v3105, %v3277
    %v3279 = vpop.f32.mrb[0].mxu0
    %v3280 = vpop.f32.mrb[0].mxu0
    %3281 = vdwg.mxu0
    %3282 = vmatprep.subr.bf16.mxu0 0
    %3283 = vmatpush1.bf16.msra.mxu0 %v3195
    %3284 = vmatprep.subr.bf16.mxu0 0
    %3285 = vmatpush1.bf16.msra.mxu0 %v3198
    %3286 = vmatprep.subr.bf16.mxu0 0
    %3287 = vmatpush1.bf16.msra.mxu0 %v3201
    %3288 = vmatprep.subr.bf16.mxu0 0
    %3289 = vmatpush1.bf16.msra.mxu0 %v3204
    %3290 = vmatprep.subr.bf16.mxu0 0
    %3291 = vmatpush1.bf16.msra.mxu0 %v3207
    %3292 = vmatprep.subr.bf16.mxu0 0
    %3293 = vmatpush1.bf16.msra.mxu0 %v3210
    %3294 = vmatprep.subr.bf16.mxu0 0
    %3295 = vmatpush1.bf16.msra.mxu0 %v3213
    %3296 = vmatprep.subr.bf16.mxu0 0
    %3297 = vmatpush1.bf16.msra.mxu0 %v3216
    %3298 = vmatprep.subr.bf16.mxu0 0
    %3299 = vmatpush1.bf16.msra.mxu0 0
    %3300 = vmatprep.subr.bf16.mxu0 0
    %3301 = vmatpush1.bf16.msra.mxu0 0
    %3302 = vmatprep.subr.bf16.mxu0 0
    %3303 = vmatpush1.bf16.msra.mxu0 0
    %3304 = vmatprep.subr.bf16.mxu0 0
    %3305 = vmatpush1.bf16.msra.mxu0 0
    %3306 = vmatprep.subr.bf16.mxu0 0
    %3307 = vmatpush1.bf16.msra.mxu0 0
    %3308 = vmatprep.subr.bf16.mxu0 0
    %3309 = vmatpush1.bf16.msra.mxu0 0
    %3310 = vmatprep.subr.bf16.mxu0 0
    %3311 = vmatpush1.bf16.msra.mxu0 0
    %3312 = vmatprep.subr.bf16.mxu0 0
    %3313 = vmatpush1.bf16.msra.mxu0 0
    %3314 = vmatprep.mubr.bf16.mxu0 0
    %3315 = vmatmul.mubr.bf16.gmra.mrb[0].mxu0 %v2793
    %v3316 = vpop.f32.mrb[0].mxu0
    %v3317 = vadd.f32 %v3109, %v3316
    %v3318 = vpop.f32.mrb[0].mxu0
    %v3319 = vpop.f32.mrb[0].mxu0
    %v3320 = vpop.f32.mrb[0].mxu0
    %3321 = vdwg.mxu0
    %v3322 = vpack.c.bf16 %v2259, %v2259
    %v3323 = vld [vmem:[#allocation15] sm:$0xff]
    %v3324 = vld [vmem:[#allocation15 + $0x8] sm:$0xf]
    %v3325 = vld [vmem:[#allocation15 + $0xc] sm:$0xff]
    %v3326 = vld [vmem:[#allocation15 + $0x14] sm:$0xf]
    %v3327 = vld [vmem:[#allocation15 + $0x18] sm:$0xff]
    %v3328 = vld [vmem:[#allocation15 + $0x20] sm:$0xf]
    %v3329 = vld [vmem:[#allocation15 + $0x24] sm:$0xff]
    %v3330 = vld [vmem:[#allocation15 + $0x2c] sm:$0xf]
    %v3331 = vld [vmem:[#allocation15 + $0x30] sm:$0xff]
    %v3332 = vld [vmem:[#allocation15 + $0x38] sm:$0xf]
    %v3333 = vld [vmem:[#allocation15 + $0x3c] sm:$0xff]
    %v3334 = vld [vmem:[#allocation15 + $0x44] sm:$0xf]
    %v3335 = vld [vmem:[#allocation15 + $0x48] sm:$0xff]
    %v3336 = vld [vmem:[#allocation15 + $0x50] sm:$0xf]
    %v3337 = vld [vmem:[#allocation15 + $0x54] sm:$0xff]
    %v3338 = vld [vmem:[#allocation15 + $0x5c] sm:$0xf]
    %v3339 = vld [vmem:[#allocation15 + $0x60] sm:$0xff]
    %v3340 = vld [vmem:[#allocation15 + $0x68] sm:$0xf]
    %v3341 = vld [vmem:[#allocation15 + $0x6c] sm:$0xff]
    %v3342 = vld [vmem:[#allocation15 + $0x74] sm:$0xf]
    %v3343 = vld [vmem:[#allocation15 + $0x78] sm:$0xff]
    %v3344 = vld [vmem:[#allocation15 + $0x80] sm:$0xf]
    %v3345 = vld [vmem:[#allocation15 + $0x84] sm:$0xff]
    %v3346 = vld [vmem:[#allocation15 + $0x8c] sm:$0xf]
    %v3347 = vld [vmem:[#allocation15 + $0x90] sm:$0xff]
    %v3348 = vld [vmem:[#allocation15 + $0x98] sm:$0xf]
    %v3349 = vld [vmem:[#allocation15 + $0x9c] sm:$0xff]
    %v3350 = vld [vmem:[#allocation15 + $0xa4] sm:$0xf]
    %v3351 = vld [vmem:[#allocation15 + $0xa8] sm:$0xff]
    %v3352 = vld [vmem:[#allocation15 + $0xb0] sm:$0xf]
    %v3353 = vld [vmem:[#allocation15 + $0xb4] sm:$0xff]
    %v3354 = vld [vmem:[#allocation15 + $0xbc] sm:$0xf]
    %v3387 = vunpack.c.l.b16 %v3323
    %v3388 = vunpack.c.h.b16 %v3323
    %v3389 = vunpack.c.l.b16 %v3324
    %v3390 = vunpack.c.l.b16 %v3325
    %v3391 = vunpack.c.h.b16 %v3325
    %v3392 = vunpack.c.l.b16 %v3326
    %v3393 = vunpack.c.l.b16 %v3327
    %v3394 = vunpack.c.h.b16 %v3327
    %v3395 = vunpack.c.l.b16 %v3328
    %v3396 = vunpack.c.l.b16 %v3329
    %v3397 = vunpack.c.h.b16 %v3329
    %v3398 = vunpack.c.l.b16 %v3330
    %v3399 = vunpack.c.l.b16 %v3331
    %v3400 = vunpack.c.h.b16 %v3331
    %v3401 = vunpack.c.l.b16 %v3332
    %v3402 = vunpack.c.l.b16 %v3333
    %v3403 = vunpack.c.h.b16 %v3333
    %v3404 = vunpack.c.l.b16 %v3334
    %v3405 = vunpack.c.l.b16 %v3335
    %v3406 = vunpack.c.h.b16 %v3335
    %v3407 = vunpack.c.l.b16 %v3336
    %v3408 = vunpack.c.l.b16 %v3337
    %v3409 = vunpack.c.h.b16 %v3337
    %v3410 = vunpack.c.l.b16 %v3338
    %v3411 = vunpack.c.l.b16 %v3339
    %v3412 = vunpack.c.h.b16 %v3339
    %v3413 = vunpack.c.l.b16 %v3340
    %v3414 = vunpack.c.l.b16 %v3341
    %v3415 = vunpack.c.h.b16 %v3341
    %v3416 = vunpack.c.l.b16 %v3342
    %v3417 = vunpack.c.l.b16 %v3343
    %v3418 = vunpack.c.h.b16 %v3343
    %v3419 = vunpack.c.l.b16 %v3344
    %v3420 = vunpack.c.l.b16 %v3345
    %v3421 = vunpack.c.h.b16 %v3345
    %v3422 = vunpack.c.l.b16 %v3346
    %v3423 = vunpack.c.l.b16 %v3347
    %v3424 = vunpack.c.h.b16 %v3347
    %v3425 = vunpack.c.l.b16 %v3348
    %v3426 = vunpack.c.l.b16 %v3349
    %v3427 = vunpack.c.h.b16 %v3349
    %v3428 = vunpack.c.l.b16 %v3350
    %v3429 = vunpack.c.l.b16 %v3351
    %v3430 = vunpack.c.h.b16 %v3351
    %v3431 = vunpack.c.l.b16 %v3352
    %v3432 = vunpack.c.l.b16 %v3353
    %v3433 = vunpack.c.h.b16 %v3353
    %v3434 = vunpack.c.l.b16 %v3354
    %v3435 = vpack.c.b16 %v3390, %v3387
    %v3436 = vpack.c.b16 %v3391, %v3388
    %v3437 = vpack.c.b16 %v3392, %v3389
    %v3438 = vpack.c.b16 %v3396, %v3393
    %v3439 = vpack.c.b16 %v3397, %v3394
    %v3440 = vpack.c.b16 %v3398, %v3395
    %v3441 = vpack.c.b16 %v3402, %v3399
    %v3442 = vpack.c.b16 %v3403, %v3400
    %v3443 = vpack.c.b16 %v3404, %v3401
    %v3444 = vpack.c.b16 %v3408, %v3405
    %v3445 = vpack.c.b16 %v3409, %v3406
    %v3446 = vpack.c.b16 %v3410, %v3407
    %v3447 = vpack.c.b16 %v3414, %v3411
    %v3448 = vpack.c.b16 %v3415, %v3412
    %v3449 = vpack.c.b16 %v3416, %v3413
    %v3450 = vpack.c.b16 %v3420, %v3417
    %v3451 = vpack.c.b16 %v3421, %v3418
    %v3452 = vpack.c.b16 %v3422, %v3419
    %v3453 = vpack.c.b16 %v3426, %v3423
    %v3454 = vpack.c.b16 %v3427, %v3424
    %v3455 = vpack.c.b16 %v3428, %v3425
    %v3456 = vpack.c.b16 %v3432, %v3429
    %v3457 = vpack.c.b16 %v3433, %v3430
    %v3458 = vpack.c.b16 %v3434, %v3431
    %3483 = vmatprep.subr.bf16.mxu0 %v3436
    %3484 = vmatpush1.bf16.msra.mxu0 %v3435
    %3485 = vmatprep.subr.bf16.mxu0 %v3439
    %3486 = vmatpush1.bf16.msra.mxu0 %v3438
    %3487 = vmatprep.subr.bf16.mxu0 %v3442
    %3488 = vmatpush1.bf16.msra.mxu0 %v3441
    %3489 = vmatprep.subr.bf16.mxu0 %v3445
    %3490 = vmatpush1.bf16.msra.mxu0 %v3444
    %3491 = vmatprep.subr.bf16.mxu0 %v3448
    %3492 = vmatpush1.bf16.msra.mxu0 %v3447
    %3493 = vmatprep.subr.bf16.mxu0 %v3451
    %3494 = vmatpush1.bf16.msra.mxu0 %v3450
    %3495 = vmatprep.subr.bf16.mxu0 %v3454
    %3496 = vmatpush1.bf16.msra.mxu0 %v3453
    %3497 = vmatprep.subr.bf16.mxu0 %v3457
    %3498 = vmatpush1.bf16.msra.mxu0 %v3456
    %3499 = vmatprep.subr.bf16.mxu0 0
    %3500 = vmatpush1.bf16.msra.mxu0 0
    %3501 = vmatprep.subr.bf16.mxu0 0
    %3502 = vmatpush1.bf16.msra.mxu0 0
    %3503 = vmatprep.subr.bf16.mxu0 0
    %3504 = vmatpush1.bf16.msra.mxu0 0
    %3505 = vmatprep.subr.bf16.mxu0 0
    %3506 = vmatpush1.bf16.msra.mxu0 0
    %3507 = vmatprep.subr.bf16.mxu0 0
    %3508 = vmatpush1.bf16.msra.mxu0 0
    %3509 = vmatprep.subr.bf16.mxu0 0
    %3510 = vmatpush1.bf16.msra.mxu0 0
    %3511 = vmatprep.subr.bf16.mxu0 0
    %3512 = vmatpush1.bf16.msra.mxu0 0
    %3513 = vmatprep.subr.bf16.mxu0 0
    %3514 = vmatpush1.bf16.msra.mxu0 0
    %3515 = vmatprep.mubr.bf16.mxu0 0
    %3516 = vmatmul.mubr.bf16.gmra.mrb[0].mxu0 %v3322
    %v3517 = vpop.f32.mrb[0].mxu0
    %v3518 = vadd.f32 0.0, %v3517
    %v3519 = vpop.f32.mrb[0].mxu0
    %v3520 = vadd.f32 0.0, %v3519
    %v3521 = vpop.f32.mrb[0].mxu0
    %v3522 = vpop.f32.mrb[0].mxu0
    %3523 = vdwg.mxu0
    %3524 = vmatprep.subr.bf16.mxu0 0
    %3525 = vmatpush1.bf16.msra.mxu0 %v3437
    %3526 = vmatprep.subr.bf16.mxu0 0
    %3527 = vmatpush1.bf16.msra.mxu0 %v3440
    %3528 = vmatprep.subr.bf16.mxu0 0
    %3529 = vmatpush1.bf16.msra.mxu0 %v3443
    %3530 = vmatprep.subr.bf16.mxu0 0
    %3531 = vmatpush1.bf16.msra.mxu0 %v3446
    %3532 = vmatprep.subr.bf16.mxu0 0
    %3533 = vmatpush1.bf16.msra.mxu0 %v3449
    %3534 = vmatprep.subr.bf16.mxu0 0
    %3535 = vmatpush1.bf16.msra.mxu0 %v3452
    %3536 = vmatprep.subr.bf16.mxu0 0
    %3537 = vmatpush1.bf16.msra.mxu0 %v3455
    %3538 = vmatprep.subr.bf16.mxu0 0
    %3539 = vmatpush1.bf16.msra.mxu0 %v3458
    %3540 = vmatprep.subr.bf16.mxu0 0
    %3541 = vmatpush1.bf16.msra.mxu0 0
    %3542 = vmatprep.subr.bf16.mxu0 0
    %3543 = vmatpush1.bf16.msra.mxu0 0
    %3544 = vmatprep.subr.bf16.mxu0 0
    %3545 = vmatpush1.bf16.msra.mxu0 0
    %3546 = vmatprep.subr.bf16.mxu0 0
    %3547 = vmatpush1.bf16.msra.mxu0 0
    %3548 = vmatprep.subr.bf16.mxu0 0
    %3549 = vmatpush1.bf16.msra.mxu0 0
    %3550 = vmatprep.subr.bf16.mxu0 0
    %3551 = vmatpush1.bf16.msra.mxu0 0
    %3552 = vmatprep.subr.bf16.mxu0 0
    %3553 = vmatpush1.bf16.msra.mxu0 0
    %3554 = vmatprep.subr.bf16.mxu0 0
    %3555 = vmatpush1.bf16.msra.mxu0 0
    %3556 = vmatprep.mubr.bf16.mxu0 0
    %3557 = vmatmul.mubr.bf16.gmra.mrb[0].mxu0 %v3322
    %v3558 = vpop.f32.mrb[0].mxu0
    %v3559 = vadd.f32 0.0, %v3558
    %v3560 = vpop.f32.mrb[0].mxu0
    %v3561 = vpop.f32.mrb[0].mxu0
    %v3562 = vpop.f32.mrb[0].mxu0
    %3563 = vdwg.mxu0
    %v3564 = vadd.f32 %v3276, %v3518
    %v3565 = vxor.u32 %v3564, 2147483648
    %v3566 = vmul.f32 %v3565, 1.442695
    %v3567 = vpow.pop %v3566
    %v3568 = vadd.f32 %v3567, 1.0
    %v3569 = vrcp.pop %v3568
    %v3570 = vmul.f32 1.0, %v3569
    %v3571 = vadd.f32 %v3278, %v3520
    %v3572 = vxor.u32 %v3571, 2147483648
    %v3573 = vmul.f32 %v3572, 1.442695
    %v3574 = vpow.pop %v3573
    %v3575 = vadd.f32 %v3574, 1.0
    %v3576 = vrcp.pop %v3575
    %v3577 = vmul.f32 1.0, %v3576
    %v3578 = vld [vmem:[%s12] sm:$0x1]
    %v3580 = vlaneseq
    %v3581 = vshrl.u32 %v3580, 7
    %v3582 = vsub.s32 0, %v3581
    %v3583 = vrot.slane %v3578, %v3582
    %v3585 = vadd.f32 %v3559, %v3583
    %v3586 = vmul.f32 %v3570, %v3585
    %v3587 = vadd.f32 %v3317, %v3586
    %v3588 = vtanh.pop %v3587
    %v3589 = vsub.f32 1.0, %v3577
    %v3590 = vmul.f32 %v3589, %v3588
    %v3591 = vmul.f32 %v3577, %v2259
    %v3592 = vadd.f32 %v3590, %v3591
    %3593 = vst [vmem:[#allocation3 + $0x8] sm:$0xff] %v3592
    %v3594 = vld [vmem:[#allocation2 + $0x60] sm:$0xff]
    %v3595 = vld [vmem:[#allocation2 + $0x68] sm:$0xff]
    %v3596 = vld [vmem:[#allocation2 + $0x70] sm:$0xff]
    %v3597 = vpack.c.bf16 %v2534, %v2534
    %v3598 = vld [vmem:[#allocation9] sm:$0xff]
    %v3599 = vld [vmem:[#allocation9 + $0x8] sm:$0xf]
    %v3600 = vld [vmem:[#allocation9 + $0xc] sm:$0xff]
    %v3601 = vld [vmem:[#allocation9 + $0x14] sm:$0xf]
    %v3602 = vld [vmem:[#allocation9 + $0x18] sm:$0xff]
    %v3603 = vld [vmem:[#allocation9 + $0x20] sm:$0xf]
    %v3604 = vld [vmem:[#allocation9 + $0x24] sm:$0xff]
    %v3605 = vld [vmem:[#allocation9 + $0x2c] sm:$0xf]
    %v3606 = vld [vmem:[#allocation9 + $0x30] sm:$0xff]
    %v3607 = vld [vmem:[#allocation9 + $0x38] sm:$0xf]
    %v3608 = vld [vmem:[#allocation9 + $0x3c] sm:$0xff]
    %v3609 = vld [vmem:[#allocation9 + $0x44] sm:$0xf]
    %v3610 = vld [vmem:[#allocation9 + $0x48] sm:$0xff]
    %v3611 = vld [vmem:[#allocation9 + $0x50] sm:$0xf]
    %v3612 = vld [vmem:[#allocation9 + $0x54] sm:$0xff]
    %v3613 = vld [vmem:[#allocation9 + $0x5c] sm:$0xf]
    %v3614 = vld [vmem:[#allocation9 + $0x60] sm:$0xff]
    %v3615 = vld [vmem:[#allocation9 + $0x68] sm:$0xf]
    %v3616 = vld [vmem:[#allocation9 + $0x6c] sm:$0xff]
    %v3617 = vld [vmem:[#allocation9 + $0x74] sm:$0xf]
    %v3618 = vld [vmem:[#allocation9 + $0x78] sm:$0xff]
    %v3619 = vld [vmem:[#allocation9 + $0x80] sm:$0xf]
    %v3620 = vld [vmem:[#allocation9 + $0x84] sm:$0xff]
    %v3621 = vld [vmem:[#allocation9 + $0x8c] sm:$0xf]
    %v3622 = vld [vmem:[#allocation9 + $0x90] sm:$0xff]
    %v3623 = vld [vmem:[#allocation9 + $0x98] sm:$0xf]
    %v3624 = vld [vmem:[#allocation9 + $0x9c] sm:$0xff]
    %v3625 = vld [vmem:[#allocation9 + $0xa4] sm:$0xf]
    %v3626 = vld [vmem:[#allocation9 + $0xa8] sm:$0xff]
    %v3627 = vld [vmem:[#allocation9 + $0xb0] sm:$0xf]
    %v3628 = vld [vmem:[#allocation9 + $0xb4] sm:$0xff]
    %v3629 = vld [vmem:[#allocation9 + $0xbc] sm:$0xf]
    %v3662 = vunpack.c.l.b16 %v3598
    %v3663 = vunpack.c.h.b16 %v3598
    %v3664 = vunpack.c.l.b16 %v3599
    %v3665 = vunpack.c.l.b16 %v3600
    %v3666 = vunpack.c.h.b16 %v3600
    %v3667 = vunpack.c.l.b16 %v3601
    %v3668 = vunpack.c.l.b16 %v3602
    %v3669 = vunpack.c.h.b16 %v3602
    %v3670 = vunpack.c.l.b16 %v3603
    %v3671 = vunpack.c.l.b16 %v3604
    %v3672 = vunpack.c.h.b16 %v3604
    %v3673 = vunpack.c.l.b16 %v3605
    %v3674 = vunpack.c.l.b16 %v3606
    %v3675 = vunpack.c.h.b16 %v3606
    %v3676 = vunpack.c.l.b16 %v3607
    %v3677 = vunpack.c.l.b16 %v3608
    %v3678 = vunpack.c.h.b16 %v3608
    %v3679 = vunpack.c.l.b16 %v3609
    %v3680 = vunpack.c.l.b16 %v3610
    %v3681 = vunpack.c.h.b16 %v3610
    %v3682 = vunpack.c.l.b16 %v3611
    %v3683 = vunpack.c.l.b16 %v3612
    %v3684 = vunpack.c.h.b16 %v3612
    %v3685 = vunpack.c.l.b16 %v3613
    %v3686 = vunpack.c.l.b16 %v3614
    %v3687 = vunpack.c.h.b16 %v3614
    %v3688 = vunpack.c.l.b16 %v3615
    %v3689 = vunpack.c.l.b16 %v3616
    %v3690 = vunpack.c.h.b16 %v3616
    %v3691 = vunpack.c.l.b16 %v3617
    %v3692 = vunpack.c.l.b16 %v3618
    %v3693 = vunpack.c.h.b16 %v3618
    %v3694 = vunpack.c.l.b16 %v3619
    %v3695 = vunpack.c.l.b16 %v3620
    %v3696 = vunpack.c.h.b16 %v3620
    %v3697 = vunpack.c.l.b16 %v3621
    %v3698 = vunpack.c.l.b16 %v3622
    %v3699 = vunpack.c.h.b16 %v3622
    %v3700 = vunpack.c.l.b16 %v3623
    %v3701 = vunpack.c.l.b16 %v3624
    %v3702 = vunpack.c.h.b16 %v3624
    %v3703 = vunpack.c.l.b16 %v3625
    %v3704 = vunpack.c.l.b16 %v3626
    %v3705 = vunpack.c.h.b16 %v3626
    %v3706 = vunpack.c.l.b16 %v3627
    %v3707 = vunpack.c.l.b16 %v3628
    %v3708 = vunpack.c.h.b16 %v3628
    %v3709 = vunpack.c.l.b16 %v3629
    %v3710 = vpack.c.b16 %v3665, %v3662
    %v3711 = vpack.c.b16 %v3666, %v3663
    %v3712 = vpack.c.b16 %v3667, %v3664
    %v3713 = vpack.c.b16 %v3671, %v3668
    %v3714 = vpack.c.b16 %v3672, %v3669
    %v3715 = vpack.c.b16 %v3673, %v3670
    %v3716 = vpack.c.b16 %v3677, %v3674
    %v3717 = vpack.c.b16 %v3678, %v3675
    %v3718 = vpack.c.b16 %v3679, %v3676
    %v3719 = vpack.c.b16 %v3683, %v3680
    %v3720 = vpack.c.b16 %v3684, %v3681
    %v3721 = vpack.c.b16 %v3685, %v3682
    %v3722 = vpack.c.b16 %v3689, %v3686
    %v3723 = vpack.c.b16 %v3690, %v3687
    %v3724 = vpack.c.b16 %v3691, %v3688
    %v3725 = vpack.c.b16 %v3695, %v3692
    %v3726 = vpack.c.b16 %v3696, %v3693
    %v3727 = vpack.c.b16 %v3697, %v3694
    %v3728 = vpack.c.b16 %v3701, %v3698
    %v3729 = vpack.c.b16 %v3702, %v3699
    %v3730 = vpack.c.b16 %v3703, %v3700
    %v3731 = vpack.c.b16 %v3707, %v3704
    %v3732 = vpack.c.b16 %v3708, %v3705
    %v3733 = vpack.c.b16 %v3709, %v3706
    %3758 = vmatprep.subr.bf16.mxu0 %v3711
    %3759 = vmatpush1.bf16.msra.mxu0 %v3710
    %3760 = vmatprep.subr.bf16.mxu0 %v3714
    %3761 = vmatpush1.bf16.msra.mxu0 %v3713
    %3762 = vmatprep.subr.bf16.mxu0 %v3717
    %3763 = vmatpush1.bf16.msra.mxu0 %v3716
    %3764 = vmatprep.subr.bf16.mxu0 %v3720
    %3765 = vmatpush1.bf16.msra.mxu0 %v3719
    %3766 = vmatprep.subr.bf16.mxu0 %v3723
    %3767 = vmatpush1.bf16.msra.mxu0 %v3722
    %3768 = vmatprep.subr.bf16.mxu0 %v3726
    %3769 = vmatpush1.bf16.msra.mxu0 %v3725
    %3770 = vmatprep.subr.bf16.mxu0 %v3729
    %3771 = vmatpush1.bf16.msra.mxu0 %v3728
    %3772 = vmatprep.subr.bf16.mxu0 %v3732
    %3773 = vmatpush1.bf16.msra.mxu0 %v3731
    %3774 = vmatprep.subr.bf16.mxu0 0
    %3775 = vmatpush1.bf16.msra.mxu0 0
    %3776 = vmatprep.subr.bf16.mxu0 0
    %3777 = vmatpush1.bf16.msra.mxu0 0
    %3778 = vmatprep.subr.bf16.mxu0 0
    %3779 = vmatpush1.bf16.msra.mxu0 0
    %3780 = vmatprep.subr.bf16.mxu0 0
    %3781 = vmatpush1.bf16.msra.mxu0 0
    %3782 = vmatprep.subr.bf16.mxu0 0
    %3783 = vmatpush1.bf16.msra.mxu0 0
    %3784 = vmatprep.subr.bf16.mxu0 0
    %3785 = vmatpush1.bf16.msra.mxu0 0
    %3786 = vmatprep.subr.bf16.mxu0 0
    %3787 = vmatpush1.bf16.msra.mxu0 0
    %3788 = vmatprep.subr.bf16.mxu0 0
    %3789 = vmatpush1.bf16.msra.mxu0 0
    %3790 = vmatprep.mubr.bf16.mxu0 0
    %3791 = vmatmul.mubr.bf16.gmra.mrb[0].mxu0 %v3597
    %v3792 = vpop.f32.mrb[0].mxu0
    %v3793 = vadd.f32 0.0, %v3792
    %v3794 = vpop.f32.mrb[0].mxu0
    %v3795 = vadd.f32 0.0, %v3794
    %v3796 = vpop.f32.mrb[0].mxu0
    %v3797 = vpop.f32.mrb[0].mxu0
    %3798 = vdwg.mxu0
    %3799 = vmatprep.subr.bf16.mxu0 0
    %3800 = vmatpush1.bf16.msra.mxu0 %v3712
    %3801 = vmatprep.subr.bf16.mxu0 0
    %3802 = vmatpush1.bf16.msra.mxu0 %v3715
    %3803 = vmatprep.subr.bf16.mxu0 0
    %3804 = vmatpush1.bf16.msra.mxu0 %v3718
    %3805 = vmatprep.subr.bf16.mxu0 0
    %3806 = vmatpush1.bf16.msra.mxu0 %v3721
    %3807 = vmatprep.subr.bf16.mxu0 0
    %3808 = vmatpush1.bf16.msra.mxu0 %v3724
    %3809 = vmatprep.subr.bf16.mxu0 0
    %3810 = vmatpush1.bf16.msra.mxu0 %v3727
    %3811 = vmatprep.subr.bf16.mxu0 0
    %3812 = vmatpush1.bf16.msra.mxu0 %v3730
    %3813 = vmatprep.subr.bf16.mxu0 0
    %3814 = vmatpush1.bf16.msra.mxu0 %v3733
    %3815 = vmatprep.subr.bf16.mxu0 0
    %3816 = vmatpush1.bf16.msra.mxu0 0
    %3817 = vmatprep.subr.bf16.mxu0 0
    %3818 = vmatpush1.bf16.msra.mxu0 0
    %3819 = vmatprep.subr.bf16.mxu0 0
    %3820 = vmatpush1.bf16.msra.mxu0 0
    %3821 = vmatprep.subr.bf16.mxu0 0
    %3822 = vmatpush1.bf16.msra.mxu0 0
    %3823 = vmatprep.subr.bf16.mxu0 0
    %3824 = vmatpush1.bf16.msra.mxu0 0
    %3825 = vmatprep.subr.bf16.mxu0 0
    %3826 = vmatpush1.bf16.msra.mxu0 0
    %3827 = vmatprep.subr.bf16.mxu0 0
    %3828 = vmatpush1.bf16.msra.mxu0 0
    %3829 = vmatprep.subr.bf16.mxu0 0
    %3830 = vmatpush1.bf16.msra.mxu0 0
    %3831 = vmatprep.mubr.bf16.mxu0 0
    %3832 = vmatmul.mubr.bf16.gmra.mrb[0].mxu0 %v3597
    %v3833 = vpop.f32.mrb[0].mxu0
    %v3834 = vadd.f32 0.0, %v3833
    %v3835 = vpop.f32.mrb[0].mxu0
    %v3836 = vpop.f32.mrb[0].mxu0
    %v3837 = vpop.f32.mrb[0].mxu0
    %3838 = vdwg.mxu0
    %v3839 = vadd.f32 %v3594, %v3793
    %v3840 = vxor.u32 %v3839, 2147483648
    %v3841 = vmul.f32 %v3840, 1.442695
    %v3842 = vpow.pop %v3841
    %v3843 = vadd.f32 %v3842, 1.0
    %v3844 = vrcp.pop %v3843
    %v3845 = vmul.f32 1.0, %v3844
    %v3846 = vadd.f32 %v3595, %v3795
    %v3847 = vxor.u32 %v3846, 2147483648
    %v3848 = vmul.f32 %v3847, 1.442695
    %v3849 = vpow.pop %v3848
    %v3850 = vadd.f32 %v3849, 1.0
    %v3851 = vrcp.pop %v3850
    %v3852 = vmul.f32 1.0, %v3851
    %v3853 = vld [vmem:[%s4] sm:$0x1]
    %v3855 = vlaneseq
    %v3856 = vshrl.u32 %v3855, 7
    %v3857 = vsub.s32 0, %v3856
    %v3858 = vrot.slane %v3853, %v3857
    %v3860 = vadd.f32 %v3834, %v3858
    %v3861 = vmul.f32 %v3845, %v3860
    %v3862 = vadd.f32 %v3596, %v3861
    %v3863 = vtanh.pop %v3862
    %v3864 = vsub.f32 1.0, %v3852
    %v3865 = vmul.f32 %v3864, %v3863
    %v3866 = vmul.f32 %v3852, %v2534
    %v3867 = vadd.f32 %v3865, %v3866
    %v3868 = vld [vmem:[#allocation10] sm:$0xff]
    %v3869 = vld [vmem:[#allocation10 + $0x8] sm:$0xf]
    %v3870 = vld [vmem:[#allocation10 + $0xc] sm:$0xff]
    %v3871 = vld [vmem:[#allocation10 + $0x14] sm:$0xf]
    %v3872 = vld [vmem:[#allocation10 + $0x18] sm:$0xff]
    %v3873 = vld [vmem:[#allocation10 + $0x20] sm:$0xf]
    %v3874 = vld [vmem:[#allocation10 + $0x24] sm:$0xff]
    %v3875 = vld [vmem:[#allocation10 + $0x2c] sm:$0xf]
    %v3876 = vld [vmem:[#allocation10 + $0x30] sm:$0xff]
    %v3877 = vld [vmem:[#allocation10 + $0x38] sm:$0xf]
    %v3878 = vld [vmem:[#allocation10 + $0x3c] sm:$0xff]
    %v3879 = vld [vmem:[#allocation10 + $0x44] sm:$0xf]
    %v3880 = vld [vmem:[#allocation10 + $0x48] sm:$0xff]
    %v3881 = vld [vmem:[#allocation10 + $0x50] sm:$0xf]
    %v3882 = vld [vmem:[#allocation10 + $0x54] sm:$0xff]
    %v3883 = vld [vmem:[#allocation10 + $0x5c] sm:$0xf]
    %v3884 = vld [vmem:[#allocation10 + $0x60] sm:$0xff]
    %v3885 = vld [vmem:[#allocation10 + $0x68] sm:$0xf]
    %v3886 = vld [vmem:[#allocation10 + $0x6c] sm:$0xff]
    %v3887 = vld [vmem:[#allocation10 + $0x74] sm:$0xf]
    %v3888 = vld [vmem:[#allocation10 + $0x78] sm:$0xff]
    %v3889 = vld [vmem:[#allocation10 + $0x80] sm:$0xf]
    %v3890 = vld [vmem:[#allocation10 + $0x84] sm:$0xff]
    %v3891 = vld [vmem:[#allocation10 + $0x8c] sm:$0xf]
    %v3892 = vld [vmem:[#allocation10 + $0x90] sm:$0xff]
    %v3893 = vld [vmem:[#allocation10 + $0x98] sm:$0xf]
    %v3894 = vld [vmem:[#allocation10 + $0x9c] sm:$0xff]
    %v3895 = vld [vmem:[#allocation10 + $0xa4] sm:$0xf]
    %v3896 = vld [vmem:[#allocation10 + $0xa8] sm:$0xff]
    %v3897 = vld [vmem:[#allocation10 + $0xb0] sm:$0xf]
    %v3898 = vld [vmem:[#allocation10 + $0xb4] sm:$0xff]
    %v3899 = vld [vmem:[#allocation10 + $0xbc] sm:$0xf]
    %v3900 = vld [vmem:[%s7] sm:$0x7]
    %v3902 = vlaneseq
    %v3903 = vshrl.u32 %v3902, 7
    %v3904 = vsub.s32 0, %v3903
    %v3905 = vrot.slane %v3900, %v3904
    %v3906 = vlaneseq
    %v3907 = vshrl.u32 %v3906, 7
    %v3908 = vsub.s32 1, %v3907
    %v3909 = vrot.slane %v3900, %v3908
    %v3910 = vlaneseq
    %v3911 = vshrl.u32 %v3910, 7
    %v3912 = vsub.s32 2, %v3911
    %v3913 = vrot.slane %v3900, %v3912
    %v3949 = vunpack.c.l.b16 %v3868
    %v3950 = vunpack.c.h.b16 %v3868
    %v3951 = vunpack.c.l.b16 %v3869
    %v3952 = vunpack.c.l.b16 %v3870
    %v3953 = vunpack.c.h.b16 %v3870
    %v3954 = vunpack.c.l.b16 %v3871
    %v3955 = vunpack.c.l.b16 %v3872
    %v3956 = vunpack.c.h.b16 %v3872
    %v3957 = vunpack.c.l.b16 %v3873
    %v3958 = vunpack.c.l.b16 %v3874
    %v3959 = vunpack.c.h.b16 %v3874
    %v3960 = vunpack.c.l.b16 %v3875
    %v3961 = vunpack.c.l.b16 %v3876
    %v3962 = vunpack.c.h.b16 %v3876
    %v3963 = vunpack.c.l.b16 %v3877
    %v3964 = vunpack.c.l.b16 %v3878
    %v3965 = vunpack.c.h.b16 %v3878
    %v3966 = vunpack.c.l.b16 %v3879
    %v3967 = vunpack.c.l.b16 %v3880
    %v3968 = vunpack.c.h.b16 %v3880
    %v3969 = vunpack.c.l.b16 %v3881
    %v3970 = vunpack.c.l.b16 %v3882
    %v3971 = vunpack.c.h.b16 %v3882
    %v3972 = vunpack.c.l.b16 %v3883
    %v3973 = vunpack.c.l.b16 %v3884
    %v3974 = vunpack.c.h.b16 %v3884
    %v3975 = vunpack.c.l.b16 %v3885
    %v3976 = vunpack.c.l.b16 %v3886
    %v3977 = vunpack.c.h.b16 %v3886
    %v3978 = vunpack.c.l.b16 %v3887
    %v3979 = vunpack.c.l.b16 %v3888
    %v3980 = vunpack.c.h.b16 %v3888
    %v3981 = vunpack.c.l.b16 %v3889
    %v3982 = vunpack.c.l.b16 %v3890
    %v3983 = vunpack.c.h.b16 %v3890
    %v3984 = vunpack.c.l.b16 %v3891
    %v3985 = vunpack.c.l.b16 %v3892
    %v3986 = vunpack.c.h.b16 %v3892
    %v3987 = vunpack.c.l.b16 %v3893
    %v3988 = vunpack.c.l.b16 %v3894
    %v3989 = vunpack.c.h.b16 %v3894
    %v3990 = vunpack.c.l.b16 %v3895
    %v3991 = vunpack.c.l.b16 %v3896
    %v3992 = vunpack.c.h.b16 %v3896
    %v3993 = vunpack.c.l.b16 %v3897
    %v3994 = vunpack.c.l.b16 %v3898
    %v3995 = vunpack.c.h.b16 %v3898
    %v3996 = vunpack.c.l.b16 %v3899
    %v3997 = vpack.c.b16 %v3952, %v3949
    %v3998 = vpack.c.b16 %v3953, %v3950
    %v3999 = vpack.c.b16 %v3954, %v3951
    %v4000 = vpack.c.b16 %v3958, %v3955
    %v4001 = vpack.c.b16 %v3959, %v3956
    %v4002 = vpack.c.b16 %v3960, %v3957
    %v4003 = vpack.c.b16 %v3964, %v3961
    %v4004 = vpack.c.b16 %v3965, %v3962
    %v4005 = vpack.c.b16 %v3966, %v3963
    %v4006 = vpack.c.b16 %v3970, %v3967
    %v4007 = vpack.c.b16 %v3971, %v3968
    %v4008 = vpack.c.b16 %v3972, %v3969
    %v4009 = vpack.c.b16 %v3976, %v3973
    %v4010 = vpack.c.b16 %v3977, %v3974
    %v4011 = vpack.c.b16 %v3978, %v3975
    %v4012 = vpack.c.b16 %v3982, %v3979
    %v4013 = vpack.c.b16 %v3983, %v3980
    %v4014 = vpack.c.b16 %v3984, %v3981
    %v4015 = vpack.c.b16 %v3988, %v3985
    %v4016 = vpack.c.b16 %v3989, %v3986
    %v4017 = vpack.c.b16 %v3990, %v3987
    %v4018 = vpack.c.b16 %v3994, %v3991
    %v4019 = vpack.c.b16 %v3995, %v3992
    %v4020 = vpack.c.b16 %v3996, %v3993
    %4045 = vmatprep.subr.bf16.mxu0 %v3998
    %4046 = vmatpush1.bf16.msra.mxu0 %v3997
    %4047 = vmatprep.subr.bf16.mxu0 %v4001
    %4048 = vmatpush1.bf16.msra.mxu0 %v4000
    %4049 = vmatprep.subr.bf16.mxu0 %v4004
    %4050 = vmatpush1.bf16.msra.mxu0 %v4003
    %4051 = vmatprep.subr.bf16.mxu0 %v4007
    %4052 = vmatpush1.bf16.msra.mxu0 %v4006
    %4053 = vmatprep.subr.bf16.mxu0 %v4010
    %4054 = vmatpush1.bf16.msra.mxu0 %v4009
    %4055 = vmatprep.subr.bf16.mxu0 %v4013
    %4056 = vmatpush1.bf16.msra.mxu0 %v4012
    %4057 = vmatprep.subr.bf16.mxu0 %v4016
    %4058 = vmatpush1.bf16.msra.mxu0 %v4015
    %4059 = vmatprep.subr.bf16.mxu0 %v4019
    %4060 = vmatpush1.bf16.msra.mxu0 %v4018
    %4061 = vmatprep.subr.bf16.mxu0 0
    %4062 = vmatpush1.bf16.msra.mxu0 0
    %4063 = vmatprep.subr.bf16.mxu0 0
    %4064 = vmatpush1.bf16.msra.mxu0 0
    %4065 = vmatprep.subr.bf16.mxu0 0
    %4066 = vmatpush1.bf16.msra.mxu0 0
    %4067 = vmatprep.subr.bf16.mxu0 0
    %4068 = vmatpush1.bf16.msra.mxu0 0
    %4069 = vmatprep.subr.bf16.mxu0 0
    %4070 = vmatpush1.bf16.msra.mxu0 0
    %4071 = vmatprep.subr.bf16.mxu0 0
    %4072 = vmatpush1.bf16.msra.mxu0 0
    %4073 = vmatprep.subr.bf16.mxu0 0
    %4074 = vmatpush1.bf16.msra.mxu0 0
    %4075 = vmatprep.subr.bf16.mxu0 0
    %4076 = vmatpush1.bf16.msra.mxu0 0
    %4077 = vmatprep.mubr.bf16.mxu0 0
    %4078 = vmatmul.mubr.bf16.gmra.mrb[0].mxu0 %v3597
    %v4079 = vpop.f32.mrb[0].mxu0
    %v4080 = vadd.f32 %v3905, %v4079
    %v4081 = vpop.f32.mrb[0].mxu0
    %v4082 = vadd.f32 %v3909, %v4081
    %v4083 = vpop.f32.mrb[0].mxu0
    %v4084 = vpop.f32.mrb[0].mxu0
    %4085 = vdwg.mxu0
    %4086 = vmatprep.subr.bf16.mxu0 0
    %4087 = vmatpush1.bf16.msra.mxu0 %v3999
    %4088 = vmatprep.subr.bf16.mxu0 0
    %4089 = vmatpush1.bf16.msra.mxu0 %v4002
    %4090 = vmatprep.subr.bf16.mxu0 0
    %4091 = vmatpush1.bf16.msra.mxu0 %v4005
    %4092 = vmatprep.subr.bf16.mxu0 0
    %4093 = vmatpush1.bf16.msra.mxu0 %v4008
    %4094 = vmatprep.subr.bf16.mxu0 0
    %4095 = vmatpush1.bf16.msra.mxu0 %v4011
    %4096 = vmatprep.subr.bf16.mxu0 0
    %4097 = vmatpush1.bf16.msra.mxu0 %v4014
    %4098 = vmatprep.subr.bf16.mxu0 0
    %4099 = vmatpush1.bf16.msra.mxu0 %v4017
    %4100 = vmatprep.subr.bf16.mxu0 0
    %4101 = vmatpush1.bf16.msra.mxu0 %v4020
    %4102 = vmatprep.subr.bf16.mxu0 0
    %4103 = vmatpush1.bf16.msra.mxu0 0
    %4104 = vmatprep.subr.bf16.mxu0 0
    %4105 = vmatpush1.bf16.msra.mxu0 0
    %4106 = vmatprep.subr.bf16.mxu0 0
    %4107 = vmatpush1.bf16.msra.mxu0 0
    %4108 = vmatprep.subr.bf16.mxu0 0
    %4109 = vmatpush1.bf16.msra.mxu0 0
    %4110 = vmatprep.subr.bf16.mxu0 0
    %4111 = vmatpush1.bf16.msra.mxu0 0
    %4112 = vmatprep.subr.bf16.mxu0 0
    %4113 = vmatpush1.bf16.msra.mxu0 0
    %4114 = vmatprep.subr.bf16.mxu0 0
    %4115 = vmatpush1.bf16.msra.mxu0 0
    %4116 = vmatprep.subr.bf16.mxu0 0
    %4117 = vmatpush1.bf16.msra.mxu0 0
    %4118 = vmatprep.mubr.bf16.mxu0 0
    %4119 = vmatmul.mubr.bf16.gmra.mrb[0].mxu0 %v3597
    %v4120 = vpop.f32.mrb[0].mxu0
    %v4121 = vadd.f32 %v3913, %v4120
    %v4122 = vpop.f32.mrb[0].mxu0
    %v4123 = vpop.f32.mrb[0].mxu0
    %v4124 = vpop.f32.mrb[0].mxu0
    %4125 = vdwg.mxu0
    %v4126 = vpack.c.bf16 %v3063, %v3063
    %v4127 = vld [vmem:[#allocation12] sm:$0xff]
    %v4128 = vld [vmem:[#allocation12 + $0x8] sm:$0xf]
    %v4129 = vld [vmem:[#allocation12 + $0xc] sm:$0xff]
    %v4130 = vld [vmem:[#allocation12 + $0x14] sm:$0xf]
    %v4131 = vld [vmem:[#allocation12 + $0x18] sm:$0xff]
    %v4132 = vld [vmem:[#allocation12 + $0x20] sm:$0xf]
    %v4133 = vld [vmem:[#allocation12 + $0x24] sm:$0xff]
    %v4134 = vld [vmem:[#allocation12 + $0x2c] sm:$0xf]
    %v4135 = vld [vmem:[#allocation12 + $0x30] sm:$0xff]
    %v4136 = vld [vmem:[#allocation12 + $0x38] sm:$0xf]
    %v4137 = vld [vmem:[#allocation12 + $0x3c] sm:$0xff]
    %v4138 = vld [vmem:[#allocation12 + $0x44] sm:$0xf]
    %v4139 = vld [vmem:[#allocation12 + $0x48] sm:$0xff]
    %v4140 = vld [vmem:[#allocation12 + $0x50] sm:$0xf]
    %v4141 = vld [vmem:[#allocation12 + $0x54] sm:$0xff]
    %v4142 = vld [vmem:[#allocation12 + $0x5c] sm:$0xf]
    %v4143 = vld [vmem:[#allocation12 + $0x60] sm:$0xff]
    %v4144 = vld [vmem:[#allocation12 + $0x68] sm:$0xf]
    %v4145 = vld [vmem:[#allocation12 + $0x6c] sm:$0xff]
    %v4146 = vld [vmem:[#allocation12 + $0x74] sm:$0xf]
    %v4147 = vld [vmem:[#allocation12 + $0x78] sm:$0xff]
    %v4148 = vld [vmem:[#allocation12 + $0x80] sm:$0xf]
    %v4149 = vld [vmem:[#allocation12 + $0x84] sm:$0xff]
    %v4150 = vld [vmem:[#allocation12 + $0x8c] sm:$0xf]
    %v4151 = vld [vmem:[#allocation12 + $0x90] sm:$0xff]
    %v4152 = vld [vmem:[#allocation12 + $0x98] sm:$0xf]
    %v4153 = vld [vmem:[#allocation12 + $0x9c] sm:$0xff]
    %v4154 = vld [vmem:[#allocation12 + $0xa4] sm:$0xf]
    %v4155 = vld [vmem:[#allocation12 + $0xa8] sm:$0xff]
    %v4156 = vld [vmem:[#allocation12 + $0xb0] sm:$0xf]
    %v4157 = vld [vmem:[#allocation12 + $0xb4] sm:$0xff]
    %v4158 = vld [vmem:[#allocation12 + $0xbc] sm:$0xf]
    %v4191 = vunpack.c.l.b16 %v4127
    %v4192 = vunpack.c.h.b16 %v4127
    %v4193 = vunpack.c.l.b16 %v4128
    %v4194 = vunpack.c.l.b16 %v4129
    %v4195 = vunpack.c.h.b16 %v4129
    %v4196 = vunpack.c.l.b16 %v4130
    %v4197 = vunpack.c.l.b16 %v4131
    %v4198 = vunpack.c.h.b16 %v4131
    %v4199 = vunpack.c.l.b16 %v4132
    %v4200 = vunpack.c.l.b16 %v4133
    %v4201 = vunpack.c.h.b16 %v4133
    %v4202 = vunpack.c.l.b16 %v4134
    %v4203 = vunpack.c.l.b16 %v4135
    %v4204 = vunpack.c.h.b16 %v4135
    %v4205 = vunpack.c.l.b16 %v4136
    %v4206 = vunpack.c.l.b16 %v4137
    %v4207 = vunpack.c.h.b16 %v4137
    %v4208 = vunpack.c.l.b16 %v4138
    %v4209 = vunpack.c.l.b16 %v4139
    %v4210 = vunpack.c.h.b16 %v4139
    %v4211 = vunpack.c.l.b16 %v4140
    %v4212 = vunpack.c.l.b16 %v4141
    %v4213 = vunpack.c.h.b16 %v4141
    %v4214 = vunpack.c.l.b16 %v4142
    %v4215 = vunpack.c.l.b16 %v4143
    %v4216 = vunpack.c.h.b16 %v4143
    %v4217 = vunpack.c.l.b16 %v4144
    %v4218 = vunpack.c.l.b16 %v4145
    %v4219 = vunpack.c.h.b16 %v4145
    %v4220 = vunpack.c.l.b16 %v4146
    %v4221 = vunpack.c.l.b16 %v4147
    %v4222 = vunpack.c.h.b16 %v4147
    %v4223 = vunpack.c.l.b16 %v4148
    %v4224 = vunpack.c.l.b16 %v4149
    %v4225 = vunpack.c.h.b16 %v4149
    %v4226 = vunpack.c.l.b16 %v4150
    %v4227 = vunpack.c.l.b16 %v4151
    %v4228 = vunpack.c.h.b16 %v4151
    %v4229 = vunpack.c.l.b16 %v4152
    %v4230 = vunpack.c.l.b16 %v4153
    %v4231 = vunpack.c.h.b16 %v4153
    %v4232 = vunpack.c.l.b16 %v4154
    %v4233 = vunpack.c.l.b16 %v4155
    %v4234 = vunpack.c.h.b16 %v4155
    %v4235 = vunpack.c.l.b16 %v4156
    %v4236 = vunpack.c.l.b16 %v4157
    %v4237 = vunpack.c.h.b16 %v4157
    %v4238 = vunpack.c.l.b16 %v4158
    %v4239 = vpack.c.b16 %v4194, %v4191
    %v4240 = vpack.c.b16 %v4195, %v4192
    %v4241 = vpack.c.b16 %v4196, %v4193
    %v4242 = vpack.c.b16 %v4200, %v4197
    %v4243 = vpack.c.b16 %v4201, %v4198
    %v4244 = vpack.c.b16 %v4202, %v4199
    %v4245 = vpack.c.b16 %v4206, %v4203
    %v4246 = vpack.c.b16 %v4207, %v4204
    %v4247 = vpack.c.b16 %v4208, %v4205
    %v4248 = vpack.c.b16 %v4212, %v4209
    %v4249 = vpack.c.b16 %v4213, %v4210
    %v4250 = vpack.c.b16 %v4214, %v4211
    %v4251 = vpack.c.b16 %v4218, %v4215
    %v4252 = vpack.c.b16 %v4219, %v4216
    %v4253 = vpack.c.b16 %v4220, %v4217
    %v4254 = vpack.c.b16 %v4224, %v4221
    %v4255 = vpack.c.b16 %v4225, %v4222
    %v4256 = vpack.c.b16 %v4226, %v4223
    %v4257 = vpack.c.b16 %v4230, %v4227
    %v4258 = vpack.c.b16 %v4231, %v4228
    %v4259 = vpack.c.b16 %v4232, %v4229
    %v4260 = vpack.c.b16 %v4236, %v4233
    %v4261 = vpack.c.b16 %v4237, %v4234
    %v4262 = vpack.c.b16 %v4238, %v4235
    %4287 = vmatprep.subr.bf16.mxu0 %v4240
    %4288 = vmatpush1.bf16.msra.mxu0 %v4239
    %4289 = vmatprep.subr.bf16.mxu0 %v4243
    %4290 = vmatpush1.bf16.msra.mxu0 %v4242
    %4291 = vmatprep.subr.bf16.mxu0 %v4246
    %4292 = vmatpush1.bf16.msra.mxu0 %v4245
    %4293 = vmatprep.subr.bf16.mxu0 %v4249
    %4294 = vmatpush1.bf16.msra.mxu0 %v4248
    %4295 = vmatprep.subr.bf16.mxu0 %v4252
    %4296 = vmatpush1.bf16.msra.mxu0 %v4251
    %4297 = vmatprep.subr.bf16.mxu0 %v4255
    %4298 = vmatpush1.bf16.msra.mxu0 %v4254
    %4299 = vmatprep.subr.bf16.mxu0 %v4258
    %4300 = vmatpush1.bf16.msra.mxu0 %v4257
    %4301 = vmatprep.subr.bf16.mxu0 %v4261
    %4302 = vmatpush1.bf16.msra.mxu0 %v4260
    %4303 = vmatprep.subr.bf16.mxu0 0
    %4304 = vmatpush1.bf16.msra.mxu0 0
    %4305 = vmatprep.subr.bf16.mxu0 0
    %4306 = vmatpush1.bf16.msra.mxu0 0
    %4307 = vmatprep.subr.bf16.mxu0 0
    %4308 = vmatpush1.bf16.msra.mxu0 0
    %4309 = vmatprep.subr.bf16.mxu0 0
    %4310 = vmatpush1.bf16.msra.mxu0 0
    %4311 = vmatprep.subr.bf16.mxu0 0
    %4312 = vmatpush1.bf16.msra.mxu0 0
    %4313 = vmatprep.subr.bf16.mxu0 0
    %4314 = vmatpush1.bf16.msra.mxu0 0
    %4315 = vmatprep.subr.bf16.mxu0 0
    %4316 = vmatpush1.bf16.msra.mxu0 0
    %4317 = vmatprep.subr.bf16.mxu0 0
    %4318 = vmatpush1.bf16.msra.mxu0 0
    %4319 = vmatprep.mubr.bf16.mxu0 0
    %4320 = vmatmul.mubr.bf16.gmra.mrb[0].mxu0 %v4126
    %v4321 = vpop.f32.mrb[0].mxu0
    %v4322 = vadd.f32 0.0, %v4321
    %v4323 = vpop.f32.mrb[0].mxu0
    %v4324 = vadd.f32 0.0, %v4323
    %v4325 = vpop.f32.mrb[0].mxu0
    %v4326 = vpop.f32.mrb[0].mxu0
    %4327 = vdwg.mxu0
    %4328 = vmatprep.subr.bf16.mxu0 0
    %4329 = vmatpush1.bf16.msra.mxu0 %v4241
    %4330 = vmatprep.subr.bf16.mxu0 0
    %4331 = vmatpush1.bf16.msra.mxu0 %v4244
    %4332 = vmatprep.subr.bf16.mxu0 0
    %4333 = vmatpush1.bf16.msra.mxu0 %v4247
    %4334 = vmatprep.subr.bf16.mxu0 0
    %4335 = vmatpush1.bf16.msra.mxu0 %v4250
    %4336 = vmatprep.subr.bf16.mxu0 0
    %4337 = vmatpush1.bf16.msra.mxu0 %v4253
    %4338 = vmatprep.subr.bf16.mxu0 0
    %4339 = vmatpush1.bf16.msra.mxu0 %v4256
    %4340 = vmatprep.subr.bf16.mxu0 0
    %4341 = vmatpush1.bf16.msra.mxu0 %v4259
    %4342 = vmatprep.subr.bf16.mxu0 0
    %4343 = vmatpush1.bf16.msra.mxu0 %v4262
    %4344 = vmatprep.subr.bf16.mxu0 0
    %4345 = vmatpush1.bf16.msra.mxu0 0
    %4346 = vmatprep.subr.bf16.mxu0 0
    %4347 = vmatpush1.bf16.msra.mxu0 0
    %4348 = vmatprep.subr.bf16.mxu0 0
    %4349 = vmatpush1.bf16.msra.mxu0 0
    %4350 = vmatprep.subr.bf16.mxu0 0
    %4351 = vmatpush1.bf16.msra.mxu0 0
    %4352 = vmatprep.subr.bf16.mxu0 0
    %4353 = vmatpush1.bf16.msra.mxu0 0
    %4354 = vmatprep.subr.bf16.mxu0 0
    %4355 = vmatpush1.bf16.msra.mxu0 0
    %4356 = vmatprep.subr.bf16.mxu0 0
    %4357 = vmatpush1.bf16.msra.mxu0 0
    %4358 = vmatprep.subr.bf16.mxu0 0
    %4359 = vmatpush1.bf16.msra.mxu0 0
    %4360 = vmatprep.mubr.bf16.mxu0 0
    %4361 = vmatmul.mubr.bf16.gmra.mrb[0].mxu0 %v4126
    %v4362 = vpop.f32.mrb[0].mxu0
    %v4363 = vadd.f32 0.0, %v4362
    %v4364 = vpop.f32.mrb[0].mxu0
    %v4365 = vpop.f32.mrb[0].mxu0
    %v4366 = vpop.f32.mrb[0].mxu0
    %4367 = vdwg.mxu0
    %v4368 = vadd.f32 %v4080, %v4322
    %v4369 = vxor.u32 %v4368, 2147483648
    %v4370 = vmul.f32 %v4369, 1.442695
    %v4371 = vpow.pop %v4370
    %v4372 = vadd.f32 %v4371, 1.0
    %v4373 = vrcp.pop %v4372
    %v4374 = vmul.f32 1.0, %v4373
    %v4375 = vadd.f32 %v4082, %v4324
    %v4376 = vxor.u32 %v4375, 2147483648
    %v4377 = vmul.f32 %v4376, 1.442695
    %v4378 = vpow.pop %v4377
    %v4379 = vadd.f32 %v4378, 1.0
    %v4380 = vrcp.pop %v4379
    %v4381 = vmul.f32 1.0, %v4380
    %v4382 = vld [vmem:[%s8] sm:$0x1]
    %v4384 = vlaneseq
    %v4385 = vshrl.u32 %v4384, 7
    %v4386 = vsub.s32 0, %v4385
    %v4387 = vrot.slane %v4382, %v4386
    %v4389 = vadd.f32 %v4363, %v4387
    %v4390 = vmul.f32 %v4374, %v4389
    %v4391 = vadd.f32 %v4121, %v4390
    %v4392 = vtanh.pop %v4391
    %v4393 = vsub.f32 1.0, %v4381
    %v4394 = vmul.f32 %v4393, %v4392
    %v4395 = vmul.f32 %v4381, %v3063
    %v4396 = vadd.f32 %v4394, %v4395
    %v4397 = vld [vmem:[#allocation13] sm:$0xff]
    %v4398 = vld [vmem:[#allocation13 + $0x8] sm:$0xf]
    %v4399 = vld [vmem:[#allocation13 + $0xc] sm:$0xff]
    %v4400 = vld [vmem:[#allocation13 + $0x14] sm:$0xf]
    %v4401 = vld [vmem:[#allocation13 + $0x18] sm:$0xff]
    %v4402 = vld [vmem:[#allocation13 + $0x20] sm:$0xf]
    %v4403 = vld [vmem:[#allocation13 + $0x24] sm:$0xff]
    %v4404 = vld [vmem:[#allocation13 + $0x2c] sm:$0xf]
    %v4405 = vld [vmem:[#allocation13 + $0x30] sm:$0xff]
    %v4406 = vld [vmem:[#allocation13 + $0x38] sm:$0xf]
    %v4407 = vld [vmem:[#allocation13 + $0x3c] sm:$0xff]
    %v4408 = vld [vmem:[#allocation13 + $0x44] sm:$0xf]
    %v4409 = vld [vmem:[#allocation13 + $0x48] sm:$0xff]
    %v4410 = vld [vmem:[#allocation13 + $0x50] sm:$0xf]
    %v4411 = vld [vmem:[#allocation13 + $0x54] sm:$0xff]
    %v4412 = vld [vmem:[#allocation13 + $0x5c] sm:$0xf]
    %v4413 = vld [vmem:[#allocation13 + $0x60] sm:$0xff]
    %v4414 = vld [vmem:[#allocation13 + $0x68] sm:$0xf]
    %v4415 = vld [vmem:[#allocation13 + $0x6c] sm:$0xff]
    %v4416 = vld [vmem:[#allocation13 + $0x74] sm:$0xf]
    %v4417 = vld [vmem:[#allocation13 + $0x78] sm:$0xff]
    %v4418 = vld [vmem:[#allocation13 + $0x80] sm:$0xf]
    %v4419 = vld [vmem:[#allocation13 + $0x84] sm:$0xff]
    %v4420 = vld [vmem:[#allocation13 + $0x8c] sm:$0xf]
    %v4421 = vld [vmem:[#allocation13 + $0x90] sm:$0xff]
    %v4422 = vld [vmem:[#allocation13 + $0x98] sm:$0xf]
    %v4423 = vld [vmem:[#allocation13 + $0x9c] sm:$0xff]
    %v4424 = vld [vmem:[#allocation13 + $0xa4] sm:$0xf]
    %v4425 = vld [vmem:[#allocation13 + $0xa8] sm:$0xff]
    %v4426 = vld [vmem:[#allocation13 + $0xb0] sm:$0xf]
    %v4427 = vld [vmem:[#allocation13 + $0xb4] sm:$0xff]
    %v4428 = vld [vmem:[#allocation13 + $0xbc] sm:$0xf]
    %v4429 = vld [vmem:[%s11] sm:$0x7]
    %v4431 = vlaneseq
    %v4432 = vshrl.u32 %v4431, 7
    %v4433 = vsub.s32 0, %v4432
    %v4434 = vrot.slane %v4429, %v4433
    %v4435 = vlaneseq
    %v4436 = vshrl.u32 %v4435, 7
    %v4437 = vsub.s32 1, %v4436
    %v4438 = vrot.slane %v4429, %v4437
    %v4439 = vlaneseq
    %v4440 = vshrl.u32 %v4439, 7
    %v4441 = vsub.s32 2, %v4440
    %v4442 = vrot.slane %v4429, %v4441
    %v4478 = vunpack.c.l.b16 %v4397
    %v4479 = vunpack.c.h.b16 %v4397
    %v4480 = vunpack.c.l.b16 %v4398
    %v4481 = vunpack.c.l.b16 %v4399
    %v4482 = vunpack.c.h.b16 %v4399
    %v4483 = vunpack.c.l.b16 %v4400
    %v4484 = vunpack.c.l.b16 %v4401
    %v4485 = vunpack.c.h.b16 %v4401
    %v4486 = vunpack.c.l.b16 %v4402
    %v4487 = vunpack.c.l.b16 %v4403
    %v4488 = vunpack.c.h.b16 %v4403
    %v4489 = vunpack.c.l.b16 %v4404
    %v4490 = vunpack.c.l.b16 %v4405
    %v4491 = vunpack.c.h.b16 %v4405
    %v4492 = vunpack.c.l.b16 %v4406
    %v4493 = vunpack.c.l.b16 %v4407
    %v4494 = vunpack.c.h.b16 %v4407
    %v4495 = vunpack.c.l.b16 %v4408
    %v4496 = vunpack.c.l.b16 %v4409
    %v4497 = vunpack.c.h.b16 %v4409
    %v4498 = vunpack.c.l.b16 %v4410
    %v4499 = vunpack.c.l.b16 %v4411
    %v4500 = vunpack.c.h.b16 %v4411
    %v4501 = vunpack.c.l.b16 %v4412
    %v4502 = vunpack.c.l.b16 %v4413
    %v4503 = vunpack.c.h.b16 %v4413
    %v4504 = vunpack.c.l.b16 %v4414
    %v4505 = vunpack.c.l.b16 %v4415
    %v4506 = vunpack.c.h.b16 %v4415
    %v4507 = vunpack.c.l.b16 %v4416
    %v4508 = vunpack.c.l.b16 %v4417
    %v4509 = vunpack.c.h.b16 %v4417
    %v4510 = vunpack.c.l.b16 %v4418
    %v4511 = vunpack.c.l.b16 %v4419
    %v4512 = vunpack.c.h.b16 %v4419
    %v4513 = vunpack.c.l.b16 %v4420
    %v4514 = vunpack.c.l.b16 %v4421
    %v4515 = vunpack.c.h.b16 %v4421
    %v4516 = vunpack.c.l.b16 %v4422
    %v4517 = vunpack.c.l.b16 %v4423
    %v4518 = vunpack.c.h.b16 %v4423
    %v4519 = vunpack.c.l.b16 %v4424
    %v4520 = vunpack.c.l.b16 %v4425
    %v4521 = vunpack.c.h.b16 %v4425
    %v4522 = vunpack.c.l.b16 %v4426
    %v4523 = vunpack.c.l.b16 %v4427
    %v4524 = vunpack.c.h.b16 %v4427
    %v4525 = vunpack.c.l.b16 %v4428
    %v4526 = vpack.c.b16 %v4481, %v4478
    %v4527 = vpack.c.b16 %v4482, %v4479
    %v4528 = vpack.c.b16 %v4483, %v4480
    %v4529 = vpack.c.b16 %v4487, %v4484
    %v4530 = vpack.c.b16 %v4488, %v4485
    %v4531 = vpack.c.b16 %v4489, %v4486
    %v4532 = vpack.c.b16 %v4493, %v4490
    %v4533 = vpack.c.b16 %v4494, %v4491
    %v4534 = vpack.c.b16 %v4495, %v4492
    %v4535 = vpack.c.b16 %v4499, %v4496
    %v4536 = vpack.c.b16 %v4500, %v4497
    %v4537 = vpack.c.b16 %v4501, %v4498
    %v4538 = vpack.c.b16 %v4505, %v4502
    %v4539 = vpack.c.b16 %v4506, %v4503
    %v4540 = vpack.c.b16 %v4507, %v4504
    %v4541 = vpack.c.b16 %v4511, %v4508
    %v4542 = vpack.c.b16 %v4512, %v4509
    %v4543 = vpack.c.b16 %v4513, %v4510
    %v4544 = vpack.c.b16 %v4517, %v4514
    %v4545 = vpack.c.b16 %v4518, %v4515
    %v4546 = vpack.c.b16 %v4519, %v4516
    %v4547 = vpack.c.b16 %v4523, %v4520
    %v4548 = vpack.c.b16 %v4524, %v4521
    %v4549 = vpack.c.b16 %v4525, %v4522
    %4574 = vmatprep.subr.bf16.mxu0 %v4527
    %4575 = vmatpush1.bf16.msra.mxu0 %v4526
    %4576 = vmatprep.subr.bf16.mxu0 %v4530
    %4577 = vmatpush1.bf16.msra.mxu0 %v4529
    %4578 = vmatprep.subr.bf16.mxu0 %v4533
    %4579 = vmatpush1.bf16.msra.mxu0 %v4532
    %4580 = vmatprep.subr.bf16.mxu0 %v4536
    %4581 = vmatpush1.bf16.msra.mxu0 %v4535
    %4582 = vmatprep.subr.bf16.mxu0 %v4539
    %4583 = vmatpush1.bf16.msra.mxu0 %v4538
    %4584 = vmatprep.subr.bf16.mxu0 %v4542
    %4585 = vmatpush1.bf16.msra.mxu0 %v4541
    %4586 = vmatprep.subr.bf16.mxu0 %v4545
    %4587 = vmatpush1.bf16.msra.mxu0 %v4544
    %4588 = vmatprep.subr.bf16.mxu0 %v4548
    %4589 = vmatpush1.bf16.msra.mxu0 %v4547
    %4590 = vmatprep.subr.bf16.mxu0 0
    %4591 = vmatpush1.bf16.msra.mxu0 0
    %4592 = vmatprep.subr.bf16.mxu0 0
    %4593 = vmatpush1.bf16.msra.mxu0 0
    %4594 = vmatprep.subr.bf16.mxu0 0
    %4595 = vmatpush1.bf16.msra.mxu0 0
    %4596 = vmatprep.subr.bf16.mxu0 0
    %4597 = vmatpush1.bf16.msra.mxu0 0
    %4598 = vmatprep.subr.bf16.mxu0 0
    %4599 = vmatpush1.bf16.msra.mxu0 0
    %4600 = vmatprep.subr.bf16.mxu0 0
    %4601 = vmatpush1.bf16.msra.mxu0 0
    %4602 = vmatprep.subr.bf16.mxu0 0
    %4603 = vmatpush1.bf16.msra.mxu0 0
    %4604 = vmatprep.subr.bf16.mxu0 0
    %4605 = vmatpush1.bf16.msra.mxu0 0
    %4606 = vmatprep.mubr.bf16.mxu0 0
    %4607 = vmatmul.mubr.bf16.gmra.mrb[0].mxu0 %v4126
    %v4608 = vpop.f32.mrb[0].mxu0
    %v4609 = vadd.f32 %v4434, %v4608
    %v4610 = vpop.f32.mrb[0].mxu0
    %v4611 = vadd.f32 %v4438, %v4610
    %v4612 = vpop.f32.mrb[0].mxu0
    %v4613 = vpop.f32.mrb[0].mxu0
    %4614 = vdwg.mxu0
    %4615 = vmatprep.subr.bf16.mxu0 0
    %4616 = vmatpush1.bf16.msra.mxu0 %v4528
    %4617 = vmatprep.subr.bf16.mxu0 0
    %4618 = vmatpush1.bf16.msra.mxu0 %v4531
    %4619 = vmatprep.subr.bf16.mxu0 0
    %4620 = vmatpush1.bf16.msra.mxu0 %v4534
    %4621 = vmatprep.subr.bf16.mxu0 0
    %4622 = vmatpush1.bf16.msra.mxu0 %v4537
    %4623 = vmatprep.subr.bf16.mxu0 0
    %4624 = vmatpush1.bf16.msra.mxu0 %v4540
    %4625 = vmatprep.subr.bf16.mxu0 0
    %4626 = vmatpush1.bf16.msra.mxu0 %v4543
    %4627 = vmatprep.subr.bf16.mxu0 0
    %4628 = vmatpush1.bf16.msra.mxu0 %v4546
    %4629 = vmatprep.subr.bf16.mxu0 0
    %4630 = vmatpush1.bf16.msra.mxu0 %v4549
    %4631 = vmatprep.subr.bf16.mxu0 0
    %4632 = vmatpush1.bf16.msra.mxu0 0
    %4633 = vmatprep.subr.bf16.mxu0 0
    %4634 = vmatpush1.bf16.msra.mxu0 0
    %4635 = vmatprep.subr.bf16.mxu0 0
    %4636 = vmatpush1.bf16.msra.mxu0 0
    %4637 = vmatprep.subr.bf16.mxu0 0
    %4638 = vmatpush1.bf16.msra.mxu0 0
    %4639 = vmatprep.subr.bf16.mxu0 0
    %4640 = vmatpush1.bf16.msra.mxu0 0
    %4641 = vmatprep.subr.bf16.mxu0 0
    %4642 = vmatpush1.bf16.msra.mxu0 0
    %4643 = vmatprep.subr.bf16.mxu0 0
    %4644 = vmatpush1.bf16.msra.mxu0 0
    %4645 = vmatprep.subr.bf16.mxu0 0
    %4646 = vmatpush1.bf16.msra.mxu0 0
    %4647 = vmatprep.mubr.bf16.mxu0 0
    %4648 = vmatmul.mubr.bf16.gmra.mrb[0].mxu0 %v4126
    %v4649 = vpop.f32.mrb[0].mxu0
    %v4650 = vadd.f32 %v4442, %v4649
    %v4651 = vpop.f32.mrb[0].mxu0
    %v4652 = vpop.f32.mrb[0].mxu0
    %v4653 = vpop.f32.mrb[0].mxu0
    %4654 = vdwg.mxu0
    %v4655 = vpack.c.bf16 %v3592, %v3592
    %v4656 = vld [vmem:[#allocation15] sm:$0xff]
    %v4657 = vld [vmem:[#allocation15 + $0x8] sm:$0xf]
    %v4658 = vld [vmem:[#allocation15 + $0xc] sm:$0xff]
    %v4659 = vld [vmem:[#allocation15 + $0x14] sm:$0xf]
    %v4660 = vld [vmem:[#allocation15 + $0x18] sm:$0xff]
    %v4661 = vld [vmem:[#allocation15 + $0x20] sm:$0xf]
    %v4662 = vld [vmem:[#allocation15 + $0x24] sm:$0xff]
    %v4663 = vld [vmem:[#allocation15 + $0x2c] sm:$0xf]
    %v4664 = vld [vmem:[#allocation15 + $0x30] sm:$0xff]
    %v4665 = vld [vmem:[#allocation15 + $0x38] sm:$0xf]
    %v4666 = vld [vmem:[#allocation15 + $0x3c] sm:$0xff]
    %v4667 = vld [vmem:[#allocation15 + $0x44] sm:$0xf]
    %v4668 = vld [vmem:[#allocation15 + $0x48] sm:$0xff]
    %v4669 = vld [vmem:[#allocation15 + $0x50] sm:$0xf]
    %v4670 = vld [vmem:[#allocation15 + $0x54] sm:$0xff]
    %v4671 = vld [vmem:[#allocation15 + $0x5c] sm:$0xf]
    %v4672 = vld [vmem:[#allocation15 + $0x60] sm:$0xff]
    %v4673 = vld [vmem:[#allocation15 + $0x68] sm:$0xf]
    %v4674 = vld [vmem:[#allocation15 + $0x6c] sm:$0xff]
    %v4675 = vld [vmem:[#allocation15 + $0x74] sm:$0xf]
    %v4676 = vld [vmem:[#allocation15 + $0x78] sm:$0xff]
    %v4677 = vld [vmem:[#allocation15 + $0x80] sm:$0xf]
    %v4678 = vld [vmem:[#allocation15 + $0x84] sm:$0xff]
    %v4679 = vld [vmem:[#allocation15 + $0x8c] sm:$0xf]
    %v4680 = vld [vmem:[#allocation15 + $0x90] sm:$0xff]
    %v4681 = vld [vmem:[#allocation15 + $0x98] sm:$0xf]
    %v4682 = vld [vmem:[#allocation15 + $0x9c] sm:$0xff]
    %v4683 = vld [vmem:[#allocation15 + $0xa4] sm:$0xf]
    %v4684 = vld [vmem:[#allocation15 + $0xa8] sm:$0xff]
    %v4685 = vld [vmem:[#allocation15 + $0xb0] sm:$0xf]
    %v4686 = vld [vmem:[#allocation15 + $0xb4] sm:$0xff]
    %v4687 = vld [vmem:[#allocation15 + $0xbc] sm:$0xf]
    %v4720 = vunpack.c.l.b16 %v4656
    %v4721 = vunpack.c.h.b16 %v4656
    %v4722 = vunpack.c.l.b16 %v4657
    %v4723 = vunpack.c.l.b16 %v4658
    %v4724 = vunpack.c.h.b16 %v4658
    %v4725 = vunpack.c.l.b16 %v4659
    %v4726 = vunpack.c.l.b16 %v4660
    %v4727 = vunpack.c.h.b16 %v4660
    %v4728 = vunpack.c.l.b16 %v4661
    %v4729 = vunpack.c.l.b16 %v4662
    %v4730 = vunpack.c.h.b16 %v4662
    %v4731 = vunpack.c.l.b16 %v4663
    %v4732 = vunpack.c.l.b16 %v4664
    %v4733 = vunpack.c.h.b16 %v4664
    %v4734 = vunpack.c.l.b16 %v4665
    %v4735 = vunpack.c.l.b16 %v4666
    %v4736 = vunpack.c.h.b16 %v4666
    %v4737 = vunpack.c.l.b16 %v4667
    %v4738 = vunpack.c.l.b16 %v4668
    %v4739 = vunpack.c.h.b16 %v4668
    %v4740 = vunpack.c.l.b16 %v4669
    %v4741 = vunpack.c.l.b16 %v4670
    %v4742 = vunpack.c.h.b16 %v4670
    %v4743 = vunpack.c.l.b16 %v4671
    %v4744 = vunpack.c.l.b16 %v4672
    %v4745 = vunpack.c.h.b16 %v4672
    %v4746 = vunpack.c.l.b16 %v4673
    %v4747 = vunpack.c.l.b16 %v4674
    %v4748 = vunpack.c.h.b16 %v4674
    %v4749 = vunpack.c.l.b16 %v4675
    %v4750 = vunpack.c.l.b16 %v4676
    %v4751 = vunpack.c.h.b16 %v4676
    %v4752 = vunpack.c.l.b16 %v4677
    %v4753 = vunpack.c.l.b16 %v4678
    %v4754 = vunpack.c.h.b16 %v4678
    %v4755 = vunpack.c.l.b16 %v4679
    %v4756 = vunpack.c.l.b16 %v4680
    %v4757 = vunpack.c.h.b16 %v4680
    %v4758 = vunpack.c.l.b16 %v4681
    %v4759 = vunpack.c.l.b16 %v4682
    %v4760 = vunpack.c.h.b16 %v4682
    %v4761 = vunpack.c.l.b16 %v4683
    %v4762 = vunpack.c.l.b16 %v4684
    %v4763 = vunpack.c.h.b16 %v4684
    %v4764 = vunpack.c.l.b16 %v4685
    %v4765 = vunpack.c.l.b16 %v4686
    %v4766 = vunpack.c.h.b16 %v4686
    %v4767 = vunpack.c.l.b16 %v4687
    %v4768 = vpack.c.b16 %v4723, %v4720
    %v4769 = vpack.c.b16 %v4724, %v4721
    %v4770 = vpack.c.b16 %v4725, %v4722
    %v4771 = vpack.c.b16 %v4729, %v4726
    %v4772 = vpack.c.b16 %v4730, %v4727
    %v4773 = vpack.c.b16 %v4731, %v4728
    %v4774 = vpack.c.b16 %v4735, %v4732
    %v4775 = vpack.c.b16 %v4736, %v4733
    %v4776 = vpack.c.b16 %v4737, %v4734
    %v4777 = vpack.c.b16 %v4741, %v4738
    %v4778 = vpack.c.b16 %v4742, %v4739
    %v4779 = vpack.c.b16 %v4743, %v4740
    %v4780 = vpack.c.b16 %v4747, %v4744
    %v4781 = vpack.c.b16 %v4748, %v4745
    %v4782 = vpack.c.b16 %v4749, %v4746
    %v4783 = vpack.c.b16 %v4753, %v4750
    %v4784 = vpack.c.b16 %v4754, %v4751
    %v4785 = vpack.c.b16 %v4755, %v4752
    %v4786 = vpack.c.b16 %v4759, %v4756
    %v4787 = vpack.c.b16 %v4760, %v4757
    %v4788 = vpack.c.b16 %v4761, %v4758
    %v4789 = vpack.c.b16 %v4765, %v4762
    %v4790 = vpack.c.b16 %v4766, %v4763
    %v4791 = vpack.c.b16 %v4767, %v4764
    %4816 = vmatprep.subr.bf16.mxu0 %v4769
    %4817 = vmatpush1.bf16.msra.mxu0 %v4768
    %4818 = vmatprep.subr.bf16.mxu0 %v4772
    %4819 = vmatpush1.bf16.msra.mxu0 %v4771
    %4820 = vmatprep.subr.bf16.mxu0 %v4775
    %4821 = vmatpush1.bf16.msra.mxu0 %v4774
    %4822 = vmatprep.subr.bf16.mxu0 %v4778
    %4823 = vmatpush1.bf16.msra.mxu0 %v4777
    %4824 = vmatprep.subr.bf16.mxu0 %v4781
    %4825 = vmatpush1.bf16.msra.mxu0 %v4780
    %4826 = vmatprep.subr.bf16.mxu0 %v4784
    %4827 = vmatpush1.bf16.msra.mxu0 %v4783
    %4828 = vmatprep.subr.bf16.mxu0 %v4787
    %4829 = vmatpush1.bf16.msra.mxu0 %v4786
    %4830 = vmatprep.subr.bf16.mxu0 %v4790
    %4831 = vmatpush1.bf16.msra.mxu0 %v4789
    %4832 = vmatprep.subr.bf16.mxu0 0
    %4833 = vmatpush1.bf16.msra.mxu0 0
    %4834 = vmatprep.subr.bf16.mxu0 0
    %4835 = vmatpush1.bf16.msra.mxu0 0
    %4836 = vmatprep.subr.bf16.mxu0 0
    %4837 = vmatpush1.bf16.msra.mxu0 0
    %4838 = vmatprep.subr.bf16.mxu0 0
    %4839 = vmatpush1.bf16.msra.mxu0 0
    %4840 = vmatprep.subr.bf16.mxu0 0
    %4841 = vmatpush1.bf16.msra.mxu0 0
    %4842 = vmatprep.subr.bf16.mxu0 0
    %4843 = vmatpush1.bf16.msra.mxu0 0
    %4844 = vmatprep.subr.bf16.mxu0 0
    %4845 = vmatpush1.bf16.msra.mxu0 0
    %4846 = vmatprep.subr.bf16.mxu0 0
    %4847 = vmatpush1.bf16.msra.mxu0 0
    %4848 = vmatprep.mubr.bf16.mxu0 0
    %4849 = vmatmul.mubr.bf16.gmra.mrb[0].mxu0 %v4655
    %v4850 = vpop.f32.mrb[0].mxu0
    %v4851 = vadd.f32 0.0, %v4850
    %v4852 = vpop.f32.mrb[0].mxu0
    %v4853 = vadd.f32 0.0, %v4852
    %v4854 = vpop.f32.mrb[0].mxu0
    %v4855 = vpop.f32.mrb[0].mxu0
    %4856 = vdwg.mxu0
    %4857 = vmatprep.subr.bf16.mxu0 0
    %4858 = vmatpush1.bf16.msra.mxu0 %v4770
    %4859 = vmatprep.subr.bf16.mxu0 0
    %4860 = vmatpush1.bf16.msra.mxu0 %v4773
    %4861 = vmatprep.subr.bf16.mxu0 0
    %4862 = vmatpush1.bf16.msra.mxu0 %v4776
    %4863 = vmatprep.subr.bf16.mxu0 0
    %4864 = vmatpush1.bf16.msra.mxu0 %v4779
    %4865 = vmatprep.subr.bf16.mxu0 0
    %4866 = vmatpush1.bf16.msra.mxu0 %v4782
    %4867 = vmatprep.subr.bf16.mxu0 0
    %4868 = vmatpush1.bf16.msra.mxu0 %v4785
    %4869 = vmatprep.subr.bf16.mxu0 0
    %4870 = vmatpush1.bf16.msra.mxu0 %v4788
    %4871 = vmatprep.subr.bf16.mxu0 0
    %4872 = vmatpush1.bf16.msra.mxu0 %v4791
    %4873 = vmatprep.subr.bf16.mxu0 0
    %4874 = vmatpush1.bf16.msra.mxu0 0
    %4875 = vmatprep.subr.bf16.mxu0 0
    %4876 = vmatpush1.bf16.msra.mxu0 0
    %4877 = vmatprep.subr.bf16.mxu0 0
    %4878 = vmatpush1.bf16.msra.mxu0 0
    %4879 = vmatprep.subr.bf16.mxu0 0
    %4880 = vmatpush1.bf16.msra.mxu0 0
    %4881 = vmatprep.subr.bf16.mxu0 0
    %4882 = vmatpush1.bf16.msra.mxu0 0
    %4883 = vmatprep.subr.bf16.mxu0 0
    %4884 = vmatpush1.bf16.msra.mxu0 0
    %4885 = vmatprep.subr.bf16.mxu0 0
    %4886 = vmatpush1.bf16.msra.mxu0 0
    %4887 = vmatprep.subr.bf16.mxu0 0
    %4888 = vmatpush1.bf16.msra.mxu0 0
    %4889 = vmatprep.mubr.bf16.mxu0 0
    %4890 = vmatmul.mubr.bf16.gmra.mrb[0].mxu0 %v4655
    %v4891 = vpop.f32.mrb[0].mxu0
    %v4892 = vadd.f32 0.0, %v4891
    %v4893 = vpop.f32.mrb[0].mxu0
    %v4894 = vpop.f32.mrb[0].mxu0
    %v4895 = vpop.f32.mrb[0].mxu0
    %4896 = vdwg.mxu0
    %v4897 = vadd.f32 %v4609, %v4851
    %v4898 = vxor.u32 %v4897, 2147483648
    %v4899 = vmul.f32 %v4898, 1.442695
    %v4900 = vpow.pop %v4899
    %v4901 = vadd.f32 %v4900, 1.0
    %v4902 = vrcp.pop %v4901
    %v4903 = vmul.f32 1.0, %v4902
    %v4904 = vadd.f32 %v4611, %v4853
    %v4905 = vxor.u32 %v4904, 2147483648
    %v4906 = vmul.f32 %v4905, 1.442695
    %v4907 = vpow.pop %v4906
    %v4908 = vadd.f32 %v4907, 1.0
    %v4909 = vrcp.pop %v4908
    %v4910 = vmul.f32 1.0, %v4909
    %v4911 = vld [vmem:[%s12] sm:$0x1]
    %v4913 = vlaneseq
    %v4914 = vshrl.u32 %v4913, 7
    %v4915 = vsub.s32 0, %v4914
    %v4916 = vrot.slane %v4911, %v4915
    %v4918 = vadd.f32 %v4892, %v4916
    %v4919 = vmul.f32 %v4903, %v4918
    %v4920 = vadd.f32 %v4650, %v4919
    %v4921 = vtanh.pop %v4920
    %v4922 = vsub.f32 1.0, %v4910
    %v4923 = vmul.f32 %v4922, %v4921
    %v4924 = vmul.f32 %v4910, %v3592
    %v4925 = vadd.f32 %v4923, %v4924
    %4926 = vst [vmem:[#allocation3 + $0x10] sm:$0xff] %v4925
    %v4927 = vld [vmem:[#allocation2 + $0x78] sm:$0xff]
    %v4928 = vld [vmem:[#allocation2 + $0x80] sm:$0xff]
    %v4929 = vld [vmem:[#allocation2 + $0x88] sm:$0xff]
    %v4930 = vpack.c.bf16 %v3867, %v3867
    %v4931 = vld [vmem:[#allocation9] sm:$0xff]
    %v4932 = vld [vmem:[#allocation9 + $0x8] sm:$0xf]
    %v4933 = vld [vmem:[#allocation9 + $0xc] sm:$0xff]
    %v4934 = vld [vmem:[#allocation9 + $0x14] sm:$0xf]
    %v4935 = vld [vmem:[#allocation9 + $0x18] sm:$0xff]
    %v4936 = vld [vmem:[#allocation9 + $0x20] sm:$0xf]
    %v4937 = vld [vmem:[#allocation9 + $0x24] sm:$0xff]
    %v4938 = vld [vmem:[#allocation9 + $0x2c] sm:$0xf]
    %v4939 = vld [vmem:[#allocation9 + $0x30] sm:$0xff]
    %v4940 = vld [vmem:[#allocation9 + $0x38] sm:$0xf]
    %v4941 = vld [vmem:[#allocation9 + $0x3c] sm:$0xff]
    %v4942 = vld [vmem:[#allocation9 + $0x44] sm:$0xf]
    %v4943 = vld [vmem:[#allocation9 + $0x48] sm:$0xff]
    %v4944 = vld [vmem:[#allocation9 + $0x50] sm:$0xf]
    %v4945 = vld [vmem:[#allocation9 + $0x54] sm:$0xff]
    %v4946 = vld [vmem:[#allocation9 + $0x5c] sm:$0xf]
    %v4947 = vld [vmem:[#allocation9 + $0x60] sm:$0xff]
    %v4948 = vld [vmem:[#allocation9 + $0x68] sm:$0xf]
    %v4949 = vld [vmem:[#allocation9 + $0x6c] sm:$0xff]
    %v4950 = vld [vmem:[#allocation9 + $0x74] sm:$0xf]
    %v4951 = vld [vmem:[#allocation9 + $0x78] sm:$0xff]
    %v4952 = vld [vmem:[#allocation9 + $0x80] sm:$0xf]
    %v4953 = vld [vmem:[#allocation9 + $0x84] sm:$0xff]
    %v4954 = vld [vmem:[#allocation9 + $0x8c] sm:$0xf]
    %v4955 = vld [vmem:[#allocation9 + $0x90] sm:$0xff]
    %v4956 = vld [vmem:[#allocation9 + $0x98] sm:$0xf]
    %v4957 = vld [vmem:[#allocation9 + $0x9c] sm:$0xff]
    %v4958 = vld [vmem:[#allocation9 + $0xa4] sm:$0xf]
    %v4959 = vld [vmem:[#allocation9 + $0xa8] sm:$0xff]
    %v4960 = vld [vmem:[#allocation9 + $0xb0] sm:$0xf]
    %v4961 = vld [vmem:[#allocation9 + $0xb4] sm:$0xff]
    %v4962 = vld [vmem:[#allocation9 + $0xbc] sm:$0xf]
    %v4995 = vunpack.c.l.b16 %v4931
    %v4996 = vunpack.c.h.b16 %v4931
    %v4997 = vunpack.c.l.b16 %v4932
    %v4998 = vunpack.c.l.b16 %v4933
    %v4999 = vunpack.c.h.b16 %v4933
    %v5000 = vunpack.c.l.b16 %v4934
    %v5001 = vunpack.c.l.b16 %v4935
    %v5002 = vunpack.c.h.b16 %v4935
    %v5003 = vunpack.c.l.b16 %v4936
    %v5004 = vunpack.c.l.b16 %v4937
    %v5005 = vunpack.c.h.b16 %v4937
    %v5006 = vunpack.c.l.b16 %v4938
    %v5007 = vunpack.c.l.b16 %v4939
    %v5008 = vunpack.c.h.b16 %v4939
    %v5009 = vunpack.c.l.b16 %v4940
    %v5010 = vunpack.c.l.b16 %v4941
    %v5011 = vunpack.c.h.b16 %v4941
    %v5012 = vunpack.c.l.b16 %v4942
    %v5013 = vunpack.c.l.b16 %v4943
    %v5014 = vunpack.c.h.b16 %v4943
    %v5015 = vunpack.c.l.b16 %v4944
    %v5016 = vunpack.c.l.b16 %v4945
    %v5017 = vunpack.c.h.b16 %v4945
    %v5018 = vunpack.c.l.b16 %v4946
    %v5019 = vunpack.c.l.b16 %v4947
    %v5020 = vunpack.c.h.b16 %v4947
    %v5021 = vunpack.c.l.b16 %v4948
    %v5022 = vunpack.c.l.b16 %v4949
    %v5023 = vunpack.c.h.b16 %v4949
    %v5024 = vunpack.c.l.b16 %v4950
    %v5025 = vunpack.c.l.b16 %v4951
    %v5026 = vunpack.c.h.b16 %v4951
    %v5027 = vunpack.c.l.b16 %v4952
    %v5028 = vunpack.c.l.b16 %v4953
    %v5029 = vunpack.c.h.b16 %v4953
    %v5030 = vunpack.c.l.b16 %v4954
    %v5031 = vunpack.c.l.b16 %v4955
    %v5032 = vunpack.c.h.b16 %v4955
    %v5033 = vunpack.c.l.b16 %v4956
    %v5034 = vunpack.c.l.b16 %v4957
    %v5035 = vunpack.c.h.b16 %v4957
    %v5036 = vunpack.c.l.b16 %v4958
    %v5037 = vunpack.c.l.b16 %v4959
    %v5038 = vunpack.c.h.b16 %v4959
    %v5039 = vunpack.c.l.b16 %v4960
    %v5040 = vunpack.c.l.b16 %v4961
    %v5041 = vunpack.c.h.b16 %v4961
    %v5042 = vunpack.c.l.b16 %v4962
    %v5043 = vpack.c.b16 %v4998, %v4995
    %v5044 = vpack.c.b16 %v4999, %v4996
    %v5045 = vpack.c.b16 %v5000, %v4997
    %v5046 = vpack.c.b16 %v5004, %v5001
    %v5047 = vpack.c.b16 %v5005, %v5002
    %v5048 = vpack.c.b16 %v5006, %v5003
    %v5049 = vpack.c.b16 %v5010, %v5007
    %v5050 = vpack.c.b16 %v5011, %v5008
    %v5051 = vpack.c.b16 %v5012, %v5009
    %v5052 = vpack.c.b16 %v5016, %v5013
    %v5053 = vpack.c.b16 %v5017, %v5014
    %v5054 = vpack.c.b16 %v5018, %v5015
    %v5055 = vpack.c.b16 %v5022, %v5019
    %v5056 = vpack.c.b16 %v5023, %v5020
    %v5057 = vpack.c.b16 %v5024, %v5021
    %v5058 = vpack.c.b16 %v5028, %v5025
    %v5059 = vpack.c.b16 %v5029, %v5026
    %v5060 = vpack.c.b16 %v5030, %v5027
    %v5061 = vpack.c.b16 %v5034, %v5031
    %v5062 = vpack.c.b16 %v5035, %v5032
    %v5063 = vpack.c.b16 %v5036, %v5033
    %v5064 = vpack.c.b16 %v5040, %v5037
    %v5065 = vpack.c.b16 %v5041, %v5038
    %v5066 = vpack.c.b16 %v5042, %v5039
    %5091 = vmatprep.subr.bf16.mxu0 %v5044
    %5092 = vmatpush1.bf16.msra.mxu0 %v5043
    %5093 = vmatprep.subr.bf16.mxu0 %v5047
    %5094 = vmatpush1.bf16.msra.mxu0 %v5046
    %5095 = vmatprep.subr.bf16.mxu0 %v5050
    %5096 = vmatpush1.bf16.msra.mxu0 %v5049
    %5097 = vmatprep.subr.bf16.mxu0 %v5053
    %5098 = vmatpush1.bf16.msra.mxu0 %v5052
    %5099 = vmatprep.subr.bf16.mxu0 %v5056
    %5100 = vmatpush1.bf16.msra.mxu0 %v5055
    %5101 = vmatprep.subr.bf16.mxu0 %v5059
    %5102 = vmatpush1.bf16.msra.mxu0 %v5058
    %5103 = vmatprep.subr.bf16.mxu0 %v5062
    %5104 = vmatpush1.bf16.msra.mxu0 %v5061
    %5105 = vmatprep.subr.bf16.mxu0 %v5065
    %5106 = vmatpush1.bf16.msra.mxu0 %v5064
    %5107 = vmatprep.subr.bf16.mxu0 0
    %5108 = vmatpush1.bf16.msra.mxu0 0
    %5109 = vmatprep.subr.bf16.mxu0 0
    %5110 = vmatpush1.bf16.msra.mxu0 0
    %5111 = vmatprep.subr.bf16.mxu0 0
    %5112 = vmatpush1.bf16.msra.mxu0 0
    %5113 = vmatprep.subr.bf16.mxu0 0
    %5114 = vmatpush1.bf16.msra.mxu0 0
    %5115 = vmatprep.subr.bf16.mxu0 0
    %5116 = vmatpush1.bf16.msra.mxu0 0
    %5117 = vmatprep.subr.bf16.mxu0 0
    %5118 = vmatpush1.bf16.msra.mxu0 0
    %5119 = vmatprep.subr.bf16.mxu0 0
    %5120 = vmatpush1.bf16.msra.mxu0 0
    %5121 = vmatprep.subr.bf16.mxu0 0
    %5122 = vmatpush1.bf16.msra.mxu0 0
    %5123 = vmatprep.mubr.bf16.mxu0 0
    %5124 = vmatmul.mubr.bf16.gmra.mrb[0].mxu0 %v4930
    %v5125 = vpop.f32.mrb[0].mxu0
    %v5126 = vadd.f32 0.0, %v5125
    %v5127 = vpop.f32.mrb[0].mxu0
    %v5128 = vadd.f32 0.0, %v5127
    %v5129 = vpop.f32.mrb[0].mxu0
    %v5130 = vpop.f32.mrb[0].mxu0
    %5131 = vdwg.mxu0
    %5132 = vmatprep.subr.bf16.mxu0 0
    %5133 = vmatpush1.bf16.msra.mxu0 %v5045
    %5134 = vmatprep.subr.bf16.mxu0 0
    %5135 = vmatpush1.bf16.msra.mxu0 %v5048
    %5136 = vmatprep.subr.bf16.mxu0 0
    %5137 = vmatpush1.bf16.msra.mxu0 %v5051
    %5138 = vmatprep.subr.bf16.mxu0 0
    %5139 = vmatpush1.bf16.msra.mxu0 %v5054
    %5140 = vmatprep.subr.bf16.mxu0 0
    %5141 = vmatpush1.bf16.msra.mxu0 %v5057
    %5142 = vmatprep.subr.bf16.mxu0 0
    %5143 = vmatpush1.bf16.msra.mxu0 %v5060
    %5144 = vmatprep.subr.bf16.mxu0 0
    %5145 = vmatpush1.bf16.msra.mxu0 %v5063
    %5146 = vmatprep.subr.bf16.mxu0 0
    %5147 = vmatpush1.bf16.msra.mxu0 %v5066
    %5148 = vmatprep.subr.bf16.mxu0 0
    %5149 = vmatpush1.bf16.msra.mxu0 0
    %5150 = vmatprep.subr.bf16.mxu0 0
    %5151 = vmatpush1.bf16.msra.mxu0 0
    %5152 = vmatprep.subr.bf16.mxu0 0
    %5153 = vmatpush1.bf16.msra.mxu0 0
    %5154 = vmatprep.subr.bf16.mxu0 0
    %5155 = vmatpush1.bf16.msra.mxu0 0
    %5156 = vmatprep.subr.bf16.mxu0 0
    %5157 = vmatpush1.bf16.msra.mxu0 0
    %5158 = vmatprep.subr.bf16.mxu0 0
    %5159 = vmatpush1.bf16.msra.mxu0 0
    %5160 = vmatprep.subr.bf16.mxu0 0
    %5161 = vmatpush1.bf16.msra.mxu0 0
    %5162 = vmatprep.subr.bf16.mxu0 0
    %5163 = vmatpush1.bf16.msra.mxu0 0
    %5164 = vmatprep.mubr.bf16.mxu0 0
    %5165 = vmatmul.mubr.bf16.gmra.mrb[0].mxu0 %v4930
    %v5166 = vpop.f32.mrb[0].mxu0
    %v5167 = vadd.f32 0.0, %v5166
    %v5168 = vpop.f32.mrb[0].mxu0
    %v5169 = vpop.f32.mrb[0].mxu0
    %v5170 = vpop.f32.mrb[0].mxu0
    %5171 = vdwg.mxu0
    %v5172 = vadd.f32 %v4927, %v5126
    %v5173 = vxor.u32 %v5172, 2147483648
    %v5174 = vmul.f32 %v5173, 1.442695
    %v5175 = vpow.pop %v5174
    %v5176 = vadd.f32 %v5175, 1.0
    %v5177 = vrcp.pop %v5176
    %v5178 = vmul.f32 1.0, %v5177
    %v5179 = vadd.f32 %v4928, %v5128
    %v5180 = vxor.u32 %v5179, 2147483648
    %v5181 = vmul.f32 %v5180, 1.442695
    %v5182 = vpow.pop %v5181
    %v5183 = vadd.f32 %v5182, 1.0
    %v5184 = vrcp.pop %v5183
    %v5185 = vmul.f32 1.0, %v5184
    %v5186 = vld [vmem:[%s4] sm:$0x1]
    %v5188 = vlaneseq
    %v5189 = vshrl.u32 %v5188, 7
    %v5190 = vsub.s32 0, %v5189
    %v5191 = vrot.slane %v5186, %v5190
    %v5193 = vadd.f32 %v5167, %v5191
    %v5194 = vmul.f32 %v5178, %v5193
    %v5195 = vadd.f32 %v4929, %v5194
    %v5196 = vtanh.pop %v5195
    %v5197 = vsub.f32 1.0, %v5185
    %v5198 = vmul.f32 %v5197, %v5196
    %v5199 = vmul.f32 %v5185, %v3867
    %v5200 = vadd.f32 %v5198, %v5199
    %v5201 = vld [vmem:[#allocation10] sm:$0xff]
    %v5202 = vld [vmem:[#allocation10 + $0x8] sm:$0xf]
    %v5203 = vld [vmem:[#allocation10 + $0xc] sm:$0xff]
    %v5204 = vld [vmem:[#allocation10 + $0x14] sm:$0xf]
    %v5205 = vld [vmem:[#allocation10 + $0x18] sm:$0xff]
    %v5206 = vld [vmem:[#allocation10 + $0x20] sm:$0xf]
    %v5207 = vld [vmem:[#allocation10 + $0x24] sm:$0xff]
    %v5208 = vld [vmem:[#allocation10 + $0x2c] sm:$0xf]
    %v5209 = vld [vmem:[#allocation10 + $0x30] sm:$0xff]
    %v5210 = vld [vmem:[#allocation10 + $0x38] sm:$0xf]
    %v5211 = vld [vmem:[#allocation10 + $0x3c] sm:$0xff]
    %v5212 = vld [vmem:[#allocation10 + $0x44] sm:$0xf]
    %v5213 = vld [vmem:[#allocation10 + $0x48] sm:$0xff]
    %v5214 = vld [vmem:[#allocation10 + $0x50] sm:$0xf]
    %v5215 = vld [vmem:[#allocation10 + $0x54] sm:$0xff]
    %v5216 = vld [vmem:[#allocation10 + $0x5c] sm:$0xf]
    %v5217 = vld [vmem:[#allocation10 + $0x60] sm:$0xff]
    %v5218 = vld [vmem:[#allocation10 + $0x68] sm:$0xf]
    %v5219 = vld [vmem:[#allocation10 + $0x6c] sm:$0xff]
    %v5220 = vld [vmem:[#allocation10 + $0x74] sm:$0xf]
    %v5221 = vld [vmem:[#allocation10 + $0x78] sm:$0xff]
    %v5222 = vld [vmem:[#allocation10 + $0x80] sm:$0xf]
    %v5223 = vld [vmem:[#allocation10 + $0x84] sm:$0xff]
    %v5224 = vld [vmem:[#allocation10 + $0x8c] sm:$0xf]
    %v5225 = vld [vmem:[#allocation10 + $0x90] sm:$0xff]
    %v5226 = vld [vmem:[#allocation10 + $0x98] sm:$0xf]
    %v5227 = vld [vmem:[#allocation10 + $0x9c] sm:$0xff]
    %v5228 = vld [vmem:[#allocation10 + $0xa4] sm:$0xf]
    %v5229 = vld [vmem:[#allocation10 + $0xa8] sm:$0xff]
    %v5230 = vld [vmem:[#allocation10 + $0xb0] sm:$0xf]
    %v5231 = vld [vmem:[#allocation10 + $0xb4] sm:$0xff]
    %v5232 = vld [vmem:[#allocation10 + $0xbc] sm:$0xf]
    %v5233 = vld [vmem:[%s7] sm:$0x7]
    %v5235 = vlaneseq
    %v5236 = vshrl.u32 %v5235, 7
    %v5237 = vsub.s32 0, %v5236
    %v5238 = vrot.slane %v5233, %v5237
    %v5239 = vlaneseq
    %v5240 = vshrl.u32 %v5239, 7
    %v5241 = vsub.s32 1, %v5240
    %v5242 = vrot.slane %v5233, %v5241
    %v5243 = vlaneseq
    %v5244 = vshrl.u32 %v5243, 7
    %v5245 = vsub.s32 2, %v5244
    %v5246 = vrot.slane %v5233, %v5245
    %v5282 = vunpack.c.l.b16 %v5201
    %v5283 = vunpack.c.h.b16 %v5201
    %v5284 = vunpack.c.l.b16 %v5202
    %v5285 = vunpack.c.l.b16 %v5203
    %v5286 = vunpack.c.h.b16 %v5203
    %v5287 = vunpack.c.l.b16 %v5204
    %v5288 = vunpack.c.l.b16 %v5205
    %v5289 = vunpack.c.h.b16 %v5205
    %v5290 = vunpack.c.l.b16 %v5206
    %v5291 = vunpack.c.l.b16 %v5207
    %v5292 = vunpack.c.h.b16 %v5207
    %v5293 = vunpack.c.l.b16 %v5208
    %v5294 = vunpack.c.l.b16 %v5209
    %v5295 = vunpack.c.h.b16 %v5209
    %v5296 = vunpack.c.l.b16 %v5210
    %v5297 = vunpack.c.l.b16 %v5211
    %v5298 = vunpack.c.h.b16 %v5211
    %v5299 = vunpack.c.l.b16 %v5212
    %v5300 = vunpack.c.l.b16 %v5213
    %v5301 = vunpack.c.h.b16 %v5213
    %v5302 = vunpack.c.l.b16 %v5214
    %v5303 = vunpack.c.l.b16 %v5215
    %v5304 = vunpack.c.h.b16 %v5215
    %v5305 = vunpack.c.l.b16 %v5216
    %v5306 = vunpack.c.l.b16 %v5217
    %v5307 = vunpack.c.h.b16 %v5217
    %v5308 = vunpack.c.l.b16 %v5218
    %v5309 = vunpack.c.l.b16 %v5219
    %v5310 = vunpack.c.h.b16 %v5219
    %v5311 = vunpack.c.l.b16 %v5220
    %v5312 = vunpack.c.l.b16 %v5221
    %v5313 = vunpack.c.h.b16 %v5221
    %v5314 = vunpack.c.l.b16 %v5222
    %v5315 = vunpack.c.l.b16 %v5223
    %v5316 = vunpack.c.h.b16 %v5223
    %v5317 = vunpack.c.l.b16 %v5224
    %v5318 = vunpack.c.l.b16 %v5225
    %v5319 = vunpack.c.h.b16 %v5225
    %v5320 = vunpack.c.l.b16 %v5226
    %v5321 = vunpack.c.l.b16 %v5227
    %v5322 = vunpack.c.h.b16 %v5227
    %v5323 = vunpack.c.l.b16 %v5228
    %v5324 = vunpack.c.l.b16 %v5229
    %v5325 = vunpack.c.h.b16 %v5229
    %v5326 = vunpack.c.l.b16 %v5230
    %v5327 = vunpack.c.l.b16 %v5231
    %v5328 = vunpack.c.h.b16 %v5231
    %v5329 = vunpack.c.l.b16 %v5232
    %v5330 = vpack.c.b16 %v5285, %v5282
    %v5331 = vpack.c.b16 %v5286, %v5283
    %v5332 = vpack.c.b16 %v5287, %v5284
    %v5333 = vpack.c.b16 %v5291, %v5288
    %v5334 = vpack.c.b16 %v5292, %v5289
    %v5335 = vpack.c.b16 %v5293, %v5290
    %v5336 = vpack.c.b16 %v5297, %v5294
    %v5337 = vpack.c.b16 %v5298, %v5295
    %v5338 = vpack.c.b16 %v5299, %v5296
    %v5339 = vpack.c.b16 %v5303, %v5300
    %v5340 = vpack.c.b16 %v5304, %v5301
    %v5341 = vpack.c.b16 %v5305, %v5302
    %v5342 = vpack.c.b16 %v5309, %v5306
    %v5343 = vpack.c.b16 %v5310, %v5307
    %v5344 = vpack.c.b16 %v5311, %v5308
    %v5345 = vpack.c.b16 %v5315, %v5312
    %v5346 = vpack.c.b16 %v5316, %v5313
    %v5347 = vpack.c.b16 %v5317, %v5314
    %v5348 = vpack.c.b16 %v5321, %v5318
    %v5349 = vpack.c.b16 %v5322, %v5319
    %v5350 = vpack.c.b16 %v5323, %v5320
    %v5351 = vpack.c.b16 %v5327, %v5324
    %v5352 = vpack.c.b16 %v5328, %v5325
    %v5353 = vpack.c.b16 %v5329, %v5326
    %5378 = vmatprep.subr.bf16.mxu0 %v5331
    %5379 = vmatpush1.bf16.msra.mxu0 %v5330
    %5380 = vmatprep.subr.bf16.mxu0 %v5334
    %5381 = vmatpush1.bf16.msra.mxu0 %v5333
    %5382 = vmatprep.subr.bf16.mxu0 %v5337
    %5383 = vmatpush1.bf16.msra.mxu0 %v5336
    %5384 = vmatprep.subr.bf16.mxu0 %v5340
    %5385 = vmatpush1.bf16.msra.mxu0 %v5339
    %5386 = vmatprep.subr.bf16.mxu0 %v5343
    %5387 = vmatpush1.bf16.msra.mxu0 %v5342
    %5388 = vmatprep.subr.bf16.mxu0 %v5346
    %5389 = vmatpush1.bf16.msra.mxu0 %v5345
    %5390 = vmatprep.subr.bf16.mxu0 %v5349
    %5391 = vmatpush1.bf16.msra.mxu0 %v5348
    %5392 = vmatprep.subr.bf16.mxu0 %v5352
    %5393 = vmatpush1.bf16.msra.mxu0 %v5351
    %5394 = vmatprep.subr.bf16.mxu0 0
    %5395 = vmatpush1.bf16.msra.mxu0 0
    %5396 = vmatprep.subr.bf16.mxu0 0
    %5397 = vmatpush1.bf16.msra.mxu0 0
    %5398 = vmatprep.subr.bf16.mxu0 0
    %5399 = vmatpush1.bf16.msra.mxu0 0
    %5400 = vmatprep.subr.bf16.mxu0 0
    %5401 = vmatpush1.bf16.msra.mxu0 0
    %5402 = vmatprep.subr.bf16.mxu0 0
    %5403 = vmatpush1.bf16.msra.mxu0 0
    %5404 = vmatprep.subr.bf16.mxu0 0
    %5405 = vmatpush1.bf16.msra.mxu0 0
    %5406 = vmatprep.subr.bf16.mxu0 0
    %5407 = vmatpush1.bf16.msra.mxu0 0
    %5408 = vmatprep.subr.bf16.mxu0 0
    %5409 = vmatpush1.bf16.msra.mxu0 0
    %5410 = vmatprep.mubr.bf16.mxu0 0
    %5411 = vmatmul.mubr.bf16.gmra.mrb[0].mxu0 %v4930
    %v5412 = vpop.f32.mrb[0].mxu0
    %v5413 = vadd.f32 %v5238, %v5412
    %v5414 = vpop.f32.mrb[0].mxu0
    %v5415 = vadd.f32 %v5242, %v5414
    %v5416 = vpop.f32.mrb[0].mxu0
    %v5417 = vpop.f32.mrb[0].mxu0
    %5418 = vdwg.mxu0
    %5419 = vmatprep.subr.bf16.mxu0 0
    %5420 = vmatpush1.bf16.msra.mxu0 %v5332
    %5421 = vmatprep.subr.bf16.mxu0 0
    %5422 = vmatpush1.bf16.msra.mxu0 %v5335
    %5423 = vmatprep.subr.bf16.mxu0 0
    %5424 = vmatpush1.bf16.msra.mxu0 %v5338
    %5425 = vmatprep.subr.bf16.mxu0 0
    %5426 = vmatpush1.bf16.msra.mxu0 %v5341
    %5427 = vmatprep.subr.bf16.mxu0 0
    %5428 = vmatpush1.bf16.msra.mxu0 %v5344
    %5429 = vmatprep.subr.bf16.mxu0 0
    %5430 = vmatpush1.bf16.msra.mxu0 %v5347
    %5431 = vmatprep.subr.bf16.mxu0 0
    %5432 = vmatpush1.bf16.msra.mxu0 %v5350
    %5433 = vmatprep.subr.bf16.mxu0 0
    %5434 = vmatpush1.bf16.msra.mxu0 %v5353
    %5435 = vmatprep.subr.bf16.mxu0 0
    %5436 = vmatpush1.bf16.msra.mxu0 0
    %5437 = vmatprep.subr.bf16.mxu0 0
    %5438 = vmatpush1.bf16.msra.mxu0 0
    %5439 = vmatprep.subr.bf16.mxu0 0
    %5440 = vmatpush1.bf16.msra.mxu0 0
    %5441 = vmatprep.subr.bf16.mxu0 0
    %5442 = vmatpush1.bf16.msra.mxu0 0
    %5443 = vmatprep.subr.bf16.mxu0 0
    %5444 = vmatpush1.bf16.msra.mxu0 0
    %5445 = vmatprep.subr.bf16.mxu0 0
    %5446 = vmatpush1.bf16.msra.mxu0 0
    %5447 = vmatprep.subr.bf16.mxu0 0
    %5448 = vmatpush1.bf16.msra.mxu0 0
    %5449 = vmatprep.subr.bf16.mxu0 0
    %5450 = vmatpush1.bf16.msra.mxu0 0
    %5451 = vmatprep.mubr.bf16.mxu0 0
    %5452 = vmatmul.mubr.bf16.gmra.mrb[0].mxu0 %v4930
    %v5453 = vpop.f32.mrb[0].mxu0
    %v5454 = vadd.f32 %v5246, %v5453
    %v5455 = vpop.f32.mrb[0].mxu0
    %v5456 = vpop.f32.mrb[0].mxu0
    %v5457 = vpop.f32.mrb[0].mxu0
    %5458 = vdwg.mxu0
    %v5459 = vpack.c.bf16 %v4396, %v4396
    %v5460 = vld [vmem:[#allocation12] sm:$0xff]
    %v5461 = vld [vmem:[#allocation12 + $0x8] sm:$0xf]
    %v5462 = vld [vmem:[#allocation12 + $0xc] sm:$0xff]
    %v5463 = vld [vmem:[#allocation12 + $0x14] sm:$0xf]
    %v5464 = vld [vmem:[#allocation12 + $0x18] sm:$0xff]
    %v5465 = vld [vmem:[#allocation12 + $0x20] sm:$0xf]
    %v5466 = vld [vmem:[#allocation12 + $0x24] sm:$0xff]
    %v5467 = vld [vmem:[#allocation12 + $0x2c] sm:$0xf]
    %v5468 = vld [vmem:[#allocation12 + $0x30] sm:$0xff]
    %v5469 = vld [vmem:[#allocation12 + $0x38] sm:$0xf]
    %v5470 = vld [vmem:[#allocation12 + $0x3c] sm:$0xff]
    %v5471 = vld [vmem:[#allocation12 + $0x44] sm:$0xf]
    %v5472 = vld [vmem:[#allocation12 + $0x48] sm:$0xff]
    %v5473 = vld [vmem:[#allocation12 + $0x50] sm:$0xf]
    %v5474 = vld [vmem:[#allocation12 + $0x54] sm:$0xff]
    %v5475 = vld [vmem:[#allocation12 + $0x5c] sm:$0xf]
    %v5476 = vld [vmem:[#allocation12 + $0x60] sm:$0xff]
    %v5477 = vld [vmem:[#allocation12 + $0x68] sm:$0xf]
    %v5478 = vld [vmem:[#allocation12 + $0x6c] sm:$0xff]
    %v5479 = vld [vmem:[#allocation12 + $0x74] sm:$0xf]
    %v5480 = vld [vmem:[#allocation12 + $0x78] sm:$0xff]
    %v5481 = vld [vmem:[#allocation12 + $0x80] sm:$0xf]
    %v5482 = vld [vmem:[#allocation12 + $0x84] sm:$0xff]
    %v5483 = vld [vmem:[#allocation12 + $0x8c] sm:$0xf]
    %v5484 = vld [vmem:[#allocation12 + $0x90] sm:$0xff]
    %v5485 = vld [vmem:[#allocation12 + $0x98] sm:$0xf]
    %v5486 = vld [vmem:[#allocation12 + $0x9c] sm:$0xff]
    %v5487 = vld [vmem:[#allocation12 + $0xa4] sm:$0xf]
    %v5488 = vld [vmem:[#allocation12 + $0xa8] sm:$0xff]
    %v5489 = vld [vmem:[#allocation12 + $0xb0] sm:$0xf]
    %v5490 = vld [vmem:[#allocation12 + $0xb4] sm:$0xff]
    %v5491 = vld [vmem:[#allocation12 + $0xbc] sm:$0xf]
    %v5524 = vunpack.c.l.b16 %v5460
    %v5525 = vunpack.c.h.b16 %v5460
    %v5526 = vunpack.c.l.b16 %v5461
    %v5527 = vunpack.c.l.b16 %v5462
    %v5528 = vunpack.c.h.b16 %v5462
    %v5529 = vunpack.c.l.b16 %v5463
    %v5530 = vunpack.c.l.b16 %v5464
    %v5531 = vunpack.c.h.b16 %v5464
    %v5532 = vunpack.c.l.b16 %v5465
    %v5533 = vunpack.c.l.b16 %v5466
    %v5534 = vunpack.c.h.b16 %v5466
    %v5535 = vunpack.c.l.b16 %v5467
    %v5536 = vunpack.c.l.b16 %v5468
    %v5537 = vunpack.c.h.b16 %v5468
    %v5538 = vunpack.c.l.b16 %v5469
    %v5539 = vunpack.c.l.b16 %v5470
    %v5540 = vunpack.c.h.b16 %v5470
    %v5541 = vunpack.c.l.b16 %v5471
    %v5542 = vunpack.c.l.b16 %v5472
    %v5543 = vunpack.c.h.b16 %v5472
    %v5544 = vunpack.c.l.b16 %v5473
    %v5545 = vunpack.c.l.b16 %v5474
    %v5546 = vunpack.c.h.b16 %v5474
    %v5547 = vunpack.c.l.b16 %v5475
    %v5548 = vunpack.c.l.b16 %v5476
    %v5549 = vunpack.c.h.b16 %v5476
    %v5550 = vunpack.c.l.b16 %v5477
    %v5551 = vunpack.c.l.b16 %v5478
    %v5552 = vunpack.c.h.b16 %v5478
    %v5553 = vunpack.c.l.b16 %v5479
    %v5554 = vunpack.c.l.b16 %v5480
    %v5555 = vunpack.c.h.b16 %v5480
    %v5556 = vunpack.c.l.b16 %v5481
    %v5557 = vunpack.c.l.b16 %v5482
    %v5558 = vunpack.c.h.b16 %v5482
    %v5559 = vunpack.c.l.b16 %v5483
    %v5560 = vunpack.c.l.b16 %v5484
    %v5561 = vunpack.c.h.b16 %v5484
    %v5562 = vunpack.c.l.b16 %v5485
    %v5563 = vunpack.c.l.b16 %v5486
    %v5564 = vunpack.c.h.b16 %v5486
    %v5565 = vunpack.c.l.b16 %v5487
    %v5566 = vunpack.c.l.b16 %v5488
    %v5567 = vunpack.c.h.b16 %v5488
    %v5568 = vunpack.c.l.b16 %v5489
    %v5569 = vunpack.c.l.b16 %v5490
    %v5570 = vunpack.c.h.b16 %v5490
    %v5571 = vunpack.c.l.b16 %v5491
    %v5572 = vpack.c.b16 %v5527, %v5524
    %v5573 = vpack.c.b16 %v5528, %v5525
    %v5574 = vpack.c.b16 %v5529, %v5526
    %v5575 = vpack.c.b16 %v5533, %v5530
    %v5576 = vpack.c.b16 %v5534, %v5531
    %v5577 = vpack.c.b16 %v5535, %v5532
    %v5578 = vpack.c.b16 %v5539, %v5536
    %v5579 = vpack.c.b16 %v5540, %v5537
    %v5580 = vpack.c.b16 %v5541, %v5538
    %v5581 = vpack.c.b16 %v5545, %v5542
    %v5582 = vpack.c.b16 %v5546, %v5543
    %v5583 = vpack.c.b16 %v5547, %v5544
    %v5584 = vpack.c.b16 %v5551, %v5548
    %v5585 = vpack.c.b16 %v5552, %v5549
    %v5586 = vpack.c.b16 %v5553, %v5550
    %v5587 = vpack.c.b16 %v5557, %v5554
    %v5588 = vpack.c.b16 %v5558, %v5555
    %v5589 = vpack.c.b16 %v5559, %v5556
    %v5590 = vpack.c.b16 %v5563, %v5560
    %v5591 = vpack.c.b16 %v5564, %v5561
    %v5592 = vpack.c.b16 %v5565, %v5562
    %v5593 = vpack.c.b16 %v5569, %v5566
    %v5594 = vpack.c.b16 %v5570, %v5567
    %v5595 = vpack.c.b16 %v5571, %v5568
    %5620 = vmatprep.subr.bf16.mxu0 %v5573
    %5621 = vmatpush1.bf16.msra.mxu0 %v5572
    %5622 = vmatprep.subr.bf16.mxu0 %v5576
    %5623 = vmatpush1.bf16.msra.mxu0 %v5575
    %5624 = vmatprep.subr.bf16.mxu0 %v5579
    %5625 = vmatpush1.bf16.msra.mxu0 %v5578
    %5626 = vmatprep.subr.bf16.mxu0 %v5582
    %5627 = vmatpush1.bf16.msra.mxu0 %v5581
    %5628 = vmatprep.subr.bf16.mxu0 %v5585
    %5629 = vmatpush1.bf16.msra.mxu0 %v5584
    %5630 = vmatprep.subr.bf16.mxu0 %v5588
    %5631 = vmatpush1.bf16.msra.mxu0 %v5587
    %5632 = vmatprep.subr.bf16.mxu0 %v5591
    %5633 = vmatpush1.bf16.msra.mxu0 %v5590
    %5634 = vmatprep.subr.bf16.mxu0 %v5594
    %5635 = vmatpush1.bf16.msra.mxu0 %v5593
    %5636 = vmatprep.subr.bf16.mxu0 0
    %5637 = vmatpush1.bf16.msra.mxu0 0
    %5638 = vmatprep.subr.bf16.mxu0 0
    %5639 = vmatpush1.bf16.msra.mxu0 0
    %5640 = vmatprep.subr.bf16.mxu0 0
    %5641 = vmatpush1.bf16.msra.mxu0 0
    %5642 = vmatprep.subr.bf16.mxu0 0
    %5643 = vmatpush1.bf16.msra.mxu0 0
    %5644 = vmatprep.subr.bf16.mxu0 0
    %5645 = vmatpush1.bf16.msra.mxu0 0
    %5646 = vmatprep.subr.bf16.mxu0 0
    %5647 = vmatpush1.bf16.msra.mxu0 0
    %5648 = vmatprep.subr.bf16.mxu0 0
    %5649 = vmatpush1.bf16.msra.mxu0 0
    %5650 = vmatprep.subr.bf16.mxu0 0
    %5651 = vmatpush1.bf16.msra.mxu0 0
    %5652 = vmatprep.mubr.bf16.mxu0 0
    %5653 = vmatmul.mubr.bf16.gmra.mrb[0].mxu0 %v5459
    %v5654 = vpop.f32.mrb[0].mxu0
    %v5655 = vadd.f32 0.0, %v5654
    %v5656 = vpop.f32.mrb[0].mxu0
    %v5657 = vadd.f32 0.0, %v5656
    %v5658 = vpop.f32.mrb[0].mxu0
    %v5659 = vpop.f32.mrb[0].mxu0
    %5660 = vdwg.mxu0
    %5661 = vmatprep.subr.bf16.mxu0 0
    %5662 = vmatpush1.bf16.msra.mxu0 %v5574
    %5663 = vmatprep.subr.bf16.mxu0 0
    %5664 = vmatpush1.bf16.msra.mxu0 %v5577
    %5665 = vmatprep.subr.bf16.mxu0 0
    %5666 = vmatpush1.bf16.msra.mxu0 %v5580
    %5667 = vmatprep.subr.bf16.mxu0 0
    %5668 = vmatpush1.bf16.msra.mxu0 %v5583
    %5669 = vmatprep.subr.bf16.mxu0 0
    %5670 = vmatpush1.bf16.msra.mxu0 %v5586
    %5671 = vmatprep.subr.bf16.mxu0 0
    %5672 = vmatpush1.bf16.msra.mxu0 %v5589
    %5673 = vmatprep.subr.bf16.mxu0 0
    %5674 = vmatpush1.bf16.msra.mxu0 %v5592
    %5675 = vmatprep.subr.bf16.mxu0 0
    %5676 = vmatpush1.bf16.msra.mxu0 %v5595
    %5677 = vmatprep.subr.bf16.mxu0 0
    %5678 = vmatpush1.bf16.msra.mxu0 0
    %5679 = vmatprep.subr.bf16.mxu0 0
    %5680 = vmatpush1.bf16.msra.mxu0 0
    %5681 = vmatprep.subr.bf16.mxu0 0
    %5682 = vmatpush1.bf16.msra.mxu0 0
    %5683 = vmatprep.subr.bf16.mxu0 0
    %5684 = vmatpush1.bf16.msra.mxu0 0
    %5685 = vmatprep.subr.bf16.mxu0 0
    %5686 = vmatpush1.bf16.msra.mxu0 0
    %5687 = vmatprep.subr.bf16.mxu0 0
    %5688 = vmatpush1.bf16.msra.mxu0 0
    %5689 = vmatprep.subr.bf16.mxu0 0
    %5690 = vmatpush1.bf16.msra.mxu0 0
    %5691 = vmatprep.subr.bf16.mxu0 0
    %5692 = vmatpush1.bf16.msra.mxu0 0
    %5693 = vmatprep.mubr.bf16.mxu0 0
    %5694 = vmatmul.mubr.bf16.gmra.mrb[0].mxu0 %v5459
    %v5695 = vpop.f32.mrb[0].mxu0
    %v5696 = vadd.f32 0.0, %v5695
    %v5697 = vpop.f32.mrb[0].mxu0
    %v5698 = vpop.f32.mrb[0].mxu0
    %v5699 = vpop.f32.mrb[0].mxu0
    %5700 = vdwg.mxu0
    %v5701 = vadd.f32 %v5413, %v5655
    %v5702 = vxor.u32 %v5701, 2147483648
    %v5703 = vmul.f32 %v5702, 1.442695
    %v5704 = vpow.pop %v5703
    %v5705 = vadd.f32 %v5704, 1.0
    %v5706 = vrcp.pop %v5705
    %v5707 = vmul.f32 1.0, %v5706
    %v5708 = vadd.f32 %v5415, %v5657
    %v5709 = vxor.u32 %v5708, 2147483648
    %v5710 = vmul.f32 %v5709, 1.442695
    %v5711 = vpow.pop %v5710
    %v5712 = vadd.f32 %v5711, 1.0
    %v5713 = vrcp.pop %v5712
    %v5714 = vmul.f32 1.0, %v5713
    %v5715 = vld [vmem:[%s8] sm:$0x1]
    %v5717 = vlaneseq
    %v5718 = vshrl.u32 %v5717, 7
    %v5719 = vsub.s32 0, %v5718
    %v5720 = vrot.slane %v5715, %v5719
    %v5722 = vadd.f32 %v5696, %v5720
    %v5723 = vmul.f32 %v5707, %v5722
    %v5724 = vadd.f32 %v5454, %v5723
    %v5725 = vtanh.pop %v5724
    %v5726 = vsub.f32 1.0, %v5714
    %v5727 = vmul.f32 %v5726, %v5725
    %v5728 = vmul.f32 %v5714, %v4396
    %v5729 = vadd.f32 %v5727, %v5728
    %v5730 = vld [vmem:[#allocation13] sm:$0xff]
    %v5731 = vld [vmem:[#allocation13 + $0x8] sm:$0xf]
    %v5732 = vld [vmem:[#allocation13 + $0xc] sm:$0xff]
    %v5733 = vld [vmem:[#allocation13 + $0x14] sm:$0xf]
    %v5734 = vld [vmem:[#allocation13 + $0x18] sm:$0xff]
    %v5735 = vld [vmem:[#allocation13 + $0x20] sm:$0xf]
    %v5736 = vld [vmem:[#allocation13 + $0x24] sm:$0xff]
    %v5737 = vld [vmem:[#allocation13 + $0x2c] sm:$0xf]
    %v5738 = vld [vmem:[#allocation13 + $0x30] sm:$0xff]
    %v5739 = vld [vmem:[#allocation13 + $0x38] sm:$0xf]
    %v5740 = vld [vmem:[#allocation13 + $0x3c] sm:$0xff]
    %v5741 = vld [vmem:[#allocation13 + $0x44] sm:$0xf]
    %v5742 = vld [vmem:[#allocation13 + $0x48] sm:$0xff]
    %v5743 = vld [vmem:[#allocation13 + $0x50] sm:$0xf]
    %v5744 = vld [vmem:[#allocation13 + $0x54] sm:$0xff]
    %v5745 = vld [vmem:[#allocation13 + $0x5c] sm:$0xf]
    %v5746 = vld [vmem:[#allocation13 + $0x60] sm:$0xff]
    %v5747 = vld [vmem:[#allocation13 + $0x68] sm:$0xf]
    %v5748 = vld [vmem:[#allocation13 + $0x6c] sm:$0xff]
    %v5749 = vld [vmem:[#allocation13 + $0x74] sm:$0xf]
    %v5750 = vld [vmem:[#allocation13 + $0x78] sm:$0xff]
    %v5751 = vld [vmem:[#allocation13 + $0x80] sm:$0xf]
    %v5752 = vld [vmem:[#allocation13 + $0x84] sm:$0xff]
    %v5753 = vld [vmem:[#allocation13 + $0x8c] sm:$0xf]
    %v5754 = vld [vmem:[#allocation13 + $0x90] sm:$0xff]
    %v5755 = vld [vmem:[#allocation13 + $0x98] sm:$0xf]
    %v5756 = vld [vmem:[#allocation13 + $0x9c] sm:$0xff]
    %v5757 = vld [vmem:[#allocation13 + $0xa4] sm:$0xf]
    %v5758 = vld [vmem:[#allocation13 + $0xa8] sm:$0xff]
    %v5759 = vld [vmem:[#allocation13 + $0xb0] sm:$0xf]
    %v5760 = vld [vmem:[#allocation13 + $0xb4] sm:$0xff]
    %v5761 = vld [vmem:[#allocation13 + $0xbc] sm:$0xf]
    %v5762 = vld [vmem:[%s11] sm:$0x7]
    %v5764 = vlaneseq
    %v5765 = vshrl.u32 %v5764, 7
    %v5766 = vsub.s32 0, %v5765
    %v5767 = vrot.slane %v5762, %v5766
    %v5768 = vlaneseq
    %v5769 = vshrl.u32 %v5768, 7
    %v5770 = vsub.s32 1, %v5769
    %v5771 = vrot.slane %v5762, %v5770
    %v5772 = vlaneseq
    %v5773 = vshrl.u32 %v5772, 7
    %v5774 = vsub.s32 2, %v5773
    %v5775 = vrot.slane %v5762, %v5774
    %v5811 = vunpack.c.l.b16 %v5730
    %v5812 = vunpack.c.h.b16 %v5730
    %v5813 = vunpack.c.l.b16 %v5731
    %v5814 = vunpack.c.l.b16 %v5732
    %v5815 = vunpack.c.h.b16 %v5732
    %v5816 = vunpack.c.l.b16 %v5733
    %v5817 = vunpack.c.l.b16 %v5734
    %v5818 = vunpack.c.h.b16 %v5734
    %v5819 = vunpack.c.l.b16 %v5735
    %v5820 = vunpack.c.l.b16 %v5736
    %v5821 = vunpack.c.h.b16 %v5736
    %v5822 = vunpack.c.l.b16 %v5737
    %v5823 = vunpack.c.l.b16 %v5738
    %v5824 = vunpack.c.h.b16 %v5738
    %v5825 = vunpack.c.l.b16 %v5739
    %v5826 = vunpack.c.l.b16 %v5740
    %v5827 = vunpack.c.h.b16 %v5740
    %v5828 = vunpack.c.l.b16 %v5741
    %v5829 = vunpack.c.l.b16 %v5742
    %v5830 = vunpack.c.h.b16 %v5742
    %v5831 = vunpack.c.l.b16 %v5743
    %v5832 = vunpack.c.l.b16 %v5744
    %v5833 = vunpack.c.h.b16 %v5744
    %v5834 = vunpack.c.l.b16 %v5745
    %v5835 = vunpack.c.l.b16 %v5746
    %v5836 = vunpack.c.h.b16 %v5746
    %v5837 = vunpack.c.l.b16 %v5747
    %v5838 = vunpack.c.l.b16 %v5748
    %v5839 = vunpack.c.h.b16 %v5748
    %v5840 = vunpack.c.l.b16 %v5749
    %v5841 = vunpack.c.l.b16 %v5750
    %v5842 = vunpack.c.h.b16 %v5750
    %v5843 = vunpack.c.l.b16 %v5751
    %v5844 = vunpack.c.l.b16 %v5752
    %v5845 = vunpack.c.h.b16 %v5752
    %v5846 = vunpack.c.l.b16 %v5753
    %v5847 = vunpack.c.l.b16 %v5754
    %v5848 = vunpack.c.h.b16 %v5754
    %v5849 = vunpack.c.l.b16 %v5755
    %v5850 = vunpack.c.l.b16 %v5756
    %v5851 = vunpack.c.h.b16 %v5756
    %v5852 = vunpack.c.l.b16 %v5757
    %v5853 = vunpack.c.l.b16 %v5758
    %v5854 = vunpack.c.h.b16 %v5758
    %v5855 = vunpack.c.l.b16 %v5759
    %v5856 = vunpack.c.l.b16 %v5760
    %v5857 = vunpack.c.h.b16 %v5760
    %v5858 = vunpack.c.l.b16 %v5761
    %v5859 = vpack.c.b16 %v5814, %v5811
    %v5860 = vpack.c.b16 %v5815, %v5812
    %v5861 = vpack.c.b16 %v5816, %v5813
    %v5862 = vpack.c.b16 %v5820, %v5817
    %v5863 = vpack.c.b16 %v5821, %v5818
    %v5864 = vpack.c.b16 %v5822, %v5819
    %v5865 = vpack.c.b16 %v5826, %v5823
    %v5866 = vpack.c.b16 %v5827, %v5824
    %v5867 = vpack.c.b16 %v5828, %v5825
    %v5868 = vpack.c.b16 %v5832, %v5829
    %v5869 = vpack.c.b16 %v5833, %v5830
    %v5870 = vpack.c.b16 %v5834, %v5831
    %v5871 = vpack.c.b16 %v5838, %v5835
    %v5872 = vpack.c.b16 %v5839, %v5836
    %v5873 = vpack.c.b16 %v5840, %v5837
    %v5874 = vpack.c.b16 %v5844, %v5841
    %v5875 = vpack.c.b16 %v5845, %v5842
    %v5876 = vpack.c.b16 %v5846, %v5843
    %v5877 = vpack.c.b16 %v5850, %v5847
    %v5878 = vpack.c.b16 %v5851, %v5848
    %v5879 = vpack.c.b16 %v5852, %v5849
    %v5880 = vpack.c.b16 %v5856, %v5853
    %v5881 = vpack.c.b16 %v5857, %v5854
    %v5882 = vpack.c.b16 %v5858, %v5855
    %5907 = vmatprep.subr.bf16.mxu0 %v5860
    %5908 = vmatpush1.bf16.msra.mxu0 %v5859
    %5909 = vmatprep.subr.bf16.mxu0 %v5863
    %5910 = vmatpush1.bf16.msra.mxu0 %v5862
    %5911 = vmatprep.subr.bf16.mxu0 %v5866
    %5912 = vmatpush1.bf16.msra.mxu0 %v5865
    %5913 = vmatprep.subr.bf16.mxu0 %v5869
    %5914 = vmatpush1.bf16.msra.mxu0 %v5868
    %5915 = vmatprep.subr.bf16.mxu0 %v5872
    %5916 = vmatpush1.bf16.msra.mxu0 %v5871
    %5917 = vmatprep.subr.bf16.mxu0 %v5875
    %5918 = vmatpush1.bf16.msra.mxu0 %v5874
    %5919 = vmatprep.subr.bf16.mxu0 %v5878
    %5920 = vmatpush1.bf16.msra.mxu0 %v5877
    %5921 = vmatprep.subr.bf16.mxu0 %v5881
    %5922 = vmatpush1.bf16.msra.mxu0 %v5880
    %5923 = vmatprep.subr.bf16.mxu0 0
    %5924 = vmatpush1.bf16.msra.mxu0 0
    %5925 = vmatprep.subr.bf16.mxu0 0
    %5926 = vmatpush1.bf16.msra.mxu0 0
    %5927 = vmatprep.subr.bf16.mxu0 0
    %5928 = vmatpush1.bf16.msra.mxu0 0
    %5929 = vmatprep.subr.bf16.mxu0 0
    %5930 = vmatpush1.bf16.msra.mxu0 0
    %5931 = vmatprep.subr.bf16.mxu0 0
    %5932 = vmatpush1.bf16.msra.mxu0 0
    %5933 = vmatprep.subr.bf16.mxu0 0
    %5934 = vmatpush1.bf16.msra.mxu0 0
    %5935 = vmatprep.subr.bf16.mxu0 0
    %5936 = vmatpush1.bf16.msra.mxu0 0
    %5937 = vmatprep.subr.bf16.mxu0 0
    %5938 = vmatpush1.bf16.msra.mxu0 0
    %5939 = vmatprep.mubr.bf16.mxu0 0
    %5940 = vmatmul.mubr.bf16.gmra.mrb[0].mxu0 %v5459
    %v5941 = vpop.f32.mrb[0].mxu0
    %v5942 = vadd.f32 %v5767, %v5941
    %v5943 = vpop.f32.mrb[0].mxu0
    %v5944 = vadd.f32 %v5771, %v5943
    %v5945 = vpop.f32.mrb[0].mxu0
    %v5946 = vpop.f32.mrb[0].mxu0
    %5947 = vdwg.mxu0
    %5948 = vmatprep.subr.bf16.mxu0 0
    %5949 = vmatpush1.bf16.msra.mxu0 %v5861
    %5950 = vmatprep.subr.bf16.mxu0 0
    %5951 = vmatpush1.bf16.msra.mxu0 %v5864
    %5952 = vmatprep.subr.bf16.mxu0 0
    %5953 = vmatpush1.bf16.msra.mxu0 %v5867
    %5954 = vmatprep.subr.bf16.mxu0 0
    %5955 = vmatpush1.bf16.msra.mxu0 %v5870
    %5956 = vmatprep.subr.bf16.mxu0 0
    %5957 = vmatpush1.bf16.msra.mxu0 %v5873
    %5958 = vmatprep.subr.bf16.mxu0 0
    %5959 = vmatpush1.bf16.msra.mxu0 %v5876
    %5960 = vmatprep.subr.bf16.mxu0 0
    %5961 = vmatpush1.bf16.msra.mxu0 %v5879
    %5962 = vmatprep.subr.bf16.mxu0 0
    %5963 = vmatpush1.bf16.msra.mxu0 %v5882
    %5964 = vmatprep.subr.bf16.mxu0 0
    %5965 = vmatpush1.bf16.msra.mxu0 0
    %5966 = vmatprep.subr.bf16.mxu0 0
    %5967 = vmatpush1.bf16.msra.mxu0 0
    %5968 = vmatprep.subr.bf16.mxu0 0
    %5969 = vmatpush1.bf16.msra.mxu0 0
    %5970 = vmatprep.subr.bf16.mxu0 0
    %5971 = vmatpush1.bf16.msra.mxu0 0
    %5972 = vmatprep.subr.bf16.mxu0 0
    %5973 = vmatpush1.bf16.msra.mxu0 0
    %5974 = vmatprep.subr.bf16.mxu0 0
    %5975 = vmatpush1.bf16.msra.mxu0 0
    %5976 = vmatprep.subr.bf16.mxu0 0
    %5977 = vmatpush1.bf16.msra.mxu0 0
    %5978 = vmatprep.subr.bf16.mxu0 0
    %5979 = vmatpush1.bf16.msra.mxu0 0
    %5980 = vmatprep.mubr.bf16.mxu0 0
    %5981 = vmatmul.mubr.bf16.gmra.mrb[0].mxu0 %v5459
    %v5982 = vpop.f32.mrb[0].mxu0
    %v5983 = vadd.f32 %v5775, %v5982
    %v5984 = vpop.f32.mrb[0].mxu0
    %v5985 = vpop.f32.mrb[0].mxu0
    %v5986 = vpop.f32.mrb[0].mxu0
    %5987 = vdwg.mxu0
    %v5988 = vpack.c.bf16 %v4925, %v4925
    %v5989 = vld [vmem:[#allocation15] sm:$0xff]
    %v5990 = vld [vmem:[#allocation15 + $0x8] sm:$0xf]
    %v5991 = vld [vmem:[#allocation15 + $0xc] sm:$0xff]
    %v5992 = vld [vmem:[#allocation15 + $0x14] sm:$0xf]
    %v5993 = vld [vmem:[#allocation15 + $0x18] sm:$0xff]
    %v5994 = vld [vmem:[#allocation15 + $0x20] sm:$0xf]
    %v5995 = vld [vmem:[#allocation15 + $0x24] sm:$0xff]
    %v5996 = vld [vmem:[#allocation15 + $0x2c] sm:$0xf]
    %v5997 = vld [vmem:[#allocation15 + $0x30] sm:$0xff]
    %v5998 = vld [vmem:[#allocation15 + $0x38] sm:$0xf]
    %v5999 = vld [vmem:[#allocation15 + $0x3c] sm:$0xff]
    %v6000 = vld [vmem:[#allocation15 + $0x44] sm:$0xf]
    %v6001 = vld [vmem:[#allocation15 + $0x48] sm:$0xff]
    %v6002 = vld [vmem:[#allocation15 + $0x50] sm:$0xf]
    %v6003 = vld [vmem:[#allocation15 + $0x54] sm:$0xff]
    %v6004 = vld [vmem:[#allocation15 + $0x5c] sm:$0xf]
    %v6005 = vld [vmem:[#allocation15 + $0x60] sm:$0xff]
    %v6006 = vld [vmem:[#allocation15 + $0x68] sm:$0xf]
    %v6007 = vld [vmem:[#allocation15 + $0x6c] sm:$0xff]
    %v6008 = vld [vmem:[#allocation15 + $0x74] sm:$0xf]
    %v6009 = vld [vmem:[#allocation15 + $0x78] sm:$0xff]
    %v6010 = vld [vmem:[#allocation15 + $0x80] sm:$0xf]
    %v6011 = vld [vmem:[#allocation15 + $0x84] sm:$0xff]
    %v6012 = vld [vmem:[#allocation15 + $0x8c] sm:$0xf]
    %v6013 = vld [vmem:[#allocation15 + $0x90] sm:$0xff]
    %v6014 = vld [vmem:[#allocation15 + $0x98] sm:$0xf]
    %v6015 = vld [vmem:[#allocation15 + $0x9c] sm:$0xff]
    %v6016 = vld [vmem:[#allocation15 + $0xa4] sm:$0xf]
    %v6017 = vld [vmem:[#allocation15 + $0xa8] sm:$0xff]
    %v6018 = vld [vmem:[#allocation15 + $0xb0] sm:$0xf]
    %v6019 = vld [vmem:[#allocation15 + $0xb4] sm:$0xff]
    %v6020 = vld [vmem:[#allocation15 + $0xbc] sm:$0xf]
    %v6053 = vunpack.c.l.b16 %v5989
    %v6054 = vunpack.c.h.b16 %v5989
    %v6055 = vunpack.c.l.b16 %v5990
    %v6056 = vunpack.c.l.b16 %v5991
    %v6057 = vunpack.c.h.b16 %v5991
    %v6058 = vunpack.c.l.b16 %v5992
    %v6059 = vunpack.c.l.b16 %v5993
    %v6060 = vunpack.c.h.b16 %v5993
    %v6061 = vunpack.c.l.b16 %v5994
    %v6062 = vunpack.c.l.b16 %v5995
    %v6063 = vunpack.c.h.b16 %v5995
    %v6064 = vunpack.c.l.b16 %v5996
    %v6065 = vunpack.c.l.b16 %v5997
    %v6066 = vunpack.c.h.b16 %v5997
    %v6067 = vunpack.c.l.b16 %v5998
    %v6068 = vunpack.c.l.b16 %v5999
    %v6069 = vunpack.c.h.b16 %v5999
    %v6070 = vunpack.c.l.b16 %v6000
    %v6071 = vunpack.c.l.b16 %v6001
    %v6072 = vunpack.c.h.b16 %v6001
    %v6073 = vunpack.c.l.b16 %v6002
    %v6074 = vunpack.c.l.b16 %v6003
    %v6075 = vunpack.c.h.b16 %v6003
    %v6076 = vunpack.c.l.b16 %v6004
    %v6077 = vunpack.c.l.b16 %v6005
    %v6078 = vunpack.c.h.b16 %v6005
    %v6079 = vunpack.c.l.b16 %v6006
    %v6080 = vunpack.c.l.b16 %v6007
    %v6081 = vunpack.c.h.b16 %v6007
    %v6082 = vunpack.c.l.b16 %v6008
    %v6083 = vunpack.c.l.b16 %v6009
    %v6084 = vunpack.c.h.b16 %v6009
    %v6085 = vunpack.c.l.b16 %v6010
    %v6086 = vunpack.c.l.b16 %v6011
    %v6087 = vunpack.c.h.b16 %v6011
    %v6088 = vunpack.c.l.b16 %v6012
    %v6089 = vunpack.c.l.b16 %v6013
    %v6090 = vunpack.c.h.b16 %v6013
    %v6091 = vunpack.c.l.b16 %v6014
    %v6092 = vunpack.c.l.b16 %v6015
    %v6093 = vunpack.c.h.b16 %v6015
    %v6094 = vunpack.c.l.b16 %v6016
    %v6095 = vunpack.c.l.b16 %v6017
    %v6096 = vunpack.c.h.b16 %v6017
    %v6097 = vunpack.c.l.b16 %v6018
    %v6098 = vunpack.c.l.b16 %v6019
    %v6099 = vunpack.c.h.b16 %v6019
    %v6100 = vunpack.c.l.b16 %v6020
    %v6101 = vpack.c.b16 %v6056, %v6053
    %v6102 = vpack.c.b16 %v6057, %v6054
    %v6103 = vpack.c.b16 %v6058, %v6055
    %v6104 = vpack.c.b16 %v6062, %v6059
    %v6105 = vpack.c.b16 %v6063, %v6060
    %v6106 = vpack.c.b16 %v6064, %v6061
    %v6107 = vpack.c.b16 %v6068, %v6065
    %v6108 = vpack.c.b16 %v6069, %v6066
    %v6109 = vpack.c.b16 %v6070, %v6067
    %v6110 = vpack.c.b16 %v6074, %v6071
    %v6111 = vpack.c.b16 %v6075, %v6072
    %v6112 = vpack.c.b16 %v6076, %v6073
    %v6113 = vpack.c.b16 %v6080, %v6077
    %v6114 = vpack.c.b16 %v6081, %v6078
    %v6115 = vpack.c.b16 %v6082, %v6079
    %v6116 = vpack.c.b16 %v6086, %v6083
    %v6117 = vpack.c.b16 %v6087, %v6084
    %v6118 = vpack.c.b16 %v6088, %v6085
    %v6119 = vpack.c.b16 %v6092, %v6089
    %v6120 = vpack.c.b16 %v6093, %v6090
    %v6121 = vpack.c.b16 %v6094, %v6091
    %v6122 = vpack.c.b16 %v6098, %v6095
    %v6123 = vpack.c.b16 %v6099, %v6096
    %v6124 = vpack.c.b16 %v6100, %v6097
    %6149 = vmatprep.subr.bf16.mxu0 %v6102
    %6150 = vmatpush1.bf16.msra.mxu0 %v6101
    %6151 = vmatprep.subr.bf16.mxu0 %v6105
    %6152 = vmatpush1.bf16.msra.mxu0 %v6104
    %6153 = vmatprep.subr.bf16.mxu0 %v6108
    %6154 = vmatpush1.bf16.msra.mxu0 %v6107
    %6155 = vmatprep.subr.bf16.mxu0 %v6111
    %6156 = vmatpush1.bf16.msra.mxu0 %v6110
    %6157 = vmatprep.subr.bf16.mxu0 %v6114
    %6158 = vmatpush1.bf16.msra.mxu0 %v6113
    %6159 = vmatprep.subr.bf16.mxu0 %v6117
    %6160 = vmatpush1.bf16.msra.mxu0 %v6116
    %6161 = vmatprep.subr.bf16.mxu0 %v6120
    %6162 = vmatpush1.bf16.msra.mxu0 %v6119
    %6163 = vmatprep.subr.bf16.mxu0 %v6123
    %6164 = vmatpush1.bf16.msra.mxu0 %v6122
    %6165 = vmatprep.subr.bf16.mxu0 0
    %6166 = vmatpush1.bf16.msra.mxu0 0
    %6167 = vmatprep.subr.bf16.mxu0 0
    %6168 = vmatpush1.bf16.msra.mxu0 0
    %6169 = vmatprep.subr.bf16.mxu0 0
    %6170 = vmatpush1.bf16.msra.mxu0 0
    %6171 = vmatprep.subr.bf16.mxu0 0
    %6172 = vmatpush1.bf16.msra.mxu0 0
    %6173 = vmatprep.subr.bf16.mxu0 0
    %6174 = vmatpush1.bf16.msra.mxu0 0
    %6175 = vmatprep.subr.bf16.mxu0 0
    %6176 = vmatpush1.bf16.msra.mxu0 0
    %6177 = vmatprep.subr.bf16.mxu0 0
    %6178 = vmatpush1.bf16.msra.mxu0 0
    %6179 = vmatprep.subr.bf16.mxu0 0
    %6180 = vmatpush1.bf16.msra.mxu0 0
    %6181 = vmatprep.mubr.bf16.mxu0 0
    %6182 = vmatmul.mubr.bf16.gmra.mrb[0].mxu0 %v5988
    %v6183 = vpop.f32.mrb[0].mxu0
    %v6184 = vadd.f32 0.0, %v6183
    %v6185 = vpop.f32.mrb[0].mxu0
    %v6186 = vadd.f32 0.0, %v6185
    %v6187 = vpop.f32.mrb[0].mxu0
    %v6188 = vpop.f32.mrb[0].mxu0
    %6189 = vdwg.mxu0
    %6190 = vmatprep.subr.bf16.mxu0 0
    %6191 = vmatpush1.bf16.msra.mxu0 %v6103
    %6192 = vmatprep.subr.bf16.mxu0 0
    %6193 = vmatpush1.bf16.msra.mxu0 %v6106
    %6194 = vmatprep.subr.bf16.mxu0 0
    %6195 = vmatpush1.bf16.msra.mxu0 %v6109
    %6196 = vmatprep.subr.bf16.mxu0 0
    %6197 = vmatpush1.bf16.msra.mxu0 %v6112
    %6198 = vmatprep.subr.bf16.mxu0 0
    %6199 = vmatpush1.bf16.msra.mxu0 %v6115
    %6200 = vmatprep.subr.bf16.mxu0 0
    %6201 = vmatpush1.bf16.msra.mxu0 %v6118
    %6202 = vmatprep.subr.bf16.mxu0 0
    %6203 = vmatpush1.bf16.msra.mxu0 %v6121
    %6204 = vmatprep.subr.bf16.mxu0 0
    %6205 = vmatpush1.bf16.msra.mxu0 %v6124
    %6206 = vmatprep.subr.bf16.mxu0 0
    %6207 = vmatpush1.bf16.msra.mxu0 0
    %6208 = vmatprep.subr.bf16.mxu0 0
    %6209 = vmatpush1.bf16.msra.mxu0 0
    %6210 = vmatprep.subr.bf16.mxu0 0
    %6211 = vmatpush1.bf16.msra.mxu0 0
    %6212 = vmatprep.subr.bf16.mxu0 0
    %6213 = vmatpush1.bf16.msra.mxu0 0
    %6214 = vmatprep.subr.bf16.mxu0 0
    %6215 = vmatpush1.bf16.msra.mxu0 0
    %6216 = vmatprep.subr.bf16.mxu0 0
    %6217 = vmatpush1.bf16.msra.mxu0 0
    %6218 = vmatprep.subr.bf16.mxu0 0
    %6219 = vmatpush1.bf16.msra.mxu0 0
    %6220 = vmatprep.subr.bf16.mxu0 0
    %6221 = vmatpush1.bf16.msra.mxu0 0
    %6222 = vmatprep.mubr.bf16.mxu0 0
    %6223 = vmatmul.mubr.bf16.gmra.mrb[0].mxu0 %v5988
    %v6224 = vpop.f32.mrb[0].mxu0
    %v6225 = vadd.f32 0.0, %v6224
    %v6226 = vpop.f32.mrb[0].mxu0
    %v6227 = vpop.f32.mrb[0].mxu0
    %v6228 = vpop.f32.mrb[0].mxu0
    %6229 = vdwg.mxu0
    %v6230 = vadd.f32 %v5942, %v6184
    %v6231 = vxor.u32 %v6230, 2147483648
    %v6232 = vmul.f32 %v6231, 1.442695
    %v6233 = vpow.pop %v6232
    %v6234 = vadd.f32 %v6233, 1.0
    %v6235 = vrcp.pop %v6234
    %v6236 = vmul.f32 1.0, %v6235
    %v6237 = vadd.f32 %v5944, %v6186
    %v6238 = vxor.u32 %v6237, 2147483648
    %v6239 = vmul.f32 %v6238, 1.442695
    %v6240 = vpow.pop %v6239
    %v6241 = vadd.f32 %v6240, 1.0
    %v6242 = vrcp.pop %v6241
    %v6243 = vmul.f32 1.0, %v6242
    %v6244 = vld [vmem:[%s12] sm:$0x1]
    %v6246 = vlaneseq
    %v6247 = vshrl.u32 %v6246, 7
    %v6248 = vsub.s32 0, %v6247
    %v6249 = vrot.slane %v6244, %v6248
    %v6251 = vadd.f32 %v6225, %v6249
    %v6252 = vmul.f32 %v6236, %v6251
    %v6253 = vadd.f32 %v5983, %v6252
    %v6254 = vtanh.pop %v6253
    %v6255 = vsub.f32 1.0, %v6243
    %v6256 = vmul.f32 %v6255, %v6254
    %v6257 = vmul.f32 %v6243, %v4925
    %v6258 = vadd.f32 %v6256, %v6257
    %6259 = vst [vmem:[#allocation3 + $0x18] sm:$0xff] %v6258
    %v6260 = vld [vmem:[#allocation2 + $0x90] sm:$0xff]
    %v6261 = vld [vmem:[#allocation2 + $0x98] sm:$0xff]
    %v6262 = vld [vmem:[#allocation2 + $0xa0] sm:$0xff]
    %v6263 = vpack.c.bf16 %v5200, %v5200
    %v6264 = vld [vmem:[#allocation9] sm:$0xff]
    %v6265 = vld [vmem:[#allocation9 + $0x8] sm:$0xf]
    %v6266 = vld [vmem:[#allocation9 + $0xc] sm:$0xff]
    %v6267 = vld [vmem:[#allocation9 + $0x14] sm:$0xf]
    %v6268 = vld [vmem:[#allocation9 + $0x18] sm:$0xff]
    %v6269 = vld [vmem:[#allocation9 + $0x20] sm:$0xf]
    %v6270 = vld [vmem:[#allocation9 + $0x24] sm:$0xff]
    %v6271 = vld [vmem:[#allocation9 + $0x2c] sm:$0xf]
    %v6272 = vld [vmem:[#allocation9 + $0x30] sm:$0xff]
    %v6273 = vld [vmem:[#allocation9 + $0x38] sm:$0xf]
    %v6274 = vld [vmem:[#allocation9 + $0x3c] sm:$0xff]
    %v6275 = vld [vmem:[#allocation9 + $0x44] sm:$0xf]
    %v6276 = vld [vmem:[#allocation9 + $0x48] sm:$0xff]
    %v6277 = vld [vmem:[#allocation9 + $0x50] sm:$0xf]
    %v6278 = vld [vmem:[#allocation9 + $0x54] sm:$0xff]
    %v6279 = vld [vmem:[#allocation9 + $0x5c] sm:$0xf]
    %v6280 = vld [vmem:[#allocation9 + $0x60] sm:$0xff]
    %v6281 = vld [vmem:[#allocation9 + $0x68] sm:$0xf]
    %v6282 = vld [vmem:[#allocation9 + $0x6c] sm:$0xff]
    %v6283 = vld [vmem:[#allocation9 + $0x74] sm:$0xf]
    %v6284 = vld [vmem:[#allocation9 + $0x78] sm:$0xff]
    %v6285 = vld [vmem:[#allocation9 + $0x80] sm:$0xf]
    %v6286 = vld [vmem:[#allocation9 + $0x84] sm:$0xff]
    %v6287 = vld [vmem:[#allocation9 + $0x8c] sm:$0xf]
    %v6288 = vld [vmem:[#allocation9 + $0x90] sm:$0xff]
    %v6289 = vld [vmem:[#allocation9 + $0x98] sm:$0xf]
    %v6290 = vld [vmem:[#allocation9 + $0x9c] sm:$0xff]
    %v6291 = vld [vmem:[#allocation9 + $0xa4] sm:$0xf]
    %v6292 = vld [vmem:[#allocation9 + $0xa8] sm:$0xff]
    %v6293 = vld [vmem:[#allocation9 + $0xb0] sm:$0xf]
    %v6294 = vld [vmem:[#allocation9 + $0xb4] sm:$0xff]
    %v6295 = vld [vmem:[#allocation9 + $0xbc] sm:$0xf]
    %v6328 = vunpack.c.l.b16 %v6264
    %v6329 = vunpack.c.h.b16 %v6264
    %v6330 = vunpack.c.l.b16 %v6265
    %v6331 = vunpack.c.l.b16 %v6266
    %v6332 = vunpack.c.h.b16 %v6266
    %v6333 = vunpack.c.l.b16 %v6267
    %v6334 = vunpack.c.l.b16 %v6268
    %v6335 = vunpack.c.h.b16 %v6268
    %v6336 = vunpack.c.l.b16 %v6269
    %v6337 = vunpack.c.l.b16 %v6270
    %v6338 = vunpack.c.h.b16 %v6270
    %v6339 = vunpack.c.l.b16 %v6271
    %v6340 = vunpack.c.l.b16 %v6272
    %v6341 = vunpack.c.h.b16 %v6272
    %v6342 = vunpack.c.l.b16 %v6273
    %v6343 = vunpack.c.l.b16 %v6274
    %v6344 = vunpack.c.h.b16 %v6274
    %v6345 = vunpack.c.l.b16 %v6275
    %v6346 = vunpack.c.l.b16 %v6276
    %v6347 = vunpack.c.h.b16 %v6276
    %v6348 = vunpack.c.l.b16 %v6277
    %v6349 = vunpack.c.l.b16 %v6278
    %v6350 = vunpack.c.h.b16 %v6278
    %v6351 = vunpack.c.l.b16 %v6279
    %v6352 = vunpack.c.l.b16 %v6280
    %v6353 = vunpack.c.h.b16 %v6280
    %v6354 = vunpack.c.l.b16 %v6281
    %v6355 = vunpack.c.l.b16 %v6282
    %v6356 = vunpack.c.h.b16 %v6282
    %v6357 = vunpack.c.l.b16 %v6283
    %v6358 = vunpack.c.l.b16 %v6284
    %v6359 = vunpack.c.h.b16 %v6284
    %v6360 = vunpack.c.l.b16 %v6285
    %v6361 = vunpack.c.l.b16 %v6286
    %v6362 = vunpack.c.h.b16 %v6286
    %v6363 = vunpack.c.l.b16 %v6287
    %v6364 = vunpack.c.l.b16 %v6288
    %v6365 = vunpack.c.h.b16 %v6288
    %v6366 = vunpack.c.l.b16 %v6289
    %v6367 = vunpack.c.l.b16 %v6290
    %v6368 = vunpack.c.h.b16 %v6290
    %v6369 = vunpack.c.l.b16 %v6291
    %v6370 = vunpack.c.l.b16 %v6292
    %v6371 = vunpack.c.h.b16 %v6292
    %v6372 = vunpack.c.l.b16 %v6293
    %v6373 = vunpack.c.l.b16 %v6294
    %v6374 = vunpack.c.h.b16 %v6294
    %v6375 = vunpack.c.l.b16 %v6295
    %v6376 = vpack.c.b16 %v6331, %v6328
    %v6377 = vpack.c.b16 %v6332, %v6329
    %v6378 = vpack.c.b16 %v6333, %v6330
    %v6379 = vpack.c.b16 %v6337, %v6334
    %v6380 = vpack.c.b16 %v6338, %v6335
    %v6381 = vpack.c.b16 %v6339, %v6336
    %v6382 = vpack.c.b16 %v6343, %v6340
    %v6383 = vpack.c.b16 %v6344, %v6341
    %v6384 = vpack.c.b16 %v6345, %v6342
    %v6385 = vpack.c.b16 %v6349, %v6346
    %v6386 = vpack.c.b16 %v6350, %v6347
    %v6387 = vpack.c.b16 %v6351, %v6348
    %v6388 = vpack.c.b16 %v6355, %v6352
    %v6389 = vpack.c.b16 %v6356, %v6353
    %v6390 = vpack.c.b16 %v6357, %v6354
    %v6391 = vpack.c.b16 %v6361, %v6358
    %v6392 = vpack.c.b16 %v6362, %v6359
    %v6393 = vpack.c.b16 %v6363, %v6360
    %v6394 = vpack.c.b16 %v6367, %v6364
    %v6395 = vpack.c.b16 %v6368, %v6365
    %v6396 = vpack.c.b16 %v6369, %v6366
    %v6397 = vpack.c.b16 %v6373, %v6370
    %v6398 = vpack.c.b16 %v6374, %v6371
    %v6399 = vpack.c.b16 %v6375, %v6372
    %6424 = vmatprep.subr.bf16.mxu0 %v6377
    %6425 = vmatpush1.bf16.msra.mxu0 %v6376
    %6426 = vmatprep.subr.bf16.mxu0 %v6380
    %6427 = vmatpush1.bf16.msra.mxu0 %v6379
    %6428 = vmatprep.subr.bf16.mxu0 %v6383
    %6429 = vmatpush1.bf16.msra.mxu0 %v6382
    %6430 = vmatprep.subr.bf16.mxu0 %v6386
    %6431 = vmatpush1.bf16.msra.mxu0 %v6385
    %6432 = vmatprep.subr.bf16.mxu0 %v6389
    %6433 = vmatpush1.bf16.msra.mxu0 %v6388
    %6434 = vmatprep.subr.bf16.mxu0 %v6392
    %6435 = vmatpush1.bf16.msra.mxu0 %v6391
    %6436 = vmatprep.subr.bf16.mxu0 %v6395
    %6437 = vmatpush1.bf16.msra.mxu0 %v6394
    %6438 = vmatprep.subr.bf16.mxu0 %v6398
    %6439 = vmatpush1.bf16.msra.mxu0 %v6397
    %6440 = vmatprep.subr.bf16.mxu0 0
    %6441 = vmatpush1.bf16.msra.mxu0 0
    %6442 = vmatprep.subr.bf16.mxu0 0
    %6443 = vmatpush1.bf16.msra.mxu0 0
    %6444 = vmatprep.subr.bf16.mxu0 0
    %6445 = vmatpush1.bf16.msra.mxu0 0
    %6446 = vmatprep.subr.bf16.mxu0 0
    %6447 = vmatpush1.bf16.msra.mxu0 0
    %6448 = vmatprep.subr.bf16.mxu0 0
    %6449 = vmatpush1.bf16.msra.mxu0 0
    %6450 = vmatprep.subr.bf16.mxu0 0
    %6451 = vmatpush1.bf16.msra.mxu0 0
    %6452 = vmatprep.subr.bf16.mxu0 0
    %6453 = vmatpush1.bf16.msra.mxu0 0
    %6454 = vmatprep.subr.bf16.mxu0 0
    %6455 = vmatpush1.bf16.msra.mxu0 0
    %6456 = vmatprep.mubr.bf16.mxu0 0
    %6457 = vmatmul.mubr.bf16.gmra.mrb[0].mxu0 %v6263
    %v6458 = vpop.f32.mrb[0].mxu0
    %v6459 = vadd.f32 0.0, %v6458
    %v6460 = vpop.f32.mrb[0].mxu0
    %v6461 = vadd.f32 0.0, %v6460
    %v6462 = vpop.f32.mrb[0].mxu0
    %v6463 = vpop.f32.mrb[0].mxu0
    %6464 = vdwg.mxu0
    %6465 = vmatprep.subr.bf16.mxu0 0
    %6466 = vmatpush1.bf16.msra.mxu0 %v6378
    %6467 = vmatprep.subr.bf16.mxu0 0
    %6468 = vmatpush1.bf16.msra.mxu0 %v6381
    %6469 = vmatprep.subr.bf16.mxu0 0
    %6470 = vmatpush1.bf16.msra.mxu0 %v6384
    %6471 = vmatprep.subr.bf16.mxu0 0
    %6472 = vmatpush1.bf16.msra.mxu0 %v6387
    %6473 = vmatprep.subr.bf16.mxu0 0
    %6474 = vmatpush1.bf16.msra.mxu0 %v6390
    %6475 = vmatprep.subr.bf16.mxu0 0
    %6476 = vmatpush1.bf16.msra.mxu0 %v6393
    %6477 = vmatprep.subr.bf16.mxu0 0
    %6478 = vmatpush1.bf16.msra.mxu0 %v6396
    %6479 = vmatprep.subr.bf16.mxu0 0
    %6480 = vmatpush1.bf16.msra.mxu0 %v6399
    %6481 = vmatprep.subr.bf16.mxu0 0
    %6482 = vmatpush1.bf16.msra.mxu0 0
    %6483 = vmatprep.subr.bf16.mxu0 0
    %6484 = vmatpush1.bf16.msra.mxu0 0
    %6485 = vmatprep.subr.bf16.mxu0 0
    %6486 = vmatpush1.bf16.msra.mxu0 0
    %6487 = vmatprep.subr.bf16.mxu0 0
    %6488 = vmatpush1.bf16.msra.mxu0 0
    %6489 = vmatprep.subr.bf16.mxu0 0
    %6490 = vmatpush1.bf16.msra.mxu0 0
    %6491 = vmatprep.subr.bf16.mxu0 0
    %6492 = vmatpush1.bf16.msra.mxu0 0
    %6493 = vmatprep.subr.bf16.mxu0 0
    %6494 = vmatpush1.bf16.msra.mxu0 0
    %6495 = vmatprep.subr.bf16.mxu0 0
    %6496 = vmatpush1.bf16.msra.mxu0 0
    %6497 = vmatprep.mubr.bf16.mxu0 0
    %6498 = vmatmul.mubr.bf16.gmra.mrb[0].mxu0 %v6263
    %v6499 = vpop.f32.mrb[0].mxu0
    %v6500 = vadd.f32 0.0, %v6499
    %v6501 = vpop.f32.mrb[0].mxu0
    %v6502 = vpop.f32.mrb[0].mxu0
    %v6503 = vpop.f32.mrb[0].mxu0
    %6504 = vdwg.mxu0
    %v6505 = vadd.f32 %v6260, %v6459
    %v6506 = vxor.u32 %v6505, 2147483648
    %v6507 = vmul.f32 %v6506, 1.442695
    %v6508 = vpow.pop %v6507
    %v6509 = vadd.f32 %v6508, 1.0
    %v6510 = vrcp.pop %v6509
    %v6511 = vmul.f32 1.0, %v6510
    %v6512 = vadd.f32 %v6261, %v6461
    %v6513 = vxor.u32 %v6512, 2147483648
    %v6514 = vmul.f32 %v6513, 1.442695
    %v6515 = vpow.pop %v6514
    %v6516 = vadd.f32 %v6515, 1.0
    %v6517 = vrcp.pop %v6516
    %v6518 = vmul.f32 1.0, %v6517
    %v6519 = vld [vmem:[%s4] sm:$0x1]
    %v6521 = vlaneseq
    %v6522 = vshrl.u32 %v6521, 7
    %v6523 = vsub.s32 0, %v6522
    %v6524 = vrot.slane %v6519, %v6523
    %v6526 = vadd.f32 %v6500, %v6524
    %v6527 = vmul.f32 %v6511, %v6526
    %v6528 = vadd.f32 %v6262, %v6527
    %v6529 = vtanh.pop %v6528
    %v6530 = vsub.f32 1.0, %v6518
    %v6531 = vmul.f32 %v6530, %v6529
    %v6532 = vmul.f32 %v6518, %v5200
    %v6533 = vadd.f32 %v6531, %v6532
    %v6534 = vld [vmem:[#allocation10] sm:$0xff]
    %v6535 = vld [vmem:[#allocation10 + $0x8] sm:$0xf]
    %v6536 = vld [vmem:[#allocation10 + $0xc] sm:$0xff]
    %v6537 = vld [vmem:[#allocation10 + $0x14] sm:$0xf]
    %v6538 = vld [vmem:[#allocation10 + $0x18] sm:$0xff]
    %v6539 = vld [vmem:[#allocation10 + $0x20] sm:$0xf]
    %v6540 = vld [vmem:[#allocation10 + $0x24] sm:$0xff]
    %v6541 = vld [vmem:[#allocation10 + $0x2c] sm:$0xf]
    %v6542 = vld [vmem:[#allocation10 + $0x30] sm:$0xff]
    %v6543 = vld [vmem:[#allocation10 + $0x38] sm:$0xf]
    %v6544 = vld [vmem:[#allocation10 + $0x3c] sm:$0xff]
    %v6545 = vld [vmem:[#allocation10 + $0x44] sm:$0xf]
    %v6546 = vld [vmem:[#allocation10 + $0x48] sm:$0xff]
    %v6547 = vld [vmem:[#allocation10 + $0x50] sm:$0xf]
    %v6548 = vld [vmem:[#allocation10 + $0x54] sm:$0xff]
    %v6549 = vld [vmem:[#allocation10 + $0x5c] sm:$0xf]
    %v6550 = vld [vmem:[#allocation10 + $0x60] sm:$0xff]
    %v6551 = vld [vmem:[#allocation10 + $0x68] sm:$0xf]
    %v6552 = vld [vmem:[#allocation10 + $0x6c] sm:$0xff]
    %v6553 = vld [vmem:[#allocation10 + $0x74] sm:$0xf]
    %v6554 = vld [vmem:[#allocation10 + $0x78] sm:$0xff]
    %v6555 = vld [vmem:[#allocation10 + $0x80] sm:$0xf]
    %v6556 = vld [vmem:[#allocation10 + $0x84] sm:$0xff]
    %v6557 = vld [vmem:[#allocation10 + $0x8c] sm:$0xf]
    %v6558 = vld [vmem:[#allocation10 + $0x90] sm:$0xff]
    %v6559 = vld [vmem:[#allocation10 + $0x98] sm:$0xf]
    %v6560 = vld [vmem:[#allocation10 + $0x9c] sm:$0xff]
    %v6561 = vld [vmem:[#allocation10 + $0xa4] sm:$0xf]
    %v6562 = vld [vmem:[#allocation10 + $0xa8] sm:$0xff]
    %v6563 = vld [vmem:[#allocation10 + $0xb0] sm:$0xf]
    %v6564 = vld [vmem:[#allocation10 + $0xb4] sm:$0xff]
    %v6565 = vld [vmem:[#allocation10 + $0xbc] sm:$0xf]
    %v6566 = vld [vmem:[%s7] sm:$0x7]
    %v6568 = vlaneseq
    %v6569 = vshrl.u32 %v6568, 7
    %v6570 = vsub.s32 0, %v6569
    %v6571 = vrot.slane %v6566, %v6570
    %v6572 = vlaneseq
    %v6573 = vshrl.u32 %v6572, 7
    %v6574 = vsub.s32 1, %v6573
    %v6575 = vrot.slane %v6566, %v6574
    %v6576 = vlaneseq
    %v6577 = vshrl.u32 %v6576, 7
    %v6578 = vsub.s32 2, %v6577
    %v6579 = vrot.slane %v6566, %v6578
    %v6615 = vunpack.c.l.b16 %v6534
    %v6616 = vunpack.c.h.b16 %v6534
    %v6617 = vunpack.c.l.b16 %v6535
    %v6618 = vunpack.c.l.b16 %v6536
    %v6619 = vunpack.c.h.b16 %v6536
    %v6620 = vunpack.c.l.b16 %v6537
    %v6621 = vunpack.c.l.b16 %v6538
    %v6622 = vunpack.c.h.b16 %v6538
    %v6623 = vunpack.c.l.b16 %v6539
    %v6624 = vunpack.c.l.b16 %v6540
    %v6625 = vunpack.c.h.b16 %v6540
    %v6626 = vunpack.c.l.b16 %v6541
    %v6627 = vunpack.c.l.b16 %v6542
    %v6628 = vunpack.c.h.b16 %v6542
    %v6629 = vunpack.c.l.b16 %v6543
    %v6630 = vunpack.c.l.b16 %v6544
    %v6631 = vunpack.c.h.b16 %v6544
    %v6632 = vunpack.c.l.b16 %v6545
    %v6633 = vunpack.c.l.b16 %v6546
    %v6634 = vunpack.c.h.b16 %v6546
    %v6635 = vunpack.c.l.b16 %v6547
    %v6636 = vunpack.c.l.b16 %v6548
    %v6637 = vunpack.c.h.b16 %v6548
    %v6638 = vunpack.c.l.b16 %v6549
    %v6639 = vunpack.c.l.b16 %v6550
    %v6640 = vunpack.c.h.b16 %v6550
    %v6641 = vunpack.c.l.b16 %v6551
    %v6642 = vunpack.c.l.b16 %v6552
    %v6643 = vunpack.c.h.b16 %v6552
    %v6644 = vunpack.c.l.b16 %v6553
    %v6645 = vunpack.c.l.b16 %v6554
    %v6646 = vunpack.c.h.b16 %v6554
    %v6647 = vunpack.c.l.b16 %v6555
    %v6648 = vunpack.c.l.b16 %v6556
    %v6649 = vunpack.c.h.b16 %v6556
    %v6650 = vunpack.c.l.b16 %v6557
    %v6651 = vunpack.c.l.b16 %v6558
    %v6652 = vunpack.c.h.b16 %v6558
    %v6653 = vunpack.c.l.b16 %v6559
    %v6654 = vunpack.c.l.b16 %v6560
    %v6655 = vunpack.c.h.b16 %v6560
    %v6656 = vunpack.c.l.b16 %v6561
    %v6657 = vunpack.c.l.b16 %v6562
    %v6658 = vunpack.c.h.b16 %v6562
    %v6659 = vunpack.c.l.b16 %v6563
    %v6660 = vunpack.c.l.b16 %v6564
    %v6661 = vunpack.c.h.b16 %v6564
    %v6662 = vunpack.c.l.b16 %v6565
    %v6663 = vpack.c.b16 %v6618, %v6615
    %v6664 = vpack.c.b16 %v6619, %v6616
    %v6665 = vpack.c.b16 %v6620, %v6617
    %v6666 = vpack.c.b16 %v6624, %v6621
    %v6667 = vpack.c.b16 %v6625, %v6622
    %v6668 = vpack.c.b16 %v6626, %v6623
    %v6669 = vpack.c.b16 %v6630, %v6627
    %v6670 = vpack.c.b16 %v6631, %v6628
    %v6671 = vpack.c.b16 %v6632, %v6629
    %v6672 = vpack.c.b16 %v6636, %v6633
    %v6673 = vpack.c.b16 %v6637, %v6634
    %v6674 = vpack.c.b16 %v6638, %v6635
    %v6675 = vpack.c.b16 %v6642, %v6639
    %v6676 = vpack.c.b16 %v6643, %v6640
    %v6677 = vpack.c.b16 %v6644, %v6641
    %v6678 = vpack.c.b16 %v6648, %v6645
    %v6679 = vpack.c.b16 %v6649, %v6646
    %v6680 = vpack.c.b16 %v6650, %v6647
    %v6681 = vpack.c.b16 %v6654, %v6651
    %v6682 = vpack.c.b16 %v6655, %v6652
    %v6683 = vpack.c.b16 %v6656, %v6653
    %v6684 = vpack.c.b16 %v6660, %v6657
    %v6685 = vpack.c.b16 %v6661, %v6658
    %v6686 = vpack.c.b16 %v6662, %v6659
    %6711 = vmatprep.subr.bf16.mxu0 %v6664
    %6712 = vmatpush1.bf16.msra.mxu0 %v6663
    %6713 = vmatprep.subr.bf16.mxu0 %v6667
    %6714 = vmatpush1.bf16.msra.mxu0 %v6666
    %6715 = vmatprep.subr.bf16.mxu0 %v6670
    %6716 = vmatpush1.bf16.msra.mxu0 %v6669
    %6717 = vmatprep.subr.bf16.mxu0 %v6673
    %6718 = vmatpush1.bf16.msra.mxu0 %v6672
    %6719 = vmatprep.subr.bf16.mxu0 %v6676
    %6720 = vmatpush1.bf16.msra.mxu0 %v6675
    %6721 = vmatprep.subr.bf16.mxu0 %v6679
    %6722 = vmatpush1.bf16.msra.mxu0 %v6678
    %6723 = vmatprep.subr.bf16.mxu0 %v6682
    %6724 = vmatpush1.bf16.msra.mxu0 %v6681
    %6725 = vmatprep.subr.bf16.mxu0 %v6685
    %6726 = vmatpush1.bf16.msra.mxu0 %v6684
    %6727 = vmatprep.subr.bf16.mxu0 0
    %6728 = vmatpush1.bf16.msra.mxu0 0
    %6729 = vmatprep.subr.bf16.mxu0 0
    %6730 = vmatpush1.bf16.msra.mxu0 0
    %6731 = vmatprep.subr.bf16.mxu0 0
    %6732 = vmatpush1.bf16.msra.mxu0 0
    %6733 = vmatprep.subr.bf16.mxu0 0
    %6734 = vmatpush1.bf16.msra.mxu0 0
    %6735 = vmatprep.subr.bf16.mxu0 0
    %6736 = vmatpush1.bf16.msra.mxu0 0
    %6737 = vmatprep.subr.bf16.mxu0 0
    %6738 = vmatpush1.bf16.msra.mxu0 0
    %6739 = vmatprep.subr.bf16.mxu0 0
    %6740 = vmatpush1.bf16.msra.mxu0 0
    %6741 = vmatprep.subr.bf16.mxu0 0
    %6742 = vmatpush1.bf16.msra.mxu0 0
    %6743 = vmatprep.mubr.bf16.mxu0 0
    %6744 = vmatmul.mubr.bf16.gmra.mrb[0].mxu0 %v6263
    %v6745 = vpop.f32.mrb[0].mxu0
    %v6746 = vadd.f32 %v6571, %v6745
    %v6747 = vpop.f32.mrb[0].mxu0
    %v6748 = vadd.f32 %v6575, %v6747
    %v6749 = vpop.f32.mrb[0].mxu0
    %v6750 = vpop.f32.mrb[0].mxu0
    %6751 = vdwg.mxu0
    %6752 = vmatprep.subr.bf16.mxu0 0
    %6753 = vmatpush1.bf16.msra.mxu0 %v6665
    %6754 = vmatprep.subr.bf16.mxu0 0
    %6755 = vmatpush1.bf16.msra.mxu0 %v6668
    %6756 = vmatprep.subr.bf16.mxu0 0
    %6757 = vmatpush1.bf16.msra.mxu0 %v6671
    %6758 = vmatprep.subr.bf16.mxu0 0
    %6759 = vmatpush1.bf16.msra.mxu0 %v6674
    %6760 = vmatprep.subr.bf16.mxu0 0
    %6761 = vmatpush1.bf16.msra.mxu0 %v6677
    %6762 = vmatprep.subr.bf16.mxu0 0
    %6763 = vmatpush1.bf16.msra.mxu0 %v6680
    %6764 = vmatprep.subr.bf16.mxu0 0
    %6765 = vmatpush1.bf16.msra.mxu0 %v6683
    %6766 = vmatprep.subr.bf16.mxu0 0
    %6767 = vmatpush1.bf16.msra.mxu0 %v6686
    %6768 = vmatprep.subr.bf16.mxu0 0
    %6769 = vmatpush1.bf16.msra.mxu0 0
    %6770 = vmatprep.subr.bf16.mxu0 0
    %6771 = vmatpush1.bf16.msra.mxu0 0
    %6772 = vmatprep.subr.bf16.mxu0 0
    %6773 = vmatpush1.bf16.msra.mxu0 0
    %6774 = vmatprep.subr.bf16.mxu0 0
    %6775 = vmatpush1.bf16.msra.mxu0 0
    %6776 = vmatprep.subr.bf16.mxu0 0
    %6777 = vmatpush1.bf16.msra.mxu0 0
    %6778 = vmatprep.subr.bf16.mxu0 0
    %6779 = vmatpush1.bf16.msra.mxu0 0
    %6780 = vmatprep.subr.bf16.mxu0 0
    %6781 = vmatpush1.bf16.msra.mxu0 0
    %6782 = vmatprep.subr.bf16.mxu0 0
    %6783 = vmatpush1.bf16.msra.mxu0 0
    %6784 = vmatprep.mubr.bf16.mxu0 0
    %6785 = vmatmul.mubr.bf16.gmra.mrb[0].mxu0 %v6263
    %v6786 = vpop.f32.mrb[0].mxu0
    %v6787 = vadd.f32 %v6579, %v6786
    %v6788 = vpop.f32.mrb[0].mxu0
    %v6789 = vpop.f32.mrb[0].mxu0
    %v6790 = vpop.f32.mrb[0].mxu0
    %6791 = vdwg.mxu0
    %v6792 = vpack.c.bf16 %v5729, %v5729
    %v6793 = vld [vmem:[#allocation12] sm:$0xff]
    %v6794 = vld [vmem:[#allocation12 + $0x8] sm:$0xf]
    %v6795 = vld [vmem:[#allocation12 + $0xc] sm:$0xff]
    %v6796 = vld [vmem:[#allocation12 + $0x14] sm:$0xf]
    %v6797 = vld [vmem:[#allocation12 + $0x18] sm:$0xff]
    %v6798 = vld [vmem:[#allocation12 + $0x20] sm:$0xf]
    %v6799 = vld [vmem:[#allocation12 + $0x24] sm:$0xff]
    %v6800 = vld [vmem:[#allocation12 + $0x2c] sm:$0xf]
    %v6801 = vld [vmem:[#allocation12 + $0x30] sm:$0xff]
    %v6802 = vld [vmem:[#allocation12 + $0x38] sm:$0xf]
    %v6803 = vld [vmem:[#allocation12 + $0x3c] sm:$0xff]
    %v6804 = vld [vmem:[#allocation12 + $0x44] sm:$0xf]
    %v6805 = vld [vmem:[#allocation12 + $0x48] sm:$0xff]
    %v6806 = vld [vmem:[#allocation12 + $0x50] sm:$0xf]
    %v6807 = vld [vmem:[#allocation12 + $0x54] sm:$0xff]
    %v6808 = vld [vmem:[#allocation12 + $0x5c] sm:$0xf]
    %v6809 = vld [vmem:[#allocation12 + $0x60] sm:$0xff]
    %v6810 = vld [vmem:[#allocation12 + $0x68] sm:$0xf]
    %v6811 = vld [vmem:[#allocation12 + $0x6c] sm:$0xff]
    %v6812 = vld [vmem:[#allocation12 + $0x74] sm:$0xf]
    %v6813 = vld [vmem:[#allocation12 + $0x78] sm:$0xff]
    %v6814 = vld [vmem:[#allocation12 + $0x80] sm:$0xf]
    %v6815 = vld [vmem:[#allocation12 + $0x84] sm:$0xff]
    %v6816 = vld [vmem:[#allocation12 + $0x8c] sm:$0xf]
    %v6817 = vld [vmem:[#allocation12 + $0x90] sm:$0xff]
    %v6818 = vld [vmem:[#allocation12 + $0x98] sm:$0xf]
    %v6819 = vld [vmem:[#allocation12 + $0x9c] sm:$0xff]
    %v6820 = vld [vmem:[#allocation12 + $0xa4] sm:$0xf]
    %v6821 = vld [vmem:[#allocation12 + $0xa8] sm:$0xff]
    %v6822 = vld [vmem:[#allocation12 + $0xb0] sm:$0xf]
    %v6823 = vld [vmem:[#allocation12 + $0xb4] sm:$0xff]
    %v6824 = vld [vmem:[#allocation12 + $0xbc] sm:$0xf]
    %v6857 = vunpack.c.l.b16 %v6793
    %v6858 = vunpack.c.h.b16 %v6793
    %v6859 = vunpack.c.l.b16 %v6794
    %v6860 = vunpack.c.l.b16 %v6795
    %v6861 = vunpack.c.h.b16 %v6795
    %v6862 = vunpack.c.l.b16 %v6796
    %v6863 = vunpack.c.l.b16 %v6797
    %v6864 = vunpack.c.h.b16 %v6797
    %v6865 = vunpack.c.l.b16 %v6798
    %v6866 = vunpack.c.l.b16 %v6799
    %v6867 = vunpack.c.h.b16 %v6799
    %v6868 = vunpack.c.l.b16 %v6800
    %v6869 = vunpack.c.l.b16 %v6801
    %v6870 = vunpack.c.h.b16 %v6801
    %v6871 = vunpack.c.l.b16 %v6802
    %v6872 = vunpack.c.l.b16 %v6803
    %v6873 = vunpack.c.h.b16 %v6803
    %v6874 = vunpack.c.l.b16 %v6804
    %v6875 = vunpack.c.l.b16 %v6805
    %v6876 = vunpack.c.h.b16 %v6805
    %v6877 = vunpack.c.l.b16 %v6806
    %v6878 = vunpack.c.l.b16 %v6807
    %v6879 = vunpack.c.h.b16 %v6807
    %v6880 = vunpack.c.l.b16 %v6808
    %v6881 = vunpack.c.l.b16 %v6809
    %v6882 = vunpack.c.h.b16 %v6809
    %v6883 = vunpack.c.l.b16 %v6810
    %v6884 = vunpack.c.l.b16 %v6811
    %v6885 = vunpack.c.h.b16 %v6811
    %v6886 = vunpack.c.l.b16 %v6812
    %v6887 = vunpack.c.l.b16 %v6813
    %v6888 = vunpack.c.h.b16 %v6813
    %v6889 = vunpack.c.l.b16 %v6814
    %v6890 = vunpack.c.l.b16 %v6815
    %v6891 = vunpack.c.h.b16 %v6815
    %v6892 = vunpack.c.l.b16 %v6816
    %v6893 = vunpack.c.l.b16 %v6817
    %v6894 = vunpack.c.h.b16 %v6817
    %v6895 = vunpack.c.l.b16 %v6818
    %v6896 = vunpack.c.l.b16 %v6819
    %v6897 = vunpack.c.h.b16 %v6819
    %v6898 = vunpack.c.l.b16 %v6820
    %v6899 = vunpack.c.l.b16 %v6821
    %v6900 = vunpack.c.h.b16 %v6821
    %v6901 = vunpack.c.l.b16 %v6822
    %v6902 = vunpack.c.l.b16 %v6823
    %v6903 = vunpack.c.h.b16 %v6823
    %v6904 = vunpack.c.l.b16 %v6824
    %v6905 = vpack.c.b16 %v6860, %v6857
    %v6906 = vpack.c.b16 %v6861, %v6858
    %v6907 = vpack.c.b16 %v6862, %v6859
    %v6908 = vpack.c.b16 %v6866, %v6863
    %v6909 = vpack.c.b16 %v6867, %v6864
    %v6910 = vpack.c.b16 %v6868, %v6865
    %v6911 = vpack.c.b16 %v6872, %v6869
    %v6912 = vpack.c.b16 %v6873, %v6870
    %v6913 = vpack.c.b16 %v6874, %v6871
    %v6914 = vpack.c.b16 %v6878, %v6875
    %v6915 = vpack.c.b16 %v6879, %v6876
    %v6916 = vpack.c.b16 %v6880, %v6877
    %v6917 = vpack.c.b16 %v6884, %v6881
    %v6918 = vpack.c.b16 %v6885, %v6882
    %v6919 = vpack.c.b16 %v6886, %v6883
    %v6920 = vpack.c.b16 %v6890, %v6887
    %v6921 = vpack.c.b16 %v6891, %v6888
    %v6922 = vpack.c.b16 %v6892, %v6889
    %v6923 = vpack.c.b16 %v6896, %v6893
    %v6924 = vpack.c.b16 %v6897, %v6894
    %v6925 = vpack.c.b16 %v6898, %v6895
    %v6926 = vpack.c.b16 %v6902, %v6899
    %v6927 = vpack.c.b16 %v6903, %v6900
    %v6928 = vpack.c.b16 %v6904, %v6901
    %6953 = vmatprep.subr.bf16.mxu0 %v6906
    %6954 = vmatpush1.bf16.msra.mxu0 %v6905
    %6955 = vmatprep.subr.bf16.mxu0 %v6909
    %6956 = vmatpush1.bf16.msra.mxu0 %v6908
    %6957 = vmatprep.subr.bf16.mxu0 %v6912
    %6958 = vmatpush1.bf16.msra.mxu0 %v6911
    %6959 = vmatprep.subr.bf16.mxu0 %v6915
    %6960 = vmatpush1.bf16.msra.mxu0 %v6914
    %6961 = vmatprep.subr.bf16.mxu0 %v6918
    %6962 = vmatpush1.bf16.msra.mxu0 %v6917
    %6963 = vmatprep.subr.bf16.mxu0 %v6921
    %6964 = vmatpush1.bf16.msra.mxu0 %v6920
    %6965 = vmatprep.subr.bf16.mxu0 %v6924
    %6966 = vmatpush1.bf16.msra.mxu0 %v6923
    %6967 = vmatprep.subr.bf16.mxu0 %v6927
    %6968 = vmatpush1.bf16.msra.mxu0 %v6926
    %6969 = vmatprep.subr.bf16.mxu0 0
    %6970 = vmatpush1.bf16.msra.mxu0 0
    %6971 = vmatprep.subr.bf16.mxu0 0
    %6972 = vmatpush1.bf16.msra.mxu0 0
    %6973 = vmatprep.subr.bf16.mxu0 0
    %6974 = vmatpush1.bf16.msra.mxu0 0
    %6975 = vmatprep.subr.bf16.mxu0 0
    %6976 = vmatpush1.bf16.msra.mxu0 0
    %6977 = vmatprep.subr.bf16.mxu0 0
    %6978 = vmatpush1.bf16.msra.mxu0 0
    %6979 = vmatprep.subr.bf16.mxu0 0
    %6980 = vmatpush1.bf16.msra.mxu0 0
    %6981 = vmatprep.subr.bf16.mxu0 0
    %6982 = vmatpush1.bf16.msra.mxu0 0
    %6983 = vmatprep.subr.bf16.mxu0 0
    %6984 = vmatpush1.bf16.msra.mxu0 0
    %6985 = vmatprep.mubr.bf16.mxu0 0
    %6986 = vmatmul.mubr.bf16.gmra.mrb[0].mxu0 %v6792
    %v6987 = vpop.f32.mrb[0].mxu0
    %v6988 = vadd.f32 0.0, %v6987
    %v6989 = vpop.f32.mrb[0].mxu0
    %v6990 = vadd.f32 0.0, %v6989
    %v6991 = vpop.f32.mrb[0].mxu0
    %v6992 = vpop.f32.mrb[0].mxu0
    %6993 = vdwg.mxu0
    %6994 = vmatprep.subr.bf16.mxu0 0
    %6995 = vmatpush1.bf16.msra.mxu0 %v6907
    %6996 = vmatprep.subr.bf16.mxu0 0
    %6997 = vmatpush1.bf16.msra.mxu0 %v6910
    %6998 = vmatprep.subr.bf16.mxu0 0
    %6999 = vmatpush1.bf16.msra.mxu0 %v6913
    %7000 = vmatprep.subr.bf16.mxu0 0
    %7001 = vmatpush1.bf16.msra.mxu0 %v6916
    %7002 = vmatprep.subr.bf16.mxu0 0
    %7003 = vmatpush1.bf16.msra.mxu0 %v6919
    %7004 = vmatprep.subr.bf16.mxu0 0
    %7005 = vmatpush1.bf16.msra.mxu0 %v6922
    %7006 = vmatprep.subr.bf16.mxu0 0
    %7007 = vmatpush1.bf16.msra.mxu0 %v6925
    %7008 = vmatprep.subr.bf16.mxu0 0
    %7009 = vmatpush1.bf16.msra.mxu0 %v6928
    %7010 = vmatprep.subr.bf16.mxu0 0
    %7011 = vmatpush1.bf16.msra.mxu0 0
    %7012 = vmatprep.subr.bf16.mxu0 0
    %7013 = vmatpush1.bf16.msra.mxu0 0
    %7014 = vmatprep.subr.bf16.mxu0 0
    %7015 = vmatpush1.bf16.msra.mxu0 0
    %7016 = vmatprep.subr.bf16.mxu0 0
    %7017 = vmatpush1.bf16.msra.mxu0 0
    %7018 = vmatprep.subr.bf16.mxu0 0
    %7019 = vmatpush1.bf16.msra.mxu0 0
    %7020 = vmatprep.subr.bf16.mxu0 0
    %7021 = vmatpush1.bf16.msra.mxu0 0
    %7022 = vmatprep.subr.bf16.mxu0 0
    %7023 = vmatpush1.bf16.msra.mxu0 0
    %7024 = vmatprep.subr.bf16.mxu0 0
    %7025 = vmatpush1.bf16.msra.mxu0 0
    %7026 = vmatprep.mubr.bf16.mxu0 0
    %7027 = vmatmul.mubr.bf16.gmra.mrb[0].mxu0 %v6792
    %v7028 = vpop.f32.mrb[0].mxu0
    %v7029 = vadd.f32 0.0, %v7028
    %v7030 = vpop.f32.mrb[0].mxu0
    %v7031 = vpop.f32.mrb[0].mxu0
    %v7032 = vpop.f32.mrb[0].mxu0
    %7033 = vdwg.mxu0
    %v7034 = vadd.f32 %v6746, %v6988
    %v7035 = vxor.u32 %v7034, 2147483648
    %v7036 = vmul.f32 %v7035, 1.442695
    %v7037 = vpow.pop %v7036
    %v7038 = vadd.f32 %v7037, 1.0
    %v7039 = vrcp.pop %v7038
    %v7040 = vmul.f32 1.0, %v7039
    %v7041 = vadd.f32 %v6748, %v6990
    %v7042 = vxor.u32 %v7041, 2147483648
    %v7043 = vmul.f32 %v7042, 1.442695
    %v7044 = vpow.pop %v7043
    %v7045 = vadd.f32 %v7044, 1.0
    %v7046 = vrcp.pop %v7045
    %v7047 = vmul.f32 1.0, %v7046
    %v7048 = vld [vmem:[%s8] sm:$0x1]
    %v7050 = vlaneseq
    %v7051 = vshrl.u32 %v7050, 7
    %v7052 = vsub.s32 0, %v7051
    %v7053 = vrot.slane %v7048, %v7052
    %v7055 = vadd.f32 %v7029, %v7053
    %v7056 = vmul.f32 %v7040, %v7055
    %v7057 = vadd.f32 %v6787, %v7056
    %v7058 = vtanh.pop %v7057
    %v7059 = vsub.f32 1.0, %v7047
    %v7060 = vmul.f32 %v7059, %v7058
    %v7061 = vmul.f32 %v7047, %v5729
    %v7062 = vadd.f32 %v7060, %v7061
    %v7063 = vld [vmem:[#allocation13] sm:$0xff]
    %v7064 = vld [vmem:[#allocation13 + $0x8] sm:$0xf]
    %v7065 = vld [vmem:[#allocation13 + $0xc] sm:$0xff]
    %v7066 = vld [vmem:[#allocation13 + $0x14] sm:$0xf]
    %v7067 = vld [vmem:[#allocation13 + $0x18] sm:$0xff]
    %v7068 = vld [vmem:[#allocation13 + $0x20] sm:$0xf]
    %v7069 = vld [vmem:[#allocation13 + $0x24] sm:$0xff]
    %v7070 = vld [vmem:[#allocation13 + $0x2c] sm:$0xf]
    %v7071 = vld [vmem:[#allocation13 + $0x30] sm:$0xff]
    %v7072 = vld [vmem:[#allocation13 + $0x38] sm:$0xf]
    %v7073 = vld [vmem:[#allocation13 + $0x3c] sm:$0xff]
    %v7074 = vld [vmem:[#allocation13 + $0x44] sm:$0xf]
    %v7075 = vld [vmem:[#allocation13 + $0x48] sm:$0xff]
    %v7076 = vld [vmem:[#allocation13 + $0x50] sm:$0xf]
    %v7077 = vld [vmem:[#allocation13 + $0x54] sm:$0xff]
    %v7078 = vld [vmem:[#allocation13 + $0x5c] sm:$0xf]
    %v7079 = vld [vmem:[#allocation13 + $0x60] sm:$0xff]
    %v7080 = vld [vmem:[#allocation13 + $0x68] sm:$0xf]
    %v7081 = vld [vmem:[#allocation13 + $0x6c] sm:$0xff]
    %v7082 = vld [vmem:[#allocation13 + $0x74] sm:$0xf]
    %v7083 = vld [vmem:[#allocation13 + $0x78] sm:$0xff]
    %v7084 = vld [vmem:[#allocation13 + $0x80] sm:$0xf]
    %v7085 = vld [vmem:[#allocation13 + $0x84] sm:$0xff]
    %v7086 = vld [vmem:[#allocation13 + $0x8c] sm:$0xf]
    %v7087 = vld [vmem:[#allocation13 + $0x90] sm:$0xff]
    %v7088 = vld [vmem:[#allocation13 + $0x98] sm:$0xf]
    %v7089 = vld [vmem:[#allocation13 + $0x9c] sm:$0xff]
    %v7090 = vld [vmem:[#allocation13 + $0xa4] sm:$0xf]
    %v7091 = vld [vmem:[#allocation13 + $0xa8] sm:$0xff]
    %v7092 = vld [vmem:[#allocation13 + $0xb0] sm:$0xf]
    %v7093 = vld [vmem:[#allocation13 + $0xb4] sm:$0xff]
    %v7094 = vld [vmem:[#allocation13 + $0xbc] sm:$0xf]
    %v7095 = vld [vmem:[%s11] sm:$0x7]
    %v7097 = vlaneseq
    %v7098 = vshrl.u32 %v7097, 7
    %v7099 = vsub.s32 0, %v7098
    %v7100 = vrot.slane %v7095, %v7099
    %v7101 = vlaneseq
    %v7102 = vshrl.u32 %v7101, 7
    %v7103 = vsub.s32 1, %v7102
    %v7104 = vrot.slane %v7095, %v7103
    %v7105 = vlaneseq
    %v7106 = vshrl.u32 %v7105, 7
    %v7107 = vsub.s32 2, %v7106
    %v7108 = vrot.slane %v7095, %v7107
    %v7144 = vunpack.c.l.b16 %v7063
    %v7145 = vunpack.c.h.b16 %v7063
    %v7146 = vunpack.c.l.b16 %v7064
    %v7147 = vunpack.c.l.b16 %v7065
    %v7148 = vunpack.c.h.b16 %v7065
    %v7149 = vunpack.c.l.b16 %v7066
    %v7150 = vunpack.c.l.b16 %v7067
    %v7151 = vunpack.c.h.b16 %v7067
    %v7152 = vunpack.c.l.b16 %v7068
    %v7153 = vunpack.c.l.b16 %v7069
    %v7154 = vunpack.c.h.b16 %v7069
    %v7155 = vunpack.c.l.b16 %v7070
    %v7156 = vunpack.c.l.b16 %v7071
    %v7157 = vunpack.c.h.b16 %v7071
    %v7158 = vunpack.c.l.b16 %v7072
    %v7159 = vunpack.c.l.b16 %v7073
    %v7160 = vunpack.c.h.b16 %v7073
    %v7161 = vunpack.c.l.b16 %v7074
    %v7162 = vunpack.c.l.b16 %v7075
    %v7163 = vunpack.c.h.b16 %v7075
    %v7164 = vunpack.c.l.b16 %v7076
    %v7165 = vunpack.c.l.b16 %v7077
    %v7166 = vunpack.c.h.b16 %v7077
    %v7167 = vunpack.c.l.b16 %v7078
    %v7168 = vunpack.c.l.b16 %v7079
    %v7169 = vunpack.c.h.b16 %v7079
    %v7170 = vunpack.c.l.b16 %v7080
    %v7171 = vunpack.c.l.b16 %v7081
    %v7172 = vunpack.c.h.b16 %v7081
    %v7173 = vunpack.c.l.b16 %v7082
    %v7174 = vunpack.c.l.b16 %v7083
    %v7175 = vunpack.c.h.b16 %v7083
    %v7176 = vunpack.c.l.b16 %v7084
    %v7177 = vunpack.c.l.b16 %v7085
    %v7178 = vunpack.c.h.b16 %v7085
    %v7179 = vunpack.c.l.b16 %v7086
    %v7180 = vunpack.c.l.b16 %v7087
    %v7181 = vunpack.c.h.b16 %v7087
    %v7182 = vunpack.c.l.b16 %v7088
    %v7183 = vunpack.c.l.b16 %v7089
    %v7184 = vunpack.c.h.b16 %v7089
    %v7185 = vunpack.c.l.b16 %v7090
    %v7186 = vunpack.c.l.b16 %v7091
    %v7187 = vunpack.c.h.b16 %v7091
    %v7188 = vunpack.c.l.b16 %v7092
    %v7189 = vunpack.c.l.b16 %v7093
    %v7190 = vunpack.c.h.b16 %v7093
    %v7191 = vunpack.c.l.b16 %v7094
    %v7192 = vpack.c.b16 %v7147, %v7144
    %v7193 = vpack.c.b16 %v7148, %v7145
    %v7194 = vpack.c.b16 %v7149, %v7146
    %v7195 = vpack.c.b16 %v7153, %v7150
    %v7196 = vpack.c.b16 %v7154, %v7151
    %v7197 = vpack.c.b16 %v7155, %v7152
    %v7198 = vpack.c.b16 %v7159, %v7156
    %v7199 = vpack.c.b16 %v7160, %v7157
    %v7200 = vpack.c.b16 %v7161, %v7158
    %v7201 = vpack.c.b16 %v7165, %v7162
    %v7202 = vpack.c.b16 %v7166, %v7163
    %v7203 = vpack.c.b16 %v7167, %v7164
    %v7204 = vpack.c.b16 %v7171, %v7168
    %v7205 = vpack.c.b16 %v7172, %v7169
    %v7206 = vpack.c.b16 %v7173, %v7170
    %v7207 = vpack.c.b16 %v7177, %v7174
    %v7208 = vpack.c.b16 %v7178, %v7175
    %v7209 = vpack.c.b16 %v7179, %v7176
    %v7210 = vpack.c.b16 %v7183, %v7180
    %v7211 = vpack.c.b16 %v7184, %v7181
    %v7212 = vpack.c.b16 %v7185, %v7182
    %v7213 = vpack.c.b16 %v7189, %v7186
    %v7214 = vpack.c.b16 %v7190, %v7187
    %v7215 = vpack.c.b16 %v7191, %v7188
    %7240 = vmatprep.subr.bf16.mxu0 %v7193
    %7241 = vmatpush1.bf16.msra.mxu0 %v7192
    %7242 = vmatprep.subr.bf16.mxu0 %v7196
    %7243 = vmatpush1.bf16.msra.mxu0 %v7195
    %7244 = vmatprep.subr.bf16.mxu0 %v7199
    %7245 = vmatpush1.bf16.msra.mxu0 %v7198
    %7246 = vmatprep.subr.bf16.mxu0 %v7202
    %7247 = vmatpush1.bf16.msra.mxu0 %v7201
    %7248 = vmatprep.subr.bf16.mxu0 %v7205
    %7249 = vmatpush1.bf16.msra.mxu0 %v7204
    %7250 = vmatprep.subr.bf16.mxu0 %v7208
    %7251 = vmatpush1.bf16.msra.mxu0 %v7207
    %7252 = vmatprep.subr.bf16.mxu0 %v7211
    %7253 = vmatpush1.bf16.msra.mxu0 %v7210
    %7254 = vmatprep.subr.bf16.mxu0 %v7214
    %7255 = vmatpush1.bf16.msra.mxu0 %v7213
    %7256 = vmatprep.subr.bf16.mxu0 0
    %7257 = vmatpush1.bf16.msra.mxu0 0
    %7258 = vmatprep.subr.bf16.mxu0 0
    %7259 = vmatpush1.bf16.msra.mxu0 0
    %7260 = vmatprep.subr.bf16.mxu0 0
    %7261 = vmatpush1.bf16.msra.mxu0 0
    %7262 = vmatprep.subr.bf16.mxu0 0
    %7263 = vmatpush1.bf16.msra.mxu0 0
    %7264 = vmatprep.subr.bf16.mxu0 0
    %7265 = vmatpush1.bf16.msra.mxu0 0
    %7266 = vmatprep.subr.bf16.mxu0 0
    %7267 = vmatpush1.bf16.msra.mxu0 0
    %7268 = vmatprep.subr.bf16.mxu0 0
    %7269 = vmatpush1.bf16.msra.mxu0 0
    %7270 = vmatprep.subr.bf16.mxu0 0
    %7271 = vmatpush1.bf16.msra.mxu0 0
    %7272 = vmatprep.mubr.bf16.mxu0 0
    %7273 = vmatmul.mubr.bf16.gmra.mrb[0].mxu0 %v6792
    %v7274 = vpop.f32.mrb[0].mxu0
    %v7275 = vadd.f32 %v7100, %v7274
    %v7276 = vpop.f32.mrb[0].mxu0
    %v7277 = vadd.f32 %v7104, %v7276
    %v7278 = vpop.f32.mrb[0].mxu0
    %v7279 = vpop.f32.mrb[0].mxu0
    %7280 = vdwg.mxu0
    %7281 = vmatprep.subr.bf16.mxu0 0
    %7282 = vmatpush1.bf16.msra.mxu0 %v7194
    %7283 = vmatprep.subr.bf16.mxu0 0
    %7284 = vmatpush1.bf16.msra.mxu0 %v7197
    %7285 = vmatprep.subr.bf16.mxu0 0
    %7286 = vmatpush1.bf16.msra.mxu0 %v7200
    %7287 = vmatprep.subr.bf16.mxu0 0
    %7288 = vmatpush1.bf16.msra.mxu0 %v7203
    %7289 = vmatprep.subr.bf16.mxu0 0
    %7290 = vmatpush1.bf16.msra.mxu0 %v7206
    %7291 = vmatprep.subr.bf16.mxu0 0
    %7292 = vmatpush1.bf16.msra.mxu0 %v7209
    %7293 = vmatprep.subr.bf16.mxu0 0
    %7294 = vmatpush1.bf16.msra.mxu0 %v7212
    %7295 = vmatprep.subr.bf16.mxu0 0
    %7296 = vmatpush1.bf16.msra.mxu0 %v7215
    %7297 = vmatprep.subr.bf16.mxu0 0
    %7298 = vmatpush1.bf16.msra.mxu0 0
    %7299 = vmatprep.subr.bf16.mxu0 0
    %7300 = vmatpush1.bf16.msra.mxu0 0
    %7301 = vmatprep.subr.bf16.mxu0 0
    %7302 = vmatpush1.bf16.msra.mxu0 0
    %7303 = vmatprep.subr.bf16.mxu0 0
    %7304 = vmatpush1.bf16.msra.mxu0 0
    %7305 = vmatprep.subr.bf16.mxu0 0
    %7306 = vmatpush1.bf16.msra.mxu0 0
    %7307 = vmatprep.subr.bf16.mxu0 0
    %7308 = vmatpush1.bf16.msra.mxu0 0
    %7309 = vmatprep.subr.bf16.mxu0 0
    %7310 = vmatpush1.bf16.msra.mxu0 0
    %7311 = vmatprep.subr.bf16.mxu0 0
    %7312 = vmatpush1.bf16.msra.mxu0 0
    %7313 = vmatprep.mubr.bf16.mxu0 0
    %7314 = vmatmul.mubr.bf16.gmra.mrb[0].mxu0 %v6792
    %v7315 = vpop.f32.mrb[0].mxu0
    %v7316 = vadd.f32 %v7108, %v7315
    %v7317 = vpop.f32.mrb[0].mxu0
    %v7318 = vpop.f32.mrb[0].mxu0
    %v7319 = vpop.f32.mrb[0].mxu0
    %7320 = vdwg.mxu0
    %v7321 = vpack.c.bf16 %v6258, %v6258
    %v7322 = vld [vmem:[#allocation15] sm:$0xff]
    %v7323 = vld [vmem:[#allocation15 + $0x8] sm:$0xf]
    %v7324 = vld [vmem:[#allocation15 + $0xc] sm:$0xff]
    %v7325 = vld [vmem:[#allocation15 + $0x14] sm:$0xf]
    %v7326 = vld [vmem:[#allocation15 + $0x18] sm:$0xff]
    %v7327 = vld [vmem:[#allocation15 + $0x20] sm:$0xf]
    %v7328 = vld [vmem:[#allocation15 + $0x24] sm:$0xff]
    %v7329 = vld [vmem:[#allocation15 + $0x2c] sm:$0xf]
    %v7330 = vld [vmem:[#allocation15 + $0x30] sm:$0xff]
    %v7331 = vld [vmem:[#allocation15 + $0x38] sm:$0xf]
    %v7332 = vld [vmem:[#allocation15 + $0x3c] sm:$0xff]
    %v7333 = vld [vmem:[#allocation15 + $0x44] sm:$0xf]
    %v7334 = vld [vmem:[#allocation15 + $0x48] sm:$0xff]
    %v7335 = vld [vmem:[#allocation15 + $0x50] sm:$0xf]
    %v7336 = vld [vmem:[#allocation15 + $0x54] sm:$0xff]
    %v7337 = vld [vmem:[#allocation15 + $0x5c] sm:$0xf]
    %v7338 = vld [vmem:[#allocation15 + $0x60] sm:$0xff]
    %v7339 = vld [vmem:[#allocation15 + $0x68] sm:$0xf]
    %v7340 = vld [vmem:[#allocation15 + $0x6c] sm:$0xff]
    %v7341 = vld [vmem:[#allocation15 + $0x74] sm:$0xf]
    %v7342 = vld [vmem:[#allocation15 + $0x78] sm:$0xff]
    %v7343 = vld [vmem:[#allocation15 + $0x80] sm:$0xf]
    %v7344 = vld [vmem:[#allocation15 + $0x84] sm:$0xff]
    %v7345 = vld [vmem:[#allocation15 + $0x8c] sm:$0xf]
    %v7346 = vld [vmem:[#allocation15 + $0x90] sm:$0xff]
    %v7347 = vld [vmem:[#allocation15 + $0x98] sm:$0xf]
    %v7348 = vld [vmem:[#allocation15 + $0x9c] sm:$0xff]
    %v7349 = vld [vmem:[#allocation15 + $0xa4] sm:$0xf]
    %v7350 = vld [vmem:[#allocation15 + $0xa8] sm:$0xff]
    %v7351 = vld [vmem:[#allocation15 + $0xb0] sm:$0xf]
    %v7352 = vld [vmem:[#allocation15 + $0xb4] sm:$0xff]
    %v7353 = vld [vmem:[#allocation15 + $0xbc] sm:$0xf]
    %v7386 = vunpack.c.l.b16 %v7322
    %v7387 = vunpack.c.h.b16 %v7322
    %v7388 = vunpack.c.l.b16 %v7323
    %v7389 = vunpack.c.l.b16 %v7324
    %v7390 = vunpack.c.h.b16 %v7324
    %v7391 = vunpack.c.l.b16 %v7325
    %v7392 = vunpack.c.l.b16 %v7326
    %v7393 = vunpack.c.h.b16 %v7326
    %v7394 = vunpack.c.l.b16 %v7327
    %v7395 = vunpack.c.l.b16 %v7328
    %v7396 = vunpack.c.h.b16 %v7328
    %v7397 = vunpack.c.l.b16 %v7329
    %v7398 = vunpack.c.l.b16 %v7330
    %v7399 = vunpack.c.h.b16 %v7330
    %v7400 = vunpack.c.l.b16 %v7331
    %v7401 = vunpack.c.l.b16 %v7332
    %v7402 = vunpack.c.h.b16 %v7332
    %v7403 = vunpack.c.l.b16 %v7333
    %v7404 = vunpack.c.l.b16 %v7334
    %v7405 = vunpack.c.h.b16 %v7334
    %v7406 = vunpack.c.l.b16 %v7335
    %v7407 = vunpack.c.l.b16 %v7336
    %v7408 = vunpack.c.h.b16 %v7336
    %v7409 = vunpack.c.l.b16 %v7337
    %v7410 = vunpack.c.l.b16 %v7338
    %v7411 = vunpack.c.h.b16 %v7338
    %v7412 = vunpack.c.l.b16 %v7339
    %v7413 = vunpack.c.l.b16 %v7340
    %v7414 = vunpack.c.h.b16 %v7340
    %v7415 = vunpack.c.l.b16 %v7341
    %v7416 = vunpack.c.l.b16 %v7342
    %v7417 = vunpack.c.h.b16 %v7342
    %v7418 = vunpack.c.l.b16 %v7343
    %v7419 = vunpack.c.l.b16 %v7344
    %v7420 = vunpack.c.h.b16 %v7344
    %v7421 = vunpack.c.l.b16 %v7345
    %v7422 = vunpack.c.l.b16 %v7346
    %v7423 = vunpack.c.h.b16 %v7346
    %v7424 = vunpack.c.l.b16 %v7347
    %v7425 = vunpack.c.l.b16 %v7348
    %v7426 = vunpack.c.h.b16 %v7348
    %v7427 = vunpack.c.l.b16 %v7349
    %v7428 = vunpack.c.l.b16 %v7350
    %v7429 = vunpack.c.h.b16 %v7350
    %v7430 = vunpack.c.l.b16 %v7351
    %v7431 = vunpack.c.l.b16 %v7352
    %v7432 = vunpack.c.h.b16 %v7352
    %v7433 = vunpack.c.l.b16 %v7353
    %v7434 = vpack.c.b16 %v7389, %v7386
    %v7435 = vpack.c.b16 %v7390, %v7387
    %v7436 = vpack.c.b16 %v7391, %v7388
    %v7437 = vpack.c.b16 %v7395, %v7392
    %v7438 = vpack.c.b16 %v7396, %v7393
    %v7439 = vpack.c.b16 %v7397, %v7394
    %v7440 = vpack.c.b16 %v7401, %v7398
    %v7441 = vpack.c.b16 %v7402, %v7399
    %v7442 = vpack.c.b16 %v7403, %v7400
    %v7443 = vpack.c.b16 %v7407, %v7404
    %v7444 = vpack.c.b16 %v7408, %v7405
    %v7445 = vpack.c.b16 %v7409, %v7406
    %v7446 = vpack.c.b16 %v7413, %v7410
    %v7447 = vpack.c.b16 %v7414, %v7411
    %v7448 = vpack.c.b16 %v7415, %v7412
    %v7449 = vpack.c.b16 %v7419, %v7416
    %v7450 = vpack.c.b16 %v7420, %v7417
    %v7451 = vpack.c.b16 %v7421, %v7418
    %v7452 = vpack.c.b16 %v7425, %v7422
    %v7453 = vpack.c.b16 %v7426, %v7423
    %v7454 = vpack.c.b16 %v7427, %v7424
    %v7455 = vpack.c.b16 %v7431, %v7428
    %v7456 = vpack.c.b16 %v7432, %v7429
    %v7457 = vpack.c.b16 %v7433, %v7430
    %7482 = vmatprep.subr.bf16.mxu0 %v7435
    %7483 = vmatpush1.bf16.msra.mxu0 %v7434
    %7484 = vmatprep.subr.bf16.mxu0 %v7438
    %7485 = vmatpush1.bf16.msra.mxu0 %v7437
    %7486 = vmatprep.subr.bf16.mxu0 %v7441
    %7487 = vmatpush1.bf16.msra.mxu0 %v7440
    %7488 = vmatprep.subr.bf16.mxu0 %v7444
    %7489 = vmatpush1.bf16.msra.mxu0 %v7443
    %7490 = vmatprep.subr.bf16.mxu0 %v7447
    %7491 = vmatpush1.bf16.msra.mxu0 %v7446
    %7492 = vmatprep.subr.bf16.mxu0 %v7450
    %7493 = vmatpush1.bf16.msra.mxu0 %v7449
    %7494 = vmatprep.subr.bf16.mxu0 %v7453
    %7495 = vmatpush1.bf16.msra.mxu0 %v7452
    %7496 = vmatprep.subr.bf16.mxu0 %v7456
    %7497 = vmatpush1.bf16.msra.mxu0 %v7455
    %7498 = vmatprep.subr.bf16.mxu0 0
    %7499 = vmatpush1.bf16.msra.mxu0 0
    %7500 = vmatprep.subr.bf16.mxu0 0
    %7501 = vmatpush1.bf16.msra.mxu0 0
    %7502 = vmatprep.subr.bf16.mxu0 0
    %7503 = vmatpush1.bf16.msra.mxu0 0
    %7504 = vmatprep.subr.bf16.mxu0 0
    %7505 = vmatpush1.bf16.msra.mxu0 0
    %7506 = vmatprep.subr.bf16.mxu0 0
    %7507 = vmatpush1.bf16.msra.mxu0 0
    %7508 = vmatprep.subr.bf16.mxu0 0
    %7509 = vmatpush1.bf16.msra.mxu0 0
    %7510 = vmatprep.subr.bf16.mxu0 0
    %7511 = vmatpush1.bf16.msra.mxu0 0
    %7512 = vmatprep.subr.bf16.mxu0 0
    %7513 = vmatpush1.bf16.msra.mxu0 0
    %7514 = vmatprep.mubr.bf16.mxu0 0
    %7515 = vmatmul.mubr.bf16.gmra.mrb[0].mxu0 %v7321
    %v7516 = vpop.f32.mrb[0].mxu0
    %v7517 = vadd.f32 0.0, %v7516
    %v7518 = vpop.f32.mrb[0].mxu0
    %v7519 = vadd.f32 0.0, %v7518
    %v7520 = vpop.f32.mrb[0].mxu0
    %v7521 = vpop.f32.mrb[0].mxu0
    %7522 = vdwg.mxu0
    %7523 = vmatprep.subr.bf16.mxu0 0
    %7524 = vmatpush1.bf16.msra.mxu0 %v7436
    %7525 = vmatprep.subr.bf16.mxu0 0
    %7526 = vmatpush1.bf16.msra.mxu0 %v7439
    %7527 = vmatprep.subr.bf16.mxu0 0
    %7528 = vmatpush1.bf16.msra.mxu0 %v7442
    %7529 = vmatprep.subr.bf16.mxu0 0
    %7530 = vmatpush1.bf16.msra.mxu0 %v7445
    %7531 = vmatprep.subr.bf16.mxu0 0
    %7532 = vmatpush1.bf16.msra.mxu0 %v7448
    %7533 = vmatprep.subr.bf16.mxu0 0
    %7534 = vmatpush1.bf16.msra.mxu0 %v7451
    %7535 = vmatprep.subr.bf16.mxu0 0
    %7536 = vmatpush1.bf16.msra.mxu0 %v7454
    %7537 = vmatprep.subr.bf16.mxu0 0
    %7538 = vmatpush1.bf16.msra.mxu0 %v7457
    %7539 = vmatprep.subr.bf16.mxu0 0
    %7540 = vmatpush1.bf16.msra.mxu0 0
    %7541 = vmatprep.subr.bf16.mxu0 0
    %7542 = vmatpush1.bf16.msra.mxu0 0
    %7543 = vmatprep.subr.bf16.mxu0 0
    %7544 = vmatpush1.bf16.msra.mxu0 0
    %7545 = vmatprep.subr.bf16.mxu0 0
    %7546 = vmatpush1.bf16.msra.mxu0 0
    %7547 = vmatprep.subr.bf16.mxu0 0
    %7548 = vmatpush1.bf16.msra.mxu0 0
    %7549 = vmatprep.subr.bf16.mxu0 0
    %7550 = vmatpush1.bf16.msra.mxu0 0
    %7551 = vmatprep.subr.bf16.mxu0 0
    %7552 = vmatpush1.bf16.msra.mxu0 0
    %7553 = vmatprep.subr.bf16.mxu0 0
    %7554 = vmatpush1.bf16.msra.mxu0 0
    %7555 = vmatprep.mubr.bf16.mxu0 0
    %7556 = vmatmul.mubr.bf16.gmra.mrb[0].mxu0 %v7321
    %v7557 = vpop.f32.mrb[0].mxu0
    %v7558 = vadd.f32 0.0, %v7557
    %v7559 = vpop.f32.mrb[0].mxu0
    %v7560 = vpop.f32.mrb[0].mxu0
    %v7561 = vpop.f32.mrb[0].mxu0
    %7562 = vdwg.mxu0
    %v7563 = vadd.f32 %v7275, %v7517
    %v7564 = vxor.u32 %v7563, 2147483648
    %v7565 = vmul.f32 %v7564, 1.442695
    %v7566 = vpow.pop %v7565
    %v7567 = vadd.f32 %v7566, 1.0
    %v7568 = vrcp.pop %v7567
    %v7569 = vmul.f32 1.0, %v7568
    %v7570 = vadd.f32 %v7277, %v7519
    %v7571 = vxor.u32 %v7570, 2147483648
    %v7572 = vmul.f32 %v7571, 1.442695
    %v7573 = vpow.pop %v7572
    %v7574 = vadd.f32 %v7573, 1.0
    %v7575 = vrcp.pop %v7574
    %v7576 = vmul.f32 1.0, %v7575
    %v7577 = vld [vmem:[%s12] sm:$0x1]
    %v7579 = vlaneseq
    %v7580 = vshrl.u32 %v7579, 7
    %v7581 = vsub.s32 0, %v7580
    %v7582 = vrot.slane %v7577, %v7581
    %v7584 = vadd.f32 %v7558, %v7582
    %v7585 = vmul.f32 %v7569, %v7584
    %v7586 = vadd.f32 %v7316, %v7585
    %v7587 = vtanh.pop %v7586
    %v7588 = vsub.f32 1.0, %v7576
    %v7589 = vmul.f32 %v7588, %v7587
    %v7590 = vmul.f32 %v7576, %v6258
    %v7591 = vadd.f32 %v7589, %v7590
    %7592 = vst [vmem:[#allocation3 + $0x20] sm:$0xff] %v7591
    %v7593 = vld [vmem:[#allocation2 + $0xa8] sm:$0xff]
    %v7594 = vld [vmem:[#allocation2 + $0xb0] sm:$0xff]
    %v7595 = vld [vmem:[#allocation2 + $0xb8] sm:$0xff]
    %v7596 = vpack.c.bf16 %v6533, %v6533
    %v7597 = vld [vmem:[#allocation9] sm:$0xff]
    %v7598 = vld [vmem:[#allocation9 + $0x8] sm:$0xf]
    %v7599 = vld [vmem:[#allocation9 + $0xc] sm:$0xff]
    %v7600 = vld [vmem:[#allocation9 + $0x14] sm:$0xf]
    %v7601 = vld [vmem:[#allocation9 + $0x18] sm:$0xff]
    %v7602 = vld [vmem:[#allocation9 + $0x20] sm:$0xf]
    %v7603 = vld [vmem:[#allocation9 + $0x24] sm:$0xff]
    %v7604 = vld [vmem:[#allocation9 + $0x2c] sm:$0xf]
    %v7605 = vld [vmem:[#allocation9 + $0x30] sm:$0xff]
    %v7606 = vld [vmem:[#allocation9 + $0x38] sm:$0xf]
    %v7607 = vld [vmem:[#allocation9 + $0x3c] sm:$0xff]
    %v7608 = vld [vmem:[#allocation9 + $0x44] sm:$0xf]
    %v7609 = vld [vmem:[#allocation9 + $0x48] sm:$0xff]
    %v7610 = vld [vmem:[#allocation9 + $0x50] sm:$0xf]
    %v7611 = vld [vmem:[#allocation9 + $0x54] sm:$0xff]
    %v7612 = vld [vmem:[#allocation9 + $0x5c] sm:$0xf]
    %v7613 = vld [vmem:[#allocation9 + $0x60] sm:$0xff]
    %v7614 = vld [vmem:[#allocation9 + $0x68] sm:$0xf]
    %v7615 = vld [vmem:[#allocation9 + $0x6c] sm:$0xff]
    %v7616 = vld [vmem:[#allocation9 + $0x74] sm:$0xf]
    %v7617 = vld [vmem:[#allocation9 + $0x78] sm:$0xff]
    %v7618 = vld [vmem:[#allocation9 + $0x80] sm:$0xf]
    %v7619 = vld [vmem:[#allocation9 + $0x84] sm:$0xff]
    %v7620 = vld [vmem:[#allocation9 + $0x8c] sm:$0xf]
    %v7621 = vld [vmem:[#allocation9 + $0x90] sm:$0xff]
    %v7622 = vld [vmem:[#allocation9 + $0x98] sm:$0xf]
    %v7623 = vld [vmem:[#allocation9 + $0x9c] sm:$0xff]
    %v7624 = vld [vmem:[#allocation9 + $0xa4] sm:$0xf]
    %v7625 = vld [vmem:[#allocation9 + $0xa8] sm:$0xff]
    %v7626 = vld [vmem:[#allocation9 + $0xb0] sm:$0xf]
    %v7627 = vld [vmem:[#allocation9 + $0xb4] sm:$0xff]
    %v7628 = vld [vmem:[#allocation9 + $0xbc] sm:$0xf]
    %v7661 = vunpack.c.l.b16 %v7597
    %v7662 = vunpack.c.h.b16 %v7597
    %v7663 = vunpack.c.l.b16 %v7598
    %v7664 = vunpack.c.l.b16 %v7599
    %v7665 = vunpack.c.h.b16 %v7599
    %v7666 = vunpack.c.l.b16 %v7600
    %v7667 = vunpack.c.l.b16 %v7601
    %v7668 = vunpack.c.h.b16 %v7601
    %v7669 = vunpack.c.l.b16 %v7602
    %v7670 = vunpack.c.l.b16 %v7603
    %v7671 = vunpack.c.h.b16 %v7603
    %v7672 = vunpack.c.l.b16 %v7604
    %v7673 = vunpack.c.l.b16 %v7605
    %v7674 = vunpack.c.h.b16 %v7605
    %v7675 = vunpack.c.l.b16 %v7606
    %v7676 = vunpack.c.l.b16 %v7607
    %v7677 = vunpack.c.h.b16 %v7607
    %v7678 = vunpack.c.l.b16 %v7608
    %v7679 = vunpack.c.l.b16 %v7609
    %v7680 = vunpack.c.h.b16 %v7609
    %v7681 = vunpack.c.l.b16 %v7610
    %v7682 = vunpack.c.l.b16 %v7611
    %v7683 = vunpack.c.h.b16 %v7611
    %v7684 = vunpack.c.l.b16 %v7612
    %v7685 = vunpack.c.l.b16 %v7613
    %v7686 = vunpack.c.h.b16 %v7613
    %v7687 = vunpack.c.l.b16 %v7614
    %v7688 = vunpack.c.l.b16 %v7615
    %v7689 = vunpack.c.h.b16 %v7615
    %v7690 = vunpack.c.l.b16 %v7616
    %v7691 = vunpack.c.l.b16 %v7617
    %v7692 = vunpack.c.h.b16 %v7617
    %v7693 = vunpack.c.l.b16 %v7618
    %v7694 = vunpack.c.l.b16 %v7619
    %v7695 = vunpack.c.h.b16 %v7619
    %v7696 = vunpack.c.l.b16 %v7620
    %v7697 = vunpack.c.l.b16 %v7621
    %v7698 = vunpack.c.h.b16 %v7621
    %v7699 = vunpack.c.l.b16 %v7622
    %v7700 = vunpack.c.l.b16 %v7623
    %v7701 = vunpack.c.h.b16 %v7623
    %v7702 = vunpack.c.l.b16 %v7624
    %v7703 = vunpack.c.l.b16 %v7625
    %v7704 = vunpack.c.h.b16 %v7625
    %v7705 = vunpack.c.l.b16 %v7626
    %v7706 = vunpack.c.l.b16 %v7627
    %v7707 = vunpack.c.h.b16 %v7627
    %v7708 = vunpack.c.l.b16 %v7628
    %v7709 = vpack.c.b16 %v7664, %v7661
    %v7710 = vpack.c.b16 %v7665, %v7662
    %v7711 = vpack.c.b16 %v7666, %v7663
    %v7712 = vpack.c.b16 %v7670, %v7667
    %v7713 = vpack.c.b16 %v7671, %v7668
    %v7714 = vpack.c.b16 %v7672, %v7669
    %v7715 = vpack.c.b16 %v7676, %v7673
    %v7716 = vpack.c.b16 %v7677, %v7674
    %v7717 = vpack.c.b16 %v7678, %v7675
    %v7718 = vpack.c.b16 %v7682, %v7679
    %v7719 = vpack.c.b16 %v7683, %v7680
    %v7720 = vpack.c.b16 %v7684, %v7681
    %v7721 = vpack.c.b16 %v7688, %v7685
    %v7722 = vpack.c.b16 %v7689, %v7686
    %v7723 = vpack.c.b16 %v7690, %v7687
    %v7724 = vpack.c.b16 %v7694, %v7691
    %v7725 = vpack.c.b16 %v7695, %v7692
    %v7726 = vpack.c.b16 %v7696, %v7693
    %v7727 = vpack.c.b16 %v7700, %v7697
    %v7728 = vpack.c.b16 %v7701, %v7698
    %v7729 = vpack.c.b16 %v7702, %v7699
    %v7730 = vpack.c.b16 %v7706, %v7703
    %v7731 = vpack.c.b16 %v7707, %v7704
    %v7732 = vpack.c.b16 %v7708, %v7705
    %7757 = vmatprep.subr.bf16.mxu0 %v7710
    %7758 = vmatpush1.bf16.msra.mxu0 %v7709
    %7759 = vmatprep.subr.bf16.mxu0 %v7713
    %7760 = vmatpush1.bf16.msra.mxu0 %v7712
    %7761 = vmatprep.subr.bf16.mxu0 %v7716
    %7762 = vmatpush1.bf16.msra.mxu0 %v7715
    %7763 = vmatprep.subr.bf16.mxu0 %v7719
    %7764 = vmatpush1.bf16.msra.mxu0 %v7718
    %7765 = vmatprep.subr.bf16.mxu0 %v7722
    %7766 = vmatpush1.bf16.msra.mxu0 %v7721
    %7767 = vmatprep.subr.bf16.mxu0 %v7725
    %7768 = vmatpush1.bf16.msra.mxu0 %v7724
    %7769 = vmatprep.subr.bf16.mxu0 %v7728
    %7770 = vmatpush1.bf16.msra.mxu0 %v7727
    %7771 = vmatprep.subr.bf16.mxu0 %v7731
    %7772 = vmatpush1.bf16.msra.mxu0 %v7730
    %7773 = vmatprep.subr.bf16.mxu0 0
    %7774 = vmatpush1.bf16.msra.mxu0 0
    %7775 = vmatprep.subr.bf16.mxu0 0
    %7776 = vmatpush1.bf16.msra.mxu0 0
    %7777 = vmatprep.subr.bf16.mxu0 0
    %7778 = vmatpush1.bf16.msra.mxu0 0
    %7779 = vmatprep.subr.bf16.mxu0 0
    %7780 = vmatpush1.bf16.msra.mxu0 0
    %7781 = vmatprep.subr.bf16.mxu0 0
    %7782 = vmatpush1.bf16.msra.mxu0 0
    %7783 = vmatprep.subr.bf16.mxu0 0
    %7784 = vmatpush1.bf16.msra.mxu0 0
    %7785 = vmatprep.subr.bf16.mxu0 0
    %7786 = vmatpush1.bf16.msra.mxu0 0
    %7787 = vmatprep.subr.bf16.mxu0 0
    %7788 = vmatpush1.bf16.msra.mxu0 0
    %7789 = vmatprep.mubr.bf16.mxu0 0
    %7790 = vmatmul.mubr.bf16.gmra.mrb[0].mxu0 %v7596
    %v7791 = vpop.f32.mrb[0].mxu0
    %v7792 = vadd.f32 0.0, %v7791
    %v7793 = vpop.f32.mrb[0].mxu0
    %v7794 = vadd.f32 0.0, %v7793
    %v7795 = vpop.f32.mrb[0].mxu0
    %v7796 = vpop.f32.mrb[0].mxu0
    %7797 = vdwg.mxu0
    %7798 = vmatprep.subr.bf16.mxu0 0
    %7799 = vmatpush1.bf16.msra.mxu0 %v7711
    %7800 = vmatprep.subr.bf16.mxu0 0
    %7801 = vmatpush1.bf16.msra.mxu0 %v7714
    %7802 = vmatprep.subr.bf16.mxu0 0
    %7803 = vmatpush1.bf16.msra.mxu0 %v7717
    %7804 = vmatprep.subr.bf16.mxu0 0
    %7805 = vmatpush1.bf16.msra.mxu0 %v7720
    %7806 = vmatprep.subr.bf16.mxu0 0
    %7807 = vmatpush1.bf16.msra.mxu0 %v7723
    %7808 = vmatprep.subr.bf16.mxu0 0
    %7809 = vmatpush1.bf16.msra.mxu0 %v7726
    %7810 = vmatprep.subr.bf16.mxu0 0
    %7811 = vmatpush1.bf16.msra.mxu0 %v7729
    %7812 = vmatprep.subr.bf16.mxu0 0
    %7813 = vmatpush1.bf16.msra.mxu0 %v7732
    %7814 = vmatprep.subr.bf16.mxu0 0
    %7815 = vmatpush1.bf16.msra.mxu0 0
    %7816 = vmatprep.subr.bf16.mxu0 0
    %7817 = vmatpush1.bf16.msra.mxu0 0
    %7818 = vmatprep.subr.bf16.mxu0 0
    %7819 = vmatpush1.bf16.msra.mxu0 0
    %7820 = vmatprep.subr.bf16.mxu0 0
    %7821 = vmatpush1.bf16.msra.mxu0 0
    %7822 = vmatprep.subr.bf16.mxu0 0
    %7823 = vmatpush1.bf16.msra.mxu0 0
    %7824 = vmatprep.subr.bf16.mxu0 0
    %7825 = vmatpush1.bf16.msra.mxu0 0
    %7826 = vmatprep.subr.bf16.mxu0 0
    %7827 = vmatpush1.bf16.msra.mxu0 0
    %7828 = vmatprep.subr.bf16.mxu0 0
    %7829 = vmatpush1.bf16.msra.mxu0 0
    %7830 = vmatprep.mubr.bf16.mxu0 0
    %7831 = vmatmul.mubr.bf16.gmra.mrb[0].mxu0 %v7596
    %v7832 = vpop.f32.mrb[0].mxu0
    %v7833 = vadd.f32 0.0, %v7832
    %v7834 = vpop.f32.mrb[0].mxu0
    %v7835 = vpop.f32.mrb[0].mxu0
    %v7836 = vpop.f32.mrb[0].mxu0
    %7837 = vdwg.mxu0
    %v7838 = vadd.f32 %v7593, %v7792
    %v7839 = vxor.u32 %v7838, 2147483648
    %v7840 = vmul.f32 %v7839, 1.442695
    %v7841 = vpow.pop %v7840
    %v7842 = vadd.f32 %v7841, 1.0
    %v7843 = vrcp.pop %v7842
    %v7844 = vmul.f32 1.0, %v7843
    %v7845 = vadd.f32 %v7594, %v7794
    %v7846 = vxor.u32 %v7845, 2147483648
    %v7847 = vmul.f32 %v7846, 1.442695
    %v7848 = vpow.pop %v7847
    %v7849 = vadd.f32 %v7848, 1.0
    %v7850 = vrcp.pop %v7849
    %v7851 = vmul.f32 1.0, %v7850
    %v7852 = vld [vmem:[%s4] sm:$0x1]
    %v7854 = vlaneseq
    %v7855 = vshrl.u32 %v7854, 7
    %v7856 = vsub.s32 0, %v7855
    %v7857 = vrot.slane %v7852, %v7856
    %v7859 = vadd.f32 %v7833, %v7857
    %v7860 = vmul.f32 %v7844, %v7859
    %v7861 = vadd.f32 %v7595, %v7860
    %v7862 = vtanh.pop %v7861
    %v7863 = vsub.f32 1.0, %v7851
    %v7864 = vmul.f32 %v7863, %v7862
    %v7865 = vmul.f32 %v7851, %v6533
    %v7866 = vadd.f32 %v7864, %v7865
    %v7867 = vld [vmem:[#allocation10] sm:$0xff]
    %v7868 = vld [vmem:[#allocation10 + $0x8] sm:$0xf]
    %v7869 = vld [vmem:[#allocation10 + $0xc] sm:$0xff]
    %v7870 = vld [vmem:[#allocation10 + $0x14] sm:$0xf]
    %v7871 = vld [vmem:[#allocation10 + $0x18] sm:$0xff]
    %v7872 = vld [vmem:[#allocation10 + $0x20] sm:$0xf]
    %v7873 = vld [vmem:[#allocation10 + $0x24] sm:$0xff]
    %v7874 = vld [vmem:[#allocation10 + $0x2c] sm:$0xf]
    %v7875 = vld [vmem:[#allocation10 + $0x30] sm:$0xff]
    %v7876 = vld [vmem:[#allocation10 + $0x38] sm:$0xf]
    %v7877 = vld [vmem:[#allocation10 + $0x3c] sm:$0xff]
    %v7878 = vld [vmem:[#allocation10 + $0x44] sm:$0xf]
    %v7879 = vld [vmem:[#allocation10 + $0x48] sm:$0xff]
    %v7880 = vld [vmem:[#allocation10 + $0x50] sm:$0xf]
    %v7881 = vld [vmem:[#allocation10 + $0x54] sm:$0xff]
    %v7882 = vld [vmem:[#allocation10 + $0x5c] sm:$0xf]
    %v7883 = vld [vmem:[#allocation10 + $0x60] sm:$0xff]
    %v7884 = vld [vmem:[#allocation10 + $0x68] sm:$0xf]
    %v7885 = vld [vmem:[#allocation10 + $0x6c] sm:$0xff]
    %v7886 = vld [vmem:[#allocation10 + $0x74] sm:$0xf]
    %v7887 = vld [vmem:[#allocation10 + $0x78] sm:$0xff]
    %v7888 = vld [vmem:[#allocation10 + $0x80] sm:$0xf]
    %v7889 = vld [vmem:[#allocation10 + $0x84] sm:$0xff]
    %v7890 = vld [vmem:[#allocation10 + $0x8c] sm:$0xf]
    %v7891 = vld [vmem:[#allocation10 + $0x90] sm:$0xff]
    %v7892 = vld [vmem:[#allocation10 + $0x98] sm:$0xf]
    %v7893 = vld [vmem:[#allocation10 + $0x9c] sm:$0xff]
    %v7894 = vld [vmem:[#allocation10 + $0xa4] sm:$0xf]
    %v7895 = vld [vmem:[#allocation10 + $0xa8] sm:$0xff]
    %v7896 = vld [vmem:[#allocation10 + $0xb0] sm:$0xf]
    %v7897 = vld [vmem:[#allocation10 + $0xb4] sm:$0xff]
    %v7898 = vld [vmem:[#allocation10 + $0xbc] sm:$0xf]
    %v7899 = vld [vmem:[%s7] sm:$0x7]
    %v7901 = vlaneseq
    %v7902 = vshrl.u32 %v7901, 7
    %v7903 = vsub.s32 0, %v7902
    %v7904 = vrot.slane %v7899, %v7903
    %v7905 = vlaneseq
    %v7906 = vshrl.u32 %v7905, 7
    %v7907 = vsub.s32 1, %v7906
    %v7908 = vrot.slane %v7899, %v7907
    %v7909 = vlaneseq
    %v7910 = vshrl.u32 %v7909, 7
    %v7911 = vsub.s32 2, %v7910
    %v7912 = vrot.slane %v7899, %v7911
    %v7948 = vunpack.c.l.b16 %v7867
    %v7949 = vunpack.c.h.b16 %v7867
    %v7950 = vunpack.c.l.b16 %v7868
    %v7951 = vunpack.c.l.b16 %v7869
    %v7952 = vunpack.c.h.b16 %v7869
    %v7953 = vunpack.c.l.b16 %v7870
    %v7954 = vunpack.c.l.b16 %v7871
    %v7955 = vunpack.c.h.b16 %v7871
    %v7956 = vunpack.c.l.b16 %v7872
    %v7957 = vunpack.c.l.b16 %v7873
    %v7958 = vunpack.c.h.b16 %v7873
    %v7959 = vunpack.c.l.b16 %v7874
    %v7960 = vunpack.c.l.b16 %v7875
    %v7961 = vunpack.c.h.b16 %v7875
    %v7962 = vunpack.c.l.b16 %v7876
    %v7963 = vunpack.c.l.b16 %v7877
    %v7964 = vunpack.c.h.b16 %v7877
    %v7965 = vunpack.c.l.b16 %v7878
    %v7966 = vunpack.c.l.b16 %v7879
    %v7967 = vunpack.c.h.b16 %v7879
    %v7968 = vunpack.c.l.b16 %v7880
    %v7969 = vunpack.c.l.b16 %v7881
    %v7970 = vunpack.c.h.b16 %v7881
    %v7971 = vunpack.c.l.b16 %v7882
    %v7972 = vunpack.c.l.b16 %v7883
    %v7973 = vunpack.c.h.b16 %v7883
    %v7974 = vunpack.c.l.b16 %v7884
    %v7975 = vunpack.c.l.b16 %v7885
    %v7976 = vunpack.c.h.b16 %v7885
    %v7977 = vunpack.c.l.b16 %v7886
    %v7978 = vunpack.c.l.b16 %v7887
    %v7979 = vunpack.c.h.b16 %v7887
    %v7980 = vunpack.c.l.b16 %v7888
    %v7981 = vunpack.c.l.b16 %v7889
    %v7982 = vunpack.c.h.b16 %v7889
    %v7983 = vunpack.c.l.b16 %v7890
    %v7984 = vunpack.c.l.b16 %v7891
    %v7985 = vunpack.c.h.b16 %v7891
    %v7986 = vunpack.c.l.b16 %v7892
    %v7987 = vunpack.c.l.b16 %v7893
    %v7988 = vunpack.c.h.b16 %v7893
    %v7989 = vunpack.c.l.b16 %v7894
    %v7990 = vunpack.c.l.b16 %v7895
    %v7991 = vunpack.c.h.b16 %v7895
    %v7992 = vunpack.c.l.b16 %v7896
    %v7993 = vunpack.c.l.b16 %v7897
    %v7994 = vunpack.c.h.b16 %v7897
    %v7995 = vunpack.c.l.b16 %v7898
    %v7996 = vpack.c.b16 %v7951, %v7948
    %v7997 = vpack.c.b16 %v7952, %v7949
    %v7998 = vpack.c.b16 %v7953, %v7950
    %v7999 = vpack.c.b16 %v7957, %v7954
    %v8000 = vpack.c.b16 %v7958, %v7955
    %v8001 = vpack.c.b16 %v7959, %v7956
    %v8002 = vpack.c.b16 %v7963, %v7960
    %v8003 = vpack.c.b16 %v7964, %v7961
    %v8004 = vpack.c.b16 %v7965, %v7962
    %v8005 = vpack.c.b16 %v7969, %v7966
    %v8006 = vpack.c.b16 %v7970, %v7967
    %v8007 = vpack.c.b16 %v7971, %v7968
    %v8008 = vpack.c.b16 %v7975, %v7972
    %v8009 = vpack.c.b16 %v7976, %v7973
    %v8010 = vpack.c.b16 %v7977, %v7974
    %v8011 = vpack.c.b16 %v7981, %v7978
    %v8012 = vpack.c.b16 %v7982, %v7979
    %v8013 = vpack.c.b16 %v7983, %v7980
    %v8014 = vpack.c.b16 %v7987, %v7984
    %v8015 = vpack.c.b16 %v7988, %v7985
    %v8016 = vpack.c.b16 %v7989, %v7986
    %v8017 = vpack.c.b16 %v7993, %v7990
    %v8018 = vpack.c.b16 %v7994, %v7991
    %v8019 = vpack.c.b16 %v7995, %v7992
    %8044 = vmatprep.subr.bf16.mxu0 %v7997
    %8045 = vmatpush1.bf16.msra.mxu0 %v7996
    %8046 = vmatprep.subr.bf16.mxu0 %v8000
    %8047 = vmatpush1.bf16.msra.mxu0 %v7999
    %8048 = vmatprep.subr.bf16.mxu0 %v8003
    %8049 = vmatpush1.bf16.msra.mxu0 %v8002
    %8050 = vmatprep.subr.bf16.mxu0 %v8006
    %8051 = vmatpush1.bf16.msra.mxu0 %v8005
    %8052 = vmatprep.subr.bf16.mxu0 %v8009
    %8053 = vmatpush1.bf16.msra.mxu0 %v8008
    %8054 = vmatprep.subr.bf16.mxu0 %v8012
    %8055 = vmatpush1.bf16.msra.mxu0 %v8011
    %8056 = vmatprep.subr.bf16.mxu0 %v8015
    %8057 = vmatpush1.bf16.msra.mxu0 %v8014
    %8058 = vmatprep.subr.bf16.mxu0 %v8018
    %8059 = vmatpush1.bf16.msra.mxu0 %v8017
    %8060 = vmatprep.subr.bf16.mxu0 0
    %8061 = vmatpush1.bf16.msra.mxu0 0
    %8062 = vmatprep.subr.bf16.mxu0 0
    %8063 = vmatpush1.bf16.msra.mxu0 0
    %8064 = vmatprep.subr.bf16.mxu0 0
    %8065 = vmatpush1.bf16.msra.mxu0 0
    %8066 = vmatprep.subr.bf16.mxu0 0
    %8067 = vmatpush1.bf16.msra.mxu0 0
    %8068 = vmatprep.subr.bf16.mxu0 0
    %8069 = vmatpush1.bf16.msra.mxu0 0
    %8070 = vmatprep.subr.bf16.mxu0 0
    %8071 = vmatpush1.bf16.msra.mxu0 0
    %8072 = vmatprep.subr.bf16.mxu0 0
    %8073 = vmatpush1.bf16.msra.mxu0 0
    %8074 = vmatprep.subr.bf16.mxu0 0
    %8075 = vmatpush1.bf16.msra.mxu0 0
    %8076 = vmatprep.mubr.bf16.mxu0 0
    %8077 = vmatmul.mubr.bf16.gmra.mrb[0].mxu0 %v7596
    %v8078 = vpop.f32.mrb[0].mxu0
    %v8079 = vadd.f32 %v7904, %v8078
    %v8080 = vpop.f32.mrb[0].mxu0
    %v8081 = vadd.f32 %v7908, %v8080
    %v8082 = vpop.f32.mrb[0].mxu0
    %v8083 = vpop.f32.mrb[0].mxu0
    %8084 = vdwg.mxu0
    %8085 = vmatprep.subr.bf16.mxu0 0
    %8086 = vmatpush1.bf16.msra.mxu0 %v7998
    %8087 = vmatprep.subr.bf16.mxu0 0
    %8088 = vmatpush1.bf16.msra.mxu0 %v8001
    %8089 = vmatprep.subr.bf16.mxu0 0
    %8090 = vmatpush1.bf16.msra.mxu0 %v8004
    %8091 = vmatprep.subr.bf16.mxu0 0
    %8092 = vmatpush1.bf16.msra.mxu0 %v8007
    %8093 = vmatprep.subr.bf16.mxu0 0
    %8094 = vmatpush1.bf16.msra.mxu0 %v8010
    %8095 = vmatprep.subr.bf16.mxu0 0
    %8096 = vmatpush1.bf16.msra.mxu0 %v8013
    %8097 = vmatprep.subr.bf16.mxu0 0
    %8098 = vmatpush1.bf16.msra.mxu0 %v8016
    %8099 = vmatprep.subr.bf16.mxu0 0
    %8100 = vmatpush1.bf16.msra.mxu0 %v8019
    %8101 = vmatprep.subr.bf16.mxu0 0
    %8102 = vmatpush1.bf16.msra.mxu0 0
    %8103 = vmatprep.subr.bf16.mxu0 0
    %8104 = vmatpush1.bf16.msra.mxu0 0
    %8105 = vmatprep.subr.bf16.mxu0 0
    %8106 = vmatpush1.bf16.msra.mxu0 0
    %8107 = vmatprep.subr.bf16.mxu0 0
    %8108 = vmatpush1.bf16.msra.mxu0 0
    %8109 = vmatprep.subr.bf16.mxu0 0
    %8110 = vmatpush1.bf16.msra.mxu0 0
    %8111 = vmatprep.subr.bf16.mxu0 0
    %8112 = vmatpush1.bf16.msra.mxu0 0
    %8113 = vmatprep.subr.bf16.mxu0 0
    %8114 = vmatpush1.bf16.msra.mxu0 0
    %8115 = vmatprep.subr.bf16.mxu0 0
    %8116 = vmatpush1.bf16.msra.mxu0 0
    %8117 = vmatprep.mubr.bf16.mxu0 0
    %8118 = vmatmul.mubr.bf16.gmra.mrb[0].mxu0 %v7596
    %v8119 = vpop.f32.mrb[0].mxu0
    %v8120 = vadd.f32 %v7912, %v8119
    %v8121 = vpop.f32.mrb[0].mxu0
    %v8122 = vpop.f32.mrb[0].mxu0
    %v8123 = vpop.f32.mrb[0].mxu0
    %8124 = vdwg.mxu0
    %v8125 = vpack.c.bf16 %v7062, %v7062
    %v8126 = vld [vmem:[#allocation12] sm:$0xff]
    %v8127 = vld [vmem:[#allocation12 + $0x8] sm:$0xf]
    %v8128 = vld [vmem:[#allocation12 + $0xc] sm:$0xff]
    %v8129 = vld [vmem:[#allocation12 + $0x14] sm:$0xf]
    %v8130 = vld [vmem:[#allocation12 + $0x18] sm:$0xff]
    %v8131 = vld [vmem:[#allocation12 + $0x20] sm:$0xf]
    %v8132 = vld [vmem:[#allocation12 + $0x24] sm:$0xff]
    %v8133 = vld [vmem:[#allocation12 + $0x2c] sm:$0xf]
    %v8134 = vld [vmem:[#allocation12 + $0x30] sm:$0xff]
    %v8135 = vld [vmem:[#allocation12 + $0x38] sm:$0xf]
    %v8136 = vld [vmem:[#allocation12 + $0x3c] sm:$0xff]
    %v8137 = vld [vmem:[#allocation12 + $0x44] sm:$0xf]
    %v8138 = vld [vmem:[#allocation12 + $0x48] sm:$0xff]
    %v8139 = vld [vmem:[#allocation12 + $0x50] sm:$0xf]
    %v8140 = vld [vmem:[#allocation12 + $0x54] sm:$0xff]
    %v8141 = vld [vmem:[#allocation12 + $0x5c] sm:$0xf]
    %v8142 = vld [vmem:[#allocation12 + $0x60] sm:$0xff]
    %v8143 = vld [vmem:[#allocation12 + $0x68] sm:$0xf]
    %v8144 = vld [vmem:[#allocation12 + $0x6c] sm:$0xff]
    %v8145 = vld [vmem:[#allocation12 + $0x74] sm:$0xf]
    %v8146 = vld [vmem:[#allocation12 + $0x78] sm:$0xff]
    %v8147 = vld [vmem:[#allocation12 + $0x80] sm:$0xf]
    %v8148 = vld [vmem:[#allocation12 + $0x84] sm:$0xff]
    %v8149 = vld [vmem:[#allocation12 + $0x8c] sm:$0xf]
    %v8150 = vld [vmem:[#allocation12 + $0x90] sm:$0xff]
    %v8151 = vld [vmem:[#allocation12 + $0x98] sm:$0xf]
    %v8152 = vld [vmem:[#allocation12 + $0x9c] sm:$0xff]
    %v8153 = vld [vmem:[#allocation12 + $0xa4] sm:$0xf]
    %v8154 = vld [vmem:[#allocation12 + $0xa8] sm:$0xff]
    %v8155 = vld [vmem:[#allocation12 + $0xb0] sm:$0xf]
    %v8156 = vld [vmem:[#allocation12 + $0xb4] sm:$0xff]
    %v8157 = vld [vmem:[#allocation12 + $0xbc] sm:$0xf]
    %v8190 = vunpack.c.l.b16 %v8126
    %v8191 = vunpack.c.h.b16 %v8126
    %v8192 = vunpack.c.l.b16 %v8127
    %v8193 = vunpack.c.l.b16 %v8128
    %v8194 = vunpack.c.h.b16 %v8128
    %v8195 = vunpack.c.l.b16 %v8129
    %v8196 = vunpack.c.l.b16 %v8130
    %v8197 = vunpack.c.h.b16 %v8130
    %v8198 = vunpack.c.l.b16 %v8131
    %v8199 = vunpack.c.l.b16 %v8132
    %v8200 = vunpack.c.h.b16 %v8132
    %v8201 = vunpack.c.l.b16 %v8133
    %v8202 = vunpack.c.l.b16 %v8134
    %v8203 = vunpack.c.h.b16 %v8134
    %v8204 = vunpack.c.l.b16 %v8135
    %v8205 = vunpack.c.l.b16 %v8136
    %v8206 = vunpack.c.h.b16 %v8136
    %v8207 = vunpack.c.l.b16 %v8137
    %v8208 = vunpack.c.l.b16 %v8138
    %v8209 = vunpack.c.h.b16 %v8138
    %v8210 = vunpack.c.l.b16 %v8139
    %v8211 = vunpack.c.l.b16 %v8140
    %v8212 = vunpack.c.h.b16 %v8140
    %v8213 = vunpack.c.l.b16 %v8141
    %v8214 = vunpack.c.l.b16 %v8142
    %v8215 = vunpack.c.h.b16 %v8142
    %v8216 = vunpack.c.l.b16 %v8143
    %v8217 = vunpack.c.l.b16 %v8144
    %v8218 = vunpack.c.h.b16 %v8144
    %v8219 = vunpack.c.l.b16 %v8145
    %v8220 = vunpack.c.l.b16 %v8146
    %v8221 = vunpack.c.h.b16 %v8146
    %v8222 = vunpack.c.l.b16 %v8147
    %v8223 = vunpack.c.l.b16 %v8148
    %v8224 = vunpack.c.h.b16 %v8148
    %v8225 = vunpack.c.l.b16 %v8149
    %v8226 = vunpack.c.l.b16 %v8150
    %v8227 = vunpack.c.h.b16 %v8150
    %v8228 = vunpack.c.l.b16 %v8151
    %v8229 = vunpack.c.l.b16 %v8152
    %v8230 = vunpack.c.h.b16 %v8152
    %v8231 = vunpack.c.l.b16 %v8153
    %v8232 = vunpack.c.l.b16 %v8154
    %v8233 = vunpack.c.h.b16 %v8154
    %v8234 = vunpack.c.l.b16 %v8155
    %v8235 = vunpack.c.l.b16 %v8156
    %v8236 = vunpack.c.h.b16 %v8156
    %v8237 = vunpack.c.l.b16 %v8157
    %v8238 = vpack.c.b16 %v8193, %v8190
    %v8239 = vpack.c.b16 %v8194, %v8191
    %v8240 = vpack.c.b16 %v8195, %v8192
    %v8241 = vpack.c.b16 %v8199, %v8196
    %v8242 = vpack.c.b16 %v8200, %v8197
    %v8243 = vpack.c.b16 %v8201, %v8198
    %v8244 = vpack.c.b16 %v8205, %v8202
    %v8245 = vpack.c.b16 %v8206, %v8203
    %v8246 = vpack.c.b16 %v8207, %v8204
    %v8247 = vpack.c.b16 %v8211, %v8208
    %v8248 = vpack.c.b16 %v8212, %v8209
    %v8249 = vpack.c.b16 %v8213, %v8210
    %v8250 = vpack.c.b16 %v8217, %v8214
    %v8251 = vpack.c.b16 %v8218, %v8215
    %v8252 = vpack.c.b16 %v8219, %v8216
    %v8253 = vpack.c.b16 %v8223, %v8220
    %v8254 = vpack.c.b16 %v8224, %v8221
    %v8255 = vpack.c.b16 %v8225, %v8222
    %v8256 = vpack.c.b16 %v8229, %v8226
    %v8257 = vpack.c.b16 %v8230, %v8227
    %v8258 = vpack.c.b16 %v8231, %v8228
    %v8259 = vpack.c.b16 %v8235, %v8232
    %v8260 = vpack.c.b16 %v8236, %v8233
    %v8261 = vpack.c.b16 %v8237, %v8234
    %8286 = vmatprep.subr.bf16.mxu0 %v8239
    %8287 = vmatpush1.bf16.msra.mxu0 %v8238
    %8288 = vmatprep.subr.bf16.mxu0 %v8242
    %8289 = vmatpush1.bf16.msra.mxu0 %v8241
    %8290 = vmatprep.subr.bf16.mxu0 %v8245
    %8291 = vmatpush1.bf16.msra.mxu0 %v8244
    %8292 = vmatprep.subr.bf16.mxu0 %v8248
    %8293 = vmatpush1.bf16.msra.mxu0 %v8247
    %8294 = vmatprep.subr.bf16.mxu0 %v8251
    %8295 = vmatpush1.bf16.msra.mxu0 %v8250
    %8296 = vmatprep.subr.bf16.mxu0 %v8254
    %8297 = vmatpush1.bf16.msra.mxu0 %v8253
    %8298 = vmatprep.subr.bf16.mxu0 %v8257
    %8299 = vmatpush1.bf16.msra.mxu0 %v8256
    %8300 = vmatprep.subr.bf16.mxu0 %v8260
    %8301 = vmatpush1.bf16.msra.mxu0 %v8259
    %8302 = vmatprep.subr.bf16.mxu0 0
    %8303 = vmatpush1.bf16.msra.mxu0 0
    %8304 = vmatprep.subr.bf16.mxu0 0
    %8305 = vmatpush1.bf16.msra.mxu0 0
    %8306 = vmatprep.subr.bf16.mxu0 0
    %8307 = vmatpush1.bf16.msra.mxu0 0
    %8308 = vmatprep.subr.bf16.mxu0 0
    %8309 = vmatpush1.bf16.msra.mxu0 0
    %8310 = vmatprep.subr.bf16.mxu0 0
    %8311 = vmatpush1.bf16.msra.mxu0 0
    %8312 = vmatprep.subr.bf16.mxu0 0
    %8313 = vmatpush1.bf16.msra.mxu0 0
    %8314 = vmatprep.subr.bf16.mxu0 0
    %8315 = vmatpush1.bf16.msra.mxu0 0
    %8316 = vmatprep.subr.bf16.mxu0 0
    %8317 = vmatpush1.bf16.msra.mxu0 0
    %8318 = vmatprep.mubr.bf16.mxu0 0
    %8319 = vmatmul.mubr.bf16.gmra.mrb[0].mxu0 %v8125
    %v8320 = vpop.f32.mrb[0].mxu0
    %v8321 = vadd.f32 0.0, %v8320
    %v8322 = vpop.f32.mrb[0].mxu0
    %v8323 = vadd.f32 0.0, %v8322
    %v8324 = vpop.f32.mrb[0].mxu0
    %v8325 = vpop.f32.mrb[0].mxu0
    %8326 = vdwg.mxu0
    %8327 = vmatprep.subr.bf16.mxu0 0
    %8328 = vmatpush1.bf16.msra.mxu0 %v8240
    %8329 = vmatprep.subr.bf16.mxu0 0
    %8330 = vmatpush1.bf16.msra.mxu0 %v8243
    %8331 = vmatprep.subr.bf16.mxu0 0
    %8332 = vmatpush1.bf16.msra.mxu0 %v8246
    %8333 = vmatprep.subr.bf16.mxu0 0
    %8334 = vmatpush1.bf16.msra.mxu0 %v8249
    %8335 = vmatprep.subr.bf16.mxu0 0
    %8336 = vmatpush1.bf16.msra.mxu0 %v8252
    %8337 = vmatprep.subr.bf16.mxu0 0
    %8338 = vmatpush1.bf16.msra.mxu0 %v8255
    %8339 = vmatprep.subr.bf16.mxu0 0
    %8340 = vmatpush1.bf16.msra.mxu0 %v8258
    %8341 = vmatprep.subr.bf16.mxu0 0
    %8342 = vmatpush1.bf16.msra.mxu0 %v8261
    %8343 = vmatprep.subr.bf16.mxu0 0
    %8344 = vmatpush1.bf16.msra.mxu0 0
    %8345 = vmatprep.subr.bf16.mxu0 0
    %8346 = vmatpush1.bf16.msra.mxu0 0
    %8347 = vmatprep.subr.bf16.mxu0 0
    %8348 = vmatpush1.bf16.msra.mxu0 0
    %8349 = vmatprep.subr.bf16.mxu0 0
    %8350 = vmatpush1.bf16.msra.mxu0 0
    %8351 = vmatprep.subr.bf16.mxu0 0
    %8352 = vmatpush1.bf16.msra.mxu0 0
    %8353 = vmatprep.subr.bf16.mxu0 0
    %8354 = vmatpush1.bf16.msra.mxu0 0
    %8355 = vmatprep.subr.bf16.mxu0 0
    %8356 = vmatpush1.bf16.msra.mxu0 0
    %8357 = vmatprep.subr.bf16.mxu0 0
    %8358 = vmatpush1.bf16.msra.mxu0 0
    %8359 = vmatprep.mubr.bf16.mxu0 0
    %8360 = vmatmul.mubr.bf16.gmra.mrb[0].mxu0 %v8125
    %v8361 = vpop.f32.mrb[0].mxu0
    %v8362 = vadd.f32 0.0, %v8361
    %v8363 = vpop.f32.mrb[0].mxu0
    %v8364 = vpop.f32.mrb[0].mxu0
    %v8365 = vpop.f32.mrb[0].mxu0
    %8366 = vdwg.mxu0
    %v8367 = vadd.f32 %v8079, %v8321
    %v8368 = vxor.u32 %v8367, 2147483648
    %v8369 = vmul.f32 %v8368, 1.442695
    %v8370 = vpow.pop %v8369
    %v8371 = vadd.f32 %v8370, 1.0
    %v8372 = vrcp.pop %v8371
    %v8373 = vmul.f32 1.0, %v8372
    %v8374 = vadd.f32 %v8081, %v8323
    %v8375 = vxor.u32 %v8374, 2147483648
    %v8376 = vmul.f32 %v8375, 1.442695
    %v8377 = vpow.pop %v8376
    %v8378 = vadd.f32 %v8377, 1.0
    %v8379 = vrcp.pop %v8378
    %v8380 = vmul.f32 1.0, %v8379
    %v8381 = vld [vmem:[%s8] sm:$0x1]
    %v8383 = vlaneseq
    %v8384 = vshrl.u32 %v8383, 7
    %v8385 = vsub.s32 0, %v8384
    %v8386 = vrot.slane %v8381, %v8385
    %v8388 = vadd.f32 %v8362, %v8386
    %v8389 = vmul.f32 %v8373, %v8388
    %v8390 = vadd.f32 %v8120, %v8389
    %v8391 = vtanh.pop %v8390
    %v8392 = vsub.f32 1.0, %v8380
    %v8393 = vmul.f32 %v8392, %v8391
    %v8394 = vmul.f32 %v8380, %v7062
    %v8395 = vadd.f32 %v8393, %v8394
    %v8396 = vld [vmem:[#allocation13] sm:$0xff]
    %v8397 = vld [vmem:[#allocation13 + $0x8] sm:$0xf]
    %v8398 = vld [vmem:[#allocation13 + $0xc] sm:$0xff]
    %v8399 = vld [vmem:[#allocation13 + $0x14] sm:$0xf]
    %v8400 = vld [vmem:[#allocation13 + $0x18] sm:$0xff]
    %v8401 = vld [vmem:[#allocation13 + $0x20] sm:$0xf]
    %v8402 = vld [vmem:[#allocation13 + $0x24] sm:$0xff]
    %v8403 = vld [vmem:[#allocation13 + $0x2c] sm:$0xf]
    %v8404 = vld [vmem:[#allocation13 + $0x30] sm:$0xff]
    %v8405 = vld [vmem:[#allocation13 + $0x38] sm:$0xf]
    %v8406 = vld [vmem:[#allocation13 + $0x3c] sm:$0xff]
    %v8407 = vld [vmem:[#allocation13 + $0x44] sm:$0xf]
    %v8408 = vld [vmem:[#allocation13 + $0x48] sm:$0xff]
    %v8409 = vld [vmem:[#allocation13 + $0x50] sm:$0xf]
    %v8410 = vld [vmem:[#allocation13 + $0x54] sm:$0xff]
    %v8411 = vld [vmem:[#allocation13 + $0x5c] sm:$0xf]
    %v8412 = vld [vmem:[#allocation13 + $0x60] sm:$0xff]
    %v8413 = vld [vmem:[#allocation13 + $0x68] sm:$0xf]
    %v8414 = vld [vmem:[#allocation13 + $0x6c] sm:$0xff]
    %v8415 = vld [vmem:[#allocation13 + $0x74] sm:$0xf]
    %v8416 = vld [vmem:[#allocation13 + $0x78] sm:$0xff]
    %v8417 = vld [vmem:[#allocation13 + $0x80] sm:$0xf]
    %v8418 = vld [vmem:[#allocation13 + $0x84] sm:$0xff]
    %v8419 = vld [vmem:[#allocation13 + $0x8c] sm:$0xf]
    %v8420 = vld [vmem:[#allocation13 + $0x90] sm:$0xff]
    %v8421 = vld [vmem:[#allocation13 + $0x98] sm:$0xf]
    %v8422 = vld [vmem:[#allocation13 + $0x9c] sm:$0xff]
    %v8423 = vld [vmem:[#allocation13 + $0xa4] sm:$0xf]
    %v8424 = vld [vmem:[#allocation13 + $0xa8] sm:$0xff]
    %v8425 = vld [vmem:[#allocation13 + $0xb0] sm:$0xf]
    %v8426 = vld [vmem:[#allocation13 + $0xb4] sm:$0xff]
    %v8427 = vld [vmem:[#allocation13 + $0xbc] sm:$0xf]
    %v8428 = vld [vmem:[%s11] sm:$0x7]
    %v8430 = vlaneseq
    %v8431 = vshrl.u32 %v8430, 7
    %v8432 = vsub.s32 0, %v8431
    %v8433 = vrot.slane %v8428, %v8432
    %v8434 = vlaneseq
    %v8435 = vshrl.u32 %v8434, 7
    %v8436 = vsub.s32 1, %v8435
    %v8437 = vrot.slane %v8428, %v8436
    %v8438 = vlaneseq
    %v8439 = vshrl.u32 %v8438, 7
    %v8440 = vsub.s32 2, %v8439
    %v8441 = vrot.slane %v8428, %v8440
    %v8477 = vunpack.c.l.b16 %v8396
    %v8478 = vunpack.c.h.b16 %v8396
    %v8479 = vunpack.c.l.b16 %v8397
    %v8480 = vunpack.c.l.b16 %v8398
    %v8481 = vunpack.c.h.b16 %v8398
    %v8482 = vunpack.c.l.b16 %v8399
    %v8483 = vunpack.c.l.b16 %v8400
    %v8484 = vunpack.c.h.b16 %v8400
    %v8485 = vunpack.c.l.b16 %v8401
    %v8486 = vunpack.c.l.b16 %v8402
    %v8487 = vunpack.c.h.b16 %v8402
    %v8488 = vunpack.c.l.b16 %v8403
    %v8489 = vunpack.c.l.b16 %v8404
    %v8490 = vunpack.c.h.b16 %v8404
    %v8491 = vunpack.c.l.b16 %v8405
    %v8492 = vunpack.c.l.b16 %v8406
    %v8493 = vunpack.c.h.b16 %v8406
    %v8494 = vunpack.c.l.b16 %v8407
    %v8495 = vunpack.c.l.b16 %v8408
    %v8496 = vunpack.c.h.b16 %v8408
    %v8497 = vunpack.c.l.b16 %v8409
    %v8498 = vunpack.c.l.b16 %v8410
    %v8499 = vunpack.c.h.b16 %v8410
    %v8500 = vunpack.c.l.b16 %v8411
    %v8501 = vunpack.c.l.b16 %v8412
    %v8502 = vunpack.c.h.b16 %v8412
    %v8503 = vunpack.c.l.b16 %v8413
    %v8504 = vunpack.c.l.b16 %v8414
    %v8505 = vunpack.c.h.b16 %v8414
    %v8506 = vunpack.c.l.b16 %v8415
    %v8507 = vunpack.c.l.b16 %v8416
    %v8508 = vunpack.c.h.b16 %v8416
    %v8509 = vunpack.c.l.b16 %v8417
    %v8510 = vunpack.c.l.b16 %v8418
    %v8511 = vunpack.c.h.b16 %v8418
    %v8512 = vunpack.c.l.b16 %v8419
    %v8513 = vunpack.c.l.b16 %v8420
    %v8514 = vunpack.c.h.b16 %v8420
    %v8515 = vunpack.c.l.b16 %v8421
    %v8516 = vunpack.c.l.b16 %v8422
    %v8517 = vunpack.c.h.b16 %v8422
    %v8518 = vunpack.c.l.b16 %v8423
    %v8519 = vunpack.c.l.b16 %v8424
    %v8520 = vunpack.c.h.b16 %v8424
    %v8521 = vunpack.c.l.b16 %v8425
    %v8522 = vunpack.c.l.b16 %v8426
    %v8523 = vunpack.c.h.b16 %v8426
    %v8524 = vunpack.c.l.b16 %v8427
    %v8525 = vpack.c.b16 %v8480, %v8477
    %v8526 = vpack.c.b16 %v8481, %v8478
    %v8527 = vpack.c.b16 %v8482, %v8479
    %v8528 = vpack.c.b16 %v8486, %v8483
    %v8529 = vpack.c.b16 %v8487, %v8484
    %v8530 = vpack.c.b16 %v8488, %v8485
    %v8531 = vpack.c.b16 %v8492, %v8489
    %v8532 = vpack.c.b16 %v8493, %v8490
    %v8533 = vpack.c.b16 %v8494, %v8491
    %v8534 = vpack.c.b16 %v8498, %v8495
    %v8535 = vpack.c.b16 %v8499, %v8496
    %v8536 = vpack.c.b16 %v8500, %v8497
    %v8537 = vpack.c.b16 %v8504, %v8501
    %v8538 = vpack.c.b16 %v8505, %v8502
    %v8539 = vpack.c.b16 %v8506, %v8503
    %v8540 = vpack.c.b16 %v8510, %v8507
    %v8541 = vpack.c.b16 %v8511, %v8508
    %v8542 = vpack.c.b16 %v8512, %v8509
    %v8543 = vpack.c.b16 %v8516, %v8513
    %v8544 = vpack.c.b16 %v8517, %v8514
    %v8545 = vpack.c.b16 %v8518, %v8515
    %v8546 = vpack.c.b16 %v8522, %v8519
    %v8547 = vpack.c.b16 %v8523, %v8520
    %v8548 = vpack.c.b16 %v8524, %v8521
    %8573 = vmatprep.subr.bf16.mxu0 %v8526
    %8574 = vmatpush1.bf16.msra.mxu0 %v8525
    %8575 = vmatprep.subr.bf16.mxu0 %v8529
    %8576 = vmatpush1.bf16.msra.mxu0 %v8528
    %8577 = vmatprep.subr.bf16.mxu0 %v8532
    %8578 = vmatpush1.bf16.msra.mxu0 %v8531
    %8579 = vmatprep.subr.bf16.mxu0 %v8535
    %8580 = vmatpush1.bf16.msra.mxu0 %v8534
    %8581 = vmatprep.subr.bf16.mxu0 %v8538
    %8582 = vmatpush1.bf16.msra.mxu0 %v8537
    %8583 = vmatprep.subr.bf16.mxu0 %v8541
    %8584 = vmatpush1.bf16.msra.mxu0 %v8540
    %8585 = vmatprep.subr.bf16.mxu0 %v8544
    %8586 = vmatpush1.bf16.msra.mxu0 %v8543
    %8587 = vmatprep.subr.bf16.mxu0 %v8547
    %8588 = vmatpush1.bf16.msra.mxu0 %v8546
    %8589 = vmatprep.subr.bf16.mxu0 0
    %8590 = vmatpush1.bf16.msra.mxu0 0
    %8591 = vmatprep.subr.bf16.mxu0 0
    %8592 = vmatpush1.bf16.msra.mxu0 0
    %8593 = vmatprep.subr.bf16.mxu0 0
    %8594 = vmatpush1.bf16.msra.mxu0 0
    %8595 = vmatprep.subr.bf16.mxu0 0
    %8596 = vmatpush1.bf16.msra.mxu0 0
    %8597 = vmatprep.subr.bf16.mxu0 0
    %8598 = vmatpush1.bf16.msra.mxu0 0
    %8599 = vmatprep.subr.bf16.mxu0 0
    %8600 = vmatpush1.bf16.msra.mxu0 0
    %8601 = vmatprep.subr.bf16.mxu0 0
    %8602 = vmatpush1.bf16.msra.mxu0 0
    %8603 = vmatprep.subr.bf16.mxu0 0
    %8604 = vmatpush1.bf16.msra.mxu0 0
    %8605 = vmatprep.mubr.bf16.mxu0 0
    %8606 = vmatmul.mubr.bf16.gmra.mrb[0].mxu0 %v8125
    %v8607 = vpop.f32.mrb[0].mxu0
    %v8608 = vadd.f32 %v8433, %v8607
    %v8609 = vpop.f32.mrb[0].mxu0
    %v8610 = vadd.f32 %v8437, %v8609
    %v8611 = vpop.f32.mrb[0].mxu0
    %v8612 = vpop.f32.mrb[0].mxu0
    %8613 = vdwg.mxu0
    %8614 = vmatprep.subr.bf16.mxu0 0
    %8615 = vmatpush1.bf16.msra.mxu0 %v8527
    %8616 = vmatprep.subr.bf16.mxu0 0
    %8617 = vmatpush1.bf16.msra.mxu0 %v8530
    %8618 = vmatprep.subr.bf16.mxu0 0
    %8619 = vmatpush1.bf16.msra.mxu0 %v8533
    %8620 = vmatprep.subr.bf16.mxu0 0
    %8621 = vmatpush1.bf16.msra.mxu0 %v8536
    %8622 = vmatprep.subr.bf16.mxu0 0
    %8623 = vmatpush1.bf16.msra.mxu0 %v8539
    %8624 = vmatprep.subr.bf16.mxu0 0
    %8625 = vmatpush1.bf16.msra.mxu0 %v8542
    %8626 = vmatprep.subr.bf16.mxu0 0
    %8627 = vmatpush1.bf16.msra.mxu0 %v8545
    %8628 = vmatprep.subr.bf16.mxu0 0
    %8629 = vmatpush1.bf16.msra.mxu0 %v8548
    %8630 = vmatprep.subr.bf16.mxu0 0
    %8631 = vmatpush1.bf16.msra.mxu0 0
    %8632 = vmatprep.subr.bf16.mxu0 0
    %8633 = vmatpush1.bf16.msra.mxu0 0
    %8634 = vmatprep.subr.bf16.mxu0 0
    %8635 = vmatpush1.bf16.msra.mxu0 0
    %8636 = vmatprep.subr.bf16.mxu0 0
    %8637 = vmatpush1.bf16.msra.mxu0 0
    %8638 = vmatprep.subr.bf16.mxu0 0
    %8639 = vmatpush1.bf16.msra.mxu0 0
    %8640 = vmatprep.subr.bf16.mxu0 0
    %8641 = vmatpush1.bf16.msra.mxu0 0
    %8642 = vmatprep.subr.bf16.mxu0 0
    %8643 = vmatpush1.bf16.msra.mxu0 0
    %8644 = vmatprep.subr.bf16.mxu0 0
    %8645 = vmatpush1.bf16.msra.mxu0 0
    %8646 = vmatprep.mubr.bf16.mxu0 0
    %8647 = vmatmul.mubr.bf16.gmra.mrb[0].mxu0 %v8125
    %v8648 = vpop.f32.mrb[0].mxu0
    %v8649 = vadd.f32 %v8441, %v8648
    %v8650 = vpop.f32.mrb[0].mxu0
    %v8651 = vpop.f32.mrb[0].mxu0
    %v8652 = vpop.f32.mrb[0].mxu0
    %8653 = vdwg.mxu0
    %v8654 = vpack.c.bf16 %v7591, %v7591
    %v8655 = vld [vmem:[#allocation15] sm:$0xff]
    %v8656 = vld [vmem:[#allocation15 + $0x8] sm:$0xf]
    %v8657 = vld [vmem:[#allocation15 + $0xc] sm:$0xff]
    %v8658 = vld [vmem:[#allocation15 + $0x14] sm:$0xf]
    %v8659 = vld [vmem:[#allocation15 + $0x18] sm:$0xff]
    %v8660 = vld [vmem:[#allocation15 + $0x20] sm:$0xf]
    %v8661 = vld [vmem:[#allocation15 + $0x24] sm:$0xff]
    %v8662 = vld [vmem:[#allocation15 + $0x2c] sm:$0xf]
    %v8663 = vld [vmem:[#allocation15 + $0x30] sm:$0xff]
    %v8664 = vld [vmem:[#allocation15 + $0x38] sm:$0xf]
    %v8665 = vld [vmem:[#allocation15 + $0x3c] sm:$0xff]
    %v8666 = vld [vmem:[#allocation15 + $0x44] sm:$0xf]
    %v8667 = vld [vmem:[#allocation15 + $0x48] sm:$0xff]
    %v8668 = vld [vmem:[#allocation15 + $0x50] sm:$0xf]
    %v8669 = vld [vmem:[#allocation15 + $0x54] sm:$0xff]
    %v8670 = vld [vmem:[#allocation15 + $0x5c] sm:$0xf]
    %v8671 = vld [vmem:[#allocation15 + $0x60] sm:$0xff]
    %v8672 = vld [vmem:[#allocation15 + $0x68] sm:$0xf]
    %v8673 = vld [vmem:[#allocation15 + $0x6c] sm:$0xff]
    %v8674 = vld [vmem:[#allocation15 + $0x74] sm:$0xf]
    %v8675 = vld [vmem:[#allocation15 + $0x78] sm:$0xff]
    %v8676 = vld [vmem:[#allocation15 + $0x80] sm:$0xf]
    %v8677 = vld [vmem:[#allocation15 + $0x84] sm:$0xff]
    %v8678 = vld [vmem:[#allocation15 + $0x8c] sm:$0xf]
    %v8679 = vld [vmem:[#allocation15 + $0x90] sm:$0xff]
    %v8680 = vld [vmem:[#allocation15 + $0x98] sm:$0xf]
    %v8681 = vld [vmem:[#allocation15 + $0x9c] sm:$0xff]
    %v8682 = vld [vmem:[#allocation15 + $0xa4] sm:$0xf]
    %v8683 = vld [vmem:[#allocation15 + $0xa8] sm:$0xff]
    %v8684 = vld [vmem:[#allocation15 + $0xb0] sm:$0xf]
    %v8685 = vld [vmem:[#allocation15 + $0xb4] sm:$0xff]
    %v8686 = vld [vmem:[#allocation15 + $0xbc] sm:$0xf]
    %v8719 = vunpack.c.l.b16 %v8655
    %v8720 = vunpack.c.h.b16 %v8655
    %v8721 = vunpack.c.l.b16 %v8656
    %v8722 = vunpack.c.l.b16 %v8657
    %v8723 = vunpack.c.h.b16 %v8657
    %v8724 = vunpack.c.l.b16 %v8658
    %v8725 = vunpack.c.l.b16 %v8659
    %v8726 = vunpack.c.h.b16 %v8659
    %v8727 = vunpack.c.l.b16 %v8660
    %v8728 = vunpack.c.l.b16 %v8661
    %v8729 = vunpack.c.h.b16 %v8661
    %v8730 = vunpack.c.l.b16 %v8662
    %v8731 = vunpack.c.l.b16 %v8663
    %v8732 = vunpack.c.h.b16 %v8663
    %v8733 = vunpack.c.l.b16 %v8664
    %v8734 = vunpack.c.l.b16 %v8665
    %v8735 = vunpack.c.h.b16 %v8665
    %v8736 = vunpack.c.l.b16 %v8666
    %v8737 = vunpack.c.l.b16 %v8667
    %v8738 = vunpack.c.h.b16 %v8667
    %v8739 = vunpack.c.l.b16 %v8668
    %v8740 = vunpack.c.l.b16 %v8669
    %v8741 = vunpack.c.h.b16 %v8669
    %v8742 = vunpack.c.l.b16 %v8670
    %v8743 = vunpack.c.l.b16 %v8671
    %v8744 = vunpack.c.h.b16 %v8671
    %v8745 = vunpack.c.l.b16 %v8672
    %v8746 = vunpack.c.l.b16 %v8673
    %v8747 = vunpack.c.h.b16 %v8673
    %v8748 = vunpack.c.l.b16 %v8674
    %v8749 = vunpack.c.l.b16 %v8675
    %v8750 = vunpack.c.h.b16 %v8675
    %v8751 = vunpack.c.l.b16 %v8676
    %v8752 = vunpack.c.l.b16 %v8677
    %v8753 = vunpack.c.h.b16 %v8677
    %v8754 = vunpack.c.l.b16 %v8678
    %v8755 = vunpack.c.l.b16 %v8679
    %v8756 = vunpack.c.h.b16 %v8679
    %v8757 = vunpack.c.l.b16 %v8680
    %v8758 = vunpack.c.l.b16 %v8681
    %v8759 = vunpack.c.h.b16 %v8681
    %v8760 = vunpack.c.l.b16 %v8682
    %v8761 = vunpack.c.l.b16 %v8683
    %v8762 = vunpack.c.h.b16 %v8683
    %v8763 = vunpack.c.l.b16 %v8684
    %v8764 = vunpack.c.l.b16 %v8685
    %v8765 = vunpack.c.h.b16 %v8685
    %v8766 = vunpack.c.l.b16 %v8686
    %v8767 = vpack.c.b16 %v8722, %v8719
    %v8768 = vpack.c.b16 %v8723, %v8720
    %v8769 = vpack.c.b16 %v8724, %v8721
    %v8770 = vpack.c.b16 %v8728, %v8725
    %v8771 = vpack.c.b16 %v8729, %v8726
    %v8772 = vpack.c.b16 %v8730, %v8727
    %v8773 = vpack.c.b16 %v8734, %v8731
    %v8774 = vpack.c.b16 %v8735, %v8732
    %v8775 = vpack.c.b16 %v8736, %v8733
    %v8776 = vpack.c.b16 %v8740, %v8737
    %v8777 = vpack.c.b16 %v8741, %v8738
    %v8778 = vpack.c.b16 %v8742, %v8739
    %v8779 = vpack.c.b16 %v8746, %v8743
    %v8780 = vpack.c.b16 %v8747, %v8744
    %v8781 = vpack.c.b16 %v8748, %v8745
    %v8782 = vpack.c.b16 %v8752, %v8749
    %v8783 = vpack.c.b16 %v8753, %v8750
    %v8784 = vpack.c.b16 %v8754, %v8751
    %v8785 = vpack.c.b16 %v8758, %v8755
    %v8786 = vpack.c.b16 %v8759, %v8756
    %v8787 = vpack.c.b16 %v8760, %v8757
    %v8788 = vpack.c.b16 %v8764, %v8761
    %v8789 = vpack.c.b16 %v8765, %v8762
    %v8790 = vpack.c.b16 %v8766, %v8763
    %8815 = vmatprep.subr.bf16.mxu0 %v8768
    %8816 = vmatpush1.bf16.msra.mxu0 %v8767
    %8817 = vmatprep.subr.bf16.mxu0 %v8771
    %8818 = vmatpush1.bf16.msra.mxu0 %v8770
    %8819 = vmatprep.subr.bf16.mxu0 %v8774
    %8820 = vmatpush1.bf16.msra.mxu0 %v8773
    %8821 = vmatprep.subr.bf16.mxu0 %v8777
    %8822 = vmatpush1.bf16.msra.mxu0 %v8776
    %8823 = vmatprep.subr.bf16.mxu0 %v8780
    %8824 = vmatpush1.bf16.msra.mxu0 %v8779
    %8825 = vmatprep.subr.bf16.mxu0 %v8783
    %8826 = vmatpush1.bf16.msra.mxu0 %v8782
    %8827 = vmatprep.subr.bf16.mxu0 %v8786
    %8828 = vmatpush1.bf16.msra.mxu0 %v8785
    %8829 = vmatprep.subr.bf16.mxu0 %v8789
    %8830 = vmatpush1.bf16.msra.mxu0 %v8788
    %8831 = vmatprep.subr.bf16.mxu0 0
    %8832 = vmatpush1.bf16.msra.mxu0 0
    %8833 = vmatprep.subr.bf16.mxu0 0
    %8834 = vmatpush1.bf16.msra.mxu0 0
    %8835 = vmatprep.subr.bf16.mxu0 0
    %8836 = vmatpush1.bf16.msra.mxu0 0
    %8837 = vmatprep.subr.bf16.mxu0 0
    %8838 = vmatpush1.bf16.msra.mxu0 0
    %8839 = vmatprep.subr.bf16.mxu0 0
    %8840 = vmatpush1.bf16.msra.mxu0 0
    %8841 = vmatprep.subr.bf16.mxu0 0
    %8842 = vmatpush1.bf16.msra.mxu0 0
    %8843 = vmatprep.subr.bf16.mxu0 0
    %8844 = vmatpush1.bf16.msra.mxu0 0
    %8845 = vmatprep.subr.bf16.mxu0 0
    %8846 = vmatpush1.bf16.msra.mxu0 0
    %8847 = vmatprep.mubr.bf16.mxu0 0
    %8848 = vmatmul.mubr.bf16.gmra.mrb[0].mxu0 %v8654
    %v8849 = vpop.f32.mrb[0].mxu0
    %v8850 = vadd.f32 0.0, %v8849
    %v8851 = vpop.f32.mrb[0].mxu0
    %v8852 = vadd.f32 0.0, %v8851
    %v8853 = vpop.f32.mrb[0].mxu0
    %v8854 = vpop.f32.mrb[0].mxu0
    %8855 = vdwg.mxu0
    %8856 = vmatprep.subr.bf16.mxu0 0
    %8857 = vmatpush1.bf16.msra.mxu0 %v8769
    %8858 = vmatprep.subr.bf16.mxu0 0
    %8859 = vmatpush1.bf16.msra.mxu0 %v8772
    %8860 = vmatprep.subr.bf16.mxu0 0
    %8861 = vmatpush1.bf16.msra.mxu0 %v8775
    %8862 = vmatprep.subr.bf16.mxu0 0
    %8863 = vmatpush1.bf16.msra.mxu0 %v8778
    %8864 = vmatprep.subr.bf16.mxu0 0
    %8865 = vmatpush1.bf16.msra.mxu0 %v8781
    %8866 = vmatprep.subr.bf16.mxu0 0
    %8867 = vmatpush1.bf16.msra.mxu0 %v8784
    %8868 = vmatprep.subr.bf16.mxu0 0
    %8869 = vmatpush1.bf16.msra.mxu0 %v8787
    %8870 = vmatprep.subr.bf16.mxu0 0
    %8871 = vmatpush1.bf16.msra.mxu0 %v8790
    %8872 = vmatprep.subr.bf16.mxu0 0
    %8873 = vmatpush1.bf16.msra.mxu0 0
    %8874 = vmatprep.subr.bf16.mxu0 0
    %8875 = vmatpush1.bf16.msra.mxu0 0
    %8876 = vmatprep.subr.bf16.mxu0 0
    %8877 = vmatpush1.bf16.msra.mxu0 0
    %8878 = vmatprep.subr.bf16.mxu0 0
    %8879 = vmatpush1.bf16.msra.mxu0 0
    %8880 = vmatprep.subr.bf16.mxu0 0
    %8881 = vmatpush1.bf16.msra.mxu0 0
    %8882 = vmatprep.subr.bf16.mxu0 0
    %8883 = vmatpush1.bf16.msra.mxu0 0
    %8884 = vmatprep.subr.bf16.mxu0 0
    %8885 = vmatpush1.bf16.msra.mxu0 0
    %8886 = vmatprep.subr.bf16.mxu0 0
    %8887 = vmatpush1.bf16.msra.mxu0 0
    %8888 = vmatprep.mubr.bf16.mxu0 0
    %8889 = vmatmul.mubr.bf16.gmra.mrb[0].mxu0 %v8654
    %v8890 = vpop.f32.mrb[0].mxu0
    %v8891 = vadd.f32 0.0, %v8890
    %v8892 = vpop.f32.mrb[0].mxu0
    %v8893 = vpop.f32.mrb[0].mxu0
    %v8894 = vpop.f32.mrb[0].mxu0
    %8895 = vdwg.mxu0
    %v8896 = vadd.f32 %v8608, %v8850
    %v8897 = vxor.u32 %v8896, 2147483648
    %v8898 = vmul.f32 %v8897, 1.442695
    %v8899 = vpow.pop %v8898
    %v8900 = vadd.f32 %v8899, 1.0
    %v8901 = vrcp.pop %v8900
    %v8902 = vmul.f32 1.0, %v8901
    %v8903 = vadd.f32 %v8610, %v8852
    %v8904 = vxor.u32 %v8903, 2147483648
    %v8905 = vmul.f32 %v8904, 1.442695
    %v8906 = vpow.pop %v8905
    %v8907 = vadd.f32 %v8906, 1.0
    %v8908 = vrcp.pop %v8907
    %v8909 = vmul.f32 1.0, %v8908
    %v8910 = vld [vmem:[%s12] sm:$0x1]
    %v8912 = vlaneseq
    %v8913 = vshrl.u32 %v8912, 7
    %v8914 = vsub.s32 0, %v8913
    %v8915 = vrot.slane %v8910, %v8914
    %v8917 = vadd.f32 %v8891, %v8915
    %v8918 = vmul.f32 %v8902, %v8917
    %v8919 = vadd.f32 %v8649, %v8918
    %v8920 = vtanh.pop %v8919
    %v8921 = vsub.f32 1.0, %v8909
    %v8922 = vmul.f32 %v8921, %v8920
    %v8923 = vmul.f32 %v8909, %v7591
    %v8924 = vadd.f32 %v8922, %v8923
    %8925 = vst [vmem:[#allocation3 + $0x28] sm:$0xff] %v8924
    %v8926 = vpack.c.bf16 %v7866, %v7866
    %v8927 = vld [vmem:[#allocation10] sm:$0xff]
    %v8928 = vld [vmem:[#allocation10 + $0x8] sm:$0xf]
    %v8929 = vld [vmem:[#allocation10 + $0xc] sm:$0xff]
    %v8930 = vld [vmem:[#allocation10 + $0x14] sm:$0xf]
    %v8931 = vld [vmem:[#allocation10 + $0x18] sm:$0xff]
    %v8932 = vld [vmem:[#allocation10 + $0x20] sm:$0xf]
    %v8933 = vld [vmem:[#allocation10 + $0x24] sm:$0xff]
    %v8934 = vld [vmem:[#allocation10 + $0x2c] sm:$0xf]
    %v8935 = vld [vmem:[#allocation10 + $0x30] sm:$0xff]
    %v8936 = vld [vmem:[#allocation10 + $0x38] sm:$0xf]
    %v8937 = vld [vmem:[#allocation10 + $0x3c] sm:$0xff]
    %v8938 = vld [vmem:[#allocation10 + $0x44] sm:$0xf]
    %v8939 = vld [vmem:[#allocation10 + $0x48] sm:$0xff]
    %v8940 = vld [vmem:[#allocation10 + $0x50] sm:$0xf]
    %v8941 = vld [vmem:[#allocation10 + $0x54] sm:$0xff]
    %v8942 = vld [vmem:[#allocation10 + $0x5c] sm:$0xf]
    %v8943 = vld [vmem:[#allocation10 + $0x60] sm:$0xff]
    %v8944 = vld [vmem:[#allocation10 + $0x68] sm:$0xf]
    %v8945 = vld [vmem:[#allocation10 + $0x6c] sm:$0xff]
    %v8946 = vld [vmem:[#allocation10 + $0x74] sm:$0xf]
    %v8947 = vld [vmem:[#allocation10 + $0x78] sm:$0xff]
    %v8948 = vld [vmem:[#allocation10 + $0x80] sm:$0xf]
    %v8949 = vld [vmem:[#allocation10 + $0x84] sm:$0xff]
    %v8950 = vld [vmem:[#allocation10 + $0x8c] sm:$0xf]
    %v8951 = vld [vmem:[#allocation10 + $0x90] sm:$0xff]
    %v8952 = vld [vmem:[#allocation10 + $0x98] sm:$0xf]
    %v8953 = vld [vmem:[#allocation10 + $0x9c] sm:$0xff]
    %v8954 = vld [vmem:[#allocation10 + $0xa4] sm:$0xf]
    %v8955 = vld [vmem:[#allocation10 + $0xa8] sm:$0xff]
    %v8956 = vld [vmem:[#allocation10 + $0xb0] sm:$0xf]
    %v8957 = vld [vmem:[#allocation10 + $0xb4] sm:$0xff]
    %v8958 = vld [vmem:[#allocation10 + $0xbc] sm:$0xf]
    %v8959 = vld [vmem:[%s7] sm:$0x7]
    %v8961 = vlaneseq
    %v8962 = vshrl.u32 %v8961, 7
    %v8963 = vsub.s32 0, %v8962
    %v8964 = vrot.slane %v8959, %v8963
    %v8965 = vlaneseq
    %v8966 = vshrl.u32 %v8965, 7
    %v8967 = vsub.s32 1, %v8966
    %v8968 = vrot.slane %v8959, %v8967
    %v8969 = vlaneseq
    %v8970 = vshrl.u32 %v8969, 7
    %v8971 = vsub.s32 2, %v8970
    %v8972 = vrot.slane %v8959, %v8971
    %v9008 = vunpack.c.l.b16 %v8927
    %v9009 = vunpack.c.h.b16 %v8927
    %v9010 = vunpack.c.l.b16 %v8928
    %v9011 = vunpack.c.l.b16 %v8929
    %v9012 = vunpack.c.h.b16 %v8929
    %v9013 = vunpack.c.l.b16 %v8930
    %v9014 = vunpack.c.l.b16 %v8931
    %v9015 = vunpack.c.h.b16 %v8931
    %v9016 = vunpack.c.l.b16 %v8932
    %v9017 = vunpack.c.l.b16 %v8933
    %v9018 = vunpack.c.h.b16 %v8933
    %v9019 = vunpack.c.l.b16 %v8934
    %v9020 = vunpack.c.l.b16 %v8935
    %v9021 = vunpack.c.h.b16 %v8935
    %v9022 = vunpack.c.l.b16 %v8936
    %v9023 = vunpack.c.l.b16 %v8937
    %v9024 = vunpack.c.h.b16 %v8937
    %v9025 = vunpack.c.l.b16 %v8938
    %v9026 = vunpack.c.l.b16 %v8939
    %v9027 = vunpack.c.h.b16 %v8939
    %v9028 = vunpack.c.l.b16 %v8940
    %v9029 = vunpack.c.l.b16 %v8941
    %v9030 = vunpack.c.h.b16 %v8941
    %v9031 = vunpack.c.l.b16 %v8942
    %v9032 = vunpack.c.l.b16 %v8943
    %v9033 = vunpack.c.h.b16 %v8943
    %v9034 = vunpack.c.l.b16 %v8944
    %v9035 = vunpack.c.l.b16 %v8945
    %v9036 = vunpack.c.h.b16 %v8945
    %v9037 = vunpack.c.l.b16 %v8946
    %v9038 = vunpack.c.l.b16 %v8947
    %v9039 = vunpack.c.h.b16 %v8947
    %v9040 = vunpack.c.l.b16 %v8948
    %v9041 = vunpack.c.l.b16 %v8949
    %v9042 = vunpack.c.h.b16 %v8949
    %v9043 = vunpack.c.l.b16 %v8950
    %v9044 = vunpack.c.l.b16 %v8951
    %v9045 = vunpack.c.h.b16 %v8951
    %v9046 = vunpack.c.l.b16 %v8952
    %v9047 = vunpack.c.l.b16 %v8953
    %v9048 = vunpack.c.h.b16 %v8953
    %v9049 = vunpack.c.l.b16 %v8954
    %v9050 = vunpack.c.l.b16 %v8955
    %v9051 = vunpack.c.h.b16 %v8955
    %v9052 = vunpack.c.l.b16 %v8956
    %v9053 = vunpack.c.l.b16 %v8957
    %v9054 = vunpack.c.h.b16 %v8957
    %v9055 = vunpack.c.l.b16 %v8958
    %v9056 = vpack.c.b16 %v9011, %v9008
    %v9057 = vpack.c.b16 %v9012, %v9009
    %v9058 = vpack.c.b16 %v9013, %v9010
    %v9059 = vpack.c.b16 %v9017, %v9014
    %v9060 = vpack.c.b16 %v9018, %v9015
    %v9061 = vpack.c.b16 %v9019, %v9016
    %v9062 = vpack.c.b16 %v9023, %v9020
    %v9063 = vpack.c.b16 %v9024, %v9021
    %v9064 = vpack.c.b16 %v9025, %v9022
    %v9065 = vpack.c.b16 %v9029, %v9026
    %v9066 = vpack.c.b16 %v9030, %v9027
    %v9067 = vpack.c.b16 %v9031, %v9028
    %v9068 = vpack.c.b16 %v9035, %v9032
    %v9069 = vpack.c.b16 %v9036, %v9033
    %v9070 = vpack.c.b16 %v9037, %v9034
    %v9071 = vpack.c.b16 %v9041, %v9038
    %v9072 = vpack.c.b16 %v9042, %v9039
    %v9073 = vpack.c.b16 %v9043, %v9040
    %v9074 = vpack.c.b16 %v9047, %v9044
    %v9075 = vpack.c.b16 %v9048, %v9045
    %v9076 = vpack.c.b16 %v9049, %v9046
    %v9077 = vpack.c.b16 %v9053, %v9050
    %v9078 = vpack.c.b16 %v9054, %v9051
    %v9079 = vpack.c.b16 %v9055, %v9052
    %9104 = vmatprep.subr.bf16.mxu0 %v9057
    %9105 = vmatpush1.bf16.msra.mxu0 %v9056
    %9106 = vmatprep.subr.bf16.mxu0 %v9060
    %9107 = vmatpush1.bf16.msra.mxu0 %v9059
    %9108 = vmatprep.subr.bf16.mxu0 %v9063
    %9109 = vmatpush1.bf16.msra.mxu0 %v9062
    %9110 = vmatprep.subr.bf16.mxu0 %v9066
    %9111 = vmatpush1.bf16.msra.mxu0 %v9065
    %9112 = vmatprep.subr.bf16.mxu0 %v9069
    %9113 = vmatpush1.bf16.msra.mxu0 %v9068
    %9114 = vmatprep.subr.bf16.mxu0 %v9072
    %9115 = vmatpush1.bf16.msra.mxu0 %v9071
    %9116 = vmatprep.subr.bf16.mxu0 %v9075
    %9117 = vmatpush1.bf16.msra.mxu0 %v9074
    %9118 = vmatprep.subr.bf16.mxu0 %v9078
    %9119 = vmatpush1.bf16.msra.mxu0 %v9077
    %9120 = vmatprep.subr.bf16.mxu0 0
    %9121 = vmatpush1.bf16.msra.mxu0 0
    %9122 = vmatprep.subr.bf16.mxu0 0
    %9123 = vmatpush1.bf16.msra.mxu0 0
    %9124 = vmatprep.subr.bf16.mxu0 0
    %9125 = vmatpush1.bf16.msra.mxu0 0
    %9126 = vmatprep.subr.bf16.mxu0 0
    %9127 = vmatpush1.bf16.msra.mxu0 0
    %9128 = vmatprep.subr.bf16.mxu0 0
    %9129 = vmatpush1.bf16.msra.mxu0 0
    %9130 = vmatprep.subr.bf16.mxu0 0
    %9131 = vmatpush1.bf16.msra.mxu0 0
    %9132 = vmatprep.subr.bf16.mxu0 0
    %9133 = vmatpush1.bf16.msra.mxu0 0
    %9134 = vmatprep.subr.bf16.mxu0 0
    %9135 = vmatpush1.bf16.msra.mxu0 0
    %9136 = vmatprep.mubr.bf16.mxu0 0
    %9137 = vmatmul.mubr.bf16.gmra.mrb[0].mxu0 %v8926
    %v9138 = vpop.f32.mrb[0].mxu0
    %v9139 = vadd.f32 %v8964, %v9138
    %v9140 = vpop.f32.mrb[0].mxu0
    %v9141 = vadd.f32 %v8968, %v9140
    %v9142 = vpop.f32.mrb[0].mxu0
    %v9143 = vpop.f32.mrb[0].mxu0
    %9144 = vdwg.mxu0
    %9145 = vmatprep.subr.bf16.mxu0 0
    %9146 = vmatpush1.bf16.msra.mxu0 %v9058
    %9147 = vmatprep.subr.bf16.mxu0 0
    %9148 = vmatpush1.bf16.msra.mxu0 %v9061
    %9149 = vmatprep.subr.bf16.mxu0 0
    %9150 = vmatpush1.bf16.msra.mxu0 %v9064
    %9151 = vmatprep.subr.bf16.mxu0 0
    %9152 = vmatpush1.bf16.msra.mxu0 %v9067
    %9153 = vmatprep.subr.bf16.mxu0 0
    %9154 = vmatpush1.bf16.msra.mxu0 %v9070
    %9155 = vmatprep.subr.bf16.mxu0 0
    %9156 = vmatpush1.bf16.msra.mxu0 %v9073
    %9157 = vmatprep.subr.bf16.mxu0 0
    %9158 = vmatpush1.bf16.msra.mxu0 %v9076
    %9159 = vmatprep.subr.bf16.mxu0 0
    %9160 = vmatpush1.bf16.msra.mxu0 %v9079
    %9161 = vmatprep.subr.bf16.mxu0 0
    %9162 = vmatpush1.bf16.msra.mxu0 0
    %9163 = vmatprep.subr.bf16.mxu0 0
    %9164 = vmatpush1.bf16.msra.mxu0 0
    %9165 = vmatprep.subr.bf16.mxu0 0
    %9166 = vmatpush1.bf16.msra.mxu0 0
    %9167 = vmatprep.subr.bf16.mxu0 0
    %9168 = vmatpush1.bf16.msra.mxu0 0
    %9169 = vmatprep.subr.bf16.mxu0 0
    %9170 = vmatpush1.bf16.msra.mxu0 0
    %9171 = vmatprep.subr.bf16.mxu0 0
    %9172 = vmatpush1.bf16.msra.mxu0 0
    %9173 = vmatprep.subr.bf16.mxu0 0
    %9174 = vmatpush1.bf16.msra.mxu0 0
    %9175 = vmatprep.subr.bf16.mxu0 0
    %9176 = vmatpush1.bf16.msra.mxu0 0
    %9177 = vmatprep.mubr.bf16.mxu0 0
    %9178 = vmatmul.mubr.bf16.gmra.mrb[0].mxu0 %v8926
    %v9179 = vpop.f32.mrb[0].mxu0
    %v9180 = vadd.f32 %v8972, %v9179
    %v9181 = vpop.f32.mrb[0].mxu0
    %v9182 = vpop.f32.mrb[0].mxu0
    %v9183 = vpop.f32.mrb[0].mxu0
    %9184 = vdwg.mxu0
    %v9185 = vpack.c.bf16 %v8395, %v8395
    %v9186 = vld [vmem:[#allocation12] sm:$0xff]
    %v9187 = vld [vmem:[#allocation12 + $0x8] sm:$0xf]
    %v9188 = vld [vmem:[#allocation12 + $0xc] sm:$0xff]
    %v9189 = vld [vmem:[#allocation12 + $0x14] sm:$0xf]
    %v9190 = vld [vmem:[#allocation12 + $0x18] sm:$0xff]
    %v9191 = vld [vmem:[#allocation12 + $0x20] sm:$0xf]
    %v9192 = vld [vmem:[#allocation12 + $0x24] sm:$0xff]
    %v9193 = vld [vmem:[#allocation12 + $0x2c] sm:$0xf]
    %v9194 = vld [vmem:[#allocation12 + $0x30] sm:$0xff]
    %v9195 = vld [vmem:[#allocation12 + $0x38] sm:$0xf]
    %v9196 = vld [vmem:[#allocation12 + $0x3c] sm:$0xff]
    %v9197 = vld [vmem:[#allocation12 + $0x44] sm:$0xf]
    %v9198 = vld [vmem:[#allocation12 + $0x48] sm:$0xff]
    %v9199 = vld [vmem:[#allocation12 + $0x50] sm:$0xf]
    %v9200 = vld [vmem:[#allocation12 + $0x54] sm:$0xff]
    %v9201 = vld [vmem:[#allocation12 + $0x5c] sm:$0xf]
    %v9202 = vld [vmem:[#allocation12 + $0x60] sm:$0xff]
    %v9203 = vld [vmem:[#allocation12 + $0x68] sm:$0xf]
    %v9204 = vld [vmem:[#allocation12 + $0x6c] sm:$0xff]
    %v9205 = vld [vmem:[#allocation12 + $0x74] sm:$0xf]
    %v9206 = vld [vmem:[#allocation12 + $0x78] sm:$0xff]
    %v9207 = vld [vmem:[#allocation12 + $0x80] sm:$0xf]
    %v9208 = vld [vmem:[#allocation12 + $0x84] sm:$0xff]
    %v9209 = vld [vmem:[#allocation12 + $0x8c] sm:$0xf]
    %v9210 = vld [vmem:[#allocation12 + $0x90] sm:$0xff]
    %v9211 = vld [vmem:[#allocation12 + $0x98] sm:$0xf]
    %v9212 = vld [vmem:[#allocation12 + $0x9c] sm:$0xff]
    %v9213 = vld [vmem:[#allocation12 + $0xa4] sm:$0xf]
    %v9214 = vld [vmem:[#allocation12 + $0xa8] sm:$0xff]
    %v9215 = vld [vmem:[#allocation12 + $0xb0] sm:$0xf]
    %v9216 = vld [vmem:[#allocation12 + $0xb4] sm:$0xff]
    %v9217 = vld [vmem:[#allocation12 + $0xbc] sm:$0xf]
    %v9250 = vunpack.c.l.b16 %v9186
    %v9251 = vunpack.c.h.b16 %v9186
    %v9252 = vunpack.c.l.b16 %v9187
    %v9253 = vunpack.c.l.b16 %v9188
    %v9254 = vunpack.c.h.b16 %v9188
    %v9255 = vunpack.c.l.b16 %v9189
    %v9256 = vunpack.c.l.b16 %v9190
    %v9257 = vunpack.c.h.b16 %v9190
    %v9258 = vunpack.c.l.b16 %v9191
    %v9259 = vunpack.c.l.b16 %v9192
    %v9260 = vunpack.c.h.b16 %v9192
    %v9261 = vunpack.c.l.b16 %v9193
    %v9262 = vunpack.c.l.b16 %v9194
    %v9263 = vunpack.c.h.b16 %v9194
    %v9264 = vunpack.c.l.b16 %v9195
    %v9265 = vunpack.c.l.b16 %v9196
    %v9266 = vunpack.c.h.b16 %v9196
    %v9267 = vunpack.c.l.b16 %v9197
    %v9268 = vunpack.c.l.b16 %v9198
    %v9269 = vunpack.c.h.b16 %v9198
    %v9270 = vunpack.c.l.b16 %v9199
    %v9271 = vunpack.c.l.b16 %v9200
    %v9272 = vunpack.c.h.b16 %v9200
    %v9273 = vunpack.c.l.b16 %v9201
    %v9274 = vunpack.c.l.b16 %v9202
    %v9275 = vunpack.c.h.b16 %v9202
    %v9276 = vunpack.c.l.b16 %v9203
    %v9277 = vunpack.c.l.b16 %v9204
    %v9278 = vunpack.c.h.b16 %v9204
    %v9279 = vunpack.c.l.b16 %v9205
    %v9280 = vunpack.c.l.b16 %v9206
    %v9281 = vunpack.c.h.b16 %v9206
    %v9282 = vunpack.c.l.b16 %v9207
    %v9283 = vunpack.c.l.b16 %v9208
    %v9284 = vunpack.c.h.b16 %v9208
    %v9285 = vunpack.c.l.b16 %v9209
    %v9286 = vunpack.c.l.b16 %v9210
    %v9287 = vunpack.c.h.b16 %v9210
    %v9288 = vunpack.c.l.b16 %v9211
    %v9289 = vunpack.c.l.b16 %v9212
    %v9290 = vunpack.c.h.b16 %v9212
    %v9291 = vunpack.c.l.b16 %v9213
    %v9292 = vunpack.c.l.b16 %v9214
    %v9293 = vunpack.c.h.b16 %v9214
    %v9294 = vunpack.c.l.b16 %v9215
    %v9295 = vunpack.c.l.b16 %v9216
    %v9296 = vunpack.c.h.b16 %v9216
    %v9297 = vunpack.c.l.b16 %v9217
    %v9298 = vpack.c.b16 %v9253, %v9250
    %v9299 = vpack.c.b16 %v9254, %v9251
    %v9300 = vpack.c.b16 %v9255, %v9252
    %v9301 = vpack.c.b16 %v9259, %v9256
    %v9302 = vpack.c.b16 %v9260, %v9257
    %v9303 = vpack.c.b16 %v9261, %v9258
    %v9304 = vpack.c.b16 %v9265, %v9262
    %v9305 = vpack.c.b16 %v9266, %v9263
    %v9306 = vpack.c.b16 %v9267, %v9264
    %v9307 = vpack.c.b16 %v9271, %v9268
    %v9308 = vpack.c.b16 %v9272, %v9269
    %v9309 = vpack.c.b16 %v9273, %v9270
    %v9310 = vpack.c.b16 %v9277, %v9274
    %v9311 = vpack.c.b16 %v9278, %v9275
    %v9312 = vpack.c.b16 %v9279, %v9276
    %v9313 = vpack.c.b16 %v9283, %v9280
    %v9314 = vpack.c.b16 %v9284, %v9281
    %v9315 = vpack.c.b16 %v9285, %v9282
    %v9316 = vpack.c.b16 %v9289, %v9286
    %v9317 = vpack.c.b16 %v9290, %v9287
    %v9318 = vpack.c.b16 %v9291, %v9288
    %v9319 = vpack.c.b16 %v9295, %v9292
    %v9320 = vpack.c.b16 %v9296, %v9293
    %v9321 = vpack.c.b16 %v9297, %v9294
    %9346 = vmatprep.subr.bf16.mxu0 %v9299
    %9347 = vmatpush1.bf16.msra.mxu0 %v9298
    %9348 = vmatprep.subr.bf16.mxu0 %v9302
    %9349 = vmatpush1.bf16.msra.mxu0 %v9301
    %9350 = vmatprep.subr.bf16.mxu0 %v9305
    %9351 = vmatpush1.bf16.msra.mxu0 %v9304
    %9352 = vmatprep.subr.bf16.mxu0 %v9308
    %9353 = vmatpush1.bf16.msra.mxu0 %v9307
    %9354 = vmatprep.subr.bf16.mxu0 %v9311
    %9355 = vmatpush1.bf16.msra.mxu0 %v9310
    %9356 = vmatprep.subr.bf16.mxu0 %v9314
    %9357 = vmatpush1.bf16.msra.mxu0 %v9313
    %9358 = vmatprep.subr.bf16.mxu0 %v9317
    %9359 = vmatpush1.bf16.msra.mxu0 %v9316
    %9360 = vmatprep.subr.bf16.mxu0 %v9320
    %9361 = vmatpush1.bf16.msra.mxu0 %v9319
    %9362 = vmatprep.subr.bf16.mxu0 0
    %9363 = vmatpush1.bf16.msra.mxu0 0
    %9364 = vmatprep.subr.bf16.mxu0 0
    %9365 = vmatpush1.bf16.msra.mxu0 0
    %9366 = vmatprep.subr.bf16.mxu0 0
    %9367 = vmatpush1.bf16.msra.mxu0 0
    %9368 = vmatprep.subr.bf16.mxu0 0
    %9369 = vmatpush1.bf16.msra.mxu0 0
    %9370 = vmatprep.subr.bf16.mxu0 0
    %9371 = vmatpush1.bf16.msra.mxu0 0
    %9372 = vmatprep.subr.bf16.mxu0 0
    %9373 = vmatpush1.bf16.msra.mxu0 0
    %9374 = vmatprep.subr.bf16.mxu0 0
    %9375 = vmatpush1.bf16.msra.mxu0 0
    %9376 = vmatprep.subr.bf16.mxu0 0
    %9377 = vmatpush1.bf16.msra.mxu0 0
    %9378 = vmatprep.mubr.bf16.mxu0 0
    %9379 = vmatmul.mubr.bf16.gmra.mrb[0].mxu0 %v9185
    %v9380 = vpop.f32.mrb[0].mxu0
    %v9381 = vadd.f32 0.0, %v9380
    %v9382 = vpop.f32.mrb[0].mxu0
    %v9383 = vadd.f32 0.0, %v9382
    %v9384 = vpop.f32.mrb[0].mxu0
    %v9385 = vpop.f32.mrb[0].mxu0
    %9386 = vdwg.mxu0
    %9387 = vmatprep.subr.bf16.mxu0 0
    %9388 = vmatpush1.bf16.msra.mxu0 %v9300
    %9389 = vmatprep.subr.bf16.mxu0 0
    %9390 = vmatpush1.bf16.msra.mxu0 %v9303
    %9391 = vmatprep.subr.bf16.mxu0 0
    %9392 = vmatpush1.bf16.msra.mxu0 %v9306
    %9393 = vmatprep.subr.bf16.mxu0 0
    %9394 = vmatpush1.bf16.msra.mxu0 %v9309
    %9395 = vmatprep.subr.bf16.mxu0 0
    %9396 = vmatpush1.bf16.msra.mxu0 %v9312
    %9397 = vmatprep.subr.bf16.mxu0 0
    %9398 = vmatpush1.bf16.msra.mxu0 %v9315
    %9399 = vmatprep.subr.bf16.mxu0 0
    %9400 = vmatpush1.bf16.msra.mxu0 %v9318
    %9401 = vmatprep.subr.bf16.mxu0 0
    %9402 = vmatpush1.bf16.msra.mxu0 %v9321
    %9403 = vmatprep.subr.bf16.mxu0 0
    %9404 = vmatpush1.bf16.msra.mxu0 0
    %9405 = vmatprep.subr.bf16.mxu0 0
    %9406 = vmatpush1.bf16.msra.mxu0 0
    %9407 = vmatprep.subr.bf16.mxu0 0
    %9408 = vmatpush1.bf16.msra.mxu0 0
    %9409 = vmatprep.subr.bf16.mxu0 0
    %9410 = vmatpush1.bf16.msra.mxu0 0
    %9411 = vmatprep.subr.bf16.mxu0 0
    %9412 = vmatpush1.bf16.msra.mxu0 0
    %9413 = vmatprep.subr.bf16.mxu0 0
    %9414 = vmatpush1.bf16.msra.mxu0 0
    %9415 = vmatprep.subr.bf16.mxu0 0
    %9416 = vmatpush1.bf16.msra.mxu0 0
    %9417 = vmatprep.subr.bf16.mxu0 0
    %9418 = vmatpush1.bf16.msra.mxu0 0
    %9419 = vmatprep.mubr.bf16.mxu0 0
    %9420 = vmatmul.mubr.bf16.gmra.mrb[0].mxu0 %v9185
    %v9421 = vpop.f32.mrb[0].mxu0
    %v9422 = vadd.f32 0.0, %v9421
    %v9423 = vpop.f32.mrb[0].mxu0
    %v9424 = vpop.f32.mrb[0].mxu0
    %v9425 = vpop.f32.mrb[0].mxu0
    %9426 = vdwg.mxu0
    %v9427 = vadd.f32 %v9139, %v9381
    %v9428 = vxor.u32 %v9427, 2147483648
    %v9429 = vmul.f32 %v9428, 1.442695
    %v9430 = vpow.pop %v9429
    %v9431 = vadd.f32 %v9430, 1.0
    %v9432 = vrcp.pop %v9431
    %v9433 = vmul.f32 1.0, %v9432
    %v9434 = vadd.f32 %v9141, %v9383
    %v9435 = vxor.u32 %v9434, 2147483648
    %v9436 = vmul.f32 %v9435, 1.442695
    %v9437 = vpow.pop %v9436
    %v9438 = vadd.f32 %v9437, 1.0
    %v9439 = vrcp.pop %v9438
    %v9440 = vmul.f32 1.0, %v9439
    %v9441 = vld [vmem:[%s8] sm:$0x1]
    %v9443 = vlaneseq
    %v9444 = vshrl.u32 %v9443, 7
    %v9445 = vsub.s32 0, %v9444
    %v9446 = vrot.slane %v9441, %v9445
    %v9448 = vadd.f32 %v9422, %v9446
    %v9449 = vmul.f32 %v9433, %v9448
    %v9450 = vadd.f32 %v9180, %v9449
    %v9451 = vtanh.pop %v9450
    %v9452 = vsub.f32 1.0, %v9440
    %v9453 = vmul.f32 %v9452, %v9451
    %v9454 = vmul.f32 %v9440, %v8395
    %v9455 = vadd.f32 %v9453, %v9454
    %v9456 = vld [vmem:[#allocation13] sm:$0xff]
    %v9457 = vld [vmem:[#allocation13 + $0x8] sm:$0xf]
    %v9458 = vld [vmem:[#allocation13 + $0xc] sm:$0xff]
    %v9459 = vld [vmem:[#allocation13 + $0x14] sm:$0xf]
    %v9460 = vld [vmem:[#allocation13 + $0x18] sm:$0xff]
    %v9461 = vld [vmem:[#allocation13 + $0x20] sm:$0xf]
    %v9462 = vld [vmem:[#allocation13 + $0x24] sm:$0xff]
    %v9463 = vld [vmem:[#allocation13 + $0x2c] sm:$0xf]
    %v9464 = vld [vmem:[#allocation13 + $0x30] sm:$0xff]
    %v9465 = vld [vmem:[#allocation13 + $0x38] sm:$0xf]
    %v9466 = vld [vmem:[#allocation13 + $0x3c] sm:$0xff]
    %v9467 = vld [vmem:[#allocation13 + $0x44] sm:$0xf]
    %v9468 = vld [vmem:[#allocation13 + $0x48] sm:$0xff]
    %v9469 = vld [vmem:[#allocation13 + $0x50] sm:$0xf]
    %v9470 = vld [vmem:[#allocation13 + $0x54] sm:$0xff]
    %v9471 = vld [vmem:[#allocation13 + $0x5c] sm:$0xf]
    %v9472 = vld [vmem:[#allocation13 + $0x60] sm:$0xff]
    %v9473 = vld [vmem:[#allocation13 + $0x68] sm:$0xf]
    %v9474 = vld [vmem:[#allocation13 + $0x6c] sm:$0xff]
    %v9475 = vld [vmem:[#allocation13 + $0x74] sm:$0xf]
    %v9476 = vld [vmem:[#allocation13 + $0x78] sm:$0xff]
    %v9477 = vld [vmem:[#allocation13 + $0x80] sm:$0xf]
    %v9478 = vld [vmem:[#allocation13 + $0x84] sm:$0xff]
    %v9479 = vld [vmem:[#allocation13 + $0x8c] sm:$0xf]
    %v9480 = vld [vmem:[#allocation13 + $0x90] sm:$0xff]
    %v9481 = vld [vmem:[#allocation13 + $0x98] sm:$0xf]
    %v9482 = vld [vmem:[#allocation13 + $0x9c] sm:$0xff]
    %v9483 = vld [vmem:[#allocation13 + $0xa4] sm:$0xf]
    %v9484 = vld [vmem:[#allocation13 + $0xa8] sm:$0xff]
    %v9485 = vld [vmem:[#allocation13 + $0xb0] sm:$0xf]
    %v9486 = vld [vmem:[#allocation13 + $0xb4] sm:$0xff]
    %v9487 = vld [vmem:[#allocation13 + $0xbc] sm:$0xf]
    %v9488 = vld [vmem:[%s11] sm:$0x7]
    %v9490 = vlaneseq
    %v9491 = vshrl.u32 %v9490, 7
    %v9492 = vsub.s32 0, %v9491
    %v9493 = vrot.slane %v9488, %v9492
    %v9494 = vlaneseq
    %v9495 = vshrl.u32 %v9494, 7
    %v9496 = vsub.s32 1, %v9495
    %v9497 = vrot.slane %v9488, %v9496
    %v9498 = vlaneseq
    %v9499 = vshrl.u32 %v9498, 7
    %v9500 = vsub.s32 2, %v9499
    %v9501 = vrot.slane %v9488, %v9500
    %v9537 = vunpack.c.l.b16 %v9456
    %v9538 = vunpack.c.h.b16 %v9456
    %v9539 = vunpack.c.l.b16 %v9457
    %v9540 = vunpack.c.l.b16 %v9458
    %v9541 = vunpack.c.h.b16 %v9458
    %v9542 = vunpack.c.l.b16 %v9459
    %v9543 = vunpack.c.l.b16 %v9460
    %v9544 = vunpack.c.h.b16 %v9460
    %v9545 = vunpack.c.l.b16 %v9461
    %v9546 = vunpack.c.l.b16 %v9462
    %v9547 = vunpack.c.h.b16 %v9462
    %v9548 = vunpack.c.l.b16 %v9463
    %v9549 = vunpack.c.l.b16 %v9464
    %v9550 = vunpack.c.h.b16 %v9464
    %v9551 = vunpack.c.l.b16 %v9465
    %v9552 = vunpack.c.l.b16 %v9466
    %v9553 = vunpack.c.h.b16 %v9466
    %v9554 = vunpack.c.l.b16 %v9467
    %v9555 = vunpack.c.l.b16 %v9468
    %v9556 = vunpack.c.h.b16 %v9468
    %v9557 = vunpack.c.l.b16 %v9469
    %v9558 = vunpack.c.l.b16 %v9470
    %v9559 = vunpack.c.h.b16 %v9470
    %v9560 = vunpack.c.l.b16 %v9471
    %v9561 = vunpack.c.l.b16 %v9472
    %v9562 = vunpack.c.h.b16 %v9472
    %v9563 = vunpack.c.l.b16 %v9473
    %v9564 = vunpack.c.l.b16 %v9474
    %v9565 = vunpack.c.h.b16 %v9474
    %v9566 = vunpack.c.l.b16 %v9475
    %v9567 = vunpack.c.l.b16 %v9476
    %v9568 = vunpack.c.h.b16 %v9476
    %v9569 = vunpack.c.l.b16 %v9477
    %v9570 = vunpack.c.l.b16 %v9478
    %v9571 = vunpack.c.h.b16 %v9478
    %v9572 = vunpack.c.l.b16 %v9479
    %v9573 = vunpack.c.l.b16 %v9480
    %v9574 = vunpack.c.h.b16 %v9480
    %v9575 = vunpack.c.l.b16 %v9481
    %v9576 = vunpack.c.l.b16 %v9482
    %v9577 = vunpack.c.h.b16 %v9482
    %v9578 = vunpack.c.l.b16 %v9483
    %v9579 = vunpack.c.l.b16 %v9484
    %v9580 = vunpack.c.h.b16 %v9484
    %v9581 = vunpack.c.l.b16 %v9485
    %v9582 = vunpack.c.l.b16 %v9486
    %v9583 = vunpack.c.h.b16 %v9486
    %v9584 = vunpack.c.l.b16 %v9487
    %v9585 = vpack.c.b16 %v9540, %v9537
    %v9586 = vpack.c.b16 %v9541, %v9538
    %v9587 = vpack.c.b16 %v9542, %v9539
    %v9588 = vpack.c.b16 %v9546, %v9543
    %v9589 = vpack.c.b16 %v9547, %v9544
    %v9590 = vpack.c.b16 %v9548, %v9545
    %v9591 = vpack.c.b16 %v9552, %v9549
    %v9592 = vpack.c.b16 %v9553, %v9550
    %v9593 = vpack.c.b16 %v9554, %v9551
    %v9594 = vpack.c.b16 %v9558, %v9555
    %v9595 = vpack.c.b16 %v9559, %v9556
    %v9596 = vpack.c.b16 %v9560, %v9557
    %v9597 = vpack.c.b16 %v9564, %v9561
    %v9598 = vpack.c.b16 %v9565, %v9562
    %v9599 = vpack.c.b16 %v9566, %v9563
    %v9600 = vpack.c.b16 %v9570, %v9567
    %v9601 = vpack.c.b16 %v9571, %v9568
    %v9602 = vpack.c.b16 %v9572, %v9569
    %v9603 = vpack.c.b16 %v9576, %v9573
    %v9604 = vpack.c.b16 %v9577, %v9574
    %v9605 = vpack.c.b16 %v9578, %v9575
    %v9606 = vpack.c.b16 %v9582, %v9579
    %v9607 = vpack.c.b16 %v9583, %v9580
    %v9608 = vpack.c.b16 %v9584, %v9581
    %9633 = vmatprep.subr.bf16.mxu0 %v9586
    %9634 = vmatpush1.bf16.msra.mxu0 %v9585
    %9635 = vmatprep.subr.bf16.mxu0 %v9589
    %9636 = vmatpush1.bf16.msra.mxu0 %v9588
    %9637 = vmatprep.subr.bf16.mxu0 %v9592
    %9638 = vmatpush1.bf16.msra.mxu0 %v9591
    %9639 = vmatprep.subr.bf16.mxu0 %v9595
    %9640 = vmatpush1.bf16.msra.mxu0 %v9594
    %9641 = vmatprep.subr.bf16.mxu0 %v9598
    %9642 = vmatpush1.bf16.msra.mxu0 %v9597
    %9643 = vmatprep.subr.bf16.mxu0 %v9601
    %9644 = vmatpush1.bf16.msra.mxu0 %v9600
    %9645 = vmatprep.subr.bf16.mxu0 %v9604
    %9646 = vmatpush1.bf16.msra.mxu0 %v9603
    %9647 = vmatprep.subr.bf16.mxu0 %v9607
    %9648 = vmatpush1.bf16.msra.mxu0 %v9606
    %9649 = vmatprep.subr.bf16.mxu0 0
    %9650 = vmatpush1.bf16.msra.mxu0 0
    %9651 = vmatprep.subr.bf16.mxu0 0
    %9652 = vmatpush1.bf16.msra.mxu0 0
    %9653 = vmatprep.subr.bf16.mxu0 0
    %9654 = vmatpush1.bf16.msra.mxu0 0
    %9655 = vmatprep.subr.bf16.mxu0 0
    %9656 = vmatpush1.bf16.msra.mxu0 0
    %9657 = vmatprep.subr.bf16.mxu0 0
    %9658 = vmatpush1.bf16.msra.mxu0 0
    %9659 = vmatprep.subr.bf16.mxu0 0
    %9660 = vmatpush1.bf16.msra.mxu0 0
    %9661 = vmatprep.subr.bf16.mxu0 0
    %9662 = vmatpush1.bf16.msra.mxu0 0
    %9663 = vmatprep.subr.bf16.mxu0 0
    %9664 = vmatpush1.bf16.msra.mxu0 0
    %9665 = vmatprep.mubr.bf16.mxu0 0
    %9666 = vmatmul.mubr.bf16.gmra.mrb[0].mxu0 %v9185
    %v9667 = vpop.f32.mrb[0].mxu0
    %v9668 = vadd.f32 %v9493, %v9667
    %v9669 = vpop.f32.mrb[0].mxu0
    %v9670 = vadd.f32 %v9497, %v9669
    %v9671 = vpop.f32.mrb[0].mxu0
    %v9672 = vpop.f32.mrb[0].mxu0
    %9673 = vdwg.mxu0
    %9674 = vmatprep.subr.bf16.mxu0 0
    %9675 = vmatpush1.bf16.msra.mxu0 %v9587
    %9676 = vmatprep.subr.bf16.mxu0 0
    %9677 = vmatpush1.bf16.msra.mxu0 %v9590
    %9678 = vmatprep.subr.bf16.mxu0 0
    %9679 = vmatpush1.bf16.msra.mxu0 %v9593
    %9680 = vmatprep.subr.bf16.mxu0 0
    %9681 = vmatpush1.bf16.msra.mxu0 %v9596
    %9682 = vmatprep.subr.bf16.mxu0 0
    %9683 = vmatpush1.bf16.msra.mxu0 %v9599
    %9684 = vmatprep.subr.bf16.mxu0 0
    %9685 = vmatpush1.bf16.msra.mxu0 %v9602
    %9686 = vmatprep.subr.bf16.mxu0 0
    %9687 = vmatpush1.bf16.msra.mxu0 %v9605
    %9688 = vmatprep.subr.bf16.mxu0 0
    %9689 = vmatpush1.bf16.msra.mxu0 %v9608
    %9690 = vmatprep.subr.bf16.mxu0 0
    %9691 = vmatpush1.bf16.msra.mxu0 0
    %9692 = vmatprep.subr.bf16.mxu0 0
    %9693 = vmatpush1.bf16.msra.mxu0 0
    %9694 = vmatprep.subr.bf16.mxu0 0
    %9695 = vmatpush1.bf16.msra.mxu0 0
    %9696 = vmatprep.subr.bf16.mxu0 0
    %9697 = vmatpush1.bf16.msra.mxu0 0
    %9698 = vmatprep.subr.bf16.mxu0 0
    %9699 = vmatpush1.bf16.msra.mxu0 0
    %9700 = vmatprep.subr.bf16.mxu0 0
    %9701 = vmatpush1.bf16.msra.mxu0 0
    %9702 = vmatprep.subr.bf16.mxu0 0
    %9703 = vmatpush1.bf16.msra.mxu0 0
    %9704 = vmatprep.subr.bf16.mxu0 0
    %9705 = vmatpush1.bf16.msra.mxu0 0
    %9706 = vmatprep.mubr.bf16.mxu0 0
    %9707 = vmatmul.mubr.bf16.gmra.mrb[0].mxu0 %v9185
    %v9708 = vpop.f32.mrb[0].mxu0
    %v9709 = vadd.f32 %v9501, %v9708
    %v9710 = vpop.f32.mrb[0].mxu0
    %v9711 = vpop.f32.mrb[0].mxu0
    %v9712 = vpop.f32.mrb[0].mxu0
    %9713 = vdwg.mxu0
    %v9714 = vpack.c.bf16 %v8924, %v8924
    %v9715 = vld [vmem:[#allocation15] sm:$0xff]
    %v9716 = vld [vmem:[#allocation15 + $0x8] sm:$0xf]
    %v9717 = vld [vmem:[#allocation15 + $0xc] sm:$0xff]
    %v9718 = vld [vmem:[#allocation15 + $0x14] sm:$0xf]
    %v9719 = vld [vmem:[#allocation15 + $0x18] sm:$0xff]
    %v9720 = vld [vmem:[#allocation15 + $0x20] sm:$0xf]
    %v9721 = vld [vmem:[#allocation15 + $0x24] sm:$0xff]
    %v9722 = vld [vmem:[#allocation15 + $0x2c] sm:$0xf]
    %v9723 = vld [vmem:[#allocation15 + $0x30] sm:$0xff]
    %v9724 = vld [vmem:[#allocation15 + $0x38] sm:$0xf]
    %v9725 = vld [vmem:[#allocation15 + $0x3c] sm:$0xff]
    %v9726 = vld [vmem:[#allocation15 + $0x44] sm:$0xf]
    %v9727 = vld [vmem:[#allocation15 + $0x48] sm:$0xff]
    %v9728 = vld [vmem:[#allocation15 + $0x50] sm:$0xf]
    %v9729 = vld [vmem:[#allocation15 + $0x54] sm:$0xff]
    %v9730 = vld [vmem:[#allocation15 + $0x5c] sm:$0xf]
    %v9731 = vld [vmem:[#allocation15 + $0x60] sm:$0xff]
    %v9732 = vld [vmem:[#allocation15 + $0x68] sm:$0xf]
    %v9733 = vld [vmem:[#allocation15 + $0x6c] sm:$0xff]
    %v9734 = vld [vmem:[#allocation15 + $0x74] sm:$0xf]
    %v9735 = vld [vmem:[#allocation15 + $0x78] sm:$0xff]
    %v9736 = vld [vmem:[#allocation15 + $0x80] sm:$0xf]
    %v9737 = vld [vmem:[#allocation15 + $0x84] sm:$0xff]
    %v9738 = vld [vmem:[#allocation15 + $0x8c] sm:$0xf]
    %v9739 = vld [vmem:[#allocation15 + $0x90] sm:$0xff]
    %v9740 = vld [vmem:[#allocation15 + $0x98] sm:$0xf]
    %v9741 = vld [vmem:[#allocation15 + $0x9c] sm:$0xff]
    %v9742 = vld [vmem:[#allocation15 + $0xa4] sm:$0xf]
    %v9743 = vld [vmem:[#allocation15 + $0xa8] sm:$0xff]
    %v9744 = vld [vmem:[#allocation15 + $0xb0] sm:$0xf]
    %v9745 = vld [vmem:[#allocation15 + $0xb4] sm:$0xff]
    %v9746 = vld [vmem:[#allocation15 + $0xbc] sm:$0xf]
    %v9779 = vunpack.c.l.b16 %v9715
    %v9780 = vunpack.c.h.b16 %v9715
    %v9781 = vunpack.c.l.b16 %v9716
    %v9782 = vunpack.c.l.b16 %v9717
    %v9783 = vunpack.c.h.b16 %v9717
    %v9784 = vunpack.c.l.b16 %v9718
    %v9785 = vunpack.c.l.b16 %v9719
    %v9786 = vunpack.c.h.b16 %v9719
    %v9787 = vunpack.c.l.b16 %v9720
    %v9788 = vunpack.c.l.b16 %v9721
    %v9789 = vunpack.c.h.b16 %v9721
    %v9790 = vunpack.c.l.b16 %v9722
    %v9791 = vunpack.c.l.b16 %v9723
    %v9792 = vunpack.c.h.b16 %v9723
    %v9793 = vunpack.c.l.b16 %v9724
    %v9794 = vunpack.c.l.b16 %v9725
    %v9795 = vunpack.c.h.b16 %v9725
    %v9796 = vunpack.c.l.b16 %v9726
    %v9797 = vunpack.c.l.b16 %v9727
    %v9798 = vunpack.c.h.b16 %v9727
    %v9799 = vunpack.c.l.b16 %v9728
    %v9800 = vunpack.c.l.b16 %v9729
    %v9801 = vunpack.c.h.b16 %v9729
    %v9802 = vunpack.c.l.b16 %v9730
    %v9803 = vunpack.c.l.b16 %v9731
    %v9804 = vunpack.c.h.b16 %v9731
    %v9805 = vunpack.c.l.b16 %v9732
    %v9806 = vunpack.c.l.b16 %v9733
    %v9807 = vunpack.c.h.b16 %v9733
    %v9808 = vunpack.c.l.b16 %v9734
    %v9809 = vunpack.c.l.b16 %v9735
    %v9810 = vunpack.c.h.b16 %v9735
    %v9811 = vunpack.c.l.b16 %v9736
    %v9812 = vunpack.c.l.b16 %v9737
    %v9813 = vunpack.c.h.b16 %v9737
    %v9814 = vunpack.c.l.b16 %v9738
    %v9815 = vunpack.c.l.b16 %v9739
    %v9816 = vunpack.c.h.b16 %v9739
    %v9817 = vunpack.c.l.b16 %v9740
    %v9818 = vunpack.c.l.b16 %v9741
    %v9819 = vunpack.c.h.b16 %v9741
    %v9820 = vunpack.c.l.b16 %v9742
    %v9821 = vunpack.c.l.b16 %v9743
    %v9822 = vunpack.c.h.b16 %v9743
    %v9823 = vunpack.c.l.b16 %v9744
    %v9824 = vunpack.c.l.b16 %v9745
    %v9825 = vunpack.c.h.b16 %v9745
    %v9826 = vunpack.c.l.b16 %v9746
    %v9827 = vpack.c.b16 %v9782, %v9779
    %v9828 = vpack.c.b16 %v9783, %v9780
    %v9829 = vpack.c.b16 %v9784, %v9781
    %v9830 = vpack.c.b16 %v9788, %v9785
    %v9831 = vpack.c.b16 %v9789, %v9786
    %v9832 = vpack.c.b16 %v9790, %v9787
    %v9833 = vpack.c.b16 %v9794, %v9791
    %v9834 = vpack.c.b16 %v9795, %v9792
    %v9835 = vpack.c.b16 %v9796, %v9793
    %v9836 = vpack.c.b16 %v9800, %v9797
    %v9837 = vpack.c.b16 %v9801, %v9798
    %v9838 = vpack.c.b16 %v9802, %v9799
    %v9839 = vpack.c.b16 %v9806, %v9803
    %v9840 = vpack.c.b16 %v9807, %v9804
    %v9841 = vpack.c.b16 %v9808, %v9805
    %v9842 = vpack.c.b16 %v9812, %v9809
    %v9843 = vpack.c.b16 %v9813, %v9810
    %v9844 = vpack.c.b16 %v9814, %v9811
    %v9845 = vpack.c.b16 %v9818, %v9815
    %v9846 = vpack.c.b16 %v9819, %v9816
    %v9847 = vpack.c.b16 %v9820, %v9817
    %v9848 = vpack.c.b16 %v9824, %v9821
    %v9849 = vpack.c.b16 %v9825, %v9822
    %v9850 = vpack.c.b16 %v9826, %v9823
    %9875 = vmatprep.subr.bf16.mxu0 %v9828
    %9876 = vmatpush1.bf16.msra.mxu0 %v9827
    %9877 = vmatprep.subr.bf16.mxu0 %v9831
    %9878 = vmatpush1.bf16.msra.mxu0 %v9830
    %9879 = vmatprep.subr.bf16.mxu0 %v9834
    %9880 = vmatpush1.bf16.msra.mxu0 %v9833
    %9881 = vmatprep.subr.bf16.mxu0 %v9837
    %9882 = vmatpush1.bf16.msra.mxu0 %v9836
    %9883 = vmatprep.subr.bf16.mxu0 %v9840
    %9884 = vmatpush1.bf16.msra.mxu0 %v9839
    %9885 = vmatprep.subr.bf16.mxu0 %v9843
    %9886 = vmatpush1.bf16.msra.mxu0 %v9842
    %9887 = vmatprep.subr.bf16.mxu0 %v9846
    %9888 = vmatpush1.bf16.msra.mxu0 %v9845
    %9889 = vmatprep.subr.bf16.mxu0 %v9849
    %9890 = vmatpush1.bf16.msra.mxu0 %v9848
    %9891 = vmatprep.subr.bf16.mxu0 0
    %9892 = vmatpush1.bf16.msra.mxu0 0
    %9893 = vmatprep.subr.bf16.mxu0 0
    %9894 = vmatpush1.bf16.msra.mxu0 0
    %9895 = vmatprep.subr.bf16.mxu0 0
    %9896 = vmatpush1.bf16.msra.mxu0 0
    %9897 = vmatprep.subr.bf16.mxu0 0
    %9898 = vmatpush1.bf16.msra.mxu0 0
    %9899 = vmatprep.subr.bf16.mxu0 0
    %9900 = vmatpush1.bf16.msra.mxu0 0
    %9901 = vmatprep.subr.bf16.mxu0 0
    %9902 = vmatpush1.bf16.msra.mxu0 0
    %9903 = vmatprep.subr.bf16.mxu0 0
    %9904 = vmatpush1.bf16.msra.mxu0 0
    %9905 = vmatprep.subr.bf16.mxu0 0
    %9906 = vmatpush1.bf16.msra.mxu0 0
    %9907 = vmatprep.mubr.bf16.mxu0 0
    %9908 = vmatmul.mubr.bf16.gmra.mrb[0].mxu0 %v9714
    %v9909 = vpop.f32.mrb[0].mxu0
    %v9910 = vadd.f32 0.0, %v9909
    %v9911 = vpop.f32.mrb[0].mxu0
    %v9912 = vadd.f32 0.0, %v9911
    %v9913 = vpop.f32.mrb[0].mxu0
    %v9914 = vpop.f32.mrb[0].mxu0
    %9915 = vdwg.mxu0
    %9916 = vmatprep.subr.bf16.mxu0 0
    %9917 = vmatpush1.bf16.msra.mxu0 %v9829
    %9918 = vmatprep.subr.bf16.mxu0 0
    %9919 = vmatpush1.bf16.msra.mxu0 %v9832
    %9920 = vmatprep.subr.bf16.mxu0 0
    %9921 = vmatpush1.bf16.msra.mxu0 %v9835
    %9922 = vmatprep.subr.bf16.mxu0 0
    %9923 = vmatpush1.bf16.msra.mxu0 %v9838
    %9924 = vmatprep.subr.bf16.mxu0 0
    %9925 = vmatpush1.bf16.msra.mxu0 %v9841
    %9926 = vmatprep.subr.bf16.mxu0 0
    %9927 = vmatpush1.bf16.msra.mxu0 %v9844
    %9928 = vmatprep.subr.bf16.mxu0 0
    %9929 = vmatpush1.bf16.msra.mxu0 %v9847
    %9930 = vmatprep.subr.bf16.mxu0 0
    %9931 = vmatpush1.bf16.msra.mxu0 %v9850
    %9932 = vmatprep.subr.bf16.mxu0 0
    %9933 = vmatpush1.bf16.msra.mxu0 0
    %9934 = vmatprep.subr.bf16.mxu0 0
    %9935 = vmatpush1.bf16.msra.mxu0 0
    %9936 = vmatprep.subr.bf16.mxu0 0
    %9937 = vmatpush1.bf16.msra.mxu0 0
    %9938 = vmatprep.subr.bf16.mxu0 0
    %9939 = vmatpush1.bf16.msra.mxu0 0
    %9940 = vmatprep.subr.bf16.mxu0 0
    %9941 = vmatpush1.bf16.msra.mxu0 0
    %9942 = vmatprep.subr.bf16.mxu0 0
    %9943 = vmatpush1.bf16.msra.mxu0 0
    %9944 = vmatprep.subr.bf16.mxu0 0
    %9945 = vmatpush1.bf16.msra.mxu0 0
    %9946 = vmatprep.subr.bf16.mxu0 0
    %9947 = vmatpush1.bf16.msra.mxu0 0
    %9948 = vmatprep.mubr.bf16.mxu0 0
    %9949 = vmatmul.mubr.bf16.gmra.mrb[0].mxu0 %v9714
    %v9950 = vpop.f32.mrb[0].mxu0
    %v9951 = vadd.f32 0.0, %v9950
    %v9952 = vpop.f32.mrb[0].mxu0
    %v9953 = vpop.f32.mrb[0].mxu0
    %v9954 = vpop.f32.mrb[0].mxu0
    %9955 = vdwg.mxu0
    %v9956 = vadd.f32 %v9668, %v9910
    %v9957 = vxor.u32 %v9956, 2147483648
    %v9958 = vmul.f32 %v9957, 1.442695
    %v9959 = vpow.pop %v9958
    %v9960 = vadd.f32 %v9959, 1.0
    %v9961 = vrcp.pop %v9960
    %v9962 = vmul.f32 1.0, %v9961
    %v9963 = vadd.f32 %v9670, %v9912
    %v9964 = vxor.u32 %v9963, 2147483648
    %v9965 = vmul.f32 %v9964, 1.442695
    %v9966 = vpow.pop %v9965
    %v9967 = vadd.f32 %v9966, 1.0
    %v9968 = vrcp.pop %v9967
    %v9969 = vmul.f32 1.0, %v9968
    %v9970 = vld [vmem:[%s12] sm:$0x1]
    %v9972 = vlaneseq
    %v9973 = vshrl.u32 %v9972, 7
    %v9974 = vsub.s32 0, %v9973
    %v9975 = vrot.slane %v9970, %v9974
    %v9977 = vadd.f32 %v9951, %v9975
    %v9978 = vmul.f32 %v9962, %v9977
    %v9979 = vadd.f32 %v9709, %v9978
    %v9980 = vtanh.pop %v9979
    %v9981 = vsub.f32 1.0, %v9969
    %v9982 = vmul.f32 %v9981, %v9980
    %v9983 = vmul.f32 %v9969, %v8924
    %v9984 = vadd.f32 %v9982, %v9983
    %9985 = vst [vmem:[#allocation3 + $0x30] sm:$0xff] %v9984
    %v9986 = vpack.c.bf16 %v9455, %v9455
    %v9987 = vld [vmem:[#allocation13] sm:$0xff]
    %v9988 = vld [vmem:[#allocation13 + $0x8] sm:$0xf]
    %v9989 = vld [vmem:[#allocation13 + $0xc] sm:$0xff]
    %v9990 = vld [vmem:[#allocation13 + $0x14] sm:$0xf]
    %v9991 = vld [vmem:[#allocation13 + $0x18] sm:$0xff]
    %v9992 = vld [vmem:[#allocation13 + $0x20] sm:$0xf]
    %v9993 = vld [vmem:[#allocation13 + $0x24] sm:$0xff]
    %v9994 = vld [vmem:[#allocation13 + $0x2c] sm:$0xf]
    %v9995 = vld [vmem:[#allocation13 + $0x30] sm:$0xff]
    %v9996 = vld [vmem:[#allocation13 + $0x38] sm:$0xf]
    %v9997 = vld [vmem:[#allocation13 + $0x3c] sm:$0xff]
    %v9998 = vld [vmem:[#allocation13 + $0x44] sm:$0xf]
    %v9999 = vld [vmem:[#allocation13 + $0x48] sm:$0xff]
    %v10000 = vld [vmem:[#allocation13 + $0x50] sm:$0xf]
    %v10001 = vld [vmem:[#allocation13 + $0x54] sm:$0xff]
    %v10002 = vld [vmem:[#allocation13 + $0x5c] sm:$0xf]
    %v10003 = vld [vmem:[#allocation13 + $0x60] sm:$0xff]
    %v10004 = vld [vmem:[#allocation13 + $0x68] sm:$0xf]
    %v10005 = vld [vmem:[#allocation13 + $0x6c] sm:$0xff]
    %v10006 = vld [vmem:[#allocation13 + $0x74] sm:$0xf]
    %v10007 = vld [vmem:[#allocation13 + $0x78] sm:$0xff]
    %v10008 = vld [vmem:[#allocation13 + $0x80] sm:$0xf]
    %v10009 = vld [vmem:[#allocation13 + $0x84] sm:$0xff]
    %v10010 = vld [vmem:[#allocation13 + $0x8c] sm:$0xf]
    %v10011 = vld [vmem:[#allocation13 + $0x90] sm:$0xff]
    %v10012 = vld [vmem:[#allocation13 + $0x98] sm:$0xf]
    %v10013 = vld [vmem:[#allocation13 + $0x9c] sm:$0xff]
    %v10014 = vld [vmem:[#allocation13 + $0xa4] sm:$0xf]
    %v10015 = vld [vmem:[#allocation13 + $0xa8] sm:$0xff]
    %v10016 = vld [vmem:[#allocation13 + $0xb0] sm:$0xf]
    %v10017 = vld [vmem:[#allocation13 + $0xb4] sm:$0xff]
    %v10018 = vld [vmem:[#allocation13 + $0xbc] sm:$0xf]
    %v10019 = vld [vmem:[%s11] sm:$0x7]
    %v10021 = vlaneseq
    %v10022 = vshrl.u32 %v10021, 7
    %v10023 = vsub.s32 0, %v10022
    %v10024 = vrot.slane %v10019, %v10023
    %v10025 = vlaneseq
    %v10026 = vshrl.u32 %v10025, 7
    %v10027 = vsub.s32 1, %v10026
    %v10028 = vrot.slane %v10019, %v10027
    %v10029 = vlaneseq
    %v10030 = vshrl.u32 %v10029, 7
    %v10031 = vsub.s32 2, %v10030
    %v10032 = vrot.slane %v10019, %v10031
    %v10068 = vunpack.c.l.b16 %v9987
    %v10069 = vunpack.c.h.b16 %v9987
    %v10070 = vunpack.c.l.b16 %v9988
    %v10071 = vunpack.c.l.b16 %v9989
    %v10072 = vunpack.c.h.b16 %v9989
    %v10073 = vunpack.c.l.b16 %v9990
    %v10074 = vunpack.c.l.b16 %v9991
    %v10075 = vunpack.c.h.b16 %v9991
    %v10076 = vunpack.c.l.b16 %v9992
    %v10077 = vunpack.c.l.b16 %v9993
    %v10078 = vunpack.c.h.b16 %v9993
    %v10079 = vunpack.c.l.b16 %v9994
    %v10080 = vunpack.c.l.b16 %v9995
    %v10081 = vunpack.c.h.b16 %v9995
    %v10082 = vunpack.c.l.b16 %v9996
    %v10083 = vunpack.c.l.b16 %v9997
    %v10084 = vunpack.c.h.b16 %v9997
    %v10085 = vunpack.c.l.b16 %v9998
    %v10086 = vunpack.c.l.b16 %v9999
    %v10087 = vunpack.c.h.b16 %v9999
    %v10088 = vunpack.c.l.b16 %v10000
    %v10089 = vunpack.c.l.b16 %v10001
    %v10090 = vunpack.c.h.b16 %v10001
    %v10091 = vunpack.c.l.b16 %v10002
    %v10092 = vunpack.c.l.b16 %v10003
    %v10093 = vunpack.c.h.b16 %v10003
    %v10094 = vunpack.c.l.b16 %v10004
    %v10095 = vunpack.c.l.b16 %v10005
    %v10096 = vunpack.c.h.b16 %v10005
    %v10097 = vunpack.c.l.b16 %v10006
    %v10098 = vunpack.c.l.b16 %v10007
    %v10099 = vunpack.c.h.b16 %v10007
    %v10100 = vunpack.c.l.b16 %v10008
    %v10101 = vunpack.c.l.b16 %v10009
    %v10102 = vunpack.c.h.b16 %v10009
    %v10103 = vunpack.c.l.b16 %v10010
    %v10104 = vunpack.c.l.b16 %v10011
    %v10105 = vunpack.c.h.b16 %v10011
    %v10106 = vunpack.c.l.b16 %v10012
    %v10107 = vunpack.c.l.b16 %v10013
    %v10108 = vunpack.c.h.b16 %v10013
    %v10109 = vunpack.c.l.b16 %v10014
    %v10110 = vunpack.c.l.b16 %v10015
    %v10111 = vunpack.c.h.b16 %v10015
    %v10112 = vunpack.c.l.b16 %v10016
    %v10113 = vunpack.c.l.b16 %v10017
    %v10114 = vunpack.c.h.b16 %v10017
    %v10115 = vunpack.c.l.b16 %v10018
    %v10116 = vpack.c.b16 %v10071, %v10068
    %v10117 = vpack.c.b16 %v10072, %v10069
    %v10118 = vpack.c.b16 %v10073, %v10070
    %v10119 = vpack.c.b16 %v10077, %v10074
    %v10120 = vpack.c.b16 %v10078, %v10075
    %v10121 = vpack.c.b16 %v10079, %v10076
    %v10122 = vpack.c.b16 %v10083, %v10080
    %v10123 = vpack.c.b16 %v10084, %v10081
    %v10124 = vpack.c.b16 %v10085, %v10082
    %v10125 = vpack.c.b16 %v10089, %v10086
    %v10126 = vpack.c.b16 %v10090, %v10087
    %v10127 = vpack.c.b16 %v10091, %v10088
    %v10128 = vpack.c.b16 %v10095, %v10092
    %v10129 = vpack.c.b16 %v10096, %v10093
    %v10130 = vpack.c.b16 %v10097, %v10094
    %v10131 = vpack.c.b16 %v10101, %v10098
    %v10132 = vpack.c.b16 %v10102, %v10099
    %v10133 = vpack.c.b16 %v10103, %v10100
    %v10134 = vpack.c.b16 %v10107, %v10104
    %v10135 = vpack.c.b16 %v10108, %v10105
    %v10136 = vpack.c.b16 %v10109, %v10106
    %v10137 = vpack.c.b16 %v10113, %v10110
    %v10138 = vpack.c.b16 %v10114, %v10111
    %v10139 = vpack.c.b16 %v10115, %v10112
    %10164 = vmatprep.subr.bf16.mxu0 %v10117
    %10165 = vmatpush1.bf16.msra.mxu0 %v10116
    %10166 = vmatprep.subr.bf16.mxu0 %v10120
    %10167 = vmatpush1.bf16.msra.mxu0 %v10119
    %10168 = vmatprep.subr.bf16.mxu0 %v10123
    %10169 = vmatpush1.bf16.msra.mxu0 %v10122
    %10170 = vmatprep.subr.bf16.mxu0 %v10126
    %10171 = vmatpush1.bf16.msra.mxu0 %v10125
    %10172 = vmatprep.subr.bf16.mxu0 %v10129
    %10173 = vmatpush1.bf16.msra.mxu0 %v10128
    %10174 = vmatprep.subr.bf16.mxu0 %v10132
    %10175 = vmatpush1.bf16.msra.mxu0 %v10131
    %10176 = vmatprep.subr.bf16.mxu0 %v10135
    %10177 = vmatpush1.bf16.msra.mxu0 %v10134
    %10178 = vmatprep.subr.bf16.mxu0 %v10138
    %10179 = vmatpush1.bf16.msra.mxu0 %v10137
    %10180 = vmatprep.subr.bf16.mxu0 0
    %10181 = vmatpush1.bf16.msra.mxu0 0
    %10182 = vmatprep.subr.bf16.mxu0 0
    %10183 = vmatpush1.bf16.msra.mxu0 0
    %10184 = vmatprep.subr.bf16.mxu0 0
    %10185 = vmatpush1.bf16.msra.mxu0 0
    %10186 = vmatprep.subr.bf16.mxu0 0
    %10187 = vmatpush1.bf16.msra.mxu0 0
    %10188 = vmatprep.subr.bf16.mxu0 0
    %10189 = vmatpush1.bf16.msra.mxu0 0
    %10190 = vmatprep.subr.bf16.mxu0 0
    %10191 = vmatpush1.bf16.msra.mxu0 0
    %10192 = vmatprep.subr.bf16.mxu0 0
    %10193 = vmatpush1.bf16.msra.mxu0 0
    %10194 = vmatprep.subr.bf16.mxu0 0
    %10195 = vmatpush1.bf16.msra.mxu0 0
    %10196 = vmatprep.mubr.bf16.mxu0 0
    %10197 = vmatmul.mubr.bf16.gmra.mrb[0].mxu0 %v9986
    %v10198 = vpop.f32.mrb[0].mxu0
    %v10199 = vadd.f32 %v10024, %v10198
    %v10200 = vpop.f32.mrb[0].mxu0
    %v10201 = vadd.f32 %v10028, %v10200
    %v10202 = vpop.f32.mrb[0].mxu0
    %v10203 = vpop.f32.mrb[0].mxu0
    %10204 = vdwg.mxu0
    %10205 = vmatprep.subr.bf16.mxu0 0
    %10206 = vmatpush1.bf16.msra.mxu0 %v10118
    %10207 = vmatprep.subr.bf16.mxu0 0
    %10208 = vmatpush1.bf16.msra.mxu0 %v10121
    %10209 = vmatprep.subr.bf16.mxu0 0
    %10210 = vmatpush1.bf16.msra.mxu0 %v10124
    %10211 = vmatprep.subr.bf16.mxu0 0
    %10212 = vmatpush1.bf16.msra.mxu0 %v10127
    %10213 = vmatprep.subr.bf16.mxu0 0
    %10214 = vmatpush1.bf16.msra.mxu0 %v10130
    %10215 = vmatprep.subr.bf16.mxu0 0
    %10216 = vmatpush1.bf16.msra.mxu0 %v10133
    %10217 = vmatprep.subr.bf16.mxu0 0
    %10218 = vmatpush1.bf16.msra.mxu0 %v10136
    %10219 = vmatprep.subr.bf16.mxu0 0
    %10220 = vmatpush1.bf16.msra.mxu0 %v10139
    %10221 = vmatprep.subr.bf16.mxu0 0
    %10222 = vmatpush1.bf16.msra.mxu0 0
    %10223 = vmatprep.subr.bf16.mxu0 0
    %10224 = vmatpush1.bf16.msra.mxu0 0
    %10225 = vmatprep.subr.bf16.mxu0 0
    %10226 = vmatpush1.bf16.msra.mxu0 0
    %10227 = vmatprep.subr.bf16.mxu0 0
    %10228 = vmatpush1.bf16.msra.mxu0 0
    %10229 = vmatprep.subr.bf16.mxu0 0
    %10230 = vmatpush1.bf16.msra.mxu0 0
    %10231 = vmatprep.subr.bf16.mxu0 0
    %10232 = vmatpush1.bf16.msra.mxu0 0
    %10233 = vmatprep.subr.bf16.mxu0 0
    %10234 = vmatpush1.bf16.msra.mxu0 0
    %10235 = vmatprep.subr.bf16.mxu0 0
    %10236 = vmatpush1.bf16.msra.mxu0 0
    %10237 = vmatprep.mubr.bf16.mxu0 0
    %10238 = vmatmul.mubr.bf16.gmra.mrb[0].mxu0 %v9986
    %v10239 = vpop.f32.mrb[0].mxu0
    %v10240 = vadd.f32 %v10032, %v10239
    %v10241 = vpop.f32.mrb[0].mxu0
    %v10242 = vpop.f32.mrb[0].mxu0
    %v10243 = vpop.f32.mrb[0].mxu0
    %10244 = vdwg.mxu0
    %v10245 = vpack.c.bf16 %v9984, %v9984
    %v10246 = vld [vmem:[#allocation15] sm:$0xff]
    %v10247 = vld [vmem:[#allocation15 + $0x8] sm:$0xf]
    %v10248 = vld [vmem:[#allocation15 + $0xc] sm:$0xff]
    %v10249 = vld [vmem:[#allocation15 + $0x14] sm:$0xf]
    %v10250 = vld [vmem:[#allocation15 + $0x18] sm:$0xff]
    %v10251 = vld [vmem:[#allocation15 + $0x20] sm:$0xf]
    %v10252 = vld [vmem:[#allocation15 + $0x24] sm:$0xff]
    %v10253 = vld [vmem:[#allocation15 + $0x2c] sm:$0xf]
    %v10254 = vld [vmem:[#allocation15 + $0x30] sm:$0xff]
    %v10255 = vld [vmem:[#allocation15 + $0x38] sm:$0xf]
    %v10256 = vld [vmem:[#allocation15 + $0x3c] sm:$0xff]
    %v10257 = vld [vmem:[#allocation15 + $0x44] sm:$0xf]
    %v10258 = vld [vmem:[#allocation15 + $0x48] sm:$0xff]
    %v10259 = vld [vmem:[#allocation15 + $0x50] sm:$0xf]
    %v10260 = vld [vmem:[#allocation15 + $0x54] sm:$0xff]
    %v10261 = vld [vmem:[#allocation15 + $0x5c] sm:$0xf]
    %v10262 = vld [vmem:[#allocation15 + $0x60] sm:$0xff]
    %v10263 = vld [vmem:[#allocation15 + $0x68] sm:$0xf]
    %v10264 = vld [vmem:[#allocation15 + $0x6c] sm:$0xff]
    %v10265 = vld [vmem:[#allocation15 + $0x74] sm:$0xf]
    %v10266 = vld [vmem:[#allocation15 + $0x78] sm:$0xff]
    %v10267 = vld [vmem:[#allocation15 + $0x80] sm:$0xf]
    %v10268 = vld [vmem:[#allocation15 + $0x84] sm:$0xff]
    %v10269 = vld [vmem:[#allocation15 + $0x8c] sm:$0xf]
    %v10270 = vld [vmem:[#allocation15 + $0x90] sm:$0xff]
    %v10271 = vld [vmem:[#allocation15 + $0x98] sm:$0xf]
    %v10272 = vld [vmem:[#allocation15 + $0x9c] sm:$0xff]
    %v10273 = vld [vmem:[#allocation15 + $0xa4] sm:$0xf]
    %v10274 = vld [vmem:[#allocation15 + $0xa8] sm:$0xff]
    %v10275 = vld [vmem:[#allocation15 + $0xb0] sm:$0xf]
    %v10276 = vld [vmem:[#allocation15 + $0xb4] sm:$0xff]
    %v10277 = vld [vmem:[#allocation15 + $0xbc] sm:$0xf]
    %v10310 = vunpack.c.l.b16 %v10246
    %v10311 = vunpack.c.h.b16 %v10246
    %v10312 = vunpack.c.l.b16 %v10247
    %v10313 = vunpack.c.l.b16 %v10248
    %v10314 = vunpack.c.h.b16 %v10248
    %v10315 = vunpack.c.l.b16 %v10249
    %v10316 = vunpack.c.l.b16 %v10250
    %v10317 = vunpack.c.h.b16 %v10250
    %v10318 = vunpack.c.l.b16 %v10251
    %v10319 = vunpack.c.l.b16 %v10252
    %v10320 = vunpack.c.h.b16 %v10252
    %v10321 = vunpack.c.l.b16 %v10253
    %v10322 = vunpack.c.l.b16 %v10254
    %v10323 = vunpack.c.h.b16 %v10254
    %v10324 = vunpack.c.l.b16 %v10255
    %v10325 = vunpack.c.l.b16 %v10256
    %v10326 = vunpack.c.h.b16 %v10256
    %v10327 = vunpack.c.l.b16 %v10257
    %v10328 = vunpack.c.l.b16 %v10258
    %v10329 = vunpack.c.h.b16 %v10258
    %v10330 = vunpack.c.l.b16 %v10259
    %v10331 = vunpack.c.l.b16 %v10260
    %v10332 = vunpack.c.h.b16 %v10260
    %v10333 = vunpack.c.l.b16 %v10261
    %v10334 = vunpack.c.l.b16 %v10262
    %v10335 = vunpack.c.h.b16 %v10262
    %v10336 = vunpack.c.l.b16 %v10263
    %v10337 = vunpack.c.l.b16 %v10264
    %v10338 = vunpack.c.h.b16 %v10264
    %v10339 = vunpack.c.l.b16 %v10265
    %v10340 = vunpack.c.l.b16 %v10266
    %v10341 = vunpack.c.h.b16 %v10266
    %v10342 = vunpack.c.l.b16 %v10267
    %v10343 = vunpack.c.l.b16 %v10268
    %v10344 = vunpack.c.h.b16 %v10268
    %v10345 = vunpack.c.l.b16 %v10269
    %v10346 = vunpack.c.l.b16 %v10270
    %v10347 = vunpack.c.h.b16 %v10270
    %v10348 = vunpack.c.l.b16 %v10271
    %v10349 = vunpack.c.l.b16 %v10272
    %v10350 = vunpack.c.h.b16 %v10272
    %v10351 = vunpack.c.l.b16 %v10273
    %v10352 = vunpack.c.l.b16 %v10274
    %v10353 = vunpack.c.h.b16 %v10274
    %v10354 = vunpack.c.l.b16 %v10275
    %v10355 = vunpack.c.l.b16 %v10276
    %v10356 = vunpack.c.h.b16 %v10276
    %v10357 = vunpack.c.l.b16 %v10277
    %v10358 = vpack.c.b16 %v10313, %v10310
    %v10359 = vpack.c.b16 %v10314, %v10311
    %v10360 = vpack.c.b16 %v10315, %v10312
    %v10361 = vpack.c.b16 %v10319, %v10316
    %v10362 = vpack.c.b16 %v10320, %v10317
    %v10363 = vpack.c.b16 %v10321, %v10318
    %v10364 = vpack.c.b16 %v10325, %v10322
    %v10365 = vpack.c.b16 %v10326, %v10323
    %v10366 = vpack.c.b16 %v10327, %v10324
    %v10367 = vpack.c.b16 %v10331, %v10328
    %v10368 = vpack.c.b16 %v10332, %v10329
    %v10369 = vpack.c.b16 %v10333, %v10330
    %v10370 = vpack.c.b16 %v10337, %v10334
    %v10371 = vpack.c.b16 %v10338, %v10335
    %v10372 = vpack.c.b16 %v10339, %v10336
    %v10373 = vpack.c.b16 %v10343, %v10340
    %v10374 = vpack.c.b16 %v10344, %v10341
    %v10375 = vpack.c.b16 %v10345, %v10342
    %v10376 = vpack.c.b16 %v10349, %v10346
    %v10377 = vpack.c.b16 %v10350, %v10347
    %v10378 = vpack.c.b16 %v10351, %v10348
    %v10379 = vpack.c.b16 %v10355, %v10352
    %v10380 = vpack.c.b16 %v10356, %v10353
    %v10381 = vpack.c.b16 %v10357, %v10354
    %10406 = vmatprep.subr.bf16.mxu0 %v10359
    %10407 = vmatpush1.bf16.msra.mxu0 %v10358
    %10408 = vmatprep.subr.bf16.mxu0 %v10362
    %10409 = vmatpush1.bf16.msra.mxu0 %v10361
    %10410 = vmatprep.subr.bf16.mxu0 %v10365
    %10411 = vmatpush1.bf16.msra.mxu0 %v10364
    %10412 = vmatprep.subr.bf16.mxu0 %v10368
    %10413 = vmatpush1.bf16.msra.mxu0 %v10367
    %10414 = vmatprep.subr.bf16.mxu0 %v10371
    %10415 = vmatpush1.bf16.msra.mxu0 %v10370
    %10416 = vmatprep.subr.bf16.mxu0 %v10374
    %10417 = vmatpush1.bf16.msra.mxu0 %v10373
    %10418 = vmatprep.subr.bf16.mxu0 %v10377
    %10419 = vmatpush1.bf16.msra.mxu0 %v10376
    %10420 = vmatprep.subr.bf16.mxu0 %v10380
    %10421 = vmatpush1.bf16.msra.mxu0 %v10379
    %10422 = vmatprep.subr.bf16.mxu0 0
    %10423 = vmatpush1.bf16.msra.mxu0 0
    %10424 = vmatprep.subr.bf16.mxu0 0
    %10425 = vmatpush1.bf16.msra.mxu0 0
    %10426 = vmatprep.subr.bf16.mxu0 0
    %10427 = vmatpush1.bf16.msra.mxu0 0
    %10428 = vmatprep.subr.bf16.mxu0 0
    %10429 = vmatpush1.bf16.msra.mxu0 0
    %10430 = vmatprep.subr.bf16.mxu0 0
    %10431 = vmatpush1.bf16.msra.mxu0 0
    %10432 = vmatprep.subr.bf16.mxu0 0
    %10433 = vmatpush1.bf16.msra.mxu0 0
    %10434 = vmatprep.subr.bf16.mxu0 0
    %10435 = vmatpush1.bf16.msra.mxu0 0
    %10436 = vmatprep.subr.bf16.mxu0 0
    %10437 = vmatpush1.bf16.msra.mxu0 0
    %10438 = vmatprep.mubr.bf16.mxu0 0
    %10439 = vmatmul.mubr.bf16.gmra.mrb[0].mxu0 %v10245
    %v10440 = vpop.f32.mrb[0].mxu0
    %v10441 = vadd.f32 0.0, %v10440
    %v10442 = vpop.f32.mrb[0].mxu0
    %v10443 = vadd.f32 0.0, %v10442
    %v10444 = vpop.f32.mrb[0].mxu0
    %v10445 = vpop.f32.mrb[0].mxu0
    %10446 = vdwg.mxu0
    %10447 = vmatprep.subr.bf16.mxu0 0
    %10448 = vmatpush1.bf16.msra.mxu0 %v10360
    %10449 = vmatprep.subr.bf16.mxu0 0
    %10450 = vmatpush1.bf16.msra.mxu0 %v10363
    %10451 = vmatprep.subr.bf16.mxu0 0
    %10452 = vmatpush1.bf16.msra.mxu0 %v10366
    %10453 = vmatprep.subr.bf16.mxu0 0
    %10454 = vmatpush1.bf16.msra.mxu0 %v10369
    %10455 = vmatprep.subr.bf16.mxu0 0
    %10456 = vmatpush1.bf16.msra.mxu0 %v10372
    %10457 = vmatprep.subr.bf16.mxu0 0
    %10458 = vmatpush1.bf16.msra.mxu0 %v10375
    %10459 = vmatprep.subr.bf16.mxu0 0
    %10460 = vmatpush1.bf16.msra.mxu0 %v10378
    %10461 = vmatprep.subr.bf16.mxu0 0
    %10462 = vmatpush1.bf16.msra.mxu0 %v10381
    %10463 = vmatprep.subr.bf16.mxu0 0
    %10464 = vmatpush1.bf16.msra.mxu0 0
    %10465 = vmatprep.subr.bf16.mxu0 0
    %10466 = vmatpush1.bf16.msra.mxu0 0
    %10467 = vmatprep.subr.bf16.mxu0 0
    %10468 = vmatpush1.bf16.msra.mxu0 0
    %10469 = vmatprep.subr.bf16.mxu0 0
    %10470 = vmatpush1.bf16.msra.mxu0 0
    %10471 = vmatprep.subr.bf16.mxu0 0
    %10472 = vmatpush1.bf16.msra.mxu0 0
    %10473 = vmatprep.subr.bf16.mxu0 0
    %10474 = vmatpush1.bf16.msra.mxu0 0
    %10475 = vmatprep.subr.bf16.mxu0 0
    %10476 = vmatpush1.bf16.msra.mxu0 0
    %10477 = vmatprep.subr.bf16.mxu0 0
    %10478 = vmatpush1.bf16.msra.mxu0 0
    %10479 = vmatprep.mubr.bf16.mxu0 0
    %10480 = vmatmul.mubr.bf16.gmra.mrb[0].mxu0 %v10245
    %v10481 = vpop.f32.mrb[0].mxu0
    %v10482 = vadd.f32 0.0, %v10481
    %v10483 = vpop.f32.mrb[0].mxu0
    %v10484 = vpop.f32.mrb[0].mxu0
    %v10485 = vpop.f32.mrb[0].mxu0
    %10486 = vdwg.mxu0
    %v10487 = vadd.f32 %v10199, %v10441
    %v10488 = vxor.u32 %v10487, 2147483648
    %v10489 = vmul.f32 %v10488, 1.442695
    %v10490 = vpow.pop %v10489
    %v10491 = vadd.f32 %v10490, 1.0
    %v10492 = vrcp.pop %v10491
    %v10493 = vmul.f32 1.0, %v10492
    %v10494 = vadd.f32 %v10201, %v10443
    %v10495 = vxor.u32 %v10494, 2147483648
    %v10496 = vmul.f32 %v10495, 1.442695
    %v10497 = vpow.pop %v10496
    %v10498 = vadd.f32 %v10497, 1.0
    %v10499 = vrcp.pop %v10498
    %v10500 = vmul.f32 1.0, %v10499
    %v10501 = vld [vmem:[%s12] sm:$0x1]
    %v10503 = vlaneseq
    %v10504 = vshrl.u32 %v10503, 7
    %v10505 = vsub.s32 0, %v10504
    %v10506 = vrot.slane %v10501, %v10505
    %v10508 = vadd.f32 %v10482, %v10506
    %v10509 = vmul.f32 %v10493, %v10508
    %v10510 = vadd.f32 %v10240, %v10509
    %v10511 = vtanh.pop %v10510
    %v10512 = vsub.f32 1.0, %v10500
    %v10513 = vmul.f32 %v10512, %v10511
    %v10514 = vmul.f32 %v10500, %v9984
    %v10515 = vadd.f32 %v10513, %v10514
    %10516 = vst [vmem:[#allocation3 + $0x38] sm:$0xff] %v10515
    %v10517 = vld [vmem:[#allocation3] sm:$0xff]
    %v10518 = vld [vmem:[#allocation3 + $0x8] sm:$0xff]
    %v10519 = vld [vmem:[#allocation3 + $0x10] sm:$0xff]
    %v10520 = vld [vmem:[#allocation3 + $0x18] sm:$0xff]
    %v10521 = vld [vmem:[#allocation3 + $0x20] sm:$0xff]
    %v10522 = vld [vmem:[#allocation3 + $0x28] sm:$0xff]
    %v10523 = vld [vmem:[#allocation3 + $0x30] sm:$0xff]
    %v10524 = vld [vmem:[#allocation3 + $0x38] sm:$0xff]
    %v10525 = vpack.c.bf16 %v10518, %v10517
    %v10526 = vpack.c.bf16 %v10520, %v10519
    %v10527 = vpack.c.bf16 %v10522, %v10521
    %v10528 = vpack.c.bf16 %v10524, %v10523
    %v10529 = vld [vmem:[#allocation16] sm:$0xf]
    %v10530 = vld [vmem:[#allocation16 + $0x4] sm:$0xf]
    %v10531 = vld [vmem:[#allocation16 + $0x8] sm:$0xf]
    %v10532 = vld [vmem:[#allocation16 + $0xc] sm:$0xf]
    %v10533 = vld [vmem:[#allocation16 + $0x10] sm:$0xf]
    %v10534 = vld [vmem:[#allocation16 + $0x14] sm:$0xf]
    %v10535 = vld [vmem:[#allocation16 + $0x18] sm:$0xf]
    %v10536 = vld [vmem:[#allocation16 + $0x1c] sm:$0xf]
    %v10537 = vld [vmem:[#allocation16 + $0x20] sm:$0xf]
    %v10538 = vld [vmem:[#allocation16 + $0x24] sm:$0xf]
    %v10539 = vld [vmem:[#allocation16 + $0x28] sm:$0xf]
    %v10540 = vld [vmem:[#allocation16 + $0x2c] sm:$0xf]
    %v10541 = vld [vmem:[#allocation16 + $0x30] sm:$0xf]
    %v10542 = vld [vmem:[#allocation16 + $0x34] sm:$0xf]
    %v10543 = vld [vmem:[#allocation16 + $0x38] sm:$0xf]
    %v10544 = vld [vmem:[#allocation16 + $0x3c] sm:$0xf]
    %v10545 = vld [vmem:[%s14] sm:$0x1]
    %v10547 = vlaneseq
    %v10548 = vshrl.u32 %v10547, 7
    %v10549 = vsub.s32 0, %v10548
    %v10550 = vrot.slane %v10545, %v10549
    %v10568 = vunpack.c.l.b16 %v10529
    %v10569 = vunpack.c.l.b16 %v10530
    %v10570 = vunpack.c.l.b16 %v10531
    %v10571 = vunpack.c.l.b16 %v10532
    %v10572 = vunpack.c.l.b16 %v10533
    %v10573 = vunpack.c.l.b16 %v10534
    %v10574 = vunpack.c.l.b16 %v10535
    %v10575 = vunpack.c.l.b16 %v10536
    %v10576 = vunpack.c.l.b16 %v10537
    %v10577 = vunpack.c.l.b16 %v10538
    %v10578 = vunpack.c.l.b16 %v10539
    %v10579 = vunpack.c.l.b16 %v10540
    %v10580 = vunpack.c.l.b16 %v10541
    %v10581 = vunpack.c.l.b16 %v10542
    %v10582 = vunpack.c.l.b16 %v10543
    %v10583 = vunpack.c.l.b16 %v10544
    %v10584 = vpack.c.b16 %v10569, %v10568
    %v10585 = vpack.c.b16 %v10571, %v10570
    %v10586 = vpack.c.b16 %v10573, %v10572
    %v10587 = vpack.c.b16 %v10575, %v10574
    %v10588 = vpack.c.b16 %v10577, %v10576
    %v10589 = vpack.c.b16 %v10579, %v10578
    %v10590 = vpack.c.b16 %v10581, %v10580
    %v10591 = vpack.c.b16 %v10583, %v10582
    %10600 = vmatprep.subr.bf16.mxu0 0
    %10601 = vmatpush1.bf16.msra.mxu0 %v10584
    %10602 = vmatprep.subr.bf16.mxu0 0
    %10603 = vmatpush1.bf16.msra.mxu0 %v10585
    %10604 = vmatprep.subr.bf16.mxu0 0
    %10605 = vmatpush1.bf16.msra.mxu0 %v10586
    %10606 = vmatprep.subr.bf16.mxu0 0
    %10607 = vmatpush1.bf16.msra.mxu0 %v10587
    %10608 = vmatprep.subr.bf16.mxu0 0
    %10609 = vmatpush1.bf16.msra.mxu0 %v10588
    %10610 = vmatprep.subr.bf16.mxu0 0
    %10611 = vmatpush1.bf16.msra.mxu0 %v10589
    %10612 = vmatprep.subr.bf16.mxu0 0
    %10613 = vmatpush1.bf16.msra.mxu0 %v10590
    %10614 = vmatprep.subr.bf16.mxu0 0
    %10615 = vmatpush1.bf16.msra.mxu0 %v10591
    %10616 = vmatprep.subr.bf16.mxu0 0
    %10617 = vmatpush1.bf16.msra.mxu0 0
    %10618 = vmatprep.subr.bf16.mxu0 0
    %10619 = vmatpush1.bf16.msra.mxu0 0
    %10620 = vmatprep.subr.bf16.mxu0 0
    %10621 = vmatpush1.bf16.msra.mxu0 0
    %10622 = vmatprep.subr.bf16.mxu0 0
    %10623 = vmatpush1.bf16.msra.mxu0 0
    %10624 = vmatprep.subr.bf16.mxu0 0
    %10625 = vmatpush1.bf16.msra.mxu0 0
    %10626 = vmatprep.subr.bf16.mxu0 0
    %10627 = vmatpush1.bf16.msra.mxu0 0
    %10628 = vmatprep.subr.bf16.mxu0 0
    %10629 = vmatpush1.bf16.msra.mxu0 0
    %10630 = vmatprep.subr.bf16.mxu0 0
    %10631 = vmatpush1.bf16.msra.mxu0 0
    %10632 = vmatprep.mubr.bf16.mxu0 0
    %10633 = vmatmul.mubr.bf16.gmra.mrb[0].mxu0 %v10525
    %v10634 = vpop.f32.mrb[0].mxu0
    %v10635 = vadd.f32 %v10550, %v10634
    %v10636 = vpop.f32.mrb[0].mxu0
    %v10637 = vpop.f32.mrb[0].mxu0
    %v10638 = vadd.f32 %v10550, %v10637
    %v10639 = vpop.f32.mrb[0].mxu0
    %10640 = vmatprep.mubr.bf16.mxu0 0
    %10641 = vmatmul.mubr.bf16.gmra.mrb[0].mxu0 %v10526
    %v10642 = vpop.f32.mrb[0].mxu0
    %v10643 = vadd.f32 %v10550, %v10642
    %v10644 = vpop.f32.mrb[0].mxu0
    %v10645 = vpop.f32.mrb[0].mxu0
    %v10646 = vadd.f32 %v10550, %v10645
    %v10647 = vpop.f32.mrb[0].mxu0
    %10648 = vmatprep.mubr.bf16.mxu0 0
    %10649 = vmatmul.mubr.bf16.gmra.mrb[0].mxu0 %v10527
    %v10650 = vpop.f32.mrb[0].mxu0
    %v10651 = vadd.f32 %v10550, %v10650
    %v10652 = vpop.f32.mrb[0].mxu0
    %v10653 = vpop.f32.mrb[0].mxu0
    %v10654 = vadd.f32 %v10550, %v10653
    %v10655 = vpop.f32.mrb[0].mxu0
    %10656 = vmatprep.mubr.bf16.mxu0 0
    %10657 = vmatmul.mubr.bf16.gmra.mrb[0].mxu0 %v10528
    %v10658 = vpop.f32.mrb[0].mxu0
    %v10659 = vadd.f32 %v10550, %v10658
    %v10660 = vpop.f32.mrb[0].mxu0
    %v10661 = vpop.f32.mrb[0].mxu0
    %v10662 = vadd.f32 %v10550, %v10661
    %v10663 = vpop.f32.mrb[0].mxu0
    %10664 = vdwg.mxu0
    %10665 = vst [vmem:[#allocation18] sm:$0xff] %v10635
    %10666 = vst [vmem:[#allocation18 + $0x8] sm:$0xff] %v10638
    %10667 = vst [vmem:[#allocation18 + $0x10] sm:$0xff] %v10643
    %10668 = vst [vmem:[#allocation18 + $0x18] sm:$0xff] %v10646
    %10669 = vst [vmem:[#allocation18 + $0x20] sm:$0xff] %v10651
    %10670 = vst [vmem:[#allocation18 + $0x28] sm:$0xff] %v10654
    %10671 = vst [vmem:[#allocation18 + $0x30] sm:$0xff] %v10659
    %10672 = vst [vmem:[#allocation18 + $0x38] sm:$0xff] %v10662
    // Predicated region
    $region94: #{tpu_custom_call.1} parent=1 // pred_check
      _
    $region95: #{tpu_custom_call.1} parent=1 // pred_check_branch
      %10674 = sbr.rel (0) target = $region97
    $region96: #{tpu_custom_call.1} parent=1 // pred_region
      %s10676 = ssub.s32 1024, 1024
      %10677 = vsyncadd [#allocation6], %s10676
      %s10678 = sshll.u32 [#allocation18], 4
      %s10679 = int_to_ptr.vmem [resolvable:$true] %s10678
      %10684 = dma.vmem_to_hbm [thread:$0]  %s10679, 1024, %s15, [#allocation6], 128, 128, 8
    $region97: #{tpu_custom_call.1} parent=1 // pred_fallthru
      _
    // Predicated region
    $region98: #{tpu_custom_call.1} parent=1 // pred_check
      _
    $region99: #{tpu_custom_call.1} parent=1 // pred_check_branch
      %10686 = sbr.rel (0) target = $region101
    $region100: #{tpu_custom_call.1} parent=1 // pred_region
      %10687 = dma.done [#allocation6], 1024
    $region101: #{tpu_custom_call.1} parent=1 // pred_fallthru
      _
    %10688 = vsyncpa [#allocation5], 1
    %10689 = vsyncpa [#allocation8], 1
    %10690 = vsyncpa [#allocation11], 1
    %10691 = vsyncpa [#allocation14], 1
    %10692 = vsyncpa [#allocation17], 1
    %10693 = vsyncpa [#allocation6], 1

</llo_original>
